<compile_context>
chip_gen: v7x
topology: tpu7x:2x2x1
jax: 0.10.0
libtpu: 0.0.40
codegen_flags: <defaults>
</compile_context>

<pallas_src>
import math

import jax
import jax.numpy as jnp
from jax.experimental import pallas as pl
from jax.experimental.pallas import tpu as pltpu

LRELU_SLOPE = 0.2
BN_EPS = 1e-5
LANE = 128          # pad Cout to the 128-lane vreg width (lane-dense stores)
SUBLANE = 8         # pad flat row width so dh*Wz tap offsets are sublane-aligned
ROW_CHUNK = 256     # in-kernel row chunk: keeps the f32 accumulator small & hot
FOLD_K_MAX = 128    # host-fold taps into K when T*Cz is this small (early layers)


def _round_up(x, m):
    return (x + m - 1) // m * m


def _vmem_limit_bytes():
    """Generation-specific scoped-VMEM budget: 3/4 of physical, capped at 100 MiB."""
    cap = 64 * 1024 * 1024
    try:
        cap = int(pltpu.get_tpu_info().vmem_capacity_bytes)
    except Exception:
        pass
    return max(32 * 1024 * 1024, min(3 * cap // 4, 100 * 1024 * 1024))


# --------------------------------------------------------------------------------------
# Conv kernel: sum-of-taps matmul over static row chunks (+ bias/act, or + BN statistics)
# --------------------------------------------------------------------------------------
def _make_conv_kernel(offsets, chunk, n_chunks, has_bias, use_bn, act):
    def kernel(*refs):
        i = 0
        z_ref = refs[i]; i += 1                   # [r_pad, Cz]   bf16 flat padded input
        w_ref = refs[i]; i += 1                   # [T, Cz, Cp]   bf16 per-tap weights
        b_ref = None
        if has_bias:
            b_ref = refs[i]; i += 1               # [1, Cp]       f32 bias
        m_ref = None
        if use_bn:
            m_ref = refs[i]; i += 1               # [m_pad, 1]    f32 0/1 validity mask
        y_ref = refs[i]; i += 1                   # [m_pad, Cp]   conv output
        stats_ref = refs[i] if use_bn else None   # [2, Cp]       f32 (sum, sumsq)

        cp = y_ref.shape[-1]
        s_run = jnp.zeros((1, cp), jnp.float32)
        ss_run = jnp.zeros((1, cp), jnp.float32)

        for c in range(n_chunks):                 # static row chunks (small, hot acc)
            c0 = c * chunk
            acc = jnp.zeros((chunk, cp), jnp.float32)
            for t, off in enumerate(offsets):     # static unroll over conv taps
                ztap = z_ref[c0 + off:c0 + off + chunk, :]           # bf16, no cast
                acc = acc + jnp.dot(ztap, w_ref[t],
                                    preferred_element_type=jnp.float32)
            if b_ref is not None:
                acc = acc + b_ref[...]

            if use_bn:
                y_ref[c0:c0 + chunk, :] = acc.astype(y_ref.dtype)    # raw conv output
                av = acc * m_ref[c0:c0 + chunk, :]                   # masked (0/1) acts
                s_run = s_run + jnp.sum(av, axis=0, keepdims=True)
                ss_run = ss_run + jnp.sum(av * acc, axis=0, keepdims=True)
            else:
                if act == "lrelu":
                    acc = jnp.where(acc >= 0.0, acc, LRELU_SLOPE * acc)
                elif act == "sigmoid":
                    acc = jax.nn.sigmoid(acc)
                y_ref[c0:c0 + chunk, :] = acc.astype(y_ref.dtype)

        if use_bn:
            stats_ref[...] = jnp.concatenate([s_run, ss_run], axis=0)

    return kernel


# --------------------------------------------------------------------------------------
# Host-side prep (1x-sized layout glue): pad, space-to-depth, flatten, weight reorg
# --------------------------------------------------------------------------------------
def _pad_or_crop_rows(zf, rows):
    cur = zf.shape[1]
    if rows > cur:
        return jnp.pad(zf, ((0, 0), (0, rows - cur), (0, 0)))
    if rows < cur:
        return zf[:, :rows, :]
    return zf


def _prep_conv_inputs(x_nhwc, w_oihw, stride):
    N, H, W, Cin = x_nhwc.shape
    Cout = w_oihw.shape[0]
    OH = (H + 2 - 4) // stride + 1
    OW = (W + 2 - 4) // stride + 1
    xp = jnp.pad(x_nhwc.astype(jnp.bfloat16), ((0, 0), (1, 1), (1, 1), (0, 0)))
    w_hwio = jnp.transpose(w_oihw, (2, 3, 1, 0)).astype(jnp.float32)   # [4,4,Cin,Cout]

    if stride == 2:
        Hp, Wp = H + 2, W + 2
        if Hp % 2:
            xp = jnp.pad(xp, ((0, 0), (0, 1), (0, 0), (0, 0))); Hp += 1
        if Wp % 2:
            xp = jnp.pad(xp, ((0, 0), (0, 0), (0, 1), (0, 0))); Wp += 1
        # space-to-depth: a 4x4 stride-2 conv == a 2x2 stride-1 conv over parity planes
        z = jnp.concatenate(
            [xp[:, py::2, px::2, :] for py in (0, 1) for px in (0, 1)], axis=-1)
        Hz, Wz0, Cz, keff = Hp // 2, Wp // 2, 4 * Cin, 2
        w_taps = jnp.stack(
            [jnp.concatenate([w_hwio[2 * dh + py, 2 * dw + px]
                              for py in (0, 1) for px in (0, 1)], axis=0)
             for dh in (0, 1) for dw in (0, 1)], axis=0)               # [4, 4*Cin, Cout]
    else:
        Hz, Wz0, Cz, keff = H + 2, W + 2, Cin, 4
        z = xp
        w_taps = jnp.stack([w_hwio[kh, kw] for kh in range(4) for kw in range(4)],
                           axis=0)                                     # [16, Cin, Cout]

    # Sublane-align the flat row width so every dh*Wz tap-offset component is 8-aligned.
    Wz = _round_up(Wz0, SUBLANE)
    if Wz > Wz0:
        z = jnp.pad(z, ((0, 0), (0, 0), (0, Wz - Wz0), (0, 0)))
    assert OW <= Wz - (keff - 1), "wrapped-column trick would leak into valid columns"

    T = keff * keff
    offsets = tuple(dh * Wz + dw for dh in range(keff) for dw in range(keff))
    m_rows = OH * Wz                       # each output row computed Wz wide (wrapped)
    n_chunks = pl.cdiv(m_rows, ROW_CHUNK)
    chunk = _round_up(pl.cdiv(m_rows, n_chunks), SUBLANE)
    m_pad = chunk * n_chunks

    zf = z.reshape(N, Hz * Wz, Cz)

    if T * Cz <= FOLD_K_MAX:
        # Tiny-K layer (e.g. layer 0): fold all taps into the contraction on the host,
        # so the kernel does one big-K matmul per chunk (small data blow-up only).
        zf = _pad_or_crop_rows(zf, m_pad + offsets[-1])
        zf = jnp.concatenate([zf[:, off:off + m_pad, :] for off in offsets], axis=-1)
        w_taps = w_taps.reshape(1, T * Cz, Cout)
        offsets, Cz, T, r_pad = (0,), T * Cz, 1, m_pad
    else:
        r_pad = m_pad + offsets[-1]
        zf = _pad_or_crop_rows(zf, r_pad)

    coutp = _round_up(Cout, LANE)
    w_taps = jnp.pad(w_taps, ((0, 0), (0, 0), (0, coutp - Cout))).astype(jnp.bfloat16)
    dims = dict(N=N, OH=OH, OW=OW, Wz=Wz, Cz=Cz, T=T, chunk=chunk, n_chunks=n_chunks,
                m_rows=m_rows, m_pad=m_pad, r_pad=r_pad, cout=Cout, coutp=coutp,
                offsets=offsets)
    return zf, w_taps, dims


def _conv_pass(zf, w_taps, bias, dims, *, use_bn, act, out_dtype):
    N, m_pad, r_pad = dims["N"], dims["m_pad"], dims["r_pad"]
    cz, cp, cout = dims["Cz"], dims["coutp"], dims["cout"]
    chunk, n_chunks, T = dims["chunk"], dims["n_chunks"], dims["T"]

    in_specs = [pl.BlockSpec((None, r_pad, cz), lambda n: (n, 0, 0)),
                pl.BlockSpec((T, cz, cp), lambda n: (0, 0, 0))]
    args = [zf, w_taps]

    has_bias = bias is not None
    if has_bias:
        b = jnp.pad(bias.astype(jnp.float32), (0, cp - cout)).reshape(1, cp)
        in_specs.append(pl.BlockSpec((1, cp), lambda n: (0, 0)))
        args.append(b)

    if use_bn:
        # Precomputed 0/1 validity mask (valid rows & non-wrapped columns): replaces
        # the old in-kernel iota % Wz + compare + where.
        m = jnp.arange(m_pad, dtype=jnp.int32)
        valid = (m < dims["m_rows"]) & ((m % dims["Wz"]) < dims["OW"])
        mask = valid.astype(jnp.float32).reshape(m_pad, 1)
        in_specs.append(pl.BlockSpec((m_pad, 1), lambda n: (0, 0)))
        args.append(mask)

    out_shape = jax.ShapeDtypeStruct((N, m_pad, cp), out_dtype)
    out_spec = pl.BlockSpec((None, m_pad, cp), lambda n: (n, 0, 0))
    if use_bn:
        out_shape = (out_shape, jax.ShapeDtypeStruct((N, 2, cp), jnp.float32))
        out_spec = (out_spec, pl.BlockSpec((None, 2, cp), lambda n: (n, 0, 0)))

    kernel = _make_conv_kernel(dims["offsets"], chunk, n_chunks, has_bias, use_bn, act)
    return pl.pallas_call(
        kernel,
        grid=(N,),
        in_specs=in_specs,
        out_specs=out_spec,
        out_shape=out_shape,
        compiler_params=pltpu.CompilerParams(
            dimension_semantics=("parallel",),
            vmem_limit_bytes=_vmem_limit_bytes()),
    )(*args)


def _conv_layer(x_nhwc, p):
    zf, w_taps, d = _prep_conv_inputs(x_nhwc, p["w"], p["stride"])
    N, OH, OW, Wz = d["N"], d["OH"], d["OW"], d["Wz"]
    cout, m_rows = d["cout"], d["m_rows"]

    if p["use_bn"]:
        y1, stats = _conv_pass(zf, w_taps, None, d, use_bn=True, act=None,
                               out_dtype=jnp.bfloat16)
        tot = jnp.sum(stats, axis=0)[:, :cout]                  # [2, Cout]
        cnt = float(N * OH * OW)
        mean = tot[0] / cnt
        var = jnp.maximum(tot[1] / cnt - mean * mean, 0.0)      # biased var (training BN)
        scale = p["gamma"] * jax.lax.rsqrt(var + BN_EPS)
        shift = p["beta"] - mean * scale
        # BN-apply + LeakyReLU folded into this lazy elementwise/crop chain; under jit
        # XLA fuses it with the next layer's pad / space-to-depth copy (no Pallas pass).
        v = y1[:, :m_rows, :cout].astype(jnp.float32) * scale + shift
        v = jnp.where(v >= 0.0, v, LRELU_SLOPE * v)
        y = v.reshape(N, OH, Wz, cout)[:, :, :OW, :]
    else:
        out_dtype = jnp.float32 if p["act"] == "sigmoid" else jnp.bfloat16
        y1 = _conv_pass(zf, w_taps, p["b"], d, use_bn=False, act=p["act"],
                        out_dtype=out_dtype)
        y = y1[:, :m_rows, :cout].reshape(N, OH, Wz, cout)[:, :, :OW, :]
    return y


# --------------------------------------------------------------------------------------
# Module definition / init (mirrors the PyTorch NLayerDiscriminator)
# --------------------------------------------------------------------------------------
def _layer_specs(input_nc, ndf, n_layers):
    specs = [dict(cin=input_nc, cout=ndf, stride=2, use_bn=False, act="lrelu", bias=True)]
    nf = 1
    for n in range(1, n_layers):
        nf_prev, nf = nf, min(2 ** n, 8)
        specs.append(dict(cin=ndf * nf_prev, cout=ndf * nf, stride=2,
                          use_bn=True, act="lrelu", bias=False))
    nf_prev, nf = nf, min(2 ** n_layers, 8)
    specs.append(dict(cin=ndf * nf_prev, cout=ndf * nf, stride=1,
                      use_bn=True, act="lrelu", bias=False))
    specs.append(dict(cin=ndf * nf, cout=1, stride=1,
                      use_bn=False, act="sigmoid", bias=True))
    return specs


def init_params(key, input_nc, ndf=8, n_layers=3):
    """kaiming_normal_ (fan_in, gain=sqrt(2)) conv weights, zero bias, BN gamma=1/beta=0."""
    params = []
    for spec in _layer_specs(input_nc, ndf, n_layers):
        key, sub = jax.random.split(key)
        cin, cout = spec["cin"], spec["cout"]
        std = math.sqrt(2.0 / (cin * 16))
        p = dict(spec)
        p["w"] = jax.random.normal(sub, (cout, cin, 4, 4), dtype=jnp.float32) * std
        p["b"] = jnp.zeros((cout,), jnp.float32) if spec["bias"] else None
        if spec["use_bn"]:
            p["gamma"] = jnp.ones((cout,), jnp.float32)
            p["beta"] = jnp.zeros((cout,), jnp.float32)
        params.append(p)
    return params


def nlayer_discriminator(x_nchw, params):
    x = jnp.transpose(x_nchw, (0, 2, 3, 1))                       # NCHW -> NHWC
    for p in params:
        x = _conv_layer(x, p)
    return jnp.transpose(x, (0, 3, 1, 2)).astype(jnp.float32)     # NHWC -> NCHW


if __name__ == "__main__":
    key = jax.random.PRNGKey(0)
    k_x, k_p = jax.random.split(key)

    # Three stride-2 convs + two 4x4 stride-1 convs need spatial >= 32 for a
    # non-empty output; ndf scaled down to 8 for a small test.
    N, C_in, H, W = 2, 4, 32, 32
    x = jax.random.normal(k_x, (N, C_in, H, W), dtype=jnp.float32)
    params = init_params(k_p, input_nc=C_in, ndf=8, n_layers=3)

    fwd = jax.jit(lambda inp: nlayer_discriminator(inp, params))
    out = jax.block_until_ready(fwd(x))              # -> [2, 1, 2, 2], sigmoid in [0, 1]

    assert out.shape == (2, 1, 2, 2), out.shape
    assert bool(jnp.all(jnp.isfinite(out)))
    assert bool(jnp.all((out >= 0.0) & (out <= 1.0)))
    print("KERNEL_OK")
</pallas_src>

<mosaic_0001>
module attributes {stable_mosaic.version = 11 : i64} {
  func.func @kernel(%arg0: i32, %arg1: memref<1x384x64xbf16, #tpu.memory_space<vmem>>, %arg2: memref<1x64x128xbf16, #tpu.memory_space<vmem>>, %arg3: memref<1x128xf32, #tpu.memory_space<vmem>>, %arg4: memref<1x384x128xbf16, #tpu.memory_space<vmem>>) attributes {dimension_semantics = [#tpu.dimension_semantics<parallel>], iteration_bounds = array<i64: 2>, scalar_prefetch = 0 : i64, scratch_operands = 0 : i64, tpu.core_type = #tpu.core_type<tc>, window_params = [{transform_indices = @transform_0, window_bounds = array<i64: 1, 384, 64>}, {pipeline_mode = #tpu.pipeline_mode<synchronous>, transform_indices = @transform_1, window_bounds = array<i64: 1, 64, 128>}, {pipeline_mode = #tpu.pipeline_mode<synchronous>, transform_indices = @transform_2, window_bounds = array<i64: 1, 128>}, {transform_indices = @transform_3, window_bounds = array<i64: 1, 384, 128>}]} {
    %cst = arith.constant 0.000000e+00 : f32
    %0 = vector.broadcast %cst : f32 to vector<192x128xf32>
    %c0 = arith.constant 0 : index
    %c0_0 = arith.constant 0 : index
    %c0_1 = arith.constant 0 : index
    %1 = vector.load %arg1[%c0, %c0_0, %c0_1] : memref<1x384x64xbf16, #tpu.memory_space<vmem>>, vector<1x192x64xbf16>
    %2 = vector.shape_cast %1 : vector<1x192x64xbf16> to vector<192x64xbf16>
    %c0_2 = arith.constant 0 : index
    %c0_3 = arith.constant 0 : index
    %c0_4 = arith.constant 0 : index
    %3 = vector.load %arg2[%c0_2, %c0_3, %c0_4] : memref<1x64x128xbf16, #tpu.memory_space<vmem>>, vector<1x64x128xbf16>
    %4 = vector.shape_cast %3 : vector<1x64x128xbf16> to vector<64x128xbf16>
    %cst_5 = arith.constant dense<0.000000e+00> : vector<192x128xf32>
    %5 = tpu.matmul %2, %4, %cst_5 {dimension_numbers = #tpu.dot_dimension_numbers<[1], [0], [0], [1], [0, 0, 1, 1], [], []>} : vector<192x64xbf16>, vector<64x128xbf16>, vector<192x128xf32> -> vector<192x128xf32>
    %6 = arith.addf %0, %5 : vector<192x128xf32>
    %c0_6 = arith.constant 0 : index
    %c0_7 = arith.constant 0 : index
    %7 = vector.load %arg3[%c0_6, %c0_7] : memref<1x128xf32, #tpu.memory_space<vmem>>, vector<1x128xf32>
    %8 = vector.broadcast %7 : vector<1x128xf32> to vector<192x128xf32>
    %9 = arith.addf %6, %8 : vector<192x128xf32>
    %cst_8 = arith.constant 0.000000e+00 : f32
    %10 = vector.broadcast %cst_8 : f32 to vector<192x128xf32>
    %11 = arith.cmpf oge, %9, %10 : vector<192x128xf32>
    %cst_9 = arith.constant 2.000000e-01 : f32
    %12 = vector.broadcast %cst_9 : f32 to vector<192x128xf32>
    %13 = arith.mulf %12, %9 : vector<192x128xf32>
    %14 = arith.select %11, %9, %13 : vector<192x128xi1>, vector<192x128xf32>
    %15 = arith.truncf %14 : vector<192x128xf32> to vector<192x128xbf16>
    %c0_10 = arith.constant 0 : index
    %c0_11 = arith.constant 0 : index
    %c0_12 = arith.constant 0 : index
    %16 = vector.load %arg4[%c0_10, %c0_11, %c0_12] : memref<1x384x128xbf16, #tpu.memory_space<vmem>>, vector<1x192x128xbf16>
    %17 = vector.shape_cast %16 : vector<1x192x128xbf16> to vector<192x128xbf16>
    %18 = vector.shape_cast %15 : vector<192x128xbf16> to vector<1x192x128xbf16>
    tpu.vector_store %arg4[%c0_10, %c0_11, %c0_12], %18 {strides = array<i32>} : memref<1x384x128xbf16, #tpu.memory_space<vmem>>, vector<1x192x128xbf16>,
    %cst_13 = arith.constant 0.000000e+00 : f32
    %19 = vector.broadcast %cst_13 : f32 to vector<192x128xf32>
    %c0_14 = arith.constant 0 : index
    %c192 = arith.constant 192 : index
    %c0_15 = arith.constant 0 : index
    %20 = vector.load %arg1[%c0_14, %c192, %c0_15] : memref<1x384x64xbf16, #tpu.memory_space<vmem>>, vector<1x192x64xbf16>
    %21 = vector.shape_cast %20 : vector<1x192x64xbf16> to vector<192x64xbf16>
    %c0_16 = arith.constant 0 : index
    %c0_17 = arith.constant 0 : index
    %c0_18 = arith.constant 0 : index
    %22 = vector.load %arg2[%c0_16, %c0_17, %c0_18] : memref<1x64x128xbf16, #tpu.memory_space<vmem>>, vector<1x64x128xbf16>
    %23 = vector.shape_cast %22 : vector<1x64x128xbf16> to vector<64x128xbf16>
    %cst_19 = arith.constant dense<0.000000e+00> : vector<192x128xf32>
    %24 = tpu.matmul %21, %23, %cst_19 {dimension_numbers = #tpu.dot_dimension_numbers<[1], [0], [0], [1], [0, 0, 1, 1], [], []>} : vector<192x64xbf16>, vector<64x128xbf16>, vector<192x128xf32> -> vector<192x128xf32>
    %25 = arith.addf %19, %24 : vector<192x128xf32>
    %c0_20 = arith.constant 0 : index
    %c0_21 = arith.constant 0 : index
    %26 = vector.load %arg3[%c0_20, %c0_21] : memref<1x128xf32, #tpu.memory_space<vmem>>, vector<1x128xf32>
    %27 = vector.broadcast %26 : vector<1x128xf32> to vector<192x128xf32>
    %28 = arith.addf %25, %27 : vector<192x128xf32>
    %cst_22 = arith.constant 0.000000e+00 : f32
    %29 = vector.broadcast %cst_22 : f32 to vector<192x128xf32>
    %30 = arith.cmpf oge, %28, %29 : vector<192x128xf32>
    %cst_23 = arith.constant 2.000000e-01 : f32
    %31 = vector.broadcast %cst_23 : f32 to vector<192x128xf32>
    %32 = arith.mulf %31, %28 : vector<192x128xf32>
    %33 = arith.select %30, %28, %32 : vector<192x128xi1>, vector<192x128xf32>
    %34 = arith.truncf %33 : vector<192x128xf32> to vector<192x128xbf16>
    %c0_24 = arith.constant 0 : index
    %c192_25 = arith.constant 192 : index
    %c0_26 = arith.constant 0 : index
    %35 = vector.load %arg4[%c0_24, %c192_25, %c0_26] : memref<1x384x128xbf16, #tpu.memory_space<vmem>>, vector<1x192x128xbf16>
    %36 = vector.shape_cast %35 : vector<1x192x128xbf16> to vector<192x128xbf16>
    %37 = vector.shape_cast %34 : vector<192x128xbf16> to vector<1x192x128xbf16>
    tpu.vector_store %arg4[%c0_24, %c192_25, %c0_26], %37 {strides = array<i32>} : memref<1x384x128xbf16, #tpu.memory_space<vmem>>, vector<1x192x128xbf16>,
    return
  }
  func.func @transform_0(%arg0: i32) -> (i32, i32, i32) {
    %c0_i32 = arith.constant 0 : i32
    %c0_i32_0 = arith.constant 0 : i32
    %c0_i32_1 = arith.constant 0 : i32
    return %arg0, %c0_i32, %c0_i32_0 : i32, i32, i32
  }
  func.func @transform_1(%arg0: i32) -> (i32, i32, i32) {
    %c0_i32 = arith.constant 0 : i32
    %c0_i32_0 = arith.constant 0 : i32
    %c0_i32_1 = arith.constant 0 : i32
    %c0_i32_2 = arith.constant 0 : i32
    return %c0_i32, %c0_i32_0, %c0_i32_1 : i32, i32, i32
  }
  func.func @transform_2(%arg0: i32) -> (i32, i32) {
    %c0_i32 = arith.constant 0 : i32
    %c0_i32_0 = arith.constant 0 : i32
    %c0_i32_1 = arith.constant 0 : i32
    return %c0_i32, %c0_i32_0 : i32, i32
  }
  func.func @transform_3(%arg0: i32) -> (i32, i32, i32) {
    %c0_i32 = arith.constant 0 : i32
    %c0_i32_0 = arith.constant 0 : i32
    %c0_i32_1 = arith.constant 0 : i32
    return %arg0, %c0_i32, %c0_i32_0 : i32, i32, i32
  }
}

module attributes {stable_mosaic.version = 11 : i64} {
  func.func @kernel(%arg0: i32, %arg1: memref<1x128x128xbf16, #tpu.memory_space<vmem>>, %arg2: memref<1x128x128xbf16, #tpu.memory_space<vmem>>, %arg3: memref<128x1xf32, #tpu.memory_space<vmem>>, %arg4: memref<1x128x128xbf16, #tpu.memory_space<vmem>>, %arg5: memref<1x2x128xf32, #tpu.memory_space<vmem>>) attributes {dimension_semantics = [#tpu.dimension_semantics<parallel>], iteration_bounds = array<i64: 2>, scalar_prefetch = 0 : i64, scratch_operands = 0 : i64, tpu.core_type = #tpu.core_type<tc>, window_params = [{transform_indices = @transform_0, window_bounds = array<i64: 1, 128, 128>}, {pipeline_mode = #tpu.pipeline_mode<synchronous>, transform_indices = @transform_1, window_bounds = array<i64: 1, 128, 128>}, {pipeline_mode = #tpu.pipeline_mode<synchronous>, transform_indices = @transform_2, window_bounds = array<i64: 128, 1>}, {transform_indices = @transform_3, window_bounds = array<i64: 1, 128, 128>}, {transform_indices = @transform_4, window_bounds = array<i64: 1, 2, 128>}]} {
    %cst = arith.constant 0.000000e+00 : f32
    %0 = vector.broadcast %cst : f32 to vector<1x128xf32>
    %cst_0 = arith.constant 0.000000e+00 : f32
    %1 = vector.broadcast %cst_0 : f32 to vector<1x128xf32>
    %cst_1 = arith.constant 0.000000e+00 : f32
    %2 = vector.broadcast %cst_1 : f32 to vector<128x128xf32>
    %c0 = arith.constant 0 : index
    %c0_2 = arith.constant 0 : index
    %c0_3 = arith.constant 0 : index
    %3 = vector.load %arg1[%c0, %c0_2, %c0_3] : memref<1x128x128xbf16, #tpu.memory_space<vmem>>, vector<1x128x128xbf16>
    %4 = vector.shape_cast %3 : vector<1x128x128xbf16> to vector<128x128xbf16>
    %c0_4 = arith.constant 0 : index
    %c0_5 = arith.constant 0 : index
    %c0_6 = arith.constant 0 : index
    %5 = vector.load %arg2[%c0_4, %c0_5, %c0_6] : memref<1x128x128xbf16, #tpu.memory_space<vmem>>, vector<1x128x128xbf16>
    %6 = vector.shape_cast %5 : vector<1x128x128xbf16> to vector<128x128xbf16>
    %cst_7 = arith.constant dense<0.000000e+00> : vector<128x128xf32>
    %7 = tpu.matmul %4, %6, %cst_7 {dimension_numbers = #tpu.dot_dimension_numbers<[1], [0], [0], [1], [0, 0, 1, 1], [], []>} : vector<128x128xbf16>, vector<128x128xbf16>, vector<128x128xf32> -> vector<128x128xf32>
    %8 = arith.addf %2, %7 : vector<128x128xf32>
    %9 = arith.truncf %8 : vector<128x128xf32> to vector<128x128xbf16>
    %c0_8 = arith.constant 0 : index
    %c0_9 = arith.constant 0 : index
    %c0_10 = arith.constant 0 : index
    %10 = vector.load %arg4[%c0_8, %c0_9, %c0_10] : memref<1x128x128xbf16, #tpu.memory_space<vmem>>, vector<1x128x128xbf16>
    %11 = vector.shape_cast %10 : vector<1x128x128xbf16> to vector<128x128xbf16>
    %12 = vector.shape_cast %9 : vector<128x128xbf16> to vector<1x128x128xbf16>
    tpu.vector_store %arg4[%c0_8, %c0_9, %c0_10], %12 {strides = array<i32>} : memref<1x128x128xbf16, #tpu.memory_space<vmem>>, vector<1x128x128xbf16>,
    %c0_11 = arith.constant 0 : index
    %c0_12 = arith.constant 0 : index
    %13 = vector.load %arg3[%c0_11, %c0_12] : memref<128x1xf32, #tpu.memory_space<vmem>>, vector<128x1xf32>
    %14 = vector.broadcast %13 : vector<128x1xf32> to vector<128x128xf32>
    %15 = arith.mulf %8, %14 : vector<128x128xf32>
    %cst_13 = arith.constant dense<0.000000e+00> : vector<128xf32>
    %16 = vector.multi_reduction <add>, %15, %cst_13 [0] : vector<128x128xf32> to vector<128xf32>
    %17 = vector.shape_cast %16 : vector<128xf32> to vector<1x128xf32>
    %18 = arith.addf %0, %17 : vector<1x128xf32>
    %19 = arith.mulf %15, %8 : vector<128x128xf32>
    %cst_14 = arith.constant dense<0.000000e+00> : vector<128xf32>
    %20 = vector.multi_reduction <add>, %19, %cst_14 [0] : vector<128x128xf32> to vector<128xf32>
    %21 = vector.shape_cast %20 : vector<128xf32> to vector<1x128xf32>
    %22 = arith.addf %1, %21 : vector<1x128xf32>
    %23 = tpu.concatenate %18, %22 in 0 : vector<1x128xf32>, vector<1x128xf32> -> vector<2x128xf32>
    %c0_15 = arith.constant 0 : index
    %c0_16 = arith.constant 0 : index
    %c0_17 = arith.constant 0 : index
    %24 = vector.load %arg5[%c0_15, %c0_16, %c0_17] : memref<1x2x128xf32, #tpu.memory_space<vmem>>, vector<1x2x128xf32>
    %25 = vector.shape_cast %24 : vector<1x2x128xf32> to vector<2x128xf32>
    %26 = vector.shape_cast %23 : vector<2x128xf32> to vector<1x2x128xf32>
    tpu.vector_store %arg5[%c0_15, %c0_16, %c0_17], %26 {strides = array<i32>} : memref<1x2x128xf32, #tpu.memory_space<vmem>>, vector<1x2x128xf32>,
    return
  }
  func.func @transform_0(%arg0: i32) -> (i32, i32, i32) {
    %c0_i32 = arith.constant 0 : i32
    %c0_i32_0 = arith.constant 0 : i32
    %c0_i32_1 = arith.constant 0 : i32
    return %arg0, %c0_i32, %c0_i32_0 : i32, i32, i32
  }
  func.func @transform_1(%arg0: i32) -> (i32, i32, i32) {
    %c0_i32 = arith.constant 0 : i32
    %c0_i32_0 = arith.constant 0 : i32
    %c0_i32_1 = arith.constant 0 : i32
    %c0_i32_2 = arith.constant 0 : i32
    return %c0_i32, %c0_i32_0, %c0_i32_1 : i32, i32, i32
  }
  func.func @transform_2(%arg0: i32) -> (i32, i32) {
    %c0_i32 = arith.constant 0 : i32
    %c0_i32_0 = arith.constant 0 : i32
    %c0_i32_1 = arith.constant 0 : i32
    return %c0_i32, %c0_i32_0 : i32, i32
  }
  func.func @transform_3(%arg0: i32) -> (i32, i32, i32) {
    %c0_i32 = arith.constant 0 : i32
    %c0_i32_0 = arith.constant 0 : i32
    %c0_i32_1 = arith.constant 0 : i32
    return %arg0, %c0_i32, %c0_i32_0 : i32, i32, i32
  }
  func.func @transform_4(%arg0: i32) -> (i32, i32, i32) {
    %c0_i32 = arith.constant 0 : i32
    %c0_i32_0 = arith.constant 0 : i32
    %c0_i32_1 = arith.constant 0 : i32
    return %arg0, %c0_i32, %c0_i32_0 : i32, i32, i32
  }
}

module attributes {stable_mosaic.version = 11 : i64} {
  func.func @kernel(%arg0: i32, %arg1: memref<1x41x64xbf16, #tpu.memory_space<vmem>>, %arg2: memref<4x64x128xbf16, #tpu.memory_space<vmem>>, %arg3: memref<32x1xf32, #tpu.memory_space<vmem>>, %arg4: memref<1x32x128xbf16, #tpu.memory_space<vmem>>, %arg5: memref<1x2x128xf32, #tpu.memory_space<vmem>>) attributes {dimension_semantics = [#tpu.dimension_semantics<parallel>], iteration_bounds = array<i64: 2>, scalar_prefetch = 0 : i64, scratch_operands = 0 : i64, tpu.core_type = #tpu.core_type<tc>, window_params = [{transform_indices = @transform_0, window_bounds = array<i64: 1, 41, 64>}, {pipeline_mode = #tpu.pipeline_mode<synchronous>, transform_indices = @transform_1, window_bounds = array<i64: 4, 64, 128>}, {pipeline_mode = #tpu.pipeline_mode<synchronous>, transform_indices = @transform_2, window_bounds = array<i64: 32, 1>}, {transform_indices = @transform_3, window_bounds = array<i64: 1, 32, 128>}, {transform_indices = @transform_4, window_bounds = array<i64: 1, 2, 128>}]} {
    %cst = arith.constant 0.000000e+00 : f32
    %0 = vector.broadcast %cst : f32 to vector<1x128xf32>
    %cst_0 = arith.constant 0.000000e+00 : f32
    %1 = vector.broadcast %cst_0 : f32 to vector<1x128xf32>
    %cst_1 = arith.constant 0.000000e+00 : f32
    %2 = vector.broadcast %cst_1 : f32 to vector<32x128xf32>
    %c0 = arith.constant 0 : index
    %c0_2 = arith.constant 0 : index
    %c0_3 = arith.constant 0 : index
    %3 = vector.load %arg1[%c0, %c0_2, %c0_3] : memref<1x41x64xbf16, #tpu.memory_space<vmem>>, vector<1x32x64xbf16>
    %4 = vector.shape_cast %3 : vector<1x32x64xbf16> to vector<32x64xbf16>
    %c0_4 = arith.constant 0 : index
    %c0_5 = arith.constant 0 : index
    %c0_6 = arith.constant 0 : index
    %5 = vector.load %arg2[%c0_4, %c0_5, %c0_6] : memref<4x64x128xbf16, #tpu.memory_space<vmem>>, vector<1x64x128xbf16>
    %6 = vector.shape_cast %5 : vector<1x64x128xbf16> to vector<64x128xbf16>
    %cst_7 = arith.constant dense<0.000000e+00> : vector<32x128xf32>
    %7 = tpu.matmul %4, %6, %cst_7 {dimension_numbers = #tpu.dot_dimension_numbers<[1], [0], [0], [1], [0, 0, 1, 1], [], []>} : vector<32x64xbf16>, vector<64x128xbf16>, vector<32x128xf32> -> vector<32x128xf32>
    %8 = arith.addf %2, %7 : vector<32x128xf32>
    %c0_8 = arith.constant 0 : index
    %c1 = arith.constant 1 : index
    %c0_9 = arith.constant 0 : index
    %9 = vector.load %arg1[%c0_8, %c1, %c0_9] : memref<1x41x64xbf16, #tpu.memory_space<vmem>>, vector<1x32x64xbf16>
    %10 = vector.shape_cast %9 : vector<1x32x64xbf16> to vector<32x64xbf16>
    %c1_10 = arith.constant 1 : index
    %c0_11 = arith.constant 0 : index
    %c0_12 = arith.constant 0 : index
    %11 = vector.load %arg2[%c1_10, %c0_11, %c0_12] : memref<4x64x128xbf16, #tpu.memory_space<vmem>>, vector<1x64x128xbf16>
    %12 = vector.shape_cast %11 : vector<1x64x128xbf16> to vector<64x128xbf16>
    %cst_13 = arith.constant dense<0.000000e+00> : vector<32x128xf32>
    %13 = tpu.matmul %10, %12, %cst_13 {dimension_numbers = #tpu.dot_dimension_numbers<[1], [0], [0], [1], [0, 0, 1, 1], [], []>} : vector<32x64xbf16>, vector<64x128xbf16>, vector<32x128xf32> -> vector<32x128xf32>
    %14 = arith.addf %8, %13 : vector<32x128xf32>
    %c0_14 = arith.constant 0 : index
    %c8 = arith.constant 8 : index
    %c0_15 = arith.constant 0 : index
    %15 = vector.load %arg1[%c0_14, %c8, %c0_15] : memref<1x41x64xbf16, #tpu.memory_space<vmem>>, vector<1x32x64xbf16>
    %16 = vector.shape_cast %15 : vector<1x32x64xbf16> to vector<32x64xbf16>
    %c2 = arith.constant 2 : index
    %c0_16 = arith.constant 0 : index
    %c0_17 = arith.constant 0 : index
    %17 = vector.load %arg2[%c2, %c0_16, %c0_17] : memref<4x64x128xbf16, #tpu.memory_space<vmem>>, vector<1x64x128xbf16>
    %18 = vector.shape_cast %17 : vector<1x64x128xbf16> to vector<64x128xbf16>
    %cst_18 = arith.constant dense<0.000000e+00> : vector<32x128xf32>
    %19 = tpu.matmul %16, %18, %cst_18 {dimension_numbers = #tpu.dot_dimension_numbers<[1], [0], [0], [1], [0, 0, 1, 1], [], []>} : vector<32x64xbf16>, vector<64x128xbf16>, vector<32x128xf32> -> vector<32x128xf32>
    %20 = arith.addf %14, %19 : vector<32x128xf32>
    %c0_19 = arith.constant 0 : index
    %c9 = arith.constant 9 : index
    %c0_20 = arith.constant 0 : index
    %21 = vector.load %arg1[%c0_19, %c9, %c0_20] : memref<1x41x64xbf16, #tpu.memory_space<vmem>>, vector<1x32x64xbf16>
    %22 = vector.shape_cast %21 : vector<1x32x64xbf16> to vector<32x64xbf16>
    %c3 = arith.constant 3 : index
    %c0_21 = arith.constant 0 : index
    %c0_22 = arith.constant 0 : index
    %23 = vector.load %arg2[%c3, %c0_21, %c0_22] : memref<4x64x128xbf16, #tpu.memory_space<vmem>>, vector<1x64x128xbf16>
    %24 = vector.shape_cast %23 : vector<1x64x128xbf16> to vector<64x128xbf16>
    %cst_23 = arith.constant dense<0.000000e+00> : vector<32x128xf32>
    %25 = tpu.matmul %22, %24, %cst_23 {dimension_numbers = #tpu.dot_dimension_numbers<[1], [0], [0], [1], [0, 0, 1, 1], [], []>} : vector<32x64xbf16>, vector<64x128xbf16>, vector<32x128xf32> -> vector<32x128xf32>
    %26 = arith.addf %20, %25 : vector<32x128xf32>
    %27 = arith.truncf %26 : vector<32x128xf32> to vector<32x128xbf16>
    %c0_24 = arith.constant 0 : index
    %c0_25 = arith.constant 0 : index
    %c0_26 = arith.constant 0 : index
    %28 = vector.load %arg4[%c0_24, %c0_25, %c0_26] : memref<1x32x128xbf16, #tpu.memory_space<vmem>>, vector<1x32x128xbf16>
    %29 = vector.shape_cast %28 : vector<1x32x128xbf16> to vector<32x128xbf16>
    %30 = vector.shape_cast %27 : vector<32x128xbf16> to vector<1x32x128xbf16>
    tpu.vector_store %arg4[%c0_24, %c0_25, %c0_26], %30 {strides = array<i32>} : memref<1x32x128xbf16, #tpu.memory_space<vmem>>, vector<1x32x128xbf16>,
    %c0_27 = arith.constant 0 : index
    %c0_28 = arith.constant 0 : index
    %31 = vector.load %arg3[%c0_27, %c0_28] : memref<32x1xf32, #tpu.memory_space<vmem>>, vector<32x1xf32>
    %32 = vector.broadcast %31 : vector<32x1xf32> to vector<32x128xf32>
    %33 = arith.mulf %26, %32 : vector<32x128xf32>
    %cst_29 = arith.constant dense<0.000000e+00> : vector<128xf32>
    %34 = vector.multi_reduction <add>, %33, %cst_29 [0] : vector<32x128xf32> to vector<128xf32>
    %35 = vector.shape_cast %34 : vector<128xf32> to vector<1x128xf32>
    %36 = arith.addf %0, %35 : vector<1x128xf32>
    %37 = arith.mulf %33, %26 : vector<32x128xf32>
    %cst_30 = arith.constant dense<0.000000e+00> : vector<128xf32>
    %38 = vector.multi_reduction <add>, %37, %cst_30 [0] : vector<32x128xf32> to vector<128xf32>
    %39 = vector.shape_cast %38 : vector<128xf32> to vector<1x128xf32>
    %40 = arith.addf %1, %39 : vector<1x128xf32>
    %41 = tpu.concatenate %36, %40 in 0 : vector<1x128xf32>, vector<1x128xf32> -> vector<2x128xf32>
    %c0_31 = arith.constant 0 : index
    %c0_32 = arith.constant 0 : index
    %c0_33 = arith.constant 0 : index
    %42 = vector.load %arg5[%c0_31, %c0_32, %c0_33] : memref<1x2x128xf32, #tpu.memory_space<vmem>>, vector<1x2x128xf32>
    %43 = vector.shape_cast %42 : vector<1x2x128xf32> to vector<2x128xf32>
    %44 = vector.shape_cast %41 : vector<2x128xf32> to vector<1x2x128xf32>
    tpu.vector_store %arg5[%c0_31, %c0_32, %c0_33], %44 {strides = array<i32>} : memref<1x2x128xf32, #tpu.memory_space<vmem>>, vector<1x2x128xf32>,
    return
  }
  func.func @transform_0(%arg0: i32) -> (i32, i32, i32) {
    %c0_i32 = arith.constant 0 : i32
    %c0_i32_0 = arith.constant 0 : i32
    %c0_i32_1 = arith.constant 0 : i32
    return %arg0, %c0_i32, %c0_i32_0 : i32, i32, i32
  }
  func.func @transform_1(%arg0: i32) -> (i32, i32, i32) {
    %c0_i32 = arith.constant 0 : i32
    %c0_i32_0 = arith.constant 0 : i32
    %c0_i32_1 = arith.constant 0 : i32
    %c0_i32_2 = arith.constant 0 : i32
    return %c0_i32, %c0_i32_0, %c0_i32_1 : i32, i32, i32
  }
  func.func @transform_2(%arg0: i32) -> (i32, i32) {
    %c0_i32 = arith.constant 0 : i32
    %c0_i32_0 = arith.constant 0 : i32
    %c0_i32_1 = arith.constant 0 : i32
    return %c0_i32, %c0_i32_0 : i32, i32
  }
  func.func @transform_3(%arg0: i32) -> (i32, i32, i32) {
    %c0_i32 = arith.constant 0 : i32
    %c0_i32_0 = arith.constant 0 : i32
    %c0_i32_1 = arith.constant 0 : i32
    return %arg0, %c0_i32, %c0_i32_0 : i32, i32, i32
  }
  func.func @transform_4(%arg0: i32) -> (i32, i32, i32) {
    %c0_i32 = arith.constant 0 : i32
    %c0_i32_0 = arith.constant 0 : i32
    %c0_i32_1 = arith.constant 0 : i32
    return %arg0, %c0_i32, %c0_i32_0 : i32, i32, i32
  }
}

module attributes {stable_mosaic.version = 11 : i64} {
  func.func @kernel(%arg0: i32, %arg1: memref<1x51x32xbf16, #tpu.memory_space<vmem>>, %arg2: memref<16x32x128xbf16, #tpu.memory_space<vmem>>, %arg3: memref<24x1xf32, #tpu.memory_space<vmem>>, %arg4: memref<1x24x128xbf16, #tpu.memory_space<vmem>>, %arg5: memref<1x2x128xf32, #tpu.memory_space<vmem>>) attributes {dimension_semantics = [#tpu.dimension_semantics<parallel>], iteration_bounds = array<i64: 2>, scalar_prefetch = 0 : i64, scratch_operands = 0 : i64, tpu.core_type = #tpu.core_type<tc>, window_params = [{transform_indices = @transform_0, window_bounds = array<i64: 1, 51, 32>}, {pipeline_mode = #tpu.pipeline_mode<synchronous>, transform_indices = @transform_1, window_bounds = array<i64: 16, 32, 128>}, {pipeline_mode = #tpu.pipeline_mode<synchronous>, transform_indices = @transform_2, window_bounds = array<i64: 24, 1>}, {transform_indices = @transform_3, window_bounds = array<i64: 1, 24, 128>}, {transform_indices = @transform_4, window_bounds = array<i64: 1, 2, 128>}]} {
    %cst = arith.constant 0.000000e+00 : f32
    %0 = vector.broadcast %cst : f32 to vector<1x128xf32>
    %cst_0 = arith.constant 0.000000e+00 : f32
    %1 = vector.broadcast %cst_0 : f32 to vector<1x128xf32>
    %cst_1 = arith.constant 0.000000e+00 : f32
    %2 = vector.broadcast %cst_1 : f32 to vector<24x128xf32>
    %c0 = arith.constant 0 : index
    %c0_2 = arith.constant 0 : index
    %c0_3 = arith.constant 0 : index
    %3 = vector.load %arg1[%c0, %c0_2, %c0_3] : memref<1x51x32xbf16, #tpu.memory_space<vmem>>, vector<1x24x32xbf16>
    %4 = vector.shape_cast %3 : vector<1x24x32xbf16> to vector<24x32xbf16>
    %c0_4 = arith.constant 0 : index
    %c0_5 = arith.constant 0 : index
    %c0_6 = arith.constant 0 : index
    %5 = vector.load %arg2[%c0_4, %c0_5, %c0_6] : memref<16x32x128xbf16, #tpu.memory_space<vmem>>, vector<1x32x128xbf16>
    %6 = vector.shape_cast %5 : vector<1x32x128xbf16> to vector<32x128xbf16>
    %cst_7 = arith.constant dense<0.000000e+00> : vector<24x128xf32>
    %7 = tpu.matmul %4, %6, %cst_7 {dimension_numbers = #tpu.dot_dimension_numbers<[1], [0], [0], [1], [0, 0, 1, 1], [], []>} : vector<24x32xbf16>, vector<32x128xbf16>, vector<24x128xf32> -> vector<24x128xf32>
    %8 = arith.addf %2, %7 : vector<24x128xf32>
    %c0_8 = arith.constant 0 : index
    %c1 = arith.constant 1 : index
    %c0_9 = arith.constant 0 : index
    %9 = vector.load %arg1[%c0_8, %c1, %c0_9] : memref<1x51x32xbf16, #tpu.memory_space<vmem>>, vector<1x24x32xbf16>
    %10 = vector.shape_cast %9 : vector<1x24x32xbf16> to vector<24x32xbf16>
    %c1_10 = arith.constant 1 : index
    %c0_11 = arith.constant 0 : index
    %c0_12 = arith.constant 0 : index
    %11 = vector.load %arg2[%c1_10, %c0_11, %c0_12] : memref<16x32x128xbf16, #tpu.memory_space<vmem>>, vector<1x32x128xbf16>
    %12 = vector.shape_cast %11 : vector<1x32x128xbf16> to vector<32x128xbf16>
    %cst_13 = arith.constant dense<0.000000e+00> : vector<24x128xf32>
    %13 = tpu.matmul %10, %12, %cst_13 {dimension_numbers = #tpu.dot_dimension_numbers<[1], [0], [0], [1], [0, 0, 1, 1], [], []>} : vector<24x32xbf16>, vector<32x128xbf16>, vector<24x128xf32> -> vector<24x128xf32>
    %14 = arith.addf %8, %13 : vector<24x128xf32>
    %c0_14 = arith.constant 0 : index
    %c2 = arith.constant 2 : index
    %c0_15 = arith.constant 0 : index
    %15 = vector.load %arg1[%c0_14, %c2, %c0_15] : memref<1x51x32xbf16, #tpu.memory_space<vmem>>, vector<1x24x32xbf16>
    %16 = vector.shape_cast %15 : vector<1x24x32xbf16> to vector<24x32xbf16>
    %c2_16 = arith.constant 2 : index
    %c0_17 = arith.constant 0 : index
    %c0_18 = arith.constant 0 : index
    %17 = vector.load %arg2[%c2_16, %c0_17, %c0_18] : memref<16x32x128xbf16, #tpu.memory_space<vmem>>, vector<1x32x128xbf16>
    %18 = vector.shape_cast %17 : vector<1x32x128xbf16> to vector<32x128xbf16>
    %cst_19 = arith.constant dense<0.000000e+00> : vector<24x128xf32>
    %19 = tpu.matmul %16, %18, %cst_19 {dimension_numbers = #tpu.dot_dimension_numbers<[1], [0], [0], [1], [0, 0, 1, 1], [], []>} : vector<24x32xbf16>, vector<32x128xbf16>, vector<24x128xf32> -> vector<24x128xf32>
    %20 = arith.addf %14, %19 : vector<24x128xf32>
    %c0_20 = arith.constant 0 : index
    %c3 = arith.constant 3 : index
    %c0_21 = arith.constant 0 : index
    %21 = vector.load %arg1[%c0_20, %c3, %c0_21] : memref<1x51x32xbf16, #tpu.memory_space<vmem>>, vector<1x24x32xbf16>
    %22 = vector.shape_cast %21 : vector<1x24x32xbf16> to vector<24x32xbf16>
    %c3_22 = arith.constant 3 : index
    %c0_23 = arith.constant 0 : index
    %c0_24 = arith.constant 0 : index
    %23 = vector.load %arg2[%c3_22, %c0_23, %c0_24] : memref<16x32x128xbf16, #tpu.memory_space<vmem>>, vector<1x32x128xbf16>
    %24 = vector.shape_cast %23 : vector<1x32x128xbf16> to vector<32x128xbf16>
    %cst_25 = arith.constant dense<0.000000e+00> : vector<24x128xf32>
    %25 = tpu.matmul %22, %24, %cst_25 {dimension_numbers = #tpu.dot_dimension_numbers<[1], [0], [0], [1], [0, 0, 1, 1], [], []>} : vector<24x32xbf16>, vector<32x128xbf16>, vector<24x128xf32> -> vector<24x128xf32>
    %26 = arith.addf %20, %25 : vector<24x128xf32>
    %c0_26 = arith.constant 0 : index
    %c8 = arith.constant 8 : index
    %c0_27 = arith.constant 0 : index
    %27 = vector.load %arg1[%c0_26, %c8, %c0_27] : memref<1x51x32xbf16, #tpu.memory_space<vmem>>, vector<1x24x32xbf16>
    %28 = vector.shape_cast %27 : vector<1x24x32xbf16> to vector<24x32xbf16>
    %c4 = arith.constant 4 : index
    %c0_28 = arith.constant 0 : index
    %c0_29 = arith.constant 0 : index
    %29 = vector.load %arg2[%c4, %c0_28, %c0_29] : memref<16x32x128xbf16, #tpu.memory_space<vmem>>, vector<1x32x128xbf16>
    %30 = vector.shape_cast %29 : vector<1x32x128xbf16> to vector<32x128xbf16>
    %cst_30 = arith.constant dense<0.000000e+00> : vector<24x128xf32>
    %31 = tpu.matmul %28, %30, %cst_30 {dimension_numbers = #tpu.dot_dimension_numbers<[1], [0], [0], [1], [0, 0, 1, 1], [], []>} : vector<24x32xbf16>, vector<32x128xbf16>, vector<24x128xf32> -> vector<24x128xf32>
    %32 = arith.addf %26, %31 : vector<24x128xf32>
    %c0_31 = arith.constant 0 : index
    %c9 = arith.constant 9 : index
    %c0_32 = arith.constant 0 : index
    %33 = vector.load %arg1[%c0_31, %c9, %c0_32] : memref<1x51x32xbf16, #tpu.memory_space<vmem>>, vector<1x24x32xbf16>
    %34 = vector.shape_cast %33 : vector<1x24x32xbf16> to vector<24x32xbf16>
    %c5 = arith.constant 5 : index
    %c0_33 = arith.constant 0 : index
    %c0_34 = arith.constant 0 : index
    %35 = vector.load %arg2[%c5, %c0_33, %c0_34] : memref<16x32x128xbf16, #tpu.memory_space<vmem>>, vector<1x32x128xbf16>
    %36 = vector.shape_cast %35 : vector<1x32x128xbf16> to vector<32x128xbf16>
    %cst_35 = arith.constant dense<0.000000e+00> : vector<24x128xf32>
    %37 = tpu.matmul %34, %36, %cst_35 {dimension_numbers = #tpu.dot_dimension_numbers<[1], [0], [0], [1], [0, 0, 1, 1], [], []>} : vector<24x32xbf16>, vector<32x128xbf16>, vector<24x128xf32> -> vector<24x128xf32>
    %38 = arith.addf %32, %37 : vector<24x128xf32>
    %c0_36 = arith.constant 0 : index
    %c10 = arith.constant 10 : index
    %c0_37 = arith.constant 0 : index
    %39 = vector.load %arg1[%c0_36, %c10, %c0_37] : memref<1x51x32xbf16, #tpu.memory_space<vmem>>, vector<1x24x32xbf16>
    %40 = vector.shape_cast %39 : vector<1x24x32xbf16> to vector<24x32xbf16>
    %c6 = arith.constant 6 : index
    %c0_38 = arith.constant 0 : index
    %c0_39 = arith.constant 0 : index
    %41 = vector.load %arg2[%c6, %c0_38, %c0_39] : memref<16x32x128xbf16, #tpu.memory_space<vmem>>, vector<1x32x128xbf16>
    %42 = vector.shape_cast %41 : vector<1x32x128xbf16> to vector<32x128xbf16>
    %cst_40 = arith.constant dense<0.000000e+00> : vector<24x128xf32>
    %43 = tpu.matmul %40, %42, %cst_40 {dimension_numbers = #tpu.dot_dimension_numbers<[1], [0], [0], [1], [0, 0, 1, 1], [], []>} : vector<24x32xbf16>, vector<32x128xbf16>, vector<24x128xf32> -> vector<24x128xf32>
    %44 = arith.addf %38, %43 : vector<24x128xf32>
    %c0_41 = arith.constant 0 : index
    %c11 = arith.constant 11 : index
    %c0_42 = arith.constant 0 : index
    %45 = vector.load %arg1[%c0_41, %c11, %c0_42] : memref<1x51x32xbf16, #tpu.memory_space<vmem>>, vector<1x24x32xbf16>
    %46 = vector.shape_cast %45 : vector<1x24x32xbf16> to vector<24x32xbf16>
    %c7 = arith.constant 7 : index
    %c0_43 = arith.constant 0 : index
    %c0_44 = arith.constant 0 : index
    %47 = vector.load %arg2[%c7, %c0_43, %c0_44] : memref<16x32x128xbf16, #tpu.memory_space<vmem>>, vector<1x32x128xbf16>
    %48 = vector.shape_cast %47 : vector<1x32x128xbf16> to vector<32x128xbf16>
    %cst_45 = arith.constant dense<0.000000e+00> : vector<24x128xf32>
    %49 = tpu.matmul %46, %48, %cst_45 {dimension_numbers = #tpu.dot_dimension_numbers<[1], [0], [0], [1], [0, 0, 1, 1], [], []>} : vector<24x32xbf16>, vector<32x128xbf16>, vector<24x128xf32> -> vector<24x128xf32>
    %50 = arith.addf %44, %49 : vector<24x128xf32>
    %c0_46 = arith.constant 0 : index
    %c16 = arith.constant 16 : index
    %c0_47 = arith.constant 0 : index
    %51 = vector.load %arg1[%c0_46, %c16, %c0_47] : memref<1x51x32xbf16, #tpu.memory_space<vmem>>, vector<1x24x32xbf16>
    %52 = vector.shape_cast %51 : vector<1x24x32xbf16> to vector<24x32xbf16>
    %c8_48 = arith.constant 8 : index
    %c0_49 = arith.constant 0 : index
    %c0_50 = arith.constant 0 : index
    %53 = vector.load %arg2[%c8_48, %c0_49, %c0_50] : memref<16x32x128xbf16, #tpu.memory_space<vmem>>, vector<1x32x128xbf16>
    %54 = vector.shape_cast %53 : vector<1x32x128xbf16> to vector<32x128xbf16>
    %cst_51 = arith.constant dense<0.000000e+00> : vector<24x128xf32>
    %55 = tpu.matmul %52, %54, %cst_51 {dimension_numbers = #tpu.dot_dimension_numbers<[1], [0], [0], [1], [0, 0, 1, 1], [], []>} : vector<24x32xbf16>, vector<32x128xbf16>, vector<24x128xf32> -> vector<24x128xf32>
    %56 = arith.addf %50, %55 : vector<24x128xf32>
    %c0_52 = arith.constant 0 : index
    %c17 = arith.constant 17 : index
    %c0_53 = arith.constant 0 : index
    %57 = vector.load %arg1[%c0_52, %c17, %c0_53] : memref<1x51x32xbf16, #tpu.memory_space<vmem>>, vector<1x24x32xbf16>
    %58 = vector.shape_cast %57 : vector<1x24x32xbf16> to vector<24x32xbf16>
    %c9_54 = arith.constant 9 : index
    %c0_55 = arith.constant 0 : index
    %c0_56 = arith.constant 0 : index
    %59 = vector.load %arg2[%c9_54, %c0_55, %c0_56] : memref<16x32x128xbf16, #tpu.memory_space<vmem>>, vector<1x32x128xbf16>
    %60 = vector.shape_cast %59 : vector<1x32x128xbf16> to vector<32x128xbf16>
    %cst_57 = arith.constant dense<0.000000e+00> : vector<24x128xf32>
    %61 = tpu.matmul %58, %60, %cst_57 {dimension_numbers = #tpu.dot_dimension_numbers<[1], [0], [0], [1], [0, 0, 1, 1], [], []>} : vector<24x32xbf16>, vector<32x128xbf16>, vector<24x128xf32> -> vector<24x128xf32>
    %62 = arith.addf %56, %61 : vector<24x128xf32>
    %c0_58 = arith.constant 0 : index
    %c18 = arith.constant 18 : index
    %c0_59 = arith.constant 0 : index
    %63 = vector.load %arg1[%c0_58, %c18, %c0_59] : memref<1x51x32xbf16, #tpu.memory_space<vmem>>, vector<1x24x32xbf16>
    %64 = vector.shape_cast %63 : vector<1x24x32xbf16> to vector<24x32xbf16>
    %c10_60 = arith.constant 10 : index
    %c0_61 = arith.constant 0 : index
    %c0_62 = arith.constant 0 : index
    %65 = vector.load %arg2[%c10_60, %c0_61, %c0_62] : memref<16x32x128xbf16, #tpu.memory_space<vmem>>, vector<1x32x128xbf16>
    %66 = vector.shape_cast %65 : vector<1x32x128xbf16> to vector<32x128xbf16>
    %cst_63 = arith.constant dense<0.000000e+00> : vector<24x128xf32>
    %67 = tpu.matmul %64, %66, %cst_63 {dimension_numbers = #tpu.dot_dimension_numbers<[1], [0], [0], [1], [0, 0, 1, 1], [], []>} : vector<24x32xbf16>, vector<32x128xbf16>, vector<24x128xf32> -> vector<24x128xf32>
    %68 = arith.addf %62, %67 : vector<24x128xf32>
    %c0_64 = arith.constant 0 : index
    %c19 = arith.constant 19 : index
    %c0_65 = arith.constant 0 : index
    %69 = vector.load %arg1[%c0_64, %c19, %c0_65] : memref<1x51x32xbf16, #tpu.memory_space<vmem>>, vector<1x24x32xbf16>
    %70 = vector.shape_cast %69 : vector<1x24x32xbf16> to vector<24x32xbf16>
    %c11_66 = arith.constant 11 : index
    %c0_67 = arith.constant 0 : index
    %c0_68 = arith.constant 0 : index
    %71 = vector.load %arg2[%c11_66, %c0_67, %c0_68] : memref<16x32x128xbf16, #tpu.memory_space<vmem>>, vector<1x32x128xbf16>
    %72 = vector.shape_cast %71 : vector<1x32x128xbf16> to vector<32x128xbf16>
    %cst_69 = arith.constant dense<0.000000e+00> : vector<24x128xf32>
    %73 = tpu.matmul %70, %72, %cst_69 {dimension_numbers = #tpu.dot_dimension_numbers<[1], [0], [0], [1], [0, 0, 1, 1], [], []>} : vector<24x32xbf16>, vector<32x128xbf16>, vector<24x128xf32> -> vector<24x128xf32>
    %74 = arith.addf %68, %73 : vector<24x128xf32>
    %c0_70 = arith.constant 0 : index
    %c24 = arith.constant 24 : index
    %c0_71 = arith.constant 0 : index
    %75 = vector.load %arg1[%c0_70, %c24, %c0_71] : memref<1x51x32xbf16, #tpu.memory_space<vmem>>, vector<1x24x32xbf16>
    %76 = vector.shape_cast %75 : vector<1x24x32xbf16> to vector<24x32xbf16>
    %c12 = arith.constant 12 : index
    %c0_72 = arith.constant 0 : index
    %c0_73 = arith.constant 0 : index
    %77 = vector.load %arg2[%c12, %c0_72, %c0_73] : memref<16x32x128xbf16, #tpu.memory_space<vmem>>, vector<1x32x128xbf16>
    %78 = vector.shape_cast %77 : vector<1x32x128xbf16> to vector<32x128xbf16>
    %cst_74 = arith.constant dense<0.000000e+00> : vector<24x128xf32>
    %79 = tpu.matmul %76, %78, %cst_74 {dimension_numbers = #tpu.dot_dimension_numbers<[1], [0], [0], [1], [0, 0, 1, 1], [], []>} : vector<24x32xbf16>, vector<32x128xbf16>, vector<24x128xf32> -> vector<24x128xf32>
    %80 = arith.addf %74, %79 : vector<24x128xf32>
    %c0_75 = arith.constant 0 : index
    %c25 = arith.constant 25 : index
    %c0_76 = arith.constant 0 : index
    %81 = vector.load %arg1[%c0_75, %c25, %c0_76] : memref<1x51x32xbf16, #tpu.memory_space<vmem>>, vector<1x24x32xbf16>
    %82 = vector.shape_cast %81 : vector<1x24x32xbf16> to vector<24x32xbf16>
    %c13 = arith.constant 13 : index
    %c0_77 = arith.constant 0 : index
    %c0_78 = arith.constant 0 : index
    %83 = vector.load %arg2[%c13, %c0_77, %c0_78] : memref<16x32x128xbf16, #tpu.memory_space<vmem>>, vector<1x32x128xbf16>
    %84 = vector.shape_cast %83 : vector<1x32x128xbf16> to vector<32x128xbf16>
    %cst_79 = arith.constant dense<0.000000e+00> : vector<24x128xf32>
    %85 = tpu.matmul %82, %84, %cst_79 {dimension_numbers = #tpu.dot_dimension_numbers<[1], [0], [0], [1], [0, 0, 1, 1], [], []>} : vector<24x32xbf16>, vector<32x128xbf16>, vector<24x128xf32> -> vector<24x128xf32>
    %86 = arith.addf %80, %85 : vector<24x128xf32>
    %c0_80 = arith.constant 0 : index
    %c26 = arith.constant 26 : index
    %c0_81 = arith.constant 0 : index
    %87 = vector.load %arg1[%c0_80, %c26, %c0_81] : memref<1x51x32xbf16, #tpu.memory_space<vmem>>, vector<1x24x32xbf16>
    %88 = vector.shape_cast %87 : vector<1x24x32xbf16> to vector<24x32xbf16>
    %c14 = arith.constant 14 : index
    %c0_82 = arith.constant 0 : index
    %c0_83 = arith.constant 0 : index
    %89 = vector.load %arg2[%c14, %c0_82, %c0_83] : memref<16x32x128xbf16, #tpu.memory_space<vmem>>, vector<1x32x128xbf16>
    %90 = vector.shape_cast %89 : vector<1x32x128xbf16> to vector<32x128xbf16>
    %cst_84 = arith.constant dense<0.000000e+00> : vector<24x128xf32>
    %91 = tpu.matmul %88, %90, %cst_84 {dimension_numbers = #tpu.dot_dimension_numbers<[1], [0], [0], [1], [0, 0, 1, 1], [], []>} : vector<24x32xbf16>, vector<32x128xbf16>, vector<24x128xf32> -> vector<24x128xf32>
    %92 = arith.addf %86, %91 : vector<24x128xf32>
    %c0_85 = arith.constant 0 : index
    %c27 = arith.constant 27 : index
    %c0_86 = arith.constant 0 : index
    %93 = vector.load %arg1[%c0_85, %c27, %c0_86] : memref<1x51x32xbf16, #tpu.memory_space<vmem>>, vector<1x24x32xbf16>
    %94 = vector.shape_cast %93 : vector<1x24x32xbf16> to vector<24x32xbf16>
    %c15 = arith.constant 15 : index
    %c0_87 = arith.constant 0 : index
    %c0_88 = arith.constant 0 : index
    %95 = vector.load %arg2[%c15, %c0_87, %c0_88] : memref<16x32x128xbf16, #tpu.memory_space<vmem>>, vector<1x32x128xbf16>
    %96 = vector.shape_cast %95 : vector<1x32x128xbf16> to vector<32x128xbf16>
    %cst_89 = arith.constant dense<0.000000e+00> : vector<24x128xf32>
    %97 = tpu.matmul %94, %96, %cst_89 {dimension_numbers = #tpu.dot_dimension_numbers<[1], [0], [0], [1], [0, 0, 1, 1], [], []>} : vector<24x32xbf16>, vector<32x128xbf16>, vector<24x128xf32> -> vector<24x128xf32>
    %98 = arith.addf %92, %97 : vector<24x128xf32>
    %99 = arith.truncf %98 : vector<24x128xf32> to vector<24x128xbf16>
    %c0_90 = arith.constant 0 : index
    %c0_91 = arith.constant 0 : index
    %c0_92 = arith.constant 0 : index
    %100 = vector.load %arg4[%c0_90, %c0_91, %c0_92] : memref<1x24x128xbf16, #tpu.memory_space<vmem>>, vector<1x24x128xbf16>
    %101 = vector.shape_cast %100 : vector<1x24x128xbf16> to vector<24x128xbf16>
    %102 = vector.shape_cast %99 : vector<24x128xbf16> to vector<1x24x128xbf16>
    tpu.vector_store %arg4[%c0_90, %c0_91, %c0_92], %102 {strides = array<i32>} : memref<1x24x128xbf16, #tpu.memory_space<vmem>>, vector<1x24x128xbf16>,
    %c0_93 = arith.constant 0 : index
    %c0_94 = arith.constant 0 : index
    %103 = vector.load %arg3[%c0_93, %c0_94] : memref<24x1xf32, #tpu.memory_space<vmem>>, vector<24x1xf32>
    %104 = vector.broadcast %103 : vector<24x1xf32> to vector<24x128xf32>
    %105 = arith.mulf %98, %104 : vector<24x128xf32>
    %cst_95 = arith.constant dense<0.000000e+00> : vector<128xf32>
    %106 = vector.multi_reduction <add>, %105, %cst_95 [0] : vector<24x128xf32> to vector<128xf32>
    %107 = vector.shape_cast %106 : vector<128xf32> to vector<1x128xf32>
    %108 = arith.addf %0, %107 : vector<1x128xf32>
    %109 = arith.mulf %105, %98 : vector<24x128xf32>
    %cst_96 = arith.constant dense<0.000000e+00> : vector<128xf32>
    %110 = vector.multi_reduction <add>, %109, %cst_96 [0] : vector<24x128xf32> to vector<128xf32>
    %111 = vector.shape_cast %110 : vector<128xf32> to vector<1x128xf32>
    %112 = arith.addf %1, %111 : vector<1x128xf32>
    %113 = tpu.concatenate %108, %112 in 0 : vector<1x128xf32>, vector<1x128xf32> -> vector<2x128xf32>
    %c0_97 = arith.constant 0 : index
    %c0_98 = arith.constant 0 : index
    %c0_99 = arith.constant 0 : index
    %114 = vector.load %arg5[%c0_97, %c0_98, %c0_99] : memref<1x2x128xf32, #tpu.memory_space<vmem>>, vector<1x2x128xf32>
    %115 = vector.shape_cast %114 : vector<1x2x128xf32> to vector<2x128xf32>
    %116 = vector.shape_cast %113 : vector<2x128xf32> to vector<1x2x128xf32>
    tpu.vector_store %arg5[%c0_97, %c0_98, %c0_99], %116 {strides = array<i32>} : memref<1x2x128xf32, #tpu.memory_space<vmem>>, vector<1x2x128xf32>,
    return
  }
  func.func @transform_0(%arg0: i32) -> (i32, i32, i32) {
    %c0_i32 = arith.constant 0 : i32
    %c0_i32_0 = arith.constant 0 : i32
    %c0_i32_1 = arith.constant 0 : i32
    return %arg0, %c0_i32, %c0_i32_0 : i32, i32, i32
  }
  func.func @transform_1(%arg0: i32) -> (i32, i32, i32) {
    %c0_i32 = arith.constant 0 : i32
    %c0_i32_0 = arith.constant 0 : i32
    %c0_i32_1 = arith.constant 0 : i32
    %c0_i32_2 = arith.constant 0 : i32
    return %c0_i32, %c0_i32_0, %c0_i32_1 : i32, i32, i32
  }
  func.func @transform_2(%arg0: i32) -> (i32, i32) {
    %c0_i32 = arith.constant 0 : i32
    %c0_i32_0 = arith.constant 0 : i32
    %c0_i32_1 = arith.constant 0 : i32
    return %c0_i32, %c0_i32_0 : i32, i32
  }
  func.func @transform_3(%arg0: i32) -> (i32, i32, i32) {
    %c0_i32 = arith.constant 0 : i32
    %c0_i32_0 = arith.constant 0 : i32
    %c0_i32_1 = arith.constant 0 : i32
    return %arg0, %c0_i32, %c0_i32_0 : i32, i32, i32
  }
  func.func @transform_4(%arg0: i32) -> (i32, i32, i32) {
    %c0_i32 = arith.constant 0 : i32
    %c0_i32_0 = arith.constant 0 : i32
    %c0_i32_1 = arith.constant 0 : i32
    return %arg0, %c0_i32, %c0_i32_0 : i32, i32, i32
  }
}

module attributes {stable_mosaic.version = 11 : i64} {
  func.func @kernel(%arg0: i32, %arg1: memref<1x43x64xbf16, #tpu.memory_space<vmem>>, %arg2: memref<16x64x128xbf16, #tpu.memory_space<vmem>>, %arg3: memref<1x128xf32, #tpu.memory_space<vmem>>, %arg4: memref<1x16x128xf32, #tpu.memory_space<vmem>>) attributes {dimension_semantics = [#tpu.dimension_semantics<parallel>], iteration_bounds = array<i64: 2>, scalar_prefetch = 0 : i64, scratch_operands = 0 : i64, tpu.core_type = #tpu.core_type<tc>, window_params = [{transform_indices = @transform_0, window_bounds = array<i64: 1, 43, 64>}, {pipeline_mode = #tpu.pipeline_mode<synchronous>, transform_indices = @transform_1, window_bounds = array<i64: 16, 64, 128>}, {pipeline_mode = #tpu.pipeline_mode<synchronous>, transform_indices = @transform_2, window_bounds = array<i64: 1, 128>}, {transform_indices = @transform_3, window_bounds = array<i64: 1, 16, 128>}]} {
    %cst = arith.constant 0.000000e+00 : f32
    %0 = vector.broadcast %cst : f32 to vector<16x128xf32>
    %c0 = arith.constant 0 : index
    %c0_0 = arith.constant 0 : index
    %c0_1 = arith.constant 0 : index
    %1 = vector.load %arg1[%c0, %c0_0, %c0_1] : memref<1x43x64xbf16, #tpu.memory_space<vmem>>, vector<1x16x64xbf16>
    %2 = vector.shape_cast %1 : vector<1x16x64xbf16> to vector<16x64xbf16>
    %c0_2 = arith.constant 0 : index
    %c0_3 = arith.constant 0 : index
    %c0_4 = arith.constant 0 : index
    %3 = vector.load %arg2[%c0_2, %c0_3, %c0_4] : memref<16x64x128xbf16, #tpu.memory_space<vmem>>, vector<1x64x128xbf16>
    %4 = vector.shape_cast %3 : vector<1x64x128xbf16> to vector<64x128xbf16>
    %cst_5 = arith.constant dense<0.000000e+00> : vector<16x128xf32>
    %5 = tpu.matmul %2, %4, %cst_5 {dimension_numbers = #tpu.dot_dimension_numbers<[1], [0], [0], [1], [0, 0, 1, 1], [], []>} : vector<16x64xbf16>, vector<64x128xbf16>, vector<16x128xf32> -> vector<16x128xf32>
    %6 = arith.addf %0, %5 : vector<16x128xf32>
    %c0_6 = arith.constant 0 : index
    %c1 = arith.constant 1 : index
    %c0_7 = arith.constant 0 : index
    %7 = vector.load %arg1[%c0_6, %c1, %c0_7] : memref<1x43x64xbf16, #tpu.memory_space<vmem>>, vector<1x16x64xbf16>
    %8 = vector.shape_cast %7 : vector<1x16x64xbf16> to vector<16x64xbf16>
    %c1_8 = arith.constant 1 : index
    %c0_9 = arith.constant 0 : index
    %c0_10 = arith.constant 0 : index
    %9 = vector.load %arg2[%c1_8, %c0_9, %c0_10] : memref<16x64x128xbf16, #tpu.memory_space<vmem>>, vector<1x64x128xbf16>
    %10 = vector.shape_cast %9 : vector<1x64x128xbf16> to vector<64x128xbf16>
    %cst_11 = arith.constant dense<0.000000e+00> : vector<16x128xf32>
    %11 = tpu.matmul %8, %10, %cst_11 {dimension_numbers = #tpu.dot_dimension_numbers<[1], [0], [0], [1], [0, 0, 1, 1], [], []>} : vector<16x64xbf16>, vector<64x128xbf16>, vector<16x128xf32> -> vector<16x128xf32>
    %12 = arith.addf %6, %11 : vector<16x128xf32>
    %c0_12 = arith.constant 0 : index
    %c2 = arith.constant 2 : index
    %c0_13 = arith.constant 0 : index
    %13 = vector.load %arg1[%c0_12, %c2, %c0_13] : memref<1x43x64xbf16, #tpu.memory_space<vmem>>, vector<1x16x64xbf16>
    %14 = vector.shape_cast %13 : vector<1x16x64xbf16> to vector<16x64xbf16>
    %c2_14 = arith.constant 2 : index
    %c0_15 = arith.constant 0 : index
    %c0_16 = arith.constant 0 : index
    %15 = vector.load %arg2[%c2_14, %c0_15, %c0_16] : memref<16x64x128xbf16, #tpu.memory_space<vmem>>, vector<1x64x128xbf16>
    %16 = vector.shape_cast %15 : vector<1x64x128xbf16> to vector<64x128xbf16>
    %cst_17 = arith.constant dense<0.000000e+00> : vector<16x128xf32>
    %17 = tpu.matmul %14, %16, %cst_17 {dimension_numbers = #tpu.dot_dimension_numbers<[1], [0], [0], [1], [0, 0, 1, 1], [], []>} : vector<16x64xbf16>, vector<64x128xbf16>, vector<16x128xf32> -> vector<16x128xf32>
    %18 = arith.addf %12, %17 : vector<16x128xf32>
    %c0_18 = arith.constant 0 : index
    %c3 = arith.constant 3 : index
    %c0_19 = arith.constant 0 : index
    %19 = vector.load %arg1[%c0_18, %c3, %c0_19] : memref<1x43x64xbf16, #tpu.memory_space<vmem>>, vector<1x16x64xbf16>
    %20 = vector.shape_cast %19 : vector<1x16x64xbf16> to vector<16x64xbf16>
    %c3_20 = arith.constant 3 : index
    %c0_21 = arith.constant 0 : index
    %c0_22 = arith.constant 0 : index
    %21 = vector.load %arg2[%c3_20, %c0_21, %c0_22] : memref<16x64x128xbf16, #tpu.memory_space<vmem>>, vector<1x64x128xbf16>
    %22 = vector.shape_cast %21 : vector<1x64x128xbf16> to vector<64x128xbf16>
    %cst_23 = arith.constant dense<0.000000e+00> : vector<16x128xf32>
    %23 = tpu.matmul %20, %22, %cst_23 {dimension_numbers = #tpu.dot_dimension_numbers<[1], [0], [0], [1], [0, 0, 1, 1], [], []>} : vector<16x64xbf16>, vector<64x128xbf16>, vector<16x128xf32> -> vector<16x128xf32>
    %24 = arith.addf %18, %23 : vector<16x128xf32>
    %c0_24 = arith.constant 0 : index
    %c8 = arith.constant 8 : index
    %c0_25 = arith.constant 0 : index
    %25 = vector.load %arg1[%c0_24, %c8, %c0_25] : memref<1x43x64xbf16, #tpu.memory_space<vmem>>, vector<1x16x64xbf16>
    %26 = vector.shape_cast %25 : vector<1x16x64xbf16> to vector<16x64xbf16>
    %c4 = arith.constant 4 : index
    %c0_26 = arith.constant 0 : index
    %c0_27 = arith.constant 0 : index
    %27 = vector.load %arg2[%c4, %c0_26, %c0_27] : memref<16x64x128xbf16, #tpu.memory_space<vmem>>, vector<1x64x128xbf16>
    %28 = vector.shape_cast %27 : vector<1x64x128xbf16> to vector<64x128xbf16>
    %cst_28 = arith.constant dense<0.000000e+00> : vector<16x128xf32>
    %29 = tpu.matmul %26, %28, %cst_28 {dimension_numbers = #tpu.dot_dimension_numbers<[1], [0], [0], [1], [0, 0, 1, 1], [], []>} : vector<16x64xbf16>, vector<64x128xbf16>, vector<16x128xf32> -> vector<16x128xf32>
    %30 = arith.addf %24, %29 : vector<16x128xf32>
    %c0_29 = arith.constant 0 : index
    %c9 = arith.constant 9 : index
    %c0_30 = arith.constant 0 : index
    %31 = vector.load %arg1[%c0_29, %c9, %c0_30] : memref<1x43x64xbf16, #tpu.memory_space<vmem>>, vector<1x16x64xbf16>
    %32 = vector.shape_cast %31 : vector<1x16x64xbf16> to vector<16x64xbf16>
    %c5 = arith.constant 5 : index
    %c0_31 = arith.constant 0 : index
    %c0_32 = arith.constant 0 : index
    %33 = vector.load %arg2[%c5, %c0_31, %c0_32] : memref<16x64x128xbf16, #tpu.memory_space<vmem>>, vector<1x64x128xbf16>
    %34 = vector.shape_cast %33 : vector<1x64x128xbf16> to vector<64x128xbf16>
    %cst_33 = arith.constant dense<0.000000e+00> : vector<16x128xf32>
    %35 = tpu.matmul %32, %34, %cst_33 {dimension_numbers = #tpu.dot_dimension_numbers<[1], [0], [0], [1], [0, 0, 1, 1], [], []>} : vector<16x64xbf16>, vector<64x128xbf16>, vector<16x128xf32> -> vector<16x128xf32>
    %36 = arith.addf %30, %35 : vector<16x128xf32>
    %c0_34 = arith.constant 0 : index
    %c10 = arith.constant 10 : index
    %c0_35 = arith.constant 0 : index
    %37 = vector.load %arg1[%c0_34, %c10, %c0_35] : memref<1x43x64xbf16, #tpu.memory_space<vmem>>, vector<1x16x64xbf16>
    %38 = vector.shape_cast %37 : vector<1x16x64xbf16> to vector<16x64xbf16>
    %c6 = arith.constant 6 : index
    %c0_36 = arith.constant 0 : index
    %c0_37 = arith.constant 0 : index
    %39 = vector.load %arg2[%c6, %c0_36, %c0_37] : memref<16x64x128xbf16, #tpu.memory_space<vmem>>, vector<1x64x128xbf16>
    %40 = vector.shape_cast %39 : vector<1x64x128xbf16> to vector<64x128xbf16>
    %cst_38 = arith.constant dense<0.000000e+00> : vector<16x128xf32>
    %41 = tpu.matmul %38, %40, %cst_38 {dimension_numbers = #tpu.dot_dimension_numbers<[1], [0], [0], [1], [0, 0, 1, 1], [], []>} : vector<16x64xbf16>, vector<64x128xbf16>, vector<16x128xf32> -> vector<16x128xf32>
    %42 = arith.addf %36, %41 : vector<16x128xf32>
    %c0_39 = arith.constant 0 : index
    %c11 = arith.constant 11 : index
    %c0_40 = arith.constant 0 : index
    %43 = vector.load %arg1[%c0_39, %c11, %c0_40] : memref<1x43x64xbf16, #tpu.memory_space<vmem>>, vector<1x16x64xbf16>
    %44 = vector.shape_cast %43 : vector<1x16x64xbf16> to vector<16x64xbf16>
    %c7 = arith.constant 7 : index
    %c0_41 = arith.constant 0 : index
    %c0_42 = arith.constant 0 : index
    %45 = vector.load %arg2[%c7, %c0_41, %c0_42] : memref<16x64x128xbf16, #tpu.memory_space<vmem>>, vector<1x64x128xbf16>
    %46 = vector.shape_cast %45 : vector<1x64x128xbf16> to vector<64x128xbf16>
    %cst_43 = arith.constant dense<0.000000e+00> : vector<16x128xf32>
    %47 = tpu.matmul %44, %46, %cst_43 {dimension_numbers = #tpu.dot_dimension_numbers<[1], [0], [0], [1], [0, 0, 1, 1], [], []>} : vector<16x64xbf16>, vector<64x128xbf16>, vector<16x128xf32> -> vector<16x128xf32>
    %48 = arith.addf %42, %47 : vector<16x128xf32>
    %c0_44 = arith.constant 0 : index
    %c16 = arith.constant 16 : index
    %c0_45 = arith.constant 0 : index
    %49 = vector.load %arg1[%c0_44, %c16, %c0_45] : memref<1x43x64xbf16, #tpu.memory_space<vmem>>, vector<1x16x64xbf16>
    %50 = vector.shape_cast %49 : vector<1x16x64xbf16> to vector<16x64xbf16>
    %c8_46 = arith.constant 8 : index
    %c0_47 = arith.constant 0 : index
    %c0_48 = arith.constant 0 : index
    %51 = vector.load %arg2[%c8_46, %c0_47, %c0_48] : memref<16x64x128xbf16, #tpu.memory_space<vmem>>, vector<1x64x128xbf16>
    %52 = vector.shape_cast %51 : vector<1x64x128xbf16> to vector<64x128xbf16>
    %cst_49 = arith.constant dense<0.000000e+00> : vector<16x128xf32>
    %53 = tpu.matmul %50, %52, %cst_49 {dimension_numbers = #tpu.dot_dimension_numbers<[1], [0], [0], [1], [0, 0, 1, 1], [], []>} : vector<16x64xbf16>, vector<64x128xbf16>, vector<16x128xf32> -> vector<16x128xf32>
    %54 = arith.addf %48, %53 : vector<16x128xf32>
    %c0_50 = arith.constant 0 : index
    %c17 = arith.constant 17 : index
    %c0_51 = arith.constant 0 : index
    %55 = vector.load %arg1[%c0_50, %c17, %c0_51] : memref<1x43x64xbf16, #tpu.memory_space<vmem>>, vector<1x16x64xbf16>
    %56 = vector.shape_cast %55 : vector<1x16x64xbf16> to vector<16x64xbf16>
    %c9_52 = arith.constant 9 : index
    %c0_53 = arith.constant 0 : index
    %c0_54 = arith.constant 0 : index
    %57 = vector.load %arg2[%c9_52, %c0_53, %c0_54] : memref<16x64x128xbf16, #tpu.memory_space<vmem>>, vector<1x64x128xbf16>
    %58 = vector.shape_cast %57 : vector<1x64x128xbf16> to vector<64x128xbf16>
    %cst_55 = arith.constant dense<0.000000e+00> : vector<16x128xf32>
    %59 = tpu.matmul %56, %58, %cst_55 {dimension_numbers = #tpu.dot_dimension_numbers<[1], [0], [0], [1], [0, 0, 1, 1], [], []>} : vector<16x64xbf16>, vector<64x128xbf16>, vector<16x128xf32> -> vector<16x128xf32>
    %60 = arith.addf %54, %59 : vector<16x128xf32>
    %c0_56 = arith.constant 0 : index
    %c18 = arith.constant 18 : index
    %c0_57 = arith.constant 0 : index
    %61 = vector.load %arg1[%c0_56, %c18, %c0_57] : memref<1x43x64xbf16, #tpu.memory_space<vmem>>, vector<1x16x64xbf16>
    %62 = vector.shape_cast %61 : vector<1x16x64xbf16> to vector<16x64xbf16>
    %c10_58 = arith.constant 10 : index
    %c0_59 = arith.constant 0 : index
    %c0_60 = arith.constant 0 : index
    %63 = vector.load %arg2[%c10_58, %c0_59, %c0_60] : memref<16x64x128xbf16, #tpu.memory_space<vmem>>, vector<1x64x128xbf16>
    %64 = vector.shape_cast %63 : vector<1x64x128xbf16> to vector<64x128xbf16>
    %cst_61 = arith.constant dense<0.000000e+00> : vector<16x128xf32>
    %65 = tpu.matmul %62, %64, %cst_61 {dimension_numbers = #tpu.dot_dimension_numbers<[1], [0], [0], [1], [0, 0, 1, 1], [], []>} : vector<16x64xbf16>, vector<64x128xbf16>, vector<16x128xf32> -> vector<16x128xf32>
    %66 = arith.addf %60, %65 : vector<16x128xf32>
    %c0_62 = arith.constant 0 : index
    %c19 = arith.constant 19 : index
    %c0_63 = arith.constant 0 : index
    %67 = vector.load %arg1[%c0_62, %c19, %c0_63] : memref<1x43x64xbf16, #tpu.memory_space<vmem>>, vector<1x16x64xbf16>
    %68 = vector.shape_cast %67 : vector<1x16x64xbf16> to vector<16x64xbf16>
    %c11_64 = arith.constant 11 : index
    %c0_65 = arith.constant 0 : index
    %c0_66 = arith.constant 0 : index
    %69 = vector.load %arg2[%c11_64, %c0_65, %c0_66] : memref<16x64x128xbf16, #tpu.memory_space<vmem>>, vector<1x64x128xbf16>
    %70 = vector.shape_cast %69 : vector<1x64x128xbf16> to vector<64x128xbf16>
    %cst_67 = arith.constant dense<0.000000e+00> : vector<16x128xf32>
    %71 = tpu.matmul %68, %70, %cst_67 {dimension_numbers = #tpu.dot_dimension_numbers<[1], [0], [0], [1], [0, 0, 1, 1], [], []>} : vector<16x64xbf16>, vector<64x128xbf16>, vector<16x128xf32> -> vector<16x128xf32>
    %72 = arith.addf %66, %71 : vector<16x128xf32>
    %c0_68 = arith.constant 0 : index
    %c24 = arith.constant 24 : index
    %c0_69 = arith.constant 0 : index
    %73 = vector.load %arg1[%c0_68, %c24, %c0_69] : memref<1x43x64xbf16, #tpu.memory_space<vmem>>, vector<1x16x64xbf16>
    %74 = vector.shape_cast %73 : vector<1x16x64xbf16> to vector<16x64xbf16>
    %c12 = arith.constant 12 : index
    %c0_70 = arith.constant 0 : index
    %c0_71 = arith.constant 0 : index
    %75 = vector.load %arg2[%c12, %c0_70, %c0_71] : memref<16x64x128xbf16, #tpu.memory_space<vmem>>, vector<1x64x128xbf16>
    %76 = vector.shape_cast %75 : vector<1x64x128xbf16> to vector<64x128xbf16>
    %cst_72 = arith.constant dense<0.000000e+00> : vector<16x128xf32>
    %77 = tpu.matmul %74, %76, %cst_72 {dimension_numbers = #tpu.dot_dimension_numbers<[1], [0], [0], [1], [0, 0, 1, 1], [], []>} : vector<16x64xbf16>, vector<64x128xbf16>, vector<16x128xf32> -> vector<16x128xf32>
    %78 = arith.addf %72, %77 : vector<16x128xf32>
    %c0_73 = arith.constant 0 : index
    %c25 = arith.constant 25 : index
    %c0_74 = arith.constant 0 : index
    %79 = vector.load %arg1[%c0_73, %c25, %c0_74] : memref<1x43x64xbf16, #tpu.memory_space<vmem>>, vector<1x16x64xbf16>
    %80 = vector.shape_cast %79 : vector<1x16x64xbf16> to vector<16x64xbf16>
    %c13 = arith.constant 13 : index
    %c0_75 = arith.constant 0 : index
    %c0_76 = arith.constant 0 : index
    %81 = vector.load %arg2[%c13, %c0_75, %c0_76] : memref<16x64x128xbf16, #tpu.memory_space<vmem>>, vector<1x64x128xbf16>
    %82 = vector.shape_cast %81 : vector<1x64x128xbf16> to vector<64x128xbf16>
    %cst_77 = arith.constant dense<0.000000e+00> : vector<16x128xf32>
    %83 = tpu.matmul %80, %82, %cst_77 {dimension_numbers = #tpu.dot_dimension_numbers<[1], [0], [0], [1], [0, 0, 1, 1], [], []>} : vector<16x64xbf16>, vector<64x128xbf16>, vector<16x128xf32> -> vector<16x128xf32>
    %84 = arith.addf %78, %83 : vector<16x128xf32>
    %c0_78 = arith.constant 0 : index
    %c26 = arith.constant 26 : index
    %c0_79 = arith.constant 0 : index
    %85 = vector.load %arg1[%c0_78, %c26, %c0_79] : memref<1x43x64xbf16, #tpu.memory_space<vmem>>, vector<1x16x64xbf16>
    %86 = vector.shape_cast %85 : vector<1x16x64xbf16> to vector<16x64xbf16>
    %c14 = arith.constant 14 : index
    %c0_80 = arith.constant 0 : index
    %c0_81 = arith.constant 0 : index
    %87 = vector.load %arg2[%c14, %c0_80, %c0_81] : memref<16x64x128xbf16, #tpu.memory_space<vmem>>, vector<1x64x128xbf16>
    %88 = vector.shape_cast %87 : vector<1x64x128xbf16> to vector<64x128xbf16>
    %cst_82 = arith.constant dense<0.000000e+00> : vector<16x128xf32>
    %89 = tpu.matmul %86, %88, %cst_82 {dimension_numbers = #tpu.dot_dimension_numbers<[1], [0], [0], [1], [0, 0, 1, 1], [], []>} : vector<16x64xbf16>, vector<64x128xbf16>, vector<16x128xf32> -> vector<16x128xf32>
    %90 = arith.addf %84, %89 : vector<16x128xf32>
    %c0_83 = arith.constant 0 : index
    %c27 = arith.constant 27 : index
    %c0_84 = arith.constant 0 : index
    %91 = vector.load %arg1[%c0_83, %c27, %c0_84] : memref<1x43x64xbf16, #tpu.memory_space<vmem>>, vector<1x16x64xbf16>
    %92 = vector.shape_cast %91 : vector<1x16x64xbf16> to vector<16x64xbf16>
    %c15 = arith.constant 15 : index
    %c0_85 = arith.constant 0 : index
    %c0_86 = arith.constant 0 : index
    %93 = vector.load %arg2[%c15, %c0_85, %c0_86] : memref<16x64x128xbf16, #tpu.memory_space<vmem>>, vector<1x64x128xbf16>
    %94 = vector.shape_cast %93 : vector<1x64x128xbf16> to vector<64x128xbf16>
    %cst_87 = arith.constant dense<0.000000e+00> : vector<16x128xf32>
    %95 = tpu.matmul %92, %94, %cst_87 {dimension_numbers = #tpu.dot_dimension_numbers<[1], [0], [0], [1], [0, 0, 1, 1], [], []>} : vector<16x64xbf16>, vector<64x128xbf16>, vector<16x128xf32> -> vector<16x128xf32>
    %96 = arith.addf %90, %95 : vector<16x128xf32>
    %c0_88 = arith.constant 0 : index
    %c0_89 = arith.constant 0 : index
    %97 = vector.load %arg3[%c0_88, %c0_89] : memref<1x128xf32, #tpu.memory_space<vmem>>, vector<1x128xf32>
    %98 = vector.broadcast %97 : vector<1x128xf32> to vector<16x128xf32>
    %99 = arith.addf %96, %98 : vector<16x128xf32>
    %100 = arith.negf %99 : vector<16x128xf32>
    %101 = math.exp %100 : vector<16x128xf32>
    %cst_90 = arith.constant 1.000000e+00 : f32
    %102 = vector.broadcast %cst_90 : f32 to vector<16x128xf32>
    %103 = arith.addf %102, %101 : vector<16x128xf32>
    %104 = arith.divf %102, %103 : vector<16x128xf32>
    %c0_91 = arith.constant 0 : index
    %c0_92 = arith.constant 0 : index
    %c0_93 = arith.constant 0 : index
    %105 = vector.load %arg4[%c0_91, %c0_92, %c0_93] : memref<1x16x128xf32, #tpu.memory_space<vmem>>, vector<1x16x128xf32>
    %106 = vector.shape_cast %105 : vector<1x16x128xf32> to vector<16x128xf32>
    %107 = vector.shape_cast %104 : vector<16x128xf32> to vector<1x16x128xf32>
    tpu.vector_store %arg4[%c0_91, %c0_92, %c0_93], %107 {strides = array<i32>} : memref<1x16x128xf32, #tpu.memory_space<vmem>>, vector<1x16x128xf32>,
    return
  }
  func.func @transform_0(%arg0: i32) -> (i32, i32, i32) {
    %c0_i32 = arith.constant 0 : i32
    %c0_i32_0 = arith.constant 0 : i32
    %c0_i32_1 = arith.constant 0 : i32
    return %arg0, %c0_i32, %c0_i32_0 : i32, i32, i32
  }
  func.func @transform_1(%arg0: i32) -> (i32, i32, i32) {
    %c0_i32 = arith.constant 0 : i32
    %c0_i32_0 = arith.constant 0 : i32
    %c0_i32_1 = arith.constant 0 : i32
    %c0_i32_2 = arith.constant 0 : i32
    return %c0_i32, %c0_i32_0, %c0_i32_1 : i32, i32, i32
  }
  func.func @transform_2(%arg0: i32) -> (i32, i32) {
    %c0_i32 = arith.constant 0 : i32
    %c0_i32_0 = arith.constant 0 : i32
    %c0_i32_1 = arith.constant 0 : i32
    return %c0_i32, %c0_i32_0 : i32, i32
  }
  func.func @transform_3(%arg0: i32) -> (i32, i32, i32) {
    %c0_i32 = arith.constant 0 : i32
    %c0_i32_0 = arith.constant 0 : i32
    %c0_i32_1 = arith.constant 0 : i32
    return %arg0, %c0_i32, %c0_i32_0 : i32, i32, i32
  }
}

</mosaic_0001>

<llo_original>
// kernel: _lambda_.5
$region0: #{_lambda_.5}
  #allocation0 [shape = 'u32[]', space=smem, size = 0x4, offset = 0x4, fixed_abs, tag = 'smem constant byte address 0x4 - core index']
  #allocation1 [shape = 'u32[144,128]{1,0:T(1,128)}', space=vmem, size = 0x12000, scoped, tag = 'internal scratch']
  %s0 = inlined_call_operand.vmem [shape: bf16[2,384,64], index: 0, kind: input, shape index: {}]
  %s1 = inlined_call_operand.vmem [shape: bf16[1,64,128], index: 1, kind: input, shape index: {}]
  %s2 = inlined_call_operand.vmem [shape: f32[1,128], index: 2, kind: input, shape index: {}]
  %s3 = inlined_call_operand.vmem [shape: bf16[2,384,128], index: 3, kind: output, shape index: {}]
  %s4 = sld [smem:[#allocation0]]
  $region45: #{_lambda_.5} parent=0
    _
  %s6 = ssub.s32 1, %s4
  %s7 = scalar_select 0, %s6, %s4
  loop: start=0, step=1, limit=4
  $region2: #{_lambda_.5} parent=0 // loop_pre_header
    _
  $region3: #{_lambda_.5} parent=0 // loop_header
    %s9 = sphi 0, %s13
    %p10 = scmp.ge.s32.totalorder %s9, 4
    %s19 = sphi 0, %s21
    %s22 = sphi 0, %s19
    %s23 = sphi 0, %s22
    %s39 = sphi 0, %s23
    %s43 = sphi 0, %s43
    %s45 = sphi 0, %s43
    %s46 = sphi 0, %s45
    %s60 = sphi 0, %s46
    %s64 = sphi 0, %s64
    %s66 = sphi 0, %s64
    %s67 = sphi 0, %s66
    %s81 = sphi 0, %s67
    %s87 = sphi 0, %s89
    %s90 = sphi 0, %s87
    %s91 = sphi 0, %s90
    %s107 = sphi 0, %s91
  $region4: #{_lambda_.5} parent=0 // loop_header_branch
    %12 = sbr.rel (%p10) target = $region8
  $region5: #{_lambda_.5} parent=0 // loop_body
    %s14 = ssub.s32 %s9, 1
    %s15 = ssub.s32 %s9, 2
    %s16 = sadd.s32 %s9, 1
    %s17 = ssub.s32 %s9, %s16
    %p18 = scmp.eq.s32.totalorder %s17, 0
    %s20 = sadd.s32 %s19, 1
    %s21 = scalar_select %p18, %s19, %s20
    %p24 = pneg %p18
    %p25 = scmp.eq.s32.totalorder %s9, 1
    %p26 = por %p24, %p25
    %p27 = scmp.ne.s32.totalorder %s19, %s22
    %p28 = scmp.eq.s32.totalorder %s9, 0
    %p29 = por %p27, %p28
    %p30 = scmp.ne.s32.totalorder %s19, %s22
    %p31 = scmp.eq.s32.totalorder %s14, 1
    %p32 = por %p30, %p31
    %p33 = scmp.ne.s32.totalorder %s22, %s23
    %p34 = scmp.eq.s32.totalorder %s14, 0
    %p35 = por %p33, %p34
    %p36 = scmp.ne.s32.totalorder %s22, %s23
    %p37 = scmp.eq.s32.totalorder %s15, 1
    %p38 = por %p36, %p37
    %p40 = scmp.ne.s32.totalorder %s23, %s39
    %p41 = scmp.eq.s32.totalorder %s15, 0
    %p42 = por %p40, %p41
    %s44 = sadd.s32 %s43, 1
    %p47 = scmp.eq.s32.totalorder %s9, 1
    %p48 = scmp.ne.s32.totalorder %s43, %s45
    %p49 = scmp.eq.s32.totalorder %s9, 0
    %p50 = por %p48, %p49
    %p51 = scmp.ne.s32.totalorder %s43, %s45
    %p52 = scmp.eq.s32.totalorder %s14, 1
    %p53 = por %p51, %p52
    %p54 = scmp.ne.s32.totalorder %s45, %s46
    %p55 = scmp.eq.s32.totalorder %s14, 0
    %p56 = por %p54, %p55
    %p57 = scmp.ne.s32.totalorder %s45, %s46
    %p58 = scmp.eq.s32.totalorder %s15, 1
    %p59 = por %p57, %p58
    %p61 = scmp.ne.s32.totalorder %s46, %s60
    %p62 = scmp.eq.s32.totalorder %s15, 0
    %p63 = por %p61, %p62
    %s65 = sadd.s32 %s64, 1
    %p68 = scmp.eq.s32.totalorder %s9, 1
    %p69 = scmp.ne.s32.totalorder %s64, %s66
    %p70 = scmp.eq.s32.totalorder %s9, 0
    %p71 = por %p69, %p70
    %p72 = scmp.ne.s32.totalorder %s64, %s66
    %p73 = scmp.eq.s32.totalorder %s14, 1
    %p74 = por %p72, %p73
    %p75 = scmp.ne.s32.totalorder %s66, %s67
    %p76 = scmp.eq.s32.totalorder %s14, 0
    %p77 = por %p75, %p76
    %p78 = scmp.ne.s32.totalorder %s66, %s67
    %p79 = scmp.eq.s32.totalorder %s15, 1
    %p80 = por %p78, %p79
    %p82 = scmp.ne.s32.totalorder %s67, %s81
    %p83 = scmp.eq.s32.totalorder %s15, 0
    %p84 = por %p82, %p83
    %s85 = ssub.s32 %s9, %s16
    %p86 = scmp.eq.s32.totalorder %s85, 0
    %s88 = sadd.s32 %s87, 1
    %s89 = scalar_select %p86, %s87, %s88
    %p92 = pneg %p86
    %p93 = scmp.eq.s32.totalorder %s9, 1
    %p94 = por %p92, %p93
    %p95 = scmp.ne.s32.totalorder %s87, %s90
    %p96 = scmp.eq.s32.totalorder %s9, 0
    %p97 = por %p95, %p96
    %p98 = scmp.ne.s32.totalorder %s87, %s90
    %p99 = scmp.eq.s32.totalorder %s14, 1
    %p100 = por %p98, %p99
    %p101 = scmp.ne.s32.totalorder %s90, %s91
    %p102 = scmp.eq.s32.totalorder %s14, 0
    %p103 = por %p101, %p102
    %p104 = scmp.ne.s32.totalorder %s90, %s91
    %p105 = scmp.eq.s32.totalorder %s15, 1
    %p106 = por %p104, %p105
    %p108 = scmp.ne.s32.totalorder %s91, %s107
    %p109 = scmp.eq.s32.totalorder %s15, 0
    %p110 = por %p108, %p109
    %p111 = scmp.le.s32.totalorder 1, %s9
    %p112 = scmp.lt.s32.totalorder %s9, 3
    %p113 = pnand %p111, %p112
    %p114 = pneg %p113
    // Predicated region
    $region9: #{_lambda_.5} parent=5 // pred_check
      _
    $region10: #{_lambda_.5} parent=5 // pred_check_branch
      %116 = sbr.rel (%p113) target = $region12
    $region11: #{_lambda_.5} parent=5 // pred_region
      %s117 = ssub.s32 %s9, 1
      // Predicated region
      $region13: #{_lambda_.5} parent=11 // pred_check
        %p118 = pneg %p56
      $region14: #{_lambda_.5} parent=11 // pred_check_branch
        %120 = sbr.rel (%p118) target = $region16
      $region15: #{_lambda_.5} parent=11 // pred_region
        _
      $region16: #{_lambda_.5} parent=11 // pred_fallthru
        _
      // Predicated region
      $region17: #{_lambda_.5} parent=11 // pred_check
        %p121 = pneg %p77
      $region18: #{_lambda_.5} parent=11 // pred_check_branch
        %123 = sbr.rel (%p121) target = $region20
      $region19: #{_lambda_.5} parent=11 // pred_region
        _
      $region20: #{_lambda_.5} parent=11 // pred_fallthru
        _
    $region12: #{_lambda_.5} parent=5 // pred_fallthru
      _
    %p124 = scmp.lt.s32.totalorder %s9, 2
    // Predicated region
    $region21: #{_lambda_.5} parent=5 // pred_check
      %p125 = pneg %p124
    $region22: #{_lambda_.5} parent=5 // pred_check_branch
      %127 = sbr.rel (%p125) target = $region24
    $region23: #{_lambda_.5} parent=5 // pred_region
      // Predicated region
      $region25: #{_lambda_.5} parent=23 // pred_check
        %p128 = pneg %p29
      $region26: #{_lambda_.5} parent=23 // pred_check_branch
        %130 = sbr.rel (%p128) target = $region28
      $region27: #{_lambda_.5} parent=23 // pred_region
        %p131 = scmp.lt.s32.totalorder %s9, 1
        %s132 = scalar_select %p131, %s9, 1
        %s133 = smul.addr %s132, 48
        %s134 = smul.addr %s133, 4
        %s135 = scalar_lea.vmem %s0, %s134
      $region28: #{_lambda_.5} parent=23 // pred_fallthru
        _
    $region24: #{_lambda_.5} parent=5 // pred_fallthru
      _
    %p136 = scmp.le.s32.totalorder 1, %s9
    %p137 = scmp.lt.s32.totalorder %s9, 3
    %p138 = pnand %p136, %p137
    %p139 = pneg %p138
    // Predicated region
    $region29: #{_lambda_.5} parent=5 // pred_check
      _
    $region30: #{_lambda_.5} parent=5 // pred_check_branch
      %141 = sbr.rel (%p138) target = $region32
    $region31: #{_lambda_.5} parent=5 // pred_region
      %s142 = ssub.s32 %s9, 1
      %p143 = scmp.lt.s32.totalorder %s14, 1
      %s144 = scalar_select %p143, %s14, 1
      %s145 = smul.addr %s144, 48
      %s146 = smul.addr %s145, 4
      %s147 = scalar_lea.vmem %s0, %s146
      %p148 = pneg %p35
      %p149 = pneg %p32
      %p150 = pneg %p56
      %p151 = pneg %p53
      %p152 = pneg %p77
      %p153 = pneg %p74
      %p154 = pneg %p103
      %p155 = pneg %p100
      %p156 = scmp.lt.s32.totalorder %s14, 1
      %s157 = scalar_select %p156, %s14, 1
      %s158 = smul.addr %s157, 48
      %s159 = smul.addr %s158, 4
      %s160 = scalar_lea.vmem %s3, %s159
      %p161 = scmp.lt.s32.totalorder %s14, 1
      %s162 = scalar_select %p161, %s14, 1
      %s163 = smul.addr %s162, 48
      %s164 = smul.addr %s163, 4
      %s165 = scalar_lea.vmem %s0, %s164
      %p166 = scmp.lt.s32.totalorder %s14, 1
      %s167 = scalar_select %p166, %s14, 1
      %s168 = smul.addr %s167, 48
      %s169 = smul.addr %s168, 4
      %s170 = scalar_lea.vmem %s3, %s169
      %v172 = vld [vmem:[%s165] sm:$0xf]
      %v173 = vld [vmem:[%s165 + $0x4] sm:$0xf]
      %v174 = vld [vmem:[%s165 + $0x8] sm:$0xf]
      %v175 = vld [vmem:[%s165 + $0xc] sm:$0xf]
      %v176 = vld [vmem:[%s165 + $0x10] sm:$0xf]
      %v177 = vld [vmem:[%s165 + $0x14] sm:$0xf]
      %v178 = vld [vmem:[%s165 + $0x18] sm:$0xf]
      %v179 = vld [vmem:[%s165 + $0x1c] sm:$0xf]
      %v180 = vld [vmem:[%s165 + $0x20] sm:$0xf]
      %v181 = vld [vmem:[%s165 + $0x24] sm:$0xf]
      %v182 = vld [vmem:[%s165 + $0x28] sm:$0xf]
      %v183 = vld [vmem:[%s165 + $0x2c] sm:$0xf]
      %v184 = vld [vmem:[%s165 + $0x30] sm:$0xf]
      %v185 = vld [vmem:[%s165 + $0x34] sm:$0xf]
      %v186 = vld [vmem:[%s165 + $0x38] sm:$0xf]
      %v187 = vld [vmem:[%s165 + $0x3c] sm:$0xf]
      %v188 = vld [vmem:[%s165 + $0x40] sm:$0xf]
      %v189 = vld [vmem:[%s165 + $0x44] sm:$0xf]
      %v190 = vld [vmem:[%s165 + $0x48] sm:$0xf]
      %v191 = vld [vmem:[%s165 + $0x4c] sm:$0xf]
      %v192 = vld [vmem:[%s165 + $0x50] sm:$0xf]
      %v193 = vld [vmem:[%s165 + $0x54] sm:$0xf]
      %v194 = vld [vmem:[%s165 + $0x58] sm:$0xf]
      %v195 = vld [vmem:[%s165 + $0x5c] sm:$0xf]
      %v196 = vld [vmem:[%s1] sm:$0xf]
      %v197 = vld [vmem:[%s1 + $0x4] sm:$0xf]
      %v198 = vld [vmem:[%s1 + $0x8] sm:$0xf]
      %v199 = vld [vmem:[%s1 + $0xc] sm:$0xf]
      %v200 = vld [vmem:[%s1 + $0x10] sm:$0xf]
      %v201 = vld [vmem:[%s1 + $0x14] sm:$0xf]
      %v202 = vld [vmem:[%s1 + $0x18] sm:$0xf]
      %v203 = vld [vmem:[%s1 + $0x1c] sm:$0xf]
      %v204 = vld [vmem:[%s2] sm:$0x1]
      %v206 = vlaneseq
      %v207 = vshrl.u32 %v206, 7
      %v208 = vsub.s32 0, %v207
      %v209 = vrot.slane %v204, %v208
      %v235 = vunpack.c.l.b16 %v172
      %v236 = vunpack.c.l.b16 %v173
      %v237 = vunpack.c.l.b16 %v174
      %v238 = vunpack.c.l.b16 %v175
      %v239 = vunpack.c.l.b16 %v176
      %v240 = vunpack.c.l.b16 %v177
      %v241 = vunpack.c.l.b16 %v178
      %v242 = vunpack.c.l.b16 %v179
      %v243 = vunpack.c.l.b16 %v180
      %v244 = vunpack.c.l.b16 %v181
      %v245 = vunpack.c.l.b16 %v182
      %v246 = vunpack.c.l.b16 %v183
      %v247 = vunpack.c.l.b16 %v184
      %v248 = vunpack.c.l.b16 %v185
      %v249 = vunpack.c.l.b16 %v186
      %v250 = vunpack.c.l.b16 %v187
      %v251 = vunpack.c.l.b16 %v188
      %v252 = vunpack.c.l.b16 %v189
      %v253 = vunpack.c.l.b16 %v190
      %v254 = vunpack.c.l.b16 %v191
      %v255 = vunpack.c.l.b16 %v192
      %v256 = vunpack.c.l.b16 %v193
      %v257 = vunpack.c.l.b16 %v194
      %v258 = vunpack.c.l.b16 %v195
      %v259 = vpack.c.b16 %v236, %v235
      %v260 = vpack.c.b16 %v238, %v237
      %v261 = vpack.c.b16 %v240, %v239
      %v262 = vpack.c.b16 %v242, %v241
      %v263 = vpack.c.b16 %v244, %v243
      %v264 = vpack.c.b16 %v246, %v245
      %v265 = vpack.c.b16 %v248, %v247
      %v266 = vpack.c.b16 %v250, %v249
      %v267 = vpack.c.b16 %v252, %v251
      %v268 = vpack.c.b16 %v254, %v253
      %v269 = vpack.c.b16 %v256, %v255
      %v270 = vpack.c.b16 %v258, %v257
      %v279 = vunpack.c.l.b16 %v196
      %v280 = vunpack.c.l.b16 %v197
      %v281 = vunpack.c.l.b16 %v198
      %v282 = vunpack.c.l.b16 %v199
      %v283 = vunpack.c.l.b16 %v200
      %v284 = vunpack.c.l.b16 %v201
      %v285 = vunpack.c.l.b16 %v202
      %v286 = vunpack.c.l.b16 %v203
      %v287 = vpack.c.b16 %v280, %v279
      %v288 = vpack.c.b16 %v282, %v281
      %v289 = vpack.c.b16 %v284, %v283
      %v290 = vpack.c.b16 %v286, %v285
      %vm295 = vcmask 523264
      %v297 = vsel %vm295, %v259, 0
      %v300 = vsel %vm295, %v260, 0
      %v303 = vsel %vm295, %v261, 0
      %v306 = vsel %vm295, %v262, 0
      %v309 = vsel %vm295, %v263, 0
      %v312 = vsel %vm295, %v264, 0
      %v315 = vsel %vm295, %v265, 0
      %v318 = vsel %vm295, %v266, 0
      %v321 = vsel %vm295, %v267, 0
      %v324 = vsel %vm295, %v268, 0
      %v327 = vsel %vm295, %v269, 0
      %v330 = vsel %vm295, %v270, 0
      %332 = vmatprep.subr.bf16.mxu0 0
      %333 = vmatpush1.bf16.msra.mxu0 %v287
      %334 = vmatprep.subr.bf16.mxu0 0
      %335 = vmatpush1.bf16.msra.mxu0 %v288
      %336 = vmatprep.subr.bf16.mxu0 0
      %337 = vmatpush1.bf16.msra.mxu0 %v289
      %338 = vmatprep.subr.bf16.mxu0 0
      %339 = vmatpush1.bf16.msra.mxu0 %v290
      %340 = vmatprep.subr.bf16.mxu0 0
      %341 = vmatpush1.bf16.msra.mxu0 0
      %342 = vmatprep.subr.bf16.mxu0 0
      %343 = vmatpush1.bf16.msra.mxu0 0
      %344 = vmatprep.subr.bf16.mxu0 0
      %345 = vmatpush1.bf16.msra.mxu0 0
      %346 = vmatprep.subr.bf16.mxu0 0
      %347 = vmatpush1.bf16.msra.mxu0 0
      %348 = vmatprep.subr.bf16.mxu0 0
      %349 = vmatpush1.bf16.msra.mxu0 0
      %350 = vmatprep.subr.bf16.mxu0 0
      %351 = vmatpush1.bf16.msra.mxu0 0
      %352 = vmatprep.subr.bf16.mxu0 0
      %353 = vmatpush1.bf16.msra.mxu0 0
      %354 = vmatprep.subr.bf16.mxu0 0
      %355 = vmatpush1.bf16.msra.mxu0 0
      %356 = vmatprep.subr.bf16.mxu0 0
      %357 = vmatpush1.bf16.msra.mxu0 0
      %358 = vmatprep.subr.bf16.mxu0 0
      %359 = vmatpush1.bf16.msra.mxu0 0
      %360 = vmatprep.subr.bf16.mxu0 0
      %361 = vmatpush1.bf16.msra.mxu0 0
      %362 = vmatprep.subr.bf16.mxu0 0
      %363 = vmatpush1.bf16.msra.mxu0 0
      %364 = vmatprep.mubr.bf16.mxu0 0
      %365 = vmatmul.mubr.bf16.gmra.mrb[0].mxu0 %v297
      %v366 = vpop.f32.mrb[0].mxu0
      %v367 = vadd.f32 %v209, %v366
      %v368 = vpop.f32.mrb[0].mxu0
      %v369 = vpop.f32.mrb[0].mxu0
      %v370 = vadd.f32 %v209, %v369
      %v371 = vpop.f32.mrb[0].mxu0
      %372 = vmatprep.mubr.bf16.mxu0 0
      %373 = vmatmul.mubr.bf16.gmra.mrb[0].mxu0 %v300
      %v374 = vpop.f32.mrb[0].mxu0
      %v375 = vadd.f32 %v209, %v374
      %v376 = vpop.f32.mrb[0].mxu0
      %v377 = vpop.f32.mrb[0].mxu0
      %v378 = vadd.f32 %v209, %v377
      %v379 = vpop.f32.mrb[0].mxu0
      %380 = vmatprep.mubr.bf16.mxu0 0
      %381 = vmatmul.mubr.bf16.gmra.mrb[0].mxu0 %v303
      %v382 = vpop.f32.mrb[0].mxu0
      %v383 = vadd.f32 %v209, %v382
      %v384 = vpop.f32.mrb[0].mxu0
      %v385 = vpop.f32.mrb[0].mxu0
      %v386 = vadd.f32 %v209, %v385
      %v387 = vpop.f32.mrb[0].mxu0
      %388 = vmatprep.mubr.bf16.mxu0 0
      %389 = vmatmul.mubr.bf16.gmra.mrb[0].mxu0 %v306
      %v390 = vpop.f32.mrb[0].mxu0
      %v391 = vadd.f32 %v209, %v390
      %v392 = vpop.f32.mrb[0].mxu0
      %v393 = vpop.f32.mrb[0].mxu0
      %v394 = vadd.f32 %v209, %v393
      %v395 = vpop.f32.mrb[0].mxu0
      %396 = vmatprep.mubr.bf16.mxu0 0
      %397 = vmatmul.mubr.bf16.gmra.mrb[0].mxu0 %v309
      %v398 = vpop.f32.mrb[0].mxu0
      %v399 = vadd.f32 %v209, %v398
      %v400 = vpop.f32.mrb[0].mxu0
      %v401 = vpop.f32.mrb[0].mxu0
      %v402 = vadd.f32 %v209, %v401
      %v403 = vpop.f32.mrb[0].mxu0
      %404 = vmatprep.mubr.bf16.mxu0 0
      %405 = vmatmul.mubr.bf16.gmra.mrb[0].mxu0 %v312
      %v406 = vpop.f32.mrb[0].mxu0
      %v407 = vadd.f32 %v209, %v406
      %v408 = vpop.f32.mrb[0].mxu0
      %v409 = vpop.f32.mrb[0].mxu0
      %v410 = vadd.f32 %v209, %v409
      %v411 = vpop.f32.mrb[0].mxu0
      %412 = vmatprep.mubr.bf16.mxu0 0
      %413 = vmatmul.mubr.bf16.gmra.mrb[0].mxu0 %v315
      %v414 = vpop.f32.mrb[0].mxu0
      %v415 = vadd.f32 %v209, %v414
      %v416 = vpop.f32.mrb[0].mxu0
      %v417 = vpop.f32.mrb[0].mxu0
      %v418 = vadd.f32 %v209, %v417
      %v419 = vpop.f32.mrb[0].mxu0
      %420 = vmatprep.mubr.bf16.mxu0 0
      %421 = vmatmul.mubr.bf16.gmra.mrb[0].mxu0 %v318
      %v422 = vpop.f32.mrb[0].mxu0
      %v423 = vadd.f32 %v209, %v422
      %v424 = vpop.f32.mrb[0].mxu0
      %v425 = vpop.f32.mrb[0].mxu0
      %v426 = vadd.f32 %v209, %v425
      %v427 = vpop.f32.mrb[0].mxu0
      %428 = vmatprep.mubr.bf16.mxu0 0
      %429 = vmatmul.mubr.bf16.gmra.mrb[0].mxu0 %v321
      %v430 = vpop.f32.mrb[0].mxu0
      %v431 = vadd.f32 %v209, %v430
      %v432 = vpop.f32.mrb[0].mxu0
      %v433 = vpop.f32.mrb[0].mxu0
      %v434 = vadd.f32 %v209, %v433
      %v435 = vpop.f32.mrb[0].mxu0
      %436 = vmatprep.mubr.bf16.mxu0 0
      %437 = vmatmul.mubr.bf16.gmra.mrb[0].mxu0 %v324
      %v438 = vpop.f32.mrb[0].mxu0
      %v439 = vadd.f32 %v209, %v438
      %v440 = vpop.f32.mrb[0].mxu0
      %v441 = vpop.f32.mrb[0].mxu0
      %v442 = vadd.f32 %v209, %v441
      %v443 = vpop.f32.mrb[0].mxu0
      %444 = vmatprep.mubr.bf16.mxu0 0
      %445 = vmatmul.mubr.bf16.gmra.mrb[0].mxu0 %v327
      %v446 = vpop.f32.mrb[0].mxu0
      %v447 = vadd.f32 %v209, %v446
      %v448 = vpop.f32.mrb[0].mxu0
      %v449 = vpop.f32.mrb[0].mxu0
      %v450 = vadd.f32 %v209, %v449
      %v451 = vpop.f32.mrb[0].mxu0
      %452 = vmatprep.mubr.bf16.mxu0 0
      %453 = vmatmul.mubr.bf16.gmra.mrb[0].mxu0 %v330
      %v454 = vpop.f32.mrb[0].mxu0
      %v455 = vadd.f32 %v209, %v454
      %v456 = vpop.f32.mrb[0].mxu0
      %v457 = vpop.f32.mrb[0].mxu0
      %v458 = vadd.f32 %v209, %v457
      %v459 = vpop.f32.mrb[0].mxu0
      %460 = vdwg.mxu0
      %vm461 = vcmp.ge.f32.partialorder %v367, 0.0
      %vm462 = vcmp.ge.f32.partialorder %v370, 0.0
      %vm463 = vcmp.ge.f32.partialorder %v375, 0.0
      %vm464 = vcmp.ge.f32.partialorder %v378, 0.0
      %vm465 = vcmp.ge.f32.partialorder %v383, 0.0
      %vm466 = vcmp.ge.f32.partialorder %v386, 0.0
      %vm467 = vcmp.ge.f32.partialorder %v391, 0.0
      %vm468 = vcmp.ge.f32.partialorder %v394, 0.0
      %vm469 = vcmp.ge.f32.partialorder %v399, 0.0
      %vm470 = vcmp.ge.f32.partialorder %v402, 0.0
      %vm471 = vcmp.ge.f32.partialorder %v407, 0.0
      %vm472 = vcmp.ge.f32.partialorder %v410, 0.0
      %vm473 = vcmp.ge.f32.partialorder %v415, 0.0
      %vm474 = vcmp.ge.f32.partialorder %v418, 0.0
      %vm475 = vcmp.ge.f32.partialorder %v423, 0.0
      %vm476 = vcmp.ge.f32.partialorder %v426, 0.0
      %vm477 = vcmp.ge.f32.partialorder %v431, 0.0
      %vm478 = vcmp.ge.f32.partialorder %v434, 0.0
      %vm479 = vcmp.ge.f32.partialorder %v439, 0.0
      %vm480 = vcmp.ge.f32.partialorder %v442, 0.0
      %vm481 = vcmp.ge.f32.partialorder %v447, 0.0
      %vm482 = vcmp.ge.f32.partialorder %v450, 0.0
      %vm483 = vcmp.ge.f32.partialorder %v455, 0.0
      %vm484 = vcmp.ge.f32.partialorder %v458, 0.0
      %v485 = vmul.f32 %v367, 0.2
      %v486 = vmul.f32 %v370, 0.2
      %v487 = vmul.f32 %v375, 0.2
      %v488 = vmul.f32 %v378, 0.2
      %v489 = vmul.f32 %v383, 0.2
      %v490 = vmul.f32 %v386, 0.2
      %v491 = vmul.f32 %v391, 0.2
      %v492 = vmul.f32 %v394, 0.2
      %v493 = vmul.f32 %v399, 0.2
      %v494 = vmul.f32 %v402, 0.2
      %v495 = vmul.f32 %v407, 0.2
      %v496 = vmul.f32 %v410, 0.2
      %v497 = vmul.f32 %v415, 0.2
      %v498 = vmul.f32 %v418, 0.2
      %v499 = vmul.f32 %v423, 0.2
      %v500 = vmul.f32 %v426, 0.2
      %v501 = vmul.f32 %v431, 0.2
      %v502 = vmul.f32 %v434, 0.2
      %v503 = vmul.f32 %v439, 0.2
      %v504 = vmul.f32 %v442, 0.2
      %v505 = vmul.f32 %v447, 0.2
      %v506 = vmul.f32 %v450, 0.2
      %v507 = vmul.f32 %v455, 0.2
      %v508 = vmul.f32 %v458, 0.2
      %v509 = vsel %vm461, %v367, %v485
      %v510 = vsel %vm462, %v370, %v486
      %v511 = vsel %vm463, %v375, %v487
      %v512 = vsel %vm464, %v378, %v488
      %v513 = vsel %vm465, %v383, %v489
      %v514 = vsel %vm466, %v386, %v490
      %v515 = vsel %vm467, %v391, %v491
      %v516 = vsel %vm468, %v394, %v492
      %v517 = vsel %vm469, %v399, %v493
      %v518 = vsel %vm470, %v402, %v494
      %v519 = vsel %vm471, %v407, %v495
      %v520 = vsel %vm472, %v410, %v496
      %v521 = vsel %vm473, %v415, %v497
      %v522 = vsel %vm474, %v418, %v498
      %v523 = vsel %vm475, %v423, %v499
      %v524 = vsel %vm476, %v426, %v500
      %v525 = vsel %vm477, %v431, %v501
      %v526 = vsel %vm478, %v434, %v502
      %v527 = vsel %vm479, %v439, %v503
      %v528 = vsel %vm480, %v442, %v504
      %v529 = vsel %vm481, %v447, %v505
      %v530 = vsel %vm482, %v450, %v506
      %v531 = vsel %vm483, %v455, %v507
      %v532 = vsel %vm484, %v458, %v508
      %v533 = vpack.c.bf16 %v510, %v509
      %v534 = vpack.c.bf16 %v512, %v511
      %v535 = vpack.c.bf16 %v514, %v513
      %v536 = vpack.c.bf16 %v516, %v515
      %v537 = vpack.c.bf16 %v518, %v517
      %v538 = vpack.c.bf16 %v520, %v519
      %v539 = vpack.c.bf16 %v522, %v521
      %v540 = vpack.c.bf16 %v524, %v523
      %v541 = vpack.c.bf16 %v526, %v525
      %v542 = vpack.c.bf16 %v528, %v527
      %v543 = vpack.c.bf16 %v530, %v529
      %v544 = vpack.c.bf16 %v532, %v531
      %v557 = vunpack.c.l.b16 %v533
      %v558 = vunpack.c.h.b16 %v533
      %v559 = vunpack.c.l.b16 %v534
      %v560 = vunpack.c.h.b16 %v534
      %v561 = vunpack.c.l.b16 %v535
      %v562 = vunpack.c.h.b16 %v535
      %v563 = vunpack.c.l.b16 %v536
      %v564 = vunpack.c.h.b16 %v536
      %v565 = vunpack.c.l.b16 %v537
      %v566 = vunpack.c.h.b16 %v537
      %v567 = vunpack.c.l.b16 %v538
      %v568 = vunpack.c.h.b16 %v538
      %v569 = vunpack.c.l.b16 %v539
      %v570 = vunpack.c.h.b16 %v539
      %v571 = vunpack.c.l.b16 %v540
      %v572 = vunpack.c.h.b16 %v540
      %v573 = vunpack.c.l.b16 %v541
      %v574 = vunpack.c.h.b16 %v541
      %v575 = vunpack.c.l.b16 %v542
      %v576 = vunpack.c.h.b16 %v542
      %v577 = vunpack.c.l.b16 %v543
      %v578 = vunpack.c.h.b16 %v543
      %v579 = vunpack.c.l.b16 %v544
      %v580 = vunpack.c.h.b16 %v544
      %v581 = vpack.c.b16 %v557, %v557
      %v582 = vpack.c.b16 %v558, %v558
      %v583 = vpack.c.b16 %v559, %v559
      %v584 = vpack.c.b16 %v560, %v560
      %v585 = vpack.c.b16 %v561, %v561
      %v586 = vpack.c.b16 %v562, %v562
      %v587 = vpack.c.b16 %v563, %v563
      %v588 = vpack.c.b16 %v564, %v564
      %v589 = vpack.c.b16 %v565, %v565
      %v590 = vpack.c.b16 %v566, %v566
      %v591 = vpack.c.b16 %v567, %v567
      %v592 = vpack.c.b16 %v568, %v568
      %v593 = vpack.c.b16 %v569, %v569
      %v594 = vpack.c.b16 %v570, %v570
      %v595 = vpack.c.b16 %v571, %v571
      %v596 = vpack.c.b16 %v572, %v572
      %v597 = vpack.c.b16 %v573, %v573
      %v598 = vpack.c.b16 %v574, %v574
      %v599 = vpack.c.b16 %v575, %v575
      %v600 = vpack.c.b16 %v576, %v576
      %v601 = vpack.c.b16 %v577, %v577
      %v602 = vpack.c.b16 %v578, %v578
      %v603 = vpack.c.b16 %v579, %v579
      %v604 = vpack.c.b16 %v580, %v580
      %629 = vst [vmem:[%s170] sm:$0xf] %v581
      %630 = vst [vmem:[%s170 + $0x4] sm:$0xf] %v582
      %631 = vst [vmem:[%s170 + $0x8] sm:$0xf] %v583
      %632 = vst [vmem:[%s170 + $0xc] sm:$0xf] %v584
      %633 = vst [vmem:[%s170 + $0x10] sm:$0xf] %v585
      %634 = vst [vmem:[%s170 + $0x14] sm:$0xf] %v586
      %635 = vst [vmem:[%s170 + $0x18] sm:$0xf] %v587
      %636 = vst [vmem:[%s170 + $0x1c] sm:$0xf] %v588
      %637 = vst [vmem:[%s170 + $0x20] sm:$0xf] %v589
      %638 = vst [vmem:[%s170 + $0x24] sm:$0xf] %v590
      %639 = vst [vmem:[%s170 + $0x28] sm:$0xf] %v591
      %640 = vst [vmem:[%s170 + $0x2c] sm:$0xf] %v592
      %641 = vst [vmem:[%s170 + $0x30] sm:$0xf] %v593
      %642 = vst [vmem:[%s170 + $0x34] sm:$0xf] %v594
      %643 = vst [vmem:[%s170 + $0x38] sm:$0xf] %v595
      %644 = vst [vmem:[%s170 + $0x3c] sm:$0xf] %v596
      %645 = vst [vmem:[%s170 + $0x40] sm:$0xf] %v597
      %646 = vst [vmem:[%s170 + $0x44] sm:$0xf] %v598
      %647 = vst [vmem:[%s170 + $0x48] sm:$0xf] %v599
      %648 = vst [vmem:[%s170 + $0x4c] sm:$0xf] %v600
      %649 = vst [vmem:[%s170 + $0x50] sm:$0xf] %v601
      %650 = vst [vmem:[%s170 + $0x54] sm:$0xf] %v602
      %651 = vst [vmem:[%s170 + $0x58] sm:$0xf] %v603
      %652 = vst [vmem:[%s170 + $0x5c] sm:$0xf] %v604
      %v653 = vld [vmem:[%s165 + $0x60] sm:$0xf]
      %v654 = vld [vmem:[%s165 + $0x64] sm:$0xf]
      %v655 = vld [vmem:[%s165 + $0x68] sm:$0xf]
      %v656 = vld [vmem:[%s165 + $0x6c] sm:$0xf]
      %v657 = vld [vmem:[%s165 + $0x70] sm:$0xf]
      %v658 = vld [vmem:[%s165 + $0x74] sm:$0xf]
      %v659 = vld [vmem:[%s165 + $0x78] sm:$0xf]
      %v660 = vld [vmem:[%s165 + $0x7c] sm:$0xf]
      %v661 = vld [vmem:[%s165 + $0x80] sm:$0xf]
      %v662 = vld [vmem:[%s165 + $0x84] sm:$0xf]
      %v663 = vld [vmem:[%s165 + $0x88] sm:$0xf]
      %v664 = vld [vmem:[%s165 + $0x8c] sm:$0xf]
      %v665 = vld [vmem:[%s165 + $0x90] sm:$0xf]
      %v666 = vld [vmem:[%s165 + $0x94] sm:$0xf]
      %v667 = vld [vmem:[%s165 + $0x98] sm:$0xf]
      %v668 = vld [vmem:[%s165 + $0x9c] sm:$0xf]
      %v669 = vld [vmem:[%s165 + $0xa0] sm:$0xf]
      %v670 = vld [vmem:[%s165 + $0xa4] sm:$0xf]
      %v671 = vld [vmem:[%s165 + $0xa8] sm:$0xf]
      %v672 = vld [vmem:[%s165 + $0xac] sm:$0xf]
      %v673 = vld [vmem:[%s165 + $0xb0] sm:$0xf]
      %v674 = vld [vmem:[%s165 + $0xb4] sm:$0xf]
      %v675 = vld [vmem:[%s165 + $0xb8] sm:$0xf]
      %v676 = vld [vmem:[%s165 + $0xbc] sm:$0xf]
      %v677 = vld [vmem:[%s1] sm:$0xf]
      %v678 = vld [vmem:[%s1 + $0x4] sm:$0xf]
      %v679 = vld [vmem:[%s1 + $0x8] sm:$0xf]
      %v680 = vld [vmem:[%s1 + $0xc] sm:$0xf]
      %v681 = vld [vmem:[%s1 + $0x10] sm:$0xf]
      %v682 = vld [vmem:[%s1 + $0x14] sm:$0xf]
      %v683 = vld [vmem:[%s1 + $0x18] sm:$0xf]
      %v684 = vld [vmem:[%s1 + $0x1c] sm:$0xf]
      %v685 = vld [vmem:[%s2] sm:$0x1]
      %v687 = vlaneseq
      %v688 = vshrl.u32 %v687, 7
      %v689 = vsub.s32 0, %v688
      %v690 = vrot.slane %v685, %v689
      %v716 = vunpack.c.l.b16 %v653
      %v717 = vunpack.c.l.b16 %v654
      %v718 = vunpack.c.l.b16 %v655
      %v719 = vunpack.c.l.b16 %v656
      %v720 = vunpack.c.l.b16 %v657
      %v721 = vunpack.c.l.b16 %v658
      %v722 = vunpack.c.l.b16 %v659
      %v723 = vunpack.c.l.b16 %v660
      %v724 = vunpack.c.l.b16 %v661
      %v725 = vunpack.c.l.b16 %v662
      %v726 = vunpack.c.l.b16 %v663
      %v727 = vunpack.c.l.b16 %v664
      %v728 = vunpack.c.l.b16 %v665
      %v729 = vunpack.c.l.b16 %v666
      %v730 = vunpack.c.l.b16 %v667
      %v731 = vunpack.c.l.b16 %v668
      %v732 = vunpack.c.l.b16 %v669
      %v733 = vunpack.c.l.b16 %v670
      %v734 = vunpack.c.l.b16 %v671
      %v735 = vunpack.c.l.b16 %v672
      %v736 = vunpack.c.l.b16 %v673
      %v737 = vunpack.c.l.b16 %v674
      %v738 = vunpack.c.l.b16 %v675
      %v739 = vunpack.c.l.b16 %v676
      %v740 = vpack.c.b16 %v717, %v716
      %v741 = vpack.c.b16 %v719, %v718
      %v742 = vpack.c.b16 %v721, %v720
      %v743 = vpack.c.b16 %v723, %v722
      %v744 = vpack.c.b16 %v725, %v724
      %v745 = vpack.c.b16 %v727, %v726
      %v746 = vpack.c.b16 %v729, %v728
      %v747 = vpack.c.b16 %v731, %v730
      %v748 = vpack.c.b16 %v733, %v732
      %v749 = vpack.c.b16 %v735, %v734
      %v750 = vpack.c.b16 %v737, %v736
      %v751 = vpack.c.b16 %v739, %v738
      %v760 = vunpack.c.l.b16 %v677
      %v761 = vunpack.c.l.b16 %v678
      %v762 = vunpack.c.l.b16 %v679
      %v763 = vunpack.c.l.b16 %v680
      %v764 = vunpack.c.l.b16 %v681
      %v765 = vunpack.c.l.b16 %v682
      %v766 = vunpack.c.l.b16 %v683
      %v767 = vunpack.c.l.b16 %v684
      %v768 = vpack.c.b16 %v761, %v760
      %v769 = vpack.c.b16 %v763, %v762
      %v770 = vpack.c.b16 %v765, %v764
      %v771 = vpack.c.b16 %v767, %v766
      %v777 = vsel %vm295, %v740, 0
      %v780 = vsel %vm295, %v741, 0
      %v783 = vsel %vm295, %v742, 0
      %v786 = vsel %vm295, %v743, 0
      %v789 = vsel %vm295, %v744, 0
      %v792 = vsel %vm295, %v745, 0
      %v795 = vsel %vm295, %v746, 0
      %v798 = vsel %vm295, %v747, 0
      %v801 = vsel %vm295, %v748, 0
      %v804 = vsel %vm295, %v749, 0
      %v807 = vsel %vm295, %v750, 0
      %v810 = vsel %vm295, %v751, 0
      %812 = vmatprep.subr.bf16.mxu0 0
      %813 = vmatpush1.bf16.msra.mxu0 %v768
      %814 = vmatprep.subr.bf16.mxu0 0
      %815 = vmatpush1.bf16.msra.mxu0 %v769
      %816 = vmatprep.subr.bf16.mxu0 0
      %817 = vmatpush1.bf16.msra.mxu0 %v770
      %818 = vmatprep.subr.bf16.mxu0 0
      %819 = vmatpush1.bf16.msra.mxu0 %v771
      %820 = vmatprep.subr.bf16.mxu0 0
      %821 = vmatpush1.bf16.msra.mxu0 0
      %822 = vmatprep.subr.bf16.mxu0 0
      %823 = vmatpush1.bf16.msra.mxu0 0
      %824 = vmatprep.subr.bf16.mxu0 0
      %825 = vmatpush1.bf16.msra.mxu0 0
      %826 = vmatprep.subr.bf16.mxu0 0
      %827 = vmatpush1.bf16.msra.mxu0 0
      %828 = vmatprep.subr.bf16.mxu0 0
      %829 = vmatpush1.bf16.msra.mxu0 0
      %830 = vmatprep.subr.bf16.mxu0 0
      %831 = vmatpush1.bf16.msra.mxu0 0
      %832 = vmatprep.subr.bf16.mxu0 0
      %833 = vmatpush1.bf16.msra.mxu0 0
      %834 = vmatprep.subr.bf16.mxu0 0
      %835 = vmatpush1.bf16.msra.mxu0 0
      %836 = vmatprep.subr.bf16.mxu0 0
      %837 = vmatpush1.bf16.msra.mxu0 0
      %838 = vmatprep.subr.bf16.mxu0 0
      %839 = vmatpush1.bf16.msra.mxu0 0
      %840 = vmatprep.subr.bf16.mxu0 0
      %841 = vmatpush1.bf16.msra.mxu0 0
      %842 = vmatprep.subr.bf16.mxu0 0
      %843 = vmatpush1.bf16.msra.mxu0 0
      %844 = vmatprep.mubr.bf16.mxu0 0
      %845 = vmatmul.mubr.bf16.gmra.mrb[0].mxu0 %v777
      %v846 = vpop.f32.mrb[0].mxu0
      %v847 = vadd.f32 %v690, %v846
      %v848 = vpop.f32.mrb[0].mxu0
      %v849 = vpop.f32.mrb[0].mxu0
      %v850 = vadd.f32 %v690, %v849
      %v851 = vpop.f32.mrb[0].mxu0
      %852 = vmatprep.mubr.bf16.mxu0 0
      %853 = vmatmul.mubr.bf16.gmra.mrb[0].mxu0 %v780
      %v854 = vpop.f32.mrb[0].mxu0
      %v855 = vadd.f32 %v690, %v854
      %v856 = vpop.f32.mrb[0].mxu0
      %v857 = vpop.f32.mrb[0].mxu0
      %v858 = vadd.f32 %v690, %v857
      %v859 = vpop.f32.mrb[0].mxu0
      %860 = vmatprep.mubr.bf16.mxu0 0
      %861 = vmatmul.mubr.bf16.gmra.mrb[0].mxu0 %v783
      %v862 = vpop.f32.mrb[0].mxu0
      %v863 = vadd.f32 %v690, %v862
      %v864 = vpop.f32.mrb[0].mxu0
      %v865 = vpop.f32.mrb[0].mxu0
      %v866 = vadd.f32 %v690, %v865
      %v867 = vpop.f32.mrb[0].mxu0
      %868 = vmatprep.mubr.bf16.mxu0 0
      %869 = vmatmul.mubr.bf16.gmra.mrb[0].mxu0 %v786
      %v870 = vpop.f32.mrb[0].mxu0
      %v871 = vadd.f32 %v690, %v870
      %v872 = vpop.f32.mrb[0].mxu0
      %v873 = vpop.f32.mrb[0].mxu0
      %v874 = vadd.f32 %v690, %v873
      %v875 = vpop.f32.mrb[0].mxu0
      %876 = vmatprep.mubr.bf16.mxu0 0
      %877 = vmatmul.mubr.bf16.gmra.mrb[0].mxu0 %v789
      %v878 = vpop.f32.mrb[0].mxu0
      %v879 = vadd.f32 %v690, %v878
      %v880 = vpop.f32.mrb[0].mxu0
      %v881 = vpop.f32.mrb[0].mxu0
      %v882 = vadd.f32 %v690, %v881
      %v883 = vpop.f32.mrb[0].mxu0
      %884 = vmatprep.mubr.bf16.mxu0 0
      %885 = vmatmul.mubr.bf16.gmra.mrb[0].mxu0 %v792
      %v886 = vpop.f32.mrb[0].mxu0
      %v887 = vadd.f32 %v690, %v886
      %v888 = vpop.f32.mrb[0].mxu0
      %v889 = vpop.f32.mrb[0].mxu0
      %v890 = vadd.f32 %v690, %v889
      %v891 = vpop.f32.mrb[0].mxu0
      %892 = vmatprep.mubr.bf16.mxu0 0
      %893 = vmatmul.mubr.bf16.gmra.mrb[0].mxu0 %v795
      %v894 = vpop.f32.mrb[0].mxu0
      %v895 = vadd.f32 %v690, %v894
      %v896 = vpop.f32.mrb[0].mxu0
      %v897 = vpop.f32.mrb[0].mxu0
      %v898 = vadd.f32 %v690, %v897
      %v899 = vpop.f32.mrb[0].mxu0
      %900 = vmatprep.mubr.bf16.mxu0 0
      %901 = vmatmul.mubr.bf16.gmra.mrb[0].mxu0 %v798
      %v902 = vpop.f32.mrb[0].mxu0
      %v903 = vadd.f32 %v690, %v902
      %v904 = vpop.f32.mrb[0].mxu0
      %v905 = vpop.f32.mrb[0].mxu0
      %v906 = vadd.f32 %v690, %v905
      %v907 = vpop.f32.mrb[0].mxu0
      %908 = vmatprep.mubr.bf16.mxu0 0
      %909 = vmatmul.mubr.bf16.gmra.mrb[0].mxu0 %v801
      %v910 = vpop.f32.mrb[0].mxu0
      %v911 = vadd.f32 %v690, %v910
      %v912 = vpop.f32.mrb[0].mxu0
      %v913 = vpop.f32.mrb[0].mxu0
      %v914 = vadd.f32 %v690, %v913
      %v915 = vpop.f32.mrb[0].mxu0
      %916 = vmatprep.mubr.bf16.mxu0 0
      %917 = vmatmul.mubr.bf16.gmra.mrb[0].mxu0 %v804
      %v918 = vpop.f32.mrb[0].mxu0
      %v919 = vadd.f32 %v690, %v918
      %v920 = vpop.f32.mrb[0].mxu0
      %v921 = vpop.f32.mrb[0].mxu0
      %v922 = vadd.f32 %v690, %v921
      %v923 = vpop.f32.mrb[0].mxu0
      %924 = vmatprep.mubr.bf16.mxu0 0
      %925 = vmatmul.mubr.bf16.gmra.mrb[0].mxu0 %v807
      %v926 = vpop.f32.mrb[0].mxu0
      %v927 = vadd.f32 %v690, %v926
      %v928 = vpop.f32.mrb[0].mxu0
      %v929 = vpop.f32.mrb[0].mxu0
      %v930 = vadd.f32 %v690, %v929
      %v931 = vpop.f32.mrb[0].mxu0
      %932 = vmatprep.mubr.bf16.mxu0 0
      %933 = vmatmul.mubr.bf16.gmra.mrb[0].mxu0 %v810
      %v934 = vpop.f32.mrb[0].mxu0
      %v935 = vadd.f32 %v690, %v934
      %v936 = vpop.f32.mrb[0].mxu0
      %v937 = vpop.f32.mrb[0].mxu0
      %v938 = vadd.f32 %v690, %v937
      %v939 = vpop.f32.mrb[0].mxu0
      %940 = vdwg.mxu0
      %vm941 = vcmp.ge.f32.partialorder %v847, 0.0
      %vm942 = vcmp.ge.f32.partialorder %v850, 0.0
      %vm943 = vcmp.ge.f32.partialorder %v855, 0.0
      %vm944 = vcmp.ge.f32.partialorder %v858, 0.0
      %vm945 = vcmp.ge.f32.partialorder %v863, 0.0
      %vm946 = vcmp.ge.f32.partialorder %v866, 0.0
      %vm947 = vcmp.ge.f32.partialorder %v871, 0.0
      %vm948 = vcmp.ge.f32.partialorder %v874, 0.0
      %vm949 = vcmp.ge.f32.partialorder %v879, 0.0
      %vm950 = vcmp.ge.f32.partialorder %v882, 0.0
      %vm951 = vcmp.ge.f32.partialorder %v887, 0.0
      %vm952 = vcmp.ge.f32.partialorder %v890, 0.0
      %vm953 = vcmp.ge.f32.partialorder %v895, 0.0
      %vm954 = vcmp.ge.f32.partialorder %v898, 0.0
      %vm955 = vcmp.ge.f32.partialorder %v903, 0.0
      %vm956 = vcmp.ge.f32.partialorder %v906, 0.0
      %vm957 = vcmp.ge.f32.partialorder %v911, 0.0
      %vm958 = vcmp.ge.f32.partialorder %v914, 0.0
      %vm959 = vcmp.ge.f32.partialorder %v919, 0.0
      %vm960 = vcmp.ge.f32.partialorder %v922, 0.0
      %vm961 = vcmp.ge.f32.partialorder %v927, 0.0
      %vm962 = vcmp.ge.f32.partialorder %v930, 0.0
      %vm963 = vcmp.ge.f32.partialorder %v935, 0.0
      %vm964 = vcmp.ge.f32.partialorder %v938, 0.0
      %v965 = vmul.f32 %v847, 0.2
      %v966 = vmul.f32 %v850, 0.2
      %v967 = vmul.f32 %v855, 0.2
      %v968 = vmul.f32 %v858, 0.2
      %v969 = vmul.f32 %v863, 0.2
      %v970 = vmul.f32 %v866, 0.2
      %v971 = vmul.f32 %v871, 0.2
      %v972 = vmul.f32 %v874, 0.2
      %v973 = vmul.f32 %v879, 0.2
      %v974 = vmul.f32 %v882, 0.2
      %v975 = vmul.f32 %v887, 0.2
      %v976 = vmul.f32 %v890, 0.2
      %v977 = vmul.f32 %v895, 0.2
      %v978 = vmul.f32 %v898, 0.2
      %v979 = vmul.f32 %v903, 0.2
      %v980 = vmul.f32 %v906, 0.2
      %v981 = vmul.f32 %v911, 0.2
      %v982 = vmul.f32 %v914, 0.2
      %v983 = vmul.f32 %v919, 0.2
      %v984 = vmul.f32 %v922, 0.2
      %v985 = vmul.f32 %v927, 0.2
      %v986 = vmul.f32 %v930, 0.2
      %v987 = vmul.f32 %v935, 0.2
      %v988 = vmul.f32 %v938, 0.2
      %v989 = vsel %vm941, %v847, %v965
      %v990 = vsel %vm942, %v850, %v966
      %v991 = vsel %vm943, %v855, %v967
      %v992 = vsel %vm944, %v858, %v968
      %v993 = vsel %vm945, %v863, %v969
      %v994 = vsel %vm946, %v866, %v970
      %v995 = vsel %vm947, %v871, %v971
      %v996 = vsel %vm948, %v874, %v972
      %v997 = vsel %vm949, %v879, %v973
      %v998 = vsel %vm950, %v882, %v974
      %v999 = vsel %vm951, %v887, %v975
      %v1000 = vsel %vm952, %v890, %v976
      %v1001 = vsel %vm953, %v895, %v977
      %v1002 = vsel %vm954, %v898, %v978
      %v1003 = vsel %vm955, %v903, %v979
      %v1004 = vsel %vm956, %v906, %v980
      %v1005 = vsel %vm957, %v911, %v981
      %v1006 = vsel %vm958, %v914, %v982
      %v1007 = vsel %vm959, %v919, %v983
      %v1008 = vsel %vm960, %v922, %v984
      %v1009 = vsel %vm961, %v927, %v985
      %v1010 = vsel %vm962, %v930, %v986
      %v1011 = vsel %vm963, %v935, %v987
      %v1012 = vsel %vm964, %v938, %v988
      %v1013 = vpack.c.bf16 %v990, %v989
      %v1014 = vpack.c.bf16 %v992, %v991
      %v1015 = vpack.c.bf16 %v994, %v993
      %v1016 = vpack.c.bf16 %v996, %v995
      %v1017 = vpack.c.bf16 %v998, %v997
      %v1018 = vpack.c.bf16 %v1000, %v999
      %v1019 = vpack.c.bf16 %v1002, %v1001
      %v1020 = vpack.c.bf16 %v1004, %v1003
      %v1021 = vpack.c.bf16 %v1006, %v1005
      %v1022 = vpack.c.bf16 %v1008, %v1007
      %v1023 = vpack.c.bf16 %v1010, %v1009
      %v1024 = vpack.c.bf16 %v1012, %v1011
      %v1037 = vunpack.c.l.b16 %v1013
      %v1038 = vunpack.c.h.b16 %v1013
      %v1039 = vunpack.c.l.b16 %v1014
      %v1040 = vunpack.c.h.b16 %v1014
      %v1041 = vunpack.c.l.b16 %v1015
      %v1042 = vunpack.c.h.b16 %v1015
      %v1043 = vunpack.c.l.b16 %v1016
      %v1044 = vunpack.c.h.b16 %v1016
      %v1045 = vunpack.c.l.b16 %v1017
      %v1046 = vunpack.c.h.b16 %v1017
      %v1047 = vunpack.c.l.b16 %v1018
      %v1048 = vunpack.c.h.b16 %v1018
      %v1049 = vunpack.c.l.b16 %v1019
      %v1050 = vunpack.c.h.b16 %v1019
      %v1051 = vunpack.c.l.b16 %v1020
      %v1052 = vunpack.c.h.b16 %v1020
      %v1053 = vunpack.c.l.b16 %v1021
      %v1054 = vunpack.c.h.b16 %v1021
      %v1055 = vunpack.c.l.b16 %v1022
      %v1056 = vunpack.c.h.b16 %v1022
      %v1057 = vunpack.c.l.b16 %v1023
      %v1058 = vunpack.c.h.b16 %v1023
      %v1059 = vunpack.c.l.b16 %v1024
      %v1060 = vunpack.c.h.b16 %v1024
      %v1061 = vpack.c.b16 %v1037, %v1037
      %v1062 = vpack.c.b16 %v1038, %v1038
      %v1063 = vpack.c.b16 %v1039, %v1039
      %v1064 = vpack.c.b16 %v1040, %v1040
      %v1065 = vpack.c.b16 %v1041, %v1041
      %v1066 = vpack.c.b16 %v1042, %v1042
      %v1067 = vpack.c.b16 %v1043, %v1043
      %v1068 = vpack.c.b16 %v1044, %v1044
      %v1069 = vpack.c.b16 %v1045, %v1045
      %v1070 = vpack.c.b16 %v1046, %v1046
      %v1071 = vpack.c.b16 %v1047, %v1047
      %v1072 = vpack.c.b16 %v1048, %v1048
      %v1073 = vpack.c.b16 %v1049, %v1049
      %v1074 = vpack.c.b16 %v1050, %v1050
      %v1075 = vpack.c.b16 %v1051, %v1051
      %v1076 = vpack.c.b16 %v1052, %v1052
      %v1077 = vpack.c.b16 %v1053, %v1053
      %v1078 = vpack.c.b16 %v1054, %v1054
      %v1079 = vpack.c.b16 %v1055, %v1055
      %v1080 = vpack.c.b16 %v1056, %v1056
      %v1081 = vpack.c.b16 %v1057, %v1057
      %v1082 = vpack.c.b16 %v1058, %v1058
      %v1083 = vpack.c.b16 %v1059, %v1059
      %v1084 = vpack.c.b16 %v1060, %v1060
      %1109 = vst [vmem:[%s170 + $0x60] sm:$0xf] %v1061
      %1110 = vst [vmem:[%s170 + $0x64] sm:$0xf] %v1062
      %1111 = vst [vmem:[%s170 + $0x68] sm:$0xf] %v1063
      %1112 = vst [vmem:[%s170 + $0x6c] sm:$0xf] %v1064
      %1113 = vst [vmem:[%s170 + $0x70] sm:$0xf] %v1065
      %1114 = vst [vmem:[%s170 + $0x74] sm:$0xf] %v1066
      %1115 = vst [vmem:[%s170 + $0x78] sm:$0xf] %v1067
      %1116 = vst [vmem:[%s170 + $0x7c] sm:$0xf] %v1068
      %1117 = vst [vmem:[%s170 + $0x80] sm:$0xf] %v1069
      %1118 = vst [vmem:[%s170 + $0x84] sm:$0xf] %v1070
      %1119 = vst [vmem:[%s170 + $0x88] sm:$0xf] %v1071
      %1120 = vst [vmem:[%s170 + $0x8c] sm:$0xf] %v1072
      %1121 = vst [vmem:[%s170 + $0x90] sm:$0xf] %v1073
      %1122 = vst [vmem:[%s170 + $0x94] sm:$0xf] %v1074
      %1123 = vst [vmem:[%s170 + $0x98] sm:$0xf] %v1075
      %1124 = vst [vmem:[%s170 + $0x9c] sm:$0xf] %v1076
      %1125 = vst [vmem:[%s170 + $0xa0] sm:$0xf] %v1077
      %1126 = vst [vmem:[%s170 + $0xa4] sm:$0xf] %v1078
      %1127 = vst [vmem:[%s170 + $0xa8] sm:$0xf] %v1079
      %1128 = vst [vmem:[%s170 + $0xac] sm:$0xf] %v1080
      %1129 = vst [vmem:[%s170 + $0xb0] sm:$0xf] %v1081
      %1130 = vst [vmem:[%s170 + $0xb4] sm:$0xf] %v1082
      %1131 = vst [vmem:[%s170 + $0xb8] sm:$0xf] %v1083
      %1132 = vst [vmem:[%s170 + $0xbc] sm:$0xf] %v1084
      %p1133 = scmp.lt.s32.totalorder %s14, 1
      %s1134 = scalar_select %p1133, %s14, 1
      %s1135 = smul.addr %s1134, 48
      %s1136 = smul.addr %s1135, 4
      %s1137 = scalar_lea.vmem %s3, %s1136
      // Predicated region
      $region33: #{_lambda_.5} parent=31 // pred_check
        %p1138 = pneg %p100
      $region34: #{_lambda_.5} parent=31 // pred_check_branch
        %1140 = sbr.rel (%p1138) target = $region36
      $region35: #{_lambda_.5} parent=31 // pred_region
        _
      $region36: #{_lambda_.5} parent=31 // pred_fallthru
        _
    $region32: #{_lambda_.5} parent=5 // pred_fallthru
      _
    %p1141 = scmp.le.s32.totalorder 2, %s9
    // Predicated region
    $region37: #{_lambda_.5} parent=5 // pred_check
      %p1142 = pneg %p1141
    $region38: #{_lambda_.5} parent=5 // pred_check_branch
      %1144 = sbr.rel (%p1142) target = $region40
    $region39: #{_lambda_.5} parent=5 // pred_region
      %s1145 = ssub.s32 %s9, 2
      // Predicated region
      $region41: #{_lambda_.5} parent=39 // pred_check
        %p1146 = pneg %p106
      $region42: #{_lambda_.5} parent=39 // pred_check_branch
        %1148 = sbr.rel (%p1146) target = $region44
      $region43: #{_lambda_.5} parent=39 // pred_region
        %p1149 = scmp.lt.s32.totalorder %s15, 1
        %s1150 = scalar_select %p1149, %s15, 1
        %s1151 = smul.addr %s1150, 48
        %s1152 = smul.addr %s1151, 4
        %s1153 = scalar_lea.vmem %s3, %s1152
      $region44: #{_lambda_.5} parent=39 // pred_fallthru
        _
    $region40: #{_lambda_.5} parent=5 // pred_fallthru
      _
  $region6: #{_lambda_.5} parent=0 // loop_footer
    %s13 = sadd.s32 1, %s9
  $region7: #{_lambda_.5} parent=0 // loop_footer_branch
    %8 = sbr.rel target = $region3
  $region8: #{_lambda_.5} parent=0 // loop_exit
    _

// kernel: _lambda_.6
$region0: #{_lambda_.6}
  #allocation0 [shape = 'u32[]', space=smem, size = 0x4, offset = 0x4, fixed_abs, tag = 'smem constant byte address 0x4 - core index']
  #allocation1 [shape = 'u32[144,128]{1,0:T(1,128)}', space=vmem, size = 0x12000, scoped, tag = 'internal scratch']
  %s0 = inlined_call_operand.vmem [shape: bf16[2,128,128], index: 0, kind: input, shape index: {}]
  %s1 = inlined_call_operand.vmem [shape: bf16[1,128,128], index: 1, kind: input, shape index: {}]
  %s2 = inlined_call_operand.vmem [shape: f32[128,1], index: 2, kind: input, shape index: {}]
  %s3 = inlined_call_operand.vmem [shape: bf16[2,128,128], index: 3, kind: output, shape index: {0}]
  %s4 = inlined_call_operand.vmem [shape: f32[2,2,128], index: 4, kind: output, shape index: {1}]
  %5 = xla_tuple %s3, %s4
  %s6 = sld [smem:[#allocation0]]
  $region53: #{_lambda_.6} parent=0
    _
  %s8 = ssub.s32 1, %s6
  %s9 = scalar_select 0, %s8, %s6
  loop: start=0, step=1, limit=4
  $region2: #{_lambda_.6} parent=0 // loop_pre_header
    _
  $region3: #{_lambda_.6} parent=0 // loop_header
    %s11 = sphi 0, %s15
    %p12 = scmp.ge.s32.totalorder %s11, 4
    %s21 = sphi 0, %s23
    %s24 = sphi 0, %s21
    %s25 = sphi 0, %s24
    %s41 = sphi 0, %s25
    %s45 = sphi 0, %s45
    %s47 = sphi 0, %s45
    %s48 = sphi 0, %s47
    %s62 = sphi 0, %s48
    %s66 = sphi 0, %s66
    %s68 = sphi 0, %s66
    %s69 = sphi 0, %s68
    %s83 = sphi 0, %s69
    %s89 = sphi 0, %s91
    %s92 = sphi 0, %s89
    %s93 = sphi 0, %s92
    %s109 = sphi 0, %s93
    %s115 = sphi 0, %s117
    %s118 = sphi 0, %s115
    %s119 = sphi 0, %s118
    %s135 = sphi 0, %s119
  $region4: #{_lambda_.6} parent=0 // loop_header_branch
    %14 = sbr.rel (%p12) target = $region8
  $region5: #{_lambda_.6} parent=0 // loop_body
    %s16 = ssub.s32 %s11, 1
    %s17 = ssub.s32 %s11, 2
    %s18 = sadd.s32 %s11, 1
    %s19 = ssub.s32 %s11, %s18
    %p20 = scmp.eq.s32.totalorder %s19, 0
    %s22 = sadd.s32 %s21, 1
    %s23 = scalar_select %p20, %s21, %s22
    %p26 = pneg %p20
    %p27 = scmp.eq.s32.totalorder %s11, 1
    %p28 = por %p26, %p27
    %p29 = scmp.ne.s32.totalorder %s21, %s24
    %p30 = scmp.eq.s32.totalorder %s11, 0
    %p31 = por %p29, %p30
    %p32 = scmp.ne.s32.totalorder %s21, %s24
    %p33 = scmp.eq.s32.totalorder %s16, 1
    %p34 = por %p32, %p33
    %p35 = scmp.ne.s32.totalorder %s24, %s25
    %p36 = scmp.eq.s32.totalorder %s16, 0
    %p37 = por %p35, %p36
    %p38 = scmp.ne.s32.totalorder %s24, %s25
    %p39 = scmp.eq.s32.totalorder %s17, 1
    %p40 = por %p38, %p39
    %p42 = scmp.ne.s32.totalorder %s25, %s41
    %p43 = scmp.eq.s32.totalorder %s17, 0
    %p44 = por %p42, %p43
    %s46 = sadd.s32 %s45, 1
    %p49 = scmp.eq.s32.totalorder %s11, 1
    %p50 = scmp.ne.s32.totalorder %s45, %s47
    %p51 = scmp.eq.s32.totalorder %s11, 0
    %p52 = por %p50, %p51
    %p53 = scmp.ne.s32.totalorder %s45, %s47
    %p54 = scmp.eq.s32.totalorder %s16, 1
    %p55 = por %p53, %p54
    %p56 = scmp.ne.s32.totalorder %s47, %s48
    %p57 = scmp.eq.s32.totalorder %s16, 0
    %p58 = por %p56, %p57
    %p59 = scmp.ne.s32.totalorder %s47, %s48
    %p60 = scmp.eq.s32.totalorder %s17, 1
    %p61 = por %p59, %p60
    %p63 = scmp.ne.s32.totalorder %s48, %s62
    %p64 = scmp.eq.s32.totalorder %s17, 0
    %p65 = por %p63, %p64
    %s67 = sadd.s32 %s66, 1
    %p70 = scmp.eq.s32.totalorder %s11, 1
    %p71 = scmp.ne.s32.totalorder %s66, %s68
    %p72 = scmp.eq.s32.totalorder %s11, 0
    %p73 = por %p71, %p72
    %p74 = scmp.ne.s32.totalorder %s66, %s68
    %p75 = scmp.eq.s32.totalorder %s16, 1
    %p76 = por %p74, %p75
    %p77 = scmp.ne.s32.totalorder %s68, %s69
    %p78 = scmp.eq.s32.totalorder %s16, 0
    %p79 = por %p77, %p78
    %p80 = scmp.ne.s32.totalorder %s68, %s69
    %p81 = scmp.eq.s32.totalorder %s17, 1
    %p82 = por %p80, %p81
    %p84 = scmp.ne.s32.totalorder %s69, %s83
    %p85 = scmp.eq.s32.totalorder %s17, 0
    %p86 = por %p84, %p85
    %s87 = ssub.s32 %s11, %s18
    %p88 = scmp.eq.s32.totalorder %s87, 0
    %s90 = sadd.s32 %s89, 1
    %s91 = scalar_select %p88, %s89, %s90
    %p94 = pneg %p88
    %p95 = scmp.eq.s32.totalorder %s11, 1
    %p96 = por %p94, %p95
    %p97 = scmp.ne.s32.totalorder %s89, %s92
    %p98 = scmp.eq.s32.totalorder %s11, 0
    %p99 = por %p97, %p98
    %p100 = scmp.ne.s32.totalorder %s89, %s92
    %p101 = scmp.eq.s32.totalorder %s16, 1
    %p102 = por %p100, %p101
    %p103 = scmp.ne.s32.totalorder %s92, %s93
    %p104 = scmp.eq.s32.totalorder %s16, 0
    %p105 = por %p103, %p104
    %p106 = scmp.ne.s32.totalorder %s92, %s93
    %p107 = scmp.eq.s32.totalorder %s17, 1
    %p108 = por %p106, %p107
    %p110 = scmp.ne.s32.totalorder %s93, %s109
    %p111 = scmp.eq.s32.totalorder %s17, 0
    %p112 = por %p110, %p111
    %s113 = ssub.s32 %s11, %s18
    %p114 = scmp.eq.s32.totalorder %s113, 0
    %s116 = sadd.s32 %s115, 1
    %s117 = scalar_select %p114, %s115, %s116
    %p120 = pneg %p114
    %p121 = scmp.eq.s32.totalorder %s11, 1
    %p122 = por %p120, %p121
    %p123 = scmp.ne.s32.totalorder %s115, %s118
    %p124 = scmp.eq.s32.totalorder %s11, 0
    %p125 = por %p123, %p124
    %p126 = scmp.ne.s32.totalorder %s115, %s118
    %p127 = scmp.eq.s32.totalorder %s16, 1
    %p128 = por %p126, %p127
    %p129 = scmp.ne.s32.totalorder %s118, %s119
    %p130 = scmp.eq.s32.totalorder %s16, 0
    %p131 = por %p129, %p130
    %p132 = scmp.ne.s32.totalorder %s118, %s119
    %p133 = scmp.eq.s32.totalorder %s17, 1
    %p134 = por %p132, %p133
    %p136 = scmp.ne.s32.totalorder %s119, %s135
    %p137 = scmp.eq.s32.totalorder %s17, 0
    %p138 = por %p136, %p137
    %p139 = scmp.le.s32.totalorder 1, %s11
    %p140 = scmp.lt.s32.totalorder %s11, 3
    %p141 = pnand %p139, %p140
    %p142 = pneg %p141
    // Predicated region
    $region9: #{_lambda_.6} parent=5 // pred_check
      _
    $region10: #{_lambda_.6} parent=5 // pred_check_branch
      %144 = sbr.rel (%p141) target = $region12
    $region11: #{_lambda_.6} parent=5 // pred_region
      %s145 = ssub.s32 %s11, 1
      // Predicated region
      $region13: #{_lambda_.6} parent=11 // pred_check
        %p146 = pneg %p58
      $region14: #{_lambda_.6} parent=11 // pred_check_branch
        %148 = sbr.rel (%p146) target = $region16
      $region15: #{_lambda_.6} parent=11 // pred_region
        _
      $region16: #{_lambda_.6} parent=11 // pred_fallthru
        _
      // Predicated region
      $region17: #{_lambda_.6} parent=11 // pred_check
        %p149 = pneg %p79
      $region18: #{_lambda_.6} parent=11 // pred_check_branch
        %151 = sbr.rel (%p149) target = $region20
      $region19: #{_lambda_.6} parent=11 // pred_region
        _
      $region20: #{_lambda_.6} parent=11 // pred_fallthru
        _
    $region12: #{_lambda_.6} parent=5 // pred_fallthru
      _
    %p152 = scmp.lt.s32.totalorder %s11, 2
    // Predicated region
    $region21: #{_lambda_.6} parent=5 // pred_check
      %p153 = pneg %p152
    $region22: #{_lambda_.6} parent=5 // pred_check_branch
      %155 = sbr.rel (%p153) target = $region24
    $region23: #{_lambda_.6} parent=5 // pred_region
      // Predicated region
      $region25: #{_lambda_.6} parent=23 // pred_check
        %p156 = pneg %p31
      $region26: #{_lambda_.6} parent=23 // pred_check_branch
        %158 = sbr.rel (%p156) target = $region28
      $region27: #{_lambda_.6} parent=23 // pred_region
        %p159 = scmp.lt.s32.totalorder %s11, 1
        %s160 = scalar_select %p159, %s11, 1
        %s161 = smul.addr %s160, 16
        %s162 = smul.addr %s161, 4
        %s163 = scalar_lea.vmem %s0, %s162
      $region28: #{_lambda_.6} parent=23 // pred_fallthru
        _
    $region24: #{_lambda_.6} parent=5 // pred_fallthru
      _
    %p164 = scmp.le.s32.totalorder 1, %s11
    %p165 = scmp.lt.s32.totalorder %s11, 3
    %p166 = pnand %p164, %p165
    %p167 = pneg %p166
    // Predicated region
    $region29: #{_lambda_.6} parent=5 // pred_check
      _
    $region30: #{_lambda_.6} parent=5 // pred_check_branch
      %169 = sbr.rel (%p166) target = $region32
    $region31: #{_lambda_.6} parent=5 // pred_region
      %s170 = ssub.s32 %s11, 1
      %p171 = scmp.lt.s32.totalorder %s16, 1
      %s172 = scalar_select %p171, %s16, 1
      %s173 = smul.addr %s172, 16
      %s174 = smul.addr %s173, 4
      %s175 = scalar_lea.vmem %s0, %s174
      %p176 = pneg %p37
      %p177 = pneg %p34
      %p178 = pneg %p58
      %p179 = pneg %p55
      %p180 = pneg %p79
      %p181 = pneg %p76
      %p182 = pneg %p105
      %p183 = pneg %p102
      %p184 = scmp.lt.s32.totalorder %s16, 1
      %s185 = scalar_select %p184, %s16, 1
      %s186 = smul.addr %s185, 16
      %s187 = smul.addr %s186, 4
      %s188 = scalar_lea.vmem %s3, %s187
      %p189 = pneg %p131
      %p190 = pneg %p128
      %p191 = scmp.lt.s32.totalorder %s16, 1
      %s192 = scalar_select %p191, %s16, 1
      %s193 = smul.addr %s192, 2
      %s194 = scalar_lea.vmem %s4, %s193
      %p195 = scmp.lt.s32.totalorder %s16, 1
      %s196 = scalar_select %p195, %s16, 1
      %s197 = smul.addr %s196, 16
      %s198 = smul.addr %s197, 4
      %s199 = scalar_lea.vmem %s0, %s198
      %p200 = scmp.lt.s32.totalorder %s16, 1
      %s201 = scalar_select %p200, %s16, 1
      %s202 = smul.addr %s201, 16
      %s203 = smul.addr %s202, 4
      %s204 = scalar_lea.vmem %s3, %s203
      %p205 = scmp.lt.s32.totalorder %s16, 1
      %s206 = scalar_select %p205, %s16, 1
      %s207 = smul.addr %s206, 2
      %s208 = scalar_lea.vmem %s4, %s207
      %v210 = vld [vmem:[%s199] sm:$0xf]
      %v211 = vld [vmem:[%s199 + $0x4] sm:$0xf]
      %v212 = vld [vmem:[%s199 + $0x8] sm:$0xf]
      %v213 = vld [vmem:[%s199 + $0xc] sm:$0xf]
      %v214 = vld [vmem:[%s199 + $0x10] sm:$0xf]
      %v215 = vld [vmem:[%s199 + $0x14] sm:$0xf]
      %v216 = vld [vmem:[%s199 + $0x18] sm:$0xf]
      %v217 = vld [vmem:[%s199 + $0x1c] sm:$0xf]
      %v218 = vld [vmem:[%s199 + $0x20] sm:$0xf]
      %v219 = vld [vmem:[%s199 + $0x24] sm:$0xf]
      %v220 = vld [vmem:[%s199 + $0x28] sm:$0xf]
      %v221 = vld [vmem:[%s199 + $0x2c] sm:$0xf]
      %v222 = vld [vmem:[%s199 + $0x30] sm:$0xf]
      %v223 = vld [vmem:[%s199 + $0x34] sm:$0xf]
      %v224 = vld [vmem:[%s199 + $0x38] sm:$0xf]
      %v225 = vld [vmem:[%s199 + $0x3c] sm:$0xf]
      %v226 = vld [vmem:[%s1] sm:$0xf]
      %v227 = vld [vmem:[%s1 + $0x4] sm:$0xf]
      %v228 = vld [vmem:[%s1 + $0x8] sm:$0xf]
      %v229 = vld [vmem:[%s1 + $0xc] sm:$0xf]
      %v230 = vld [vmem:[%s1 + $0x10] sm:$0xf]
      %v231 = vld [vmem:[%s1 + $0x14] sm:$0xf]
      %v232 = vld [vmem:[%s1 + $0x18] sm:$0xf]
      %v233 = vld [vmem:[%s1 + $0x1c] sm:$0xf]
      %v234 = vld [vmem:[%s1 + $0x20] sm:$0xf]
      %v235 = vld [vmem:[%s1 + $0x24] sm:$0xf]
      %v236 = vld [vmem:[%s1 + $0x28] sm:$0xf]
      %v237 = vld [vmem:[%s1 + $0x2c] sm:$0xf]
      %v238 = vld [vmem:[%s1 + $0x30] sm:$0xf]
      %v239 = vld [vmem:[%s1 + $0x34] sm:$0xf]
      %v240 = vld [vmem:[%s1 + $0x38] sm:$0xf]
      %v241 = vld [vmem:[%s1 + $0x3c] sm:$0xf]
      %v258 = vunpack.c.l.b16 %v210
      %v259 = vunpack.c.l.b16 %v211
      %v260 = vunpack.c.l.b16 %v212
      %v261 = vunpack.c.l.b16 %v213
      %v262 = vunpack.c.l.b16 %v214
      %v263 = vunpack.c.l.b16 %v215
      %v264 = vunpack.c.l.b16 %v216
      %v265 = vunpack.c.l.b16 %v217
      %v266 = vunpack.c.l.b16 %v218
      %v267 = vunpack.c.l.b16 %v219
      %v268 = vunpack.c.l.b16 %v220
      %v269 = vunpack.c.l.b16 %v221
      %v270 = vunpack.c.l.b16 %v222
      %v271 = vunpack.c.l.b16 %v223
      %v272 = vunpack.c.l.b16 %v224
      %v273 = vunpack.c.l.b16 %v225
      %v274 = vpack.c.b16 %v259, %v258
      %v275 = vpack.c.b16 %v261, %v260
      %v276 = vpack.c.b16 %v263, %v262
      %v277 = vpack.c.b16 %v265, %v264
      %v278 = vpack.c.b16 %v267, %v266
      %v279 = vpack.c.b16 %v269, %v268
      %v280 = vpack.c.b16 %v271, %v270
      %v281 = vpack.c.b16 %v273, %v272
      %v306 = vunpack.c.l.b16 %v226
      %v307 = vunpack.c.l.b16 %v227
      %v308 = vunpack.c.l.b16 %v228
      %v309 = vunpack.c.l.b16 %v229
      %v310 = vunpack.c.l.b16 %v230
      %v311 = vunpack.c.l.b16 %v231
      %v312 = vunpack.c.l.b16 %v232
      %v313 = vunpack.c.l.b16 %v233
      %v314 = vunpack.c.l.b16 %v234
      %v315 = vunpack.c.l.b16 %v235
      %v316 = vunpack.c.l.b16 %v236
      %v317 = vunpack.c.l.b16 %v237
      %v318 = vunpack.c.l.b16 %v238
      %v319 = vunpack.c.l.b16 %v239
      %v320 = vunpack.c.l.b16 %v240
      %v321 = vunpack.c.l.b16 %v241
      %v322 = vpack.c.b16 %v307, %v306
      %v323 = vpack.c.b16 %v309, %v308
      %v324 = vpack.c.b16 %v311, %v310
      %v325 = vpack.c.b16 %v313, %v312
      %v326 = vpack.c.b16 %v315, %v314
      %v327 = vpack.c.b16 %v317, %v316
      %v328 = vpack.c.b16 %v319, %v318
      %v329 = vpack.c.b16 %v321, %v320
      %338 = vmatprep.subr.bf16.mxu0 0
      %339 = vmatpush1.bf16.msra.mxu0 %v322
      %340 = vmatprep.subr.bf16.mxu0 0
      %341 = vmatpush1.bf16.msra.mxu0 %v323
      %342 = vmatprep.subr.bf16.mxu0 0
      %343 = vmatpush1.bf16.msra.mxu0 %v324
      %344 = vmatprep.subr.bf16.mxu0 0
      %345 = vmatpush1.bf16.msra.mxu0 %v325
      %346 = vmatprep.subr.bf16.mxu0 0
      %347 = vmatpush1.bf16.msra.mxu0 %v326
      %348 = vmatprep.subr.bf16.mxu0 0
      %349 = vmatpush1.bf16.msra.mxu0 %v327
      %350 = vmatprep.subr.bf16.mxu0 0
      %351 = vmatpush1.bf16.msra.mxu0 %v328
      %352 = vmatprep.subr.bf16.mxu0 0
      %353 = vmatpush1.bf16.msra.mxu0 %v329
      %354 = vmatprep.subr.bf16.mxu0 0
      %355 = vmatpush1.bf16.msra.mxu0 0
      %356 = vmatprep.subr.bf16.mxu0 0
      %357 = vmatpush1.bf16.msra.mxu0 0
      %358 = vmatprep.subr.bf16.mxu0 0
      %359 = vmatpush1.bf16.msra.mxu0 0
      %360 = vmatprep.subr.bf16.mxu0 0
      %361 = vmatpush1.bf16.msra.mxu0 0
      %362 = vmatprep.subr.bf16.mxu0 0
      %363 = vmatpush1.bf16.msra.mxu0 0
      %364 = vmatprep.subr.bf16.mxu0 0
      %365 = vmatpush1.bf16.msra.mxu0 0
      %366 = vmatprep.subr.bf16.mxu0 0
      %367 = vmatpush1.bf16.msra.mxu0 0
      %368 = vmatprep.subr.bf16.mxu0 0
      %369 = vmatpush1.bf16.msra.mxu0 0
      %370 = vmatprep.mubr.bf16.mxu0 0
      %371 = vmatmul.mubr.bf16.gmra.mrb[0].mxu0 %v274
      %v372 = vpop.f32.mrb[0].mxu0
      %v373 = vadd.f32 0.0, %v372
      %v374 = vpop.f32.mrb[0].mxu0
      %v375 = vpop.f32.mrb[0].mxu0
      %v376 = vadd.f32 0.0, %v375
      %v377 = vpop.f32.mrb[0].mxu0
      %378 = vmatprep.mubr.bf16.mxu0 0
      %379 = vmatmul.mubr.bf16.gmra.mrb[0].mxu0 %v275
      %v380 = vpop.f32.mrb[0].mxu0
      %v381 = vadd.f32 0.0, %v380
      %v382 = vpop.f32.mrb[0].mxu0
      %v383 = vpop.f32.mrb[0].mxu0
      %v384 = vadd.f32 0.0, %v383
      %v385 = vpop.f32.mrb[0].mxu0
      %386 = vmatprep.mubr.bf16.mxu0 0
      %387 = vmatmul.mubr.bf16.gmra.mrb[0].mxu0 %v276
      %v388 = vpop.f32.mrb[0].mxu0
      %v389 = vadd.f32 0.0, %v388
      %v390 = vpop.f32.mrb[0].mxu0
      %v391 = vpop.f32.mrb[0].mxu0
      %v392 = vadd.f32 0.0, %v391
      %v393 = vpop.f32.mrb[0].mxu0
      %394 = vmatprep.mubr.bf16.mxu0 0
      %395 = vmatmul.mubr.bf16.gmra.mrb[0].mxu0 %v277
      %v396 = vpop.f32.mrb[0].mxu0
      %v397 = vadd.f32 0.0, %v396
      %v398 = vpop.f32.mrb[0].mxu0
      %v399 = vpop.f32.mrb[0].mxu0
      %v400 = vadd.f32 0.0, %v399
      %v401 = vpop.f32.mrb[0].mxu0
      %402 = vmatprep.mubr.bf16.mxu0 0
      %403 = vmatmul.mubr.bf16.gmra.mrb[0].mxu0 %v278
      %v404 = vpop.f32.mrb[0].mxu0
      %v405 = vadd.f32 0.0, %v404
      %v406 = vpop.f32.mrb[0].mxu0
      %v407 = vpop.f32.mrb[0].mxu0
      %v408 = vadd.f32 0.0, %v407
      %v409 = vpop.f32.mrb[0].mxu0
      %410 = vmatprep.mubr.bf16.mxu0 0
      %411 = vmatmul.mubr.bf16.gmra.mrb[0].mxu0 %v279
      %v412 = vpop.f32.mrb[0].mxu0
      %v413 = vadd.f32 0.0, %v412
      %v414 = vpop.f32.mrb[0].mxu0
      %v415 = vpop.f32.mrb[0].mxu0
      %v416 = vadd.f32 0.0, %v415
      %v417 = vpop.f32.mrb[0].mxu0
      %418 = vmatprep.mubr.bf16.mxu0 0
      %419 = vmatmul.mubr.bf16.gmra.mrb[0].mxu0 %v280
      %v420 = vpop.f32.mrb[0].mxu0
      %v421 = vadd.f32 0.0, %v420
      %v422 = vpop.f32.mrb[0].mxu0
      %v423 = vpop.f32.mrb[0].mxu0
      %v424 = vadd.f32 0.0, %v423
      %v425 = vpop.f32.mrb[0].mxu0
      %426 = vmatprep.mubr.bf16.mxu0 0
      %427 = vmatmul.mubr.bf16.gmra.mrb[0].mxu0 %v281
      %v428 = vpop.f32.mrb[0].mxu0
      %v429 = vadd.f32 0.0, %v428
      %v430 = vpop.f32.mrb[0].mxu0
      %v431 = vpop.f32.mrb[0].mxu0
      %v432 = vadd.f32 0.0, %v431
      %v433 = vpop.f32.mrb[0].mxu0
      %434 = vdwg.mxu0
      %v435 = vpack.c.bf16 %v376, %v373
      %v436 = vpack.c.bf16 %v384, %v381
      %v437 = vpack.c.bf16 %v392, %v389
      %v438 = vpack.c.bf16 %v400, %v397
      %v439 = vpack.c.bf16 %v408, %v405
      %v440 = vpack.c.bf16 %v416, %v413
      %v441 = vpack.c.bf16 %v424, %v421
      %v442 = vpack.c.bf16 %v432, %v429
      %v451 = vunpack.c.l.b16 %v435
      %v452 = vunpack.c.h.b16 %v435
      %v453 = vunpack.c.l.b16 %v436
      %v454 = vunpack.c.h.b16 %v436
      %v455 = vunpack.c.l.b16 %v437
      %v456 = vunpack.c.h.b16 %v437
      %v457 = vunpack.c.l.b16 %v438
      %v458 = vunpack.c.h.b16 %v438
      %v459 = vunpack.c.l.b16 %v439
      %v460 = vunpack.c.h.b16 %v439
      %v461 = vunpack.c.l.b16 %v440
      %v462 = vunpack.c.h.b16 %v440
      %v463 = vunpack.c.l.b16 %v441
      %v464 = vunpack.c.h.b16 %v441
      %v465 = vunpack.c.l.b16 %v442
      %v466 = vunpack.c.h.b16 %v442
      %v467 = vpack.c.b16 %v451, %v451
      %v468 = vpack.c.b16 %v452, %v452
      %v469 = vpack.c.b16 %v453, %v453
      %v470 = vpack.c.b16 %v454, %v454
      %v471 = vpack.c.b16 %v455, %v455
      %v472 = vpack.c.b16 %v456, %v456
      %v473 = vpack.c.b16 %v457, %v457
      %v474 = vpack.c.b16 %v458, %v458
      %v475 = vpack.c.b16 %v459, %v459
      %v476 = vpack.c.b16 %v460, %v460
      %v477 = vpack.c.b16 %v461, %v461
      %v478 = vpack.c.b16 %v462, %v462
      %v479 = vpack.c.b16 %v463, %v463
      %v480 = vpack.c.b16 %v464, %v464
      %v481 = vpack.c.b16 %v465, %v465
      %v482 = vpack.c.b16 %v466, %v466
      %499 = vst [vmem:[%s204] sm:$0xf] %v467
      %500 = vst [vmem:[%s204 + $0x4] sm:$0xf] %v468
      %501 = vst [vmem:[%s204 + $0x8] sm:$0xf] %v469
      %502 = vst [vmem:[%s204 + $0xc] sm:$0xf] %v470
      %503 = vst [vmem:[%s204 + $0x10] sm:$0xf] %v471
      %504 = vst [vmem:[%s204 + $0x14] sm:$0xf] %v472
      %505 = vst [vmem:[%s204 + $0x18] sm:$0xf] %v473
      %506 = vst [vmem:[%s204 + $0x1c] sm:$0xf] %v474
      %507 = vst [vmem:[%s204 + $0x20] sm:$0xf] %v475
      %508 = vst [vmem:[%s204 + $0x24] sm:$0xf] %v476
      %509 = vst [vmem:[%s204 + $0x28] sm:$0xf] %v477
      %510 = vst [vmem:[%s204 + $0x2c] sm:$0xf] %v478
      %511 = vst [vmem:[%s204 + $0x30] sm:$0xf] %v479
      %512 = vst [vmem:[%s204 + $0x34] sm:$0xf] %v480
      %513 = vst [vmem:[%s204 + $0x38] sm:$0xf] %v481
      %514 = vst [vmem:[%s204 + $0x3c] sm:$0xf] %v482
      %v515 = vld [vmem:[%s2] sm:$0xff]
      %v516 = vld [vmem:[%s2 + $0x8] sm:$0xff]
      %v517 = vld [vmem:[%s2 + $0x10] sm:$0xff]
      %v518 = vld [vmem:[%s2 + $0x18] sm:$0xff]
      %v519 = vld [vmem:[%s2 + $0x20] sm:$0xff]
      %v520 = vld [vmem:[%s2 + $0x28] sm:$0xff]
      %v521 = vld [vmem:[%s2 + $0x30] sm:$0xff]
      %v522 = vld [vmem:[%s2 + $0x38] sm:$0xff]
      %v523 = vld [vmem:[%s2 + $0x40] sm:$0xff]
      %v524 = vld [vmem:[%s2 + $0x48] sm:$0xff]
      %v525 = vld [vmem:[%s2 + $0x50] sm:$0xff]
      %v526 = vld [vmem:[%s2 + $0x58] sm:$0xff]
      %v527 = vld [vmem:[%s2 + $0x60] sm:$0xff]
      %v528 = vld [vmem:[%s2 + $0x68] sm:$0xff]
      %v529 = vld [vmem:[%s2 + $0x70] sm:$0xff]
      %v530 = vld [vmem:[%s2 + $0x78] sm:$0xff]
      %532 = vset.pattern.permute.xlu0 0
      %533 = vperm.xlu0 %532, %v515
      %v534 = vpop.permute.xlu0 %533
      %537 = vset.pattern.permute.xlu0 0
      %538 = vperm.xlu0 %537, %v516
      %v539 = vpop.permute.xlu0 %538
      %542 = vset.pattern.permute.xlu0 0
      %543 = vperm.xlu0 %542, %v517
      %v544 = vpop.permute.xlu0 %543
      %547 = vset.pattern.permute.xlu0 0
      %548 = vperm.xlu0 %547, %v518
      %v549 = vpop.permute.xlu0 %548
      %552 = vset.pattern.permute.xlu0 0
      %553 = vperm.xlu0 %552, %v519
      %v554 = vpop.permute.xlu0 %553
      %557 = vset.pattern.permute.xlu0 0
      %558 = vperm.xlu0 %557, %v520
      %v559 = vpop.permute.xlu0 %558
      %562 = vset.pattern.permute.xlu0 0
      %563 = vperm.xlu0 %562, %v521
      %v564 = vpop.permute.xlu0 %563
      %567 = vset.pattern.permute.xlu0 0
      %568 = vperm.xlu0 %567, %v522
      %v569 = vpop.permute.xlu0 %568
      %572 = vset.pattern.permute.xlu0 0
      %573 = vperm.xlu0 %572, %v523
      %v574 = vpop.permute.xlu0 %573
      %577 = vset.pattern.permute.xlu0 0
      %578 = vperm.xlu0 %577, %v524
      %v579 = vpop.permute.xlu0 %578
      %582 = vset.pattern.permute.xlu0 0
      %583 = vperm.xlu0 %582, %v525
      %v584 = vpop.permute.xlu0 %583
      %587 = vset.pattern.permute.xlu0 0
      %588 = vperm.xlu0 %587, %v526
      %v589 = vpop.permute.xlu0 %588
      %592 = vset.pattern.permute.xlu0 0
      %593 = vperm.xlu0 %592, %v527
      %v594 = vpop.permute.xlu0 %593
      %597 = vset.pattern.permute.xlu0 0
      %598 = vperm.xlu0 %597, %v528
      %v599 = vpop.permute.xlu0 %598
      %602 = vset.pattern.permute.xlu0 0
      %603 = vperm.xlu0 %602, %v529
      %v604 = vpop.permute.xlu0 %603
      %607 = vset.pattern.permute.xlu0 0
      %608 = vperm.xlu0 %607, %v530
      %v609 = vpop.permute.xlu0 %608
      %v611 = vmul.f32 %v373, %v534
      %v612 = vmul.f32 %v376, %v539
      %v613 = vmul.f32 %v381, %v544
      %v614 = vmul.f32 %v384, %v549
      %v615 = vmul.f32 %v389, %v554
      %v616 = vmul.f32 %v392, %v559
      %v617 = vmul.f32 %v397, %v564
      %v618 = vmul.f32 %v400, %v569
      %v619 = vmul.f32 %v405, %v574
      %v620 = vmul.f32 %v408, %v579
      %v621 = vmul.f32 %v413, %v584
      %v622 = vmul.f32 %v416, %v589
      %v623 = vmul.f32 %v421, %v594
      %v624 = vmul.f32 %v424, %v599
      %v625 = vmul.f32 %v429, %v604
      %v626 = vmul.f32 %v432, %v609
      %v627 = vadd.f32 %v611, %v612
      %v628 = vadd.f32 %v627, %v613
      %v629 = vadd.f32 %v628, %v614
      %v630 = vadd.f32 %v629, %v615
      %v631 = vadd.f32 %v630, %v616
      %v632 = vadd.f32 %v631, %v617
      %v633 = vadd.f32 %v632, %v618
      %v634 = vadd.f32 %v633, %v619
      %v635 = vadd.f32 %v634, %v620
      %v636 = vadd.f32 %v635, %v621
      %v637 = vadd.f32 %v636, %v622
      %v638 = vadd.f32 %v637, %v623
      %v639 = vadd.f32 %v638, %v624
      %v640 = vadd.f32 %v639, %v625
      %v641 = vadd.f32 %v640, %v626
      %v642 = vrot.slane %v641, 4
      %v643 = vadd.f32 %v641, %v642
      %v644 = vrot.slane %v643, 2
      %v645 = vadd.f32 %v643, %v644
      %v646 = vrot.slane %v645, 1
      %v647 = vadd.f32 %v645, %v646
      %v648 = vadd.f32 %v647, 0.0
      %v649 = vmul.f32 %v611, %v373
      %v650 = vmul.f32 %v612, %v376
      %v651 = vmul.f32 %v613, %v381
      %v652 = vmul.f32 %v614, %v384
      %v653 = vmul.f32 %v615, %v389
      %v654 = vmul.f32 %v616, %v392
      %v655 = vmul.f32 %v617, %v397
      %v656 = vmul.f32 %v618, %v400
      %v657 = vmul.f32 %v619, %v405
      %v658 = vmul.f32 %v620, %v408
      %v659 = vmul.f32 %v621, %v413
      %v660 = vmul.f32 %v622, %v416
      %v661 = vmul.f32 %v623, %v421
      %v662 = vmul.f32 %v624, %v424
      %v663 = vmul.f32 %v625, %v429
      %v664 = vmul.f32 %v626, %v432
      %v665 = vadd.f32 %v649, %v650
      %v666 = vadd.f32 %v665, %v651
      %v667 = vadd.f32 %v666, %v652
      %v668 = vadd.f32 %v667, %v653
      %v669 = vadd.f32 %v668, %v654
      %v670 = vadd.f32 %v669, %v655
      %v671 = vadd.f32 %v670, %v656
      %v672 = vadd.f32 %v671, %v657
      %v673 = vadd.f32 %v672, %v658
      %v674 = vadd.f32 %v673, %v659
      %v675 = vadd.f32 %v674, %v660
      %v676 = vadd.f32 %v675, %v661
      %v677 = vadd.f32 %v676, %v662
      %v678 = vadd.f32 %v677, %v663
      %v679 = vadd.f32 %v678, %v664
      %v680 = vrot.slane %v679, 4
      %v681 = vadd.f32 %v679, %v680
      %v682 = vrot.slane %v681, 2
      %v683 = vadd.f32 %v681, %v682
      %v684 = vrot.slane %v683, 1
      %v685 = vadd.f32 %v683, %v684
      %v686 = vadd.f32 %v685, 0.0
      %vm687 = vcmask 1040384
      %v688 = vsel %vm687, %v648, %v686
      %689 = vst [vmem:[%s208] sm:$0x3] %v688
      %p690 = scmp.lt.s32.totalorder %s16, 1
      %s691 = scalar_select %p690, %s16, 1
      %s692 = smul.addr %s691, 16
      %s693 = smul.addr %s692, 4
      %s694 = scalar_lea.vmem %s3, %s693
      %p695 = scmp.lt.s32.totalorder %s16, 1
      %s696 = scalar_select %p695, %s16, 1
      %s697 = smul.addr %s696, 2
      %s698 = scalar_lea.vmem %s4, %s697
      // Predicated region
      $region33: #{_lambda_.6} parent=31 // pred_check
        %p699 = pneg %p102
      $region34: #{_lambda_.6} parent=31 // pred_check_branch
        %701 = sbr.rel (%p699) target = $region36
      $region35: #{_lambda_.6} parent=31 // pred_region
        _
      $region36: #{_lambda_.6} parent=31 // pred_fallthru
        _
      // Predicated region
      $region37: #{_lambda_.6} parent=31 // pred_check
        %p702 = pneg %p128
      $region38: #{_lambda_.6} parent=31 // pred_check_branch
        %704 = sbr.rel (%p702) target = $region40
      $region39: #{_lambda_.6} parent=31 // pred_region
        _
      $region40: #{_lambda_.6} parent=31 // pred_fallthru
        _
    $region32: #{_lambda_.6} parent=5 // pred_fallthru
      _
    %p705 = scmp.le.s32.totalorder 2, %s11
    // Predicated region
    $region41: #{_lambda_.6} parent=5 // pred_check
      %p706 = pneg %p705
    $region42: #{_lambda_.6} parent=5 // pred_check_branch
      %708 = sbr.rel (%p706) target = $region44
    $region43: #{_lambda_.6} parent=5 // pred_region
      %s709 = ssub.s32 %s11, 2
      // Predicated region
      $region45: #{_lambda_.6} parent=43 // pred_check
        %p710 = pneg %p108
      $region46: #{_lambda_.6} parent=43 // pred_check_branch
        %712 = sbr.rel (%p710) target = $region48
      $region47: #{_lambda_.6} parent=43 // pred_region
        %p713 = scmp.lt.s32.totalorder %s17, 1
        %s714 = scalar_select %p713, %s17, 1
        %s715 = smul.addr %s714, 16
        %s716 = smul.addr %s715, 4
        %s717 = scalar_lea.vmem %s3, %s716
      $region48: #{_lambda_.6} parent=43 // pred_fallthru
        _
      // Predicated region
      $region49: #{_lambda_.6} parent=43 // pred_check
        %p718 = pneg %p134
      $region50: #{_lambda_.6} parent=43 // pred_check_branch
        %720 = sbr.rel (%p718) target = $region52
      $region51: #{_lambda_.6} parent=43 // pred_region
        %p721 = scmp.lt.s32.totalorder %s17, 1
        %s722 = scalar_select %p721, %s17, 1
        %s723 = smul.addr %s722, 2
        %s724 = scalar_lea.vmem %s4, %s723
      $region52: #{_lambda_.6} parent=43 // pred_fallthru
        _
    $region44: #{_lambda_.6} parent=5 // pred_fallthru
      _
  $region6: #{_lambda_.6} parent=0 // loop_footer
    %s15 = sadd.s32 1, %s11
  $region7: #{_lambda_.6} parent=0 // loop_footer_branch
    %10 = sbr.rel target = $region3
  $region8: #{_lambda_.6} parent=0 // loop_exit
    _

// kernel: _lambda_.7
$region0: #{_lambda_.7}
  #allocation0 [shape = 'u32[]', space=smem, size = 0x4, offset = 0x4, fixed_abs, tag = 'smem constant byte address 0x4 - core index']
  #allocation1 [shape = 'u32[144,128]{1,0:T(1,128)}', space=vmem, size = 0x12000, scoped, tag = 'internal scratch']
  %s0 = inlined_call_operand.vmem [shape: bf16[2,41,64], index: 0, kind: input, shape index: {}]
  %s1 = inlined_call_operand.vmem [shape: bf16[4,64,128], index: 1, kind: input, shape index: {}]
  %s2 = inlined_call_operand.vmem [shape: f32[32,1], index: 2, kind: input, shape index: {}]
  %s3 = inlined_call_operand.vmem [shape: bf16[2,32,128], index: 3, kind: output, shape index: {0}]
  %s4 = inlined_call_operand.vmem [shape: f32[2,2,128], index: 4, kind: output, shape index: {1}]
  %5 = xla_tuple %s3, %s4
  %s6 = sld [smem:[#allocation0]]
  $region53: #{_lambda_.7} parent=0
    _
  %s8 = ssub.s32 1, %s6
  %s9 = scalar_select 0, %s8, %s6
  loop: start=0, step=1, limit=4
  $region2: #{_lambda_.7} parent=0 // loop_pre_header
    _
  $region3: #{_lambda_.7} parent=0 // loop_header
    %s11 = sphi 0, %s15
    %p12 = scmp.ge.s32.totalorder %s11, 4
    %s21 = sphi 0, %s23
    %s24 = sphi 0, %s21
    %s25 = sphi 0, %s24
    %s41 = sphi 0, %s25
    %s45 = sphi 0, %s45
    %s47 = sphi 0, %s45
    %s48 = sphi 0, %s47
    %s62 = sphi 0, %s48
    %s66 = sphi 0, %s66
    %s68 = sphi 0, %s66
    %s69 = sphi 0, %s68
    %s83 = sphi 0, %s69
    %s89 = sphi 0, %s91
    %s92 = sphi 0, %s89
    %s93 = sphi 0, %s92
    %s109 = sphi 0, %s93
    %s115 = sphi 0, %s117
    %s118 = sphi 0, %s115
    %s119 = sphi 0, %s118
    %s135 = sphi 0, %s119
  $region4: #{_lambda_.7} parent=0 // loop_header_branch
    %14 = sbr.rel (%p12) target = $region8
  $region5: #{_lambda_.7} parent=0 // loop_body
    %s16 = ssub.s32 %s11, 1
    %s17 = ssub.s32 %s11, 2
    %s18 = sadd.s32 %s11, 1
    %s19 = ssub.s32 %s11, %s18
    %p20 = scmp.eq.s32.totalorder %s19, 0
    %s22 = sadd.s32 %s21, 1
    %s23 = scalar_select %p20, %s21, %s22
    %p26 = pneg %p20
    %p27 = scmp.eq.s32.totalorder %s11, 1
    %p28 = por %p26, %p27
    %p29 = scmp.ne.s32.totalorder %s21, %s24
    %p30 = scmp.eq.s32.totalorder %s11, 0
    %p31 = por %p29, %p30
    %p32 = scmp.ne.s32.totalorder %s21, %s24
    %p33 = scmp.eq.s32.totalorder %s16, 1
    %p34 = por %p32, %p33
    %p35 = scmp.ne.s32.totalorder %s24, %s25
    %p36 = scmp.eq.s32.totalorder %s16, 0
    %p37 = por %p35, %p36
    %p38 = scmp.ne.s32.totalorder %s24, %s25
    %p39 = scmp.eq.s32.totalorder %s17, 1
    %p40 = por %p38, %p39
    %p42 = scmp.ne.s32.totalorder %s25, %s41
    %p43 = scmp.eq.s32.totalorder %s17, 0
    %p44 = por %p42, %p43
    %s46 = sadd.s32 %s45, 1
    %p49 = scmp.eq.s32.totalorder %s11, 1
    %p50 = scmp.ne.s32.totalorder %s45, %s47
    %p51 = scmp.eq.s32.totalorder %s11, 0
    %p52 = por %p50, %p51
    %p53 = scmp.ne.s32.totalorder %s45, %s47
    %p54 = scmp.eq.s32.totalorder %s16, 1
    %p55 = por %p53, %p54
    %p56 = scmp.ne.s32.totalorder %s47, %s48
    %p57 = scmp.eq.s32.totalorder %s16, 0
    %p58 = por %p56, %p57
    %p59 = scmp.ne.s32.totalorder %s47, %s48
    %p60 = scmp.eq.s32.totalorder %s17, 1
    %p61 = por %p59, %p60
    %p63 = scmp.ne.s32.totalorder %s48, %s62
    %p64 = scmp.eq.s32.totalorder %s17, 0
    %p65 = por %p63, %p64
    %s67 = sadd.s32 %s66, 1
    %p70 = scmp.eq.s32.totalorder %s11, 1
    %p71 = scmp.ne.s32.totalorder %s66, %s68
    %p72 = scmp.eq.s32.totalorder %s11, 0
    %p73 = por %p71, %p72
    %p74 = scmp.ne.s32.totalorder %s66, %s68
    %p75 = scmp.eq.s32.totalorder %s16, 1
    %p76 = por %p74, %p75
    %p77 = scmp.ne.s32.totalorder %s68, %s69
    %p78 = scmp.eq.s32.totalorder %s16, 0
    %p79 = por %p77, %p78
    %p80 = scmp.ne.s32.totalorder %s68, %s69
    %p81 = scmp.eq.s32.totalorder %s17, 1
    %p82 = por %p80, %p81
    %p84 = scmp.ne.s32.totalorder %s69, %s83
    %p85 = scmp.eq.s32.totalorder %s17, 0
    %p86 = por %p84, %p85
    %s87 = ssub.s32 %s11, %s18
    %p88 = scmp.eq.s32.totalorder %s87, 0
    %s90 = sadd.s32 %s89, 1
    %s91 = scalar_select %p88, %s89, %s90
    %p94 = pneg %p88
    %p95 = scmp.eq.s32.totalorder %s11, 1
    %p96 = por %p94, %p95
    %p97 = scmp.ne.s32.totalorder %s89, %s92
    %p98 = scmp.eq.s32.totalorder %s11, 0
    %p99 = por %p97, %p98
    %p100 = scmp.ne.s32.totalorder %s89, %s92
    %p101 = scmp.eq.s32.totalorder %s16, 1
    %p102 = por %p100, %p101
    %p103 = scmp.ne.s32.totalorder %s92, %s93
    %p104 = scmp.eq.s32.totalorder %s16, 0
    %p105 = por %p103, %p104
    %p106 = scmp.ne.s32.totalorder %s92, %s93
    %p107 = scmp.eq.s32.totalorder %s17, 1
    %p108 = por %p106, %p107
    %p110 = scmp.ne.s32.totalorder %s93, %s109
    %p111 = scmp.eq.s32.totalorder %s17, 0
    %p112 = por %p110, %p111
    %s113 = ssub.s32 %s11, %s18
    %p114 = scmp.eq.s32.totalorder %s113, 0
    %s116 = sadd.s32 %s115, 1
    %s117 = scalar_select %p114, %s115, %s116
    %p120 = pneg %p114
    %p121 = scmp.eq.s32.totalorder %s11, 1
    %p122 = por %p120, %p121
    %p123 = scmp.ne.s32.totalorder %s115, %s118
    %p124 = scmp.eq.s32.totalorder %s11, 0
    %p125 = por %p123, %p124
    %p126 = scmp.ne.s32.totalorder %s115, %s118
    %p127 = scmp.eq.s32.totalorder %s16, 1
    %p128 = por %p126, %p127
    %p129 = scmp.ne.s32.totalorder %s118, %s119
    %p130 = scmp.eq.s32.totalorder %s16, 0
    %p131 = por %p129, %p130
    %p132 = scmp.ne.s32.totalorder %s118, %s119
    %p133 = scmp.eq.s32.totalorder %s17, 1
    %p134 = por %p132, %p133
    %p136 = scmp.ne.s32.totalorder %s119, %s135
    %p137 = scmp.eq.s32.totalorder %s17, 0
    %p138 = por %p136, %p137
    %p139 = scmp.le.s32.totalorder 1, %s11
    %p140 = scmp.lt.s32.totalorder %s11, 3
    %p141 = pnand %p139, %p140
    %p142 = pneg %p141
    // Predicated region
    $region9: #{_lambda_.7} parent=5 // pred_check
      _
    $region10: #{_lambda_.7} parent=5 // pred_check_branch
      %144 = sbr.rel (%p141) target = $region12
    $region11: #{_lambda_.7} parent=5 // pred_region
      %s145 = ssub.s32 %s11, 1
      // Predicated region
      $region13: #{_lambda_.7} parent=11 // pred_check
        %p146 = pneg %p58
      $region14: #{_lambda_.7} parent=11 // pred_check_branch
        %148 = sbr.rel (%p146) target = $region16
      $region15: #{_lambda_.7} parent=11 // pred_region
        _
      $region16: #{_lambda_.7} parent=11 // pred_fallthru
        _
      // Predicated region
      $region17: #{_lambda_.7} parent=11 // pred_check
        %p149 = pneg %p79
      $region18: #{_lambda_.7} parent=11 // pred_check_branch
        %151 = sbr.rel (%p149) target = $region20
      $region19: #{_lambda_.7} parent=11 // pred_region
        _
      $region20: #{_lambda_.7} parent=11 // pred_fallthru
        _
    $region12: #{_lambda_.7} parent=5 // pred_fallthru
      _
    %p152 = scmp.lt.s32.totalorder %s11, 2
    // Predicated region
    $region21: #{_lambda_.7} parent=5 // pred_check
      %p153 = pneg %p152
    $region22: #{_lambda_.7} parent=5 // pred_check_branch
      %155 = sbr.rel (%p153) target = $region24
    $region23: #{_lambda_.7} parent=5 // pred_region
      // Predicated region
      $region25: #{_lambda_.7} parent=23 // pred_check
        %p156 = pneg %p31
      $region26: #{_lambda_.7} parent=23 // pred_check_branch
        %158 = sbr.rel (%p156) target = $region28
      $region27: #{_lambda_.7} parent=23 // pred_region
        %p159 = scmp.lt.s32.totalorder %s11, 1
        %s160 = scalar_select %p159, %s11, 1
        %s161 = smul.addr %s160, 6
        %s162 = smul.addr %s161, 4
        %s163 = scalar_lea.vmem %s0, %s162
      $region28: #{_lambda_.7} parent=23 // pred_fallthru
        _
    $region24: #{_lambda_.7} parent=5 // pred_fallthru
      _
    %p164 = scmp.le.s32.totalorder 1, %s11
    %p165 = scmp.lt.s32.totalorder %s11, 3
    %p166 = pnand %p164, %p165
    %p167 = pneg %p166
    // Predicated region
    $region29: #{_lambda_.7} parent=5 // pred_check
      _
    $region30: #{_lambda_.7} parent=5 // pred_check_branch
      %169 = sbr.rel (%p166) target = $region32
    $region31: #{_lambda_.7} parent=5 // pred_region
      %s170 = ssub.s32 %s11, 1
      %p171 = scmp.lt.s32.totalorder %s16, 1
      %s172 = scalar_select %p171, %s16, 1
      %s173 = smul.addr %s172, 6
      %s174 = smul.addr %s173, 4
      %s175 = scalar_lea.vmem %s0, %s174
      %p176 = pneg %p37
      %p177 = pneg %p34
      %p178 = pneg %p58
      %p179 = pneg %p55
      %p180 = pneg %p79
      %p181 = pneg %p76
      %p182 = pneg %p105
      %p183 = pneg %p102
      %p184 = scmp.lt.s32.totalorder %s16, 1
      %s185 = scalar_select %p184, %s16, 1
      %s186 = smul.addr %s185, 4
      %s187 = smul.addr %s186, 4
      %s188 = scalar_lea.vmem %s3, %s187
      %p189 = pneg %p131
      %p190 = pneg %p128
      %p191 = scmp.lt.s32.totalorder %s16, 1
      %s192 = scalar_select %p191, %s16, 1
      %s193 = smul.addr %s192, 2
      %s194 = scalar_lea.vmem %s4, %s193
      %p195 = scmp.lt.s32.totalorder %s16, 1
      %s196 = scalar_select %p195, %s16, 1
      %s197 = smul.addr %s196, 6
      %s198 = smul.addr %s197, 4
      %s199 = scalar_lea.vmem %s0, %s198
      %p200 = scmp.lt.s32.totalorder %s16, 1
      %s201 = scalar_select %p200, %s16, 1
      %s202 = smul.addr %s201, 4
      %s203 = smul.addr %s202, 4
      %s204 = scalar_lea.vmem %s3, %s203
      %p205 = scmp.lt.s32.totalorder %s16, 1
      %s206 = scalar_select %p205, %s16, 1
      %s207 = smul.addr %s206, 2
      %s208 = scalar_lea.vmem %s4, %s207
      %v210 = vld [vmem:[%s199] sm:$0xf]
      %v211 = vld [vmem:[%s199 + $0x4] sm:$0xf]
      %v212 = vld [vmem:[%s199 + $0x8] sm:$0xf]
      %v213 = vld [vmem:[%s199 + $0xc] sm:$0xf]
      %v214 = vld [vmem:[%s1] sm:$0xf]
      %v215 = vld [vmem:[%s1 + $0x4] sm:$0xf]
      %v216 = vld [vmem:[%s1 + $0x8] sm:$0xf]
      %v217 = vld [vmem:[%s1 + $0xc] sm:$0xf]
      %v218 = vld [vmem:[%s1 + $0x10] sm:$0xf]
      %v219 = vld [vmem:[%s1 + $0x14] sm:$0xf]
      %v220 = vld [vmem:[%s1 + $0x18] sm:$0xf]
      %v221 = vld [vmem:[%s1 + $0x1c] sm:$0xf]
      %v222 = vld [vmem:[%s199 + $0x10] sm:$0x1]
      %s223 = scalar_lea.vmem %s1, 32
      %v224 = vld [vmem:[%s223] sm:$0xf]
      %v225 = vld [vmem:[%s223 + $0x4] sm:$0xf]
      %v226 = vld [vmem:[%s223 + $0x8] sm:$0xf]
      %v227 = vld [vmem:[%s223 + $0xc] sm:$0xf]
      %v228 = vld [vmem:[%s223 + $0x10] sm:$0xf]
      %v229 = vld [vmem:[%s223 + $0x14] sm:$0xf]
      %v230 = vld [vmem:[%s223 + $0x18] sm:$0xf]
      %v231 = vld [vmem:[%s223 + $0x1c] sm:$0xf]
      %v237 = vunpack.c.l.b16 %v210
      %v238 = vunpack.c.l.b16 %v211
      %v239 = vunpack.c.l.b16 %v212
      %v240 = vunpack.c.l.b16 %v213
      %v241 = vunpack.c.l.b16 %v222
      %v242 = vpack.c.b16 %v238, %v237
      %v243 = vpack.c.b16 %v240, %v239
      %v244 = vpack.c.b16 %v241, %v241
      %vm245 = vsmask.f32 7424
      %v247 = vshrl.u32 %v242, 16
      %v249 = vshll.u32 %v242, 16
      %v251 = vrot.slane %v249, 1
      %v252 = vor.u32 %v247, %v251
      %v254 = vshll.u32 %v243, 16
      %v256 = vrot.slane %v254, 1
      %v257 = vsel %vm245, %v252, %v256
      %v258 = vshrl.u32 %v243, 16
      %v260 = vor.u32 %v258, %v256
      %v262 = vshll.u32 %v244, 16
      %v264 = vrot.slane %v262, 1
      %v265 = vsel %vm245, %v260, %v264
      %v274 = vunpack.c.l.b16 %v224
      %v275 = vunpack.c.l.b16 %v225
      %v276 = vunpack.c.l.b16 %v226
      %v277 = vunpack.c.l.b16 %v227
      %v278 = vunpack.c.l.b16 %v228
      %v279 = vunpack.c.l.b16 %v229
      %v280 = vunpack.c.l.b16 %v230
      %v281 = vunpack.c.l.b16 %v231
      %v282 = vpack.c.b16 %v275, %v274
      %v283 = vpack.c.b16 %v277, %v276
      %v284 = vpack.c.b16 %v279, %v278
      %v285 = vpack.c.b16 %v281, %v280
      %vm290 = vcmask 523264
      %v292 = vsel %vm290, %v257, 0
      %v295 = vsel %vm290, %v265, 0
      %297 = vmatprep.subr.bf16.mxu0 0
      %298 = vmatpush1.bf16.msra.mxu0 %v282
      %299 = vmatprep.subr.bf16.mxu0 0
      %300 = vmatpush1.bf16.msra.mxu0 %v283
      %301 = vmatprep.subr.bf16.mxu0 0
      %302 = vmatpush1.bf16.msra.mxu0 %v284
      %303 = vmatprep.subr.bf16.mxu0 0
      %304 = vmatpush1.bf16.msra.mxu0 %v285
      %305 = vmatprep.subr.bf16.mxu0 0
      %306 = vmatpush1.bf16.msra.mxu0 0
      %307 = vmatprep.subr.bf16.mxu0 0
      %308 = vmatpush1.bf16.msra.mxu0 0
      %309 = vmatprep.subr.bf16.mxu0 0
      %310 = vmatpush1.bf16.msra.mxu0 0
      %311 = vmatprep.subr.bf16.mxu0 0
      %312 = vmatpush1.bf16.msra.mxu0 0
      %313 = vmatprep.subr.bf16.mxu0 0
      %314 = vmatpush1.bf16.msra.mxu0 0
      %315 = vmatprep.subr.bf16.mxu0 0
      %316 = vmatpush1.bf16.msra.mxu0 0
      %317 = vmatprep.subr.bf16.mxu0 0
      %318 = vmatpush1.bf16.msra.mxu0 0
      %319 = vmatprep.subr.bf16.mxu0 0
      %320 = vmatpush1.bf16.msra.mxu0 0
      %321 = vmatprep.subr.bf16.mxu0 0
      %322 = vmatpush1.bf16.msra.mxu0 0
      %323 = vmatprep.subr.bf16.mxu0 0
      %324 = vmatpush1.bf16.msra.mxu0 0
      %325 = vmatprep.subr.bf16.mxu0 0
      %326 = vmatpush1.bf16.msra.mxu0 0
      %327 = vmatprep.subr.bf16.mxu0 0
      %328 = vmatpush1.bf16.msra.mxu0 0
      %329 = vmatprep.mubr.bf16.mxu0 0
      %330 = vmatmul.mubr.bf16.gmra.mrb[0].mxu0 %v292
      %v331 = vpop.f32.mrb[0].mxu0
      %v332 = vadd.f32 0.0, %v331
      %v333 = vpop.f32.mrb[0].mxu0
      %v334 = vpop.f32.mrb[0].mxu0
      %v335 = vadd.f32 0.0, %v334
      %v336 = vpop.f32.mrb[0].mxu0
      %337 = vmatprep.mubr.bf16.mxu0 0
      %338 = vmatmul.mubr.bf16.gmra.mrb[0].mxu0 %v295
      %v339 = vpop.f32.mrb[0].mxu0
      %v340 = vadd.f32 0.0, %v339
      %v341 = vpop.f32.mrb[0].mxu0
      %v342 = vpop.f32.mrb[0].mxu0
      %v343 = vadd.f32 0.0, %v342
      %v344 = vpop.f32.mrb[0].mxu0
      %345 = vdwg.mxu0
      %v354 = vunpack.c.l.b16 %v214
      %v355 = vunpack.c.l.b16 %v215
      %v356 = vunpack.c.l.b16 %v216
      %v357 = vunpack.c.l.b16 %v217
      %v358 = vunpack.c.l.b16 %v218
      %v359 = vunpack.c.l.b16 %v219
      %v360 = vunpack.c.l.b16 %v220
      %v361 = vunpack.c.l.b16 %v221
      %v362 = vpack.c.b16 %v355, %v354
      %v363 = vpack.c.b16 %v357, %v356
      %v364 = vpack.c.b16 %v359, %v358
      %v365 = vpack.c.b16 %v361, %v360
      %v370 = vsel %vm290, %v242, 0
      %v372 = vsel %vm290, %v243, 0
      %374 = vmatprep.subr.bf16.mxu0 0
      %375 = vmatpush1.bf16.msra.mxu0 %v362
      %376 = vmatprep.subr.bf16.mxu0 0
      %377 = vmatpush1.bf16.msra.mxu0 %v363
      %378 = vmatprep.subr.bf16.mxu0 0
      %379 = vmatpush1.bf16.msra.mxu0 %v364
      %380 = vmatprep.subr.bf16.mxu0 0
      %381 = vmatpush1.bf16.msra.mxu0 %v365
      %382 = vmatprep.subr.bf16.mxu0 0
      %383 = vmatpush1.bf16.msra.mxu0 0
      %384 = vmatprep.subr.bf16.mxu0 0
      %385 = vmatpush1.bf16.msra.mxu0 0
      %386 = vmatprep.subr.bf16.mxu0 0
      %387 = vmatpush1.bf16.msra.mxu0 0
      %388 = vmatprep.subr.bf16.mxu0 0
      %389 = vmatpush1.bf16.msra.mxu0 0
      %390 = vmatprep.subr.bf16.mxu0 0
      %391 = vmatpush1.bf16.msra.mxu0 0
      %392 = vmatprep.subr.bf16.mxu0 0
      %393 = vmatpush1.bf16.msra.mxu0 0
      %394 = vmatprep.subr.bf16.mxu0 0
      %395 = vmatpush1.bf16.msra.mxu0 0
      %396 = vmatprep.subr.bf16.mxu0 0
      %397 = vmatpush1.bf16.msra.mxu0 0
      %398 = vmatprep.subr.bf16.mxu0 0
      %399 = vmatpush1.bf16.msra.mxu0 0
      %400 = vmatprep.subr.bf16.mxu0 0
      %401 = vmatpush1.bf16.msra.mxu0 0
      %402 = vmatprep.subr.bf16.mxu0 0
      %403 = vmatpush1.bf16.msra.mxu0 0
      %404 = vmatprep.subr.bf16.mxu0 0
      %405 = vmatpush1.bf16.msra.mxu0 0
      %406 = vmatprep.mubr.bf16.mxu0 0
      %407 = vmatmul.mubr.bf16.gmra.mrb[0].mxu0 %v370
      %v408 = vpop.f32.mrb[0].mxu0
      %v409 = vadd.f32 %v332, %v408
      %v410 = vpop.f32.mrb[0].mxu0
      %v411 = vpop.f32.mrb[0].mxu0
      %v412 = vadd.f32 %v335, %v411
      %v413 = vpop.f32.mrb[0].mxu0
      %414 = vmatprep.mubr.bf16.mxu0 0
      %415 = vmatmul.mubr.bf16.gmra.mrb[0].mxu0 %v372
      %v416 = vpop.f32.mrb[0].mxu0
      %v417 = vadd.f32 %v340, %v416
      %v418 = vpop.f32.mrb[0].mxu0
      %v419 = vpop.f32.mrb[0].mxu0
      %v420 = vadd.f32 %v343, %v419
      %v421 = vpop.f32.mrb[0].mxu0
      %422 = vdwg.mxu0
      %v423 = vld [vmem:[%s199 + $0x10] sm:$0xf]
      %s424 = scalar_lea.vmem %s1, 64
      %v425 = vld [vmem:[%s424] sm:$0xf]
      %v426 = vld [vmem:[%s424 + $0x4] sm:$0xf]
      %v427 = vld [vmem:[%s424 + $0x8] sm:$0xf]
      %v428 = vld [vmem:[%s424 + $0xc] sm:$0xf]
      %v429 = vld [vmem:[%s424 + $0x10] sm:$0xf]
      %v430 = vld [vmem:[%s424 + $0x14] sm:$0xf]
      %v431 = vld [vmem:[%s424 + $0x18] sm:$0xf]
      %v432 = vld [vmem:[%s424 + $0x1c] sm:$0xf]
      %v434 = vunpack.c.l.b16 %v423
      %v435 = vpack.c.b16 %v239, %v238
      %v436 = vpack.c.b16 %v434, %v240
      %v445 = vunpack.c.l.b16 %v425
      %v446 = vunpack.c.l.b16 %v426
      %v447 = vunpack.c.l.b16 %v427
      %v448 = vunpack.c.l.b16 %v428
      %v449 = vunpack.c.l.b16 %v429
      %v450 = vunpack.c.l.b16 %v430
      %v451 = vunpack.c.l.b16 %v431
      %v452 = vunpack.c.l.b16 %v432
      %v453 = vpack.c.b16 %v446, %v445
      %v454 = vpack.c.b16 %v448, %v447
      %v455 = vpack.c.b16 %v450, %v449
      %v456 = vpack.c.b16 %v452, %v451
      %v462 = vsel %vm290, %v435, 0
      %v465 = vsel %vm290, %v436, 0
      %467 = vmatprep.subr.bf16.mxu0 0
      %468 = vmatpush1.bf16.msra.mxu0 %v453
      %469 = vmatprep.subr.bf16.mxu0 0
      %470 = vmatpush1.bf16.msra.mxu0 %v454
      %471 = vmatprep.subr.bf16.mxu0 0
      %472 = vmatpush1.bf16.msra.mxu0 %v455
      %473 = vmatprep.subr.bf16.mxu0 0
      %474 = vmatpush1.bf16.msra.mxu0 %v456
      %475 = vmatprep.subr.bf16.mxu0 0
      %476 = vmatpush1.bf16.msra.mxu0 0
      %477 = vmatprep.subr.bf16.mxu0 0
      %478 = vmatpush1.bf16.msra.mxu0 0
      %479 = vmatprep.subr.bf16.mxu0 0
      %480 = vmatpush1.bf16.msra.mxu0 0
      %481 = vmatprep.subr.bf16.mxu0 0
      %482 = vmatpush1.bf16.msra.mxu0 0
      %483 = vmatprep.subr.bf16.mxu0 0
      %484 = vmatpush1.bf16.msra.mxu0 0
      %485 = vmatprep.subr.bf16.mxu0 0
      %486 = vmatpush1.bf16.msra.mxu0 0
      %487 = vmatprep.subr.bf16.mxu0 0
      %488 = vmatpush1.bf16.msra.mxu0 0
      %489 = vmatprep.subr.bf16.mxu0 0
      %490 = vmatpush1.bf16.msra.mxu0 0
      %491 = vmatprep.subr.bf16.mxu0 0
      %492 = vmatpush1.bf16.msra.mxu0 0
      %493 = vmatprep.subr.bf16.mxu0 0
      %494 = vmatpush1.bf16.msra.mxu0 0
      %495 = vmatprep.subr.bf16.mxu0 0
      %496 = vmatpush1.bf16.msra.mxu0 0
      %497 = vmatprep.subr.bf16.mxu0 0
      %498 = vmatpush1.bf16.msra.mxu0 0
      %499 = vmatprep.mubr.bf16.mxu0 0
      %500 = vmatmul.mubr.bf16.gmra.mrb[0].mxu0 %v462
      %v501 = vpop.f32.mrb[0].mxu0
      %v502 = vadd.f32 0.0, %v501
      %v503 = vpop.f32.mrb[0].mxu0
      %v504 = vpop.f32.mrb[0].mxu0
      %v505 = vadd.f32 0.0, %v504
      %v506 = vpop.f32.mrb[0].mxu0
      %507 = vmatprep.mubr.bf16.mxu0 0
      %508 = vmatmul.mubr.bf16.gmra.mrb[0].mxu0 %v465
      %v509 = vpop.f32.mrb[0].mxu0
      %v510 = vadd.f32 0.0, %v509
      %v511 = vpop.f32.mrb[0].mxu0
      %v512 = vpop.f32.mrb[0].mxu0
      %v513 = vadd.f32 0.0, %v512
      %v514 = vpop.f32.mrb[0].mxu0
      %515 = vdwg.mxu0
      %v516 = vadd.f32 %v409, %v502
      %v517 = vadd.f32 %v412, %v505
      %v518 = vadd.f32 %v417, %v510
      %v519 = vadd.f32 %v420, %v513
      %v520 = vld [vmem:[%s199 + $0x4] sm:$0xf]
      %v521 = vld [vmem:[%s199 + $0x8] sm:$0xf]
      %v522 = vld [vmem:[%s199 + $0xc] sm:$0xf]
      %v523 = vld [vmem:[%s199 + $0x10] sm:$0xf]
      %v524 = vld [vmem:[%s199 + $0x14] sm:$0x1]
      %s525 = scalar_lea.vmem %s1, 96
      %v526 = vld [vmem:[%s525] sm:$0xf]
      %v527 = vld [vmem:[%s525 + $0x4] sm:$0xf]
      %v528 = vld [vmem:[%s525 + $0x8] sm:$0xf]
      %v529 = vld [vmem:[%s525 + $0xc] sm:$0xf]
      %v530 = vld [vmem:[%s525 + $0x10] sm:$0xf]
      %v531 = vld [vmem:[%s525 + $0x14] sm:$0xf]
      %v532 = vld [vmem:[%s525 + $0x18] sm:$0xf]
      %v533 = vld [vmem:[%s525 + $0x1c] sm:$0xf]
      %v539 = vunpack.c.l.b16 %v520
      %v540 = vunpack.c.l.b16 %v521
      %v541 = vunpack.c.l.b16 %v522
      %v542 = vunpack.c.l.b16 %v523
      %v543 = vunpack.c.l.b16 %v524
      %v544 = vpack.c.b16 %v540, %v539
      %v545 = vpack.c.b16 %v542, %v541
      %v546 = vpack.c.b16 %v543, %v543
      %v548 = vshrl.u32 %v544, 16
      %v550 = vshll.u32 %v544, 16
      %v552 = vrot.slane %v550, 1
      %v553 = vor.u32 %v548, %v552
      %v555 = vshll.u32 %v545, 16
      %v557 = vrot.slane %v555, 1
      %v558 = vsel %vm245, %v553, %v557
      %v559 = vshrl.u32 %v545, 16
      %v561 = vor.u32 %v559, %v557
      %v563 = vshll.u32 %v546, 16
      %v565 = vrot.slane %v563, 1
      %v566 = vsel %vm245, %v561, %v565
      %v575 = vunpack.c.l.b16 %v526
      %v576 = vunpack.c.l.b16 %v527
      %v577 = vunpack.c.l.b16 %v528
      %v578 = vunpack.c.l.b16 %v529
      %v579 = vunpack.c.l.b16 %v530
      %v580 = vunpack.c.l.b16 %v531
      %v581 = vunpack.c.l.b16 %v532
      %v582 = vunpack.c.l.b16 %v533
      %v583 = vpack.c.b16 %v576, %v575
      %v584 = vpack.c.b16 %v578, %v577
      %v585 = vpack.c.b16 %v580, %v579
      %v586 = vpack.c.b16 %v582, %v581
      %v592 = vsel %vm290, %v558, 0
      %v595 = vsel %vm290, %v566, 0
      %597 = vmatprep.subr.bf16.mxu0 0
      %598 = vmatpush1.bf16.msra.mxu0 %v583
      %599 = vmatprep.subr.bf16.mxu0 0
      %600 = vmatpush1.bf16.msra.mxu0 %v584
      %601 = vmatprep.subr.bf16.mxu0 0
      %602 = vmatpush1.bf16.msra.mxu0 %v585
      %603 = vmatprep.subr.bf16.mxu0 0
      %604 = vmatpush1.bf16.msra.mxu0 %v586
      %605 = vmatprep.subr.bf16.mxu0 0
      %606 = vmatpush1.bf16.msra.mxu0 0
      %607 = vmatprep.subr.bf16.mxu0 0
      %608 = vmatpush1.bf16.msra.mxu0 0
      %609 = vmatprep.subr.bf16.mxu0 0
      %610 = vmatpush1.bf16.msra.mxu0 0
      %611 = vmatprep.subr.bf16.mxu0 0
      %612 = vmatpush1.bf16.msra.mxu0 0
      %613 = vmatprep.subr.bf16.mxu0 0
      %614 = vmatpush1.bf16.msra.mxu0 0
      %615 = vmatprep.subr.bf16.mxu0 0
      %616 = vmatpush1.bf16.msra.mxu0 0
      %617 = vmatprep.subr.bf16.mxu0 0
      %618 = vmatpush1.bf16.msra.mxu0 0
      %619 = vmatprep.subr.bf16.mxu0 0
      %620 = vmatpush1.bf16.msra.mxu0 0
      %621 = vmatprep.subr.bf16.mxu0 0
      %622 = vmatpush1.bf16.msra.mxu0 0
      %623 = vmatprep.subr.bf16.mxu0 0
      %624 = vmatpush1.bf16.msra.mxu0 0
      %625 = vmatprep.subr.bf16.mxu0 0
      %626 = vmatpush1.bf16.msra.mxu0 0
      %627 = vmatprep.subr.bf16.mxu0 0
      %628 = vmatpush1.bf16.msra.mxu0 0
      %629 = vmatprep.mubr.bf16.mxu0 0
      %630 = vmatmul.mubr.bf16.gmra.mrb[0].mxu0 %v592
      %v631 = vpop.f32.mrb[0].mxu0
      %v632 = vadd.f32 0.0, %v631
      %v633 = vpop.f32.mrb[0].mxu0
      %v634 = vpop.f32.mrb[0].mxu0
      %v635 = vadd.f32 0.0, %v634
      %v636 = vpop.f32.mrb[0].mxu0
      %637 = vmatprep.mubr.bf16.mxu0 0
      %638 = vmatmul.mubr.bf16.gmra.mrb[0].mxu0 %v595
      %v639 = vpop.f32.mrb[0].mxu0
      %v640 = vadd.f32 0.0, %v639
      %v641 = vpop.f32.mrb[0].mxu0
      %v642 = vpop.f32.mrb[0].mxu0
      %v643 = vadd.f32 0.0, %v642
      %v644 = vpop.f32.mrb[0].mxu0
      %645 = vdwg.mxu0
      %v646 = vadd.f32 %v516, %v632
      %v647 = vadd.f32 %v517, %v635
      %v648 = vadd.f32 %v518, %v640
      %v649 = vadd.f32 %v519, %v643
      %v650 = vpack.c.bf16 %v647, %v646
      %v651 = vpack.c.bf16 %v649, %v648
      %v654 = vunpack.c.l.b16 %v650
      %v655 = vunpack.c.h.b16 %v650
      %v656 = vunpack.c.l.b16 %v651
      %v657 = vunpack.c.h.b16 %v651
      %v658 = vpack.c.b16 %v654, %v654
      %v659 = vpack.c.b16 %v655, %v655
      %v660 = vpack.c.b16 %v656, %v656
      %v661 = vpack.c.b16 %v657, %v657
      %666 = vst [vmem:[%s204] sm:$0xf] %v658
      %667 = vst [vmem:[%s204 + $0x4] sm:$0xf] %v659
      %668 = vst [vmem:[%s204 + $0x8] sm:$0xf] %v660
      %669 = vst [vmem:[%s204 + $0xc] sm:$0xf] %v661
      %v670 = vld [vmem:[%s2] sm:$0xff]
      %v671 = vld [vmem:[%s2 + $0x8] sm:$0xff]
      %v672 = vld [vmem:[%s2 + $0x10] sm:$0xff]
      %v673 = vld [vmem:[%s2 + $0x18] sm:$0xff]
      %675 = vset.pattern.permute.xlu0 0
      %676 = vperm.xlu0 %675, %v670
      %v677 = vpop.permute.xlu0 %676
      %680 = vset.pattern.permute.xlu0 0
      %681 = vperm.xlu0 %680, %v671
      %v682 = vpop.permute.xlu0 %681
      %685 = vset.pattern.permute.xlu0 0
      %686 = vperm.xlu0 %685, %v672
      %v687 = vpop.permute.xlu0 %686
      %690 = vset.pattern.permute.xlu0 0
      %691 = vperm.xlu0 %690, %v673
      %v692 = vpop.permute.xlu0 %691
      %v694 = vmul.f32 %v646, %v677
      %v695 = vmul.f32 %v647, %v682
      %v696 = vmul.f32 %v648, %v687
      %v697 = vmul.f32 %v649, %v692
      %v698 = vadd.f32 %v694, %v695
      %v699 = vadd.f32 %v698, %v696
      %v700 = vadd.f32 %v699, %v697
      %v701 = vrot.slane %v700, 4
      %v702 = vadd.f32 %v700, %v701
      %v703 = vrot.slane %v702, 2
      %v704 = vadd.f32 %v702, %v703
      %v705 = vrot.slane %v704, 1
      %v706 = vadd.f32 %v704, %v705
      %v707 = vadd.f32 %v706, 0.0
      %v708 = vmul.f32 %v694, %v646
      %v709 = vmul.f32 %v695, %v647
      %v710 = vmul.f32 %v696, %v648
      %v711 = vmul.f32 %v697, %v649
      %v712 = vadd.f32 %v708, %v709
      %v713 = vadd.f32 %v712, %v710
      %v714 = vadd.f32 %v713, %v711
      %v715 = vrot.slane %v714, 4
      %v716 = vadd.f32 %v714, %v715
      %v717 = vrot.slane %v716, 2
      %v718 = vadd.f32 %v716, %v717
      %v719 = vrot.slane %v718, 1
      %v720 = vadd.f32 %v718, %v719
      %v721 = vadd.f32 %v720, 0.0
      %vm722 = vcmask 1040384
      %v723 = vsel %vm722, %v707, %v721
      %724 = vst [vmem:[%s208] sm:$0x3] %v723
      %p725 = scmp.lt.s32.totalorder %s16, 1
      %s726 = scalar_select %p725, %s16, 1
      %s727 = smul.addr %s726, 4
      %s728 = smul.addr %s727, 4
      %s729 = scalar_lea.vmem %s3, %s728
      %p730 = scmp.lt.s32.totalorder %s16, 1
      %s731 = scalar_select %p730, %s16, 1
      %s732 = smul.addr %s731, 2
      %s733 = scalar_lea.vmem %s4, %s732
      // Predicated region
      $region33: #{_lambda_.7} parent=31 // pred_check
        %p734 = pneg %p102
      $region34: #{_lambda_.7} parent=31 // pred_check_branch
        %736 = sbr.rel (%p734) target = $region36
      $region35: #{_lambda_.7} parent=31 // pred_region
        _
      $region36: #{_lambda_.7} parent=31 // pred_fallthru
        _
      // Predicated region
      $region37: #{_lambda_.7} parent=31 // pred_check
        %p737 = pneg %p128
      $region38: #{_lambda_.7} parent=31 // pred_check_branch
        %739 = sbr.rel (%p737) target = $region40
      $region39: #{_lambda_.7} parent=31 // pred_region
        _
      $region40: #{_lambda_.7} parent=31 // pred_fallthru
        _
    $region32: #{_lambda_.7} parent=5 // pred_fallthru
      _
    %p740 = scmp.le.s32.totalorder 2, %s11
    // Predicated region
    $region41: #{_lambda_.7} parent=5 // pred_check
      %p741 = pneg %p740
    $region42: #{_lambda_.7} parent=5 // pred_check_branch
      %743 = sbr.rel (%p741) target = $region44
    $region43: #{_lambda_.7} parent=5 // pred_region
      %s744 = ssub.s32 %s11, 2
      // Predicated region
      $region45: #{_lambda_.7} parent=43 // pred_check
        %p745 = pneg %p108
      $region46: #{_lambda_.7} parent=43 // pred_check_branch
        %747 = sbr.rel (%p745) target = $region48
      $region47: #{_lambda_.7} parent=43 // pred_region
        %p748 = scmp.lt.s32.totalorder %s17, 1
        %s749 = scalar_select %p748, %s17, 1
        %s750 = smul.addr %s749, 4
        %s751 = smul.addr %s750, 4
        %s752 = scalar_lea.vmem %s3, %s751
      $region48: #{_lambda_.7} parent=43 // pred_fallthru
        _
      // Predicated region
      $region49: #{_lambda_.7} parent=43 // pred_check
        %p753 = pneg %p134
      $region50: #{_lambda_.7} parent=43 // pred_check_branch
        %755 = sbr.rel (%p753) target = $region52
      $region51: #{_lambda_.7} parent=43 // pred_region
        %p756 = scmp.lt.s32.totalorder %s17, 1
        %s757 = scalar_select %p756, %s17, 1
        %s758 = smul.addr %s757, 2
        %s759 = scalar_lea.vmem %s4, %s758
      $region52: #{_lambda_.7} parent=43 // pred_fallthru
        _
    $region44: #{_lambda_.7} parent=5 // pred_fallthru
      _
  $region6: #{_lambda_.7} parent=0 // loop_footer
    %s15 = sadd.s32 1, %s11
  $region7: #{_lambda_.7} parent=0 // loop_footer_branch
    %10 = sbr.rel target = $region3
  $region8: #{_lambda_.7} parent=0 // loop_exit
    _

// kernel: _lambda_.8
$region0: #{_lambda_.8}
  #allocation0 [shape = 'u32[]', space=smem, size = 0x4, offset = 0x4, fixed_abs, tag = 'smem constant byte address 0x4 - core index']
  #allocation1 [shape = 'u32[144,128]{1,0:T(1,128)}', space=vmem, size = 0x12000, scoped, tag = 'internal scratch']
  %s0 = inlined_call_operand.vmem [shape: bf16[2,51,32], index: 0, kind: input, shape index: {}]
  %s1 = inlined_call_operand.vmem [shape: bf16[16,32,128], index: 1, kind: input, shape index: {}]
  %s2 = inlined_call_operand.vmem [shape: f32[24,1], index: 2, kind: input, shape index: {}]
  %s3 = inlined_call_operand.vmem [shape: bf16[2,24,128], index: 3, kind: output, shape index: {0}]
  %s4 = inlined_call_operand.vmem [shape: f32[2,2,128], index: 4, kind: output, shape index: {1}]
  %5 = xla_tuple %s3, %s4
  %s6 = sld [smem:[#allocation0]]
  $region53: #{_lambda_.8} parent=0
    _
  %s8 = ssub.s32 1, %s6
  %s9 = scalar_select 0, %s8, %s6
  loop: start=0, step=1, limit=4
  $region2: #{_lambda_.8} parent=0 // loop_pre_header
    _
  $region3: #{_lambda_.8} parent=0 // loop_header
    %s11 = sphi 0, %s15
    %p12 = scmp.ge.s32.totalorder %s11, 4
    %s21 = sphi 0, %s23
    %s24 = sphi 0, %s21
    %s25 = sphi 0, %s24
    %s41 = sphi 0, %s25
    %s45 = sphi 0, %s45
    %s47 = sphi 0, %s45
    %s48 = sphi 0, %s47
    %s62 = sphi 0, %s48
    %s66 = sphi 0, %s66
    %s68 = sphi 0, %s66
    %s69 = sphi 0, %s68
    %s83 = sphi 0, %s69
    %s89 = sphi 0, %s91
    %s92 = sphi 0, %s89
    %s93 = sphi 0, %s92
    %s109 = sphi 0, %s93
    %s115 = sphi 0, %s117
    %s118 = sphi 0, %s115
    %s119 = sphi 0, %s118
    %s135 = sphi 0, %s119
  $region4: #{_lambda_.8} parent=0 // loop_header_branch
    %14 = sbr.rel (%p12) target = $region8
  $region5: #{_lambda_.8} parent=0 // loop_body
    %s16 = ssub.s32 %s11, 1
    %s17 = ssub.s32 %s11, 2
    %s18 = sadd.s32 %s11, 1
    %s19 = ssub.s32 %s11, %s18
    %p20 = scmp.eq.s32.totalorder %s19, 0
    %s22 = sadd.s32 %s21, 1
    %s23 = scalar_select %p20, %s21, %s22
    %p26 = pneg %p20
    %p27 = scmp.eq.s32.totalorder %s11, 1
    %p28 = por %p26, %p27
    %p29 = scmp.ne.s32.totalorder %s21, %s24
    %p30 = scmp.eq.s32.totalorder %s11, 0
    %p31 = por %p29, %p30
    %p32 = scmp.ne.s32.totalorder %s21, %s24
    %p33 = scmp.eq.s32.totalorder %s16, 1
    %p34 = por %p32, %p33
    %p35 = scmp.ne.s32.totalorder %s24, %s25
    %p36 = scmp.eq.s32.totalorder %s16, 0
    %p37 = por %p35, %p36
    %p38 = scmp.ne.s32.totalorder %s24, %s25
    %p39 = scmp.eq.s32.totalorder %s17, 1
    %p40 = por %p38, %p39
    %p42 = scmp.ne.s32.totalorder %s25, %s41
    %p43 = scmp.eq.s32.totalorder %s17, 0
    %p44 = por %p42, %p43
    %s46 = sadd.s32 %s45, 1
    %p49 = scmp.eq.s32.totalorder %s11, 1
    %p50 = scmp.ne.s32.totalorder %s45, %s47
    %p51 = scmp.eq.s32.totalorder %s11, 0
    %p52 = por %p50, %p51
    %p53 = scmp.ne.s32.totalorder %s45, %s47
    %p54 = scmp.eq.s32.totalorder %s16, 1
    %p55 = por %p53, %p54
    %p56 = scmp.ne.s32.totalorder %s47, %s48
    %p57 = scmp.eq.s32.totalorder %s16, 0
    %p58 = por %p56, %p57
    %p59 = scmp.ne.s32.totalorder %s47, %s48
    %p60 = scmp.eq.s32.totalorder %s17, 1
    %p61 = por %p59, %p60
    %p63 = scmp.ne.s32.totalorder %s48, %s62
    %p64 = scmp.eq.s32.totalorder %s17, 0
    %p65 = por %p63, %p64
    %s67 = sadd.s32 %s66, 1
    %p70 = scmp.eq.s32.totalorder %s11, 1
    %p71 = scmp.ne.s32.totalorder %s66, %s68
    %p72 = scmp.eq.s32.totalorder %s11, 0
    %p73 = por %p71, %p72
    %p74 = scmp.ne.s32.totalorder %s66, %s68
    %p75 = scmp.eq.s32.totalorder %s16, 1
    %p76 = por %p74, %p75
    %p77 = scmp.ne.s32.totalorder %s68, %s69
    %p78 = scmp.eq.s32.totalorder %s16, 0
    %p79 = por %p77, %p78
    %p80 = scmp.ne.s32.totalorder %s68, %s69
    %p81 = scmp.eq.s32.totalorder %s17, 1
    %p82 = por %p80, %p81
    %p84 = scmp.ne.s32.totalorder %s69, %s83
    %p85 = scmp.eq.s32.totalorder %s17, 0
    %p86 = por %p84, %p85
    %s87 = ssub.s32 %s11, %s18
    %p88 = scmp.eq.s32.totalorder %s87, 0
    %s90 = sadd.s32 %s89, 1
    %s91 = scalar_select %p88, %s89, %s90
    %p94 = pneg %p88
    %p95 = scmp.eq.s32.totalorder %s11, 1
    %p96 = por %p94, %p95
    %p97 = scmp.ne.s32.totalorder %s89, %s92
    %p98 = scmp.eq.s32.totalorder %s11, 0
    %p99 = por %p97, %p98
    %p100 = scmp.ne.s32.totalorder %s89, %s92
    %p101 = scmp.eq.s32.totalorder %s16, 1
    %p102 = por %p100, %p101
    %p103 = scmp.ne.s32.totalorder %s92, %s93
    %p104 = scmp.eq.s32.totalorder %s16, 0
    %p105 = por %p103, %p104
    %p106 = scmp.ne.s32.totalorder %s92, %s93
    %p107 = scmp.eq.s32.totalorder %s17, 1
    %p108 = por %p106, %p107
    %p110 = scmp.ne.s32.totalorder %s93, %s109
    %p111 = scmp.eq.s32.totalorder %s17, 0
    %p112 = por %p110, %p111
    %s113 = ssub.s32 %s11, %s18
    %p114 = scmp.eq.s32.totalorder %s113, 0
    %s116 = sadd.s32 %s115, 1
    %s117 = scalar_select %p114, %s115, %s116
    %p120 = pneg %p114
    %p121 = scmp.eq.s32.totalorder %s11, 1
    %p122 = por %p120, %p121
    %p123 = scmp.ne.s32.totalorder %s115, %s118
    %p124 = scmp.eq.s32.totalorder %s11, 0
    %p125 = por %p123, %p124
    %p126 = scmp.ne.s32.totalorder %s115, %s118
    %p127 = scmp.eq.s32.totalorder %s16, 1
    %p128 = por %p126, %p127
    %p129 = scmp.ne.s32.totalorder %s118, %s119
    %p130 = scmp.eq.s32.totalorder %s16, 0
    %p131 = por %p129, %p130
    %p132 = scmp.ne.s32.totalorder %s118, %s119
    %p133 = scmp.eq.s32.totalorder %s17, 1
    %p134 = por %p132, %p133
    %p136 = scmp.ne.s32.totalorder %s119, %s135
    %p137 = scmp.eq.s32.totalorder %s17, 0
    %p138 = por %p136, %p137
    %p139 = scmp.le.s32.totalorder 1, %s11
    %p140 = scmp.lt.s32.totalorder %s11, 3
    %p141 = pnand %p139, %p140
    %p142 = pneg %p141
    // Predicated region
    $region9: #{_lambda_.8} parent=5 // pred_check
      _
    $region10: #{_lambda_.8} parent=5 // pred_check_branch
      %144 = sbr.rel (%p141) target = $region12
    $region11: #{_lambda_.8} parent=5 // pred_region
      %s145 = ssub.s32 %s11, 1
      // Predicated region
      $region13: #{_lambda_.8} parent=11 // pred_check
        %p146 = pneg %p58
      $region14: #{_lambda_.8} parent=11 // pred_check_branch
        %148 = sbr.rel (%p146) target = $region16
      $region15: #{_lambda_.8} parent=11 // pred_region
        _
      $region16: #{_lambda_.8} parent=11 // pred_fallthru
        _
      // Predicated region
      $region17: #{_lambda_.8} parent=11 // pred_check
        %p149 = pneg %p79
      $region18: #{_lambda_.8} parent=11 // pred_check_branch
        %151 = sbr.rel (%p149) target = $region20
      $region19: #{_lambda_.8} parent=11 // pred_region
        _
      $region20: #{_lambda_.8} parent=11 // pred_fallthru
        _
    $region12: #{_lambda_.8} parent=5 // pred_fallthru
      _
    %p152 = scmp.lt.s32.totalorder %s11, 2
    // Predicated region
    $region21: #{_lambda_.8} parent=5 // pred_check
      %p153 = pneg %p152
    $region22: #{_lambda_.8} parent=5 // pred_check_branch
      %155 = sbr.rel (%p153) target = $region24
    $region23: #{_lambda_.8} parent=5 // pred_region
      // Predicated region
      $region25: #{_lambda_.8} parent=23 // pred_check
        %p156 = pneg %p31
      $region26: #{_lambda_.8} parent=23 // pred_check_branch
        %158 = sbr.rel (%p156) target = $region28
      $region27: #{_lambda_.8} parent=23 // pred_region
        %p159 = scmp.lt.s32.totalorder %s11, 1
        %s160 = scalar_select %p159, %s11, 1
        %s161 = smul.addr %s160, 7
        %s162 = smul.addr %s161, 4
        %s163 = scalar_lea.vmem %s0, %s162
      $region28: #{_lambda_.8} parent=23 // pred_fallthru
        _
    $region24: #{_lambda_.8} parent=5 // pred_fallthru
      _
    %p164 = scmp.le.s32.totalorder 1, %s11
    %p165 = scmp.lt.s32.totalorder %s11, 3
    %p166 = pnand %p164, %p165
    %p167 = pneg %p166
    // Predicated region
    $region29: #{_lambda_.8} parent=5 // pred_check
      _
    $region30: #{_lambda_.8} parent=5 // pred_check_branch
      %169 = sbr.rel (%p166) target = $region32
    $region31: #{_lambda_.8} parent=5 // pred_region
      %s170 = ssub.s32 %s11, 1
      %p171 = scmp.lt.s32.totalorder %s16, 1
      %s172 = scalar_select %p171, %s16, 1
      %s173 = smul.addr %s172, 7
      %s174 = smul.addr %s173, 4
      %s175 = scalar_lea.vmem %s0, %s174
      %p176 = pneg %p37
      %p177 = pneg %p34
      %p178 = pneg %p58
      %p179 = pneg %p55
      %p180 = pneg %p79
      %p181 = pneg %p76
      %p182 = pneg %p105
      %p183 = pneg %p102
      %p184 = scmp.lt.s32.totalorder %s16, 1
      %s185 = scalar_select %p184, %s16, 1
      %s186 = smul.addr %s185, 3
      %s187 = smul.addr %s186, 4
      %s188 = scalar_lea.vmem %s3, %s187
      %p189 = pneg %p131
      %p190 = pneg %p128
      %p191 = scmp.lt.s32.totalorder %s16, 1
      %s192 = scalar_select %p191, %s16, 1
      %s193 = smul.addr %s192, 2
      %s194 = scalar_lea.vmem %s4, %s193
      %p195 = scmp.lt.s32.totalorder %s16, 1
      %s196 = scalar_select %p195, %s16, 1
      %s197 = smul.addr %s196, 7
      %s198 = smul.addr %s197, 4
      %s199 = scalar_lea.vmem %s0, %s198
      %p200 = scmp.lt.s32.totalorder %s16, 1
      %s201 = scalar_select %p200, %s16, 1
      %s202 = smul.addr %s201, 3
      %s203 = smul.addr %s202, 4
      %s204 = scalar_lea.vmem %s3, %s203
      %p205 = scmp.lt.s32.totalorder %s16, 1
      %s206 = scalar_select %p205, %s16, 1
      %s207 = smul.addr %s206, 2
      %s208 = scalar_lea.vmem %s4, %s207
      %v210 = vld [vmem:[%s199] sm:$0xf]
      %v211 = vld [vmem:[%s199 + $0x4] sm:$0xf]
      %v212 = vld [vmem:[%s199 + $0x8] sm:$0xf]
      %v213 = vld [vmem:[%s1] sm:$0xf]
      %v214 = vld [vmem:[%s1 + $0x4] sm:$0xf]
      %v215 = vld [vmem:[%s1 + $0x8] sm:$0xf]
      %v216 = vld [vmem:[%s1 + $0xc] sm:$0xf]
      %v217 = vld [vmem:[%s199 + $0xc] sm:$0x1]
      %s218 = scalar_lea.vmem %s1, 16
      %v219 = vld [vmem:[%s218] sm:$0xf]
      %v220 = vld [vmem:[%s218 + $0x4] sm:$0xf]
      %v221 = vld [vmem:[%s218 + $0x8] sm:$0xf]
      %v222 = vld [vmem:[%s218 + $0xc] sm:$0xf]
      %v227 = vunpack.c.l.b16 %v210
      %v228 = vunpack.c.l.b16 %v211
      %v229 = vunpack.c.l.b16 %v212
      %v230 = vunpack.c.l.b16 %v217
      %v231 = vpack.c.b16 %v228, %v227
      %v232 = vpack.c.b16 %v230, %v229
      %vm233 = vsmask.f32 7424
      %v235 = vshrl.u32 %v231, 16
      %v237 = vshll.u32 %v231, 16
      %v239 = vrot.slane %v237, 1
      %v240 = vor.u32 %v235, %v239
      %v242 = vshll.u32 %v232, 16
      %v244 = vrot.slane %v242, 1
      %v245 = vsel %vm233, %v240, %v244
      %v246 = vshrl.u32 %v232, 16
      %v248 = vor.u32 %v246, %v244
      %v253 = vunpack.c.l.b16 %v219
      %v254 = vunpack.c.l.b16 %v220
      %v255 = vunpack.c.l.b16 %v221
      %v256 = vunpack.c.l.b16 %v222
      %v257 = vpack.c.b16 %v254, %v253
      %v258 = vpack.c.b16 %v256, %v255
      %vm261 = vcmask 261120
      %v263 = vsel %vm261, %v245, 0
      %v266 = vsel %vm261, %v248, 0
      %268 = vmatprep.subr.bf16.mxu0 0
      %269 = vmatpush1.bf16.msra.mxu0 %v257
      %270 = vmatprep.subr.bf16.mxu0 0
      %271 = vmatpush1.bf16.msra.mxu0 %v258
      %272 = vmatprep.subr.bf16.mxu0 0
      %273 = vmatpush1.bf16.msra.mxu0 0
      %274 = vmatprep.subr.bf16.mxu0 0
      %275 = vmatpush1.bf16.msra.mxu0 0
      %276 = vmatprep.subr.bf16.mxu0 0
      %277 = vmatpush1.bf16.msra.mxu0 0
      %278 = vmatprep.subr.bf16.mxu0 0
      %279 = vmatpush1.bf16.msra.mxu0 0
      %280 = vmatprep.subr.bf16.mxu0 0
      %281 = vmatpush1.bf16.msra.mxu0 0
      %282 = vmatprep.subr.bf16.mxu0 0
      %283 = vmatpush1.bf16.msra.mxu0 0
      %284 = vmatprep.subr.bf16.mxu0 0
      %285 = vmatpush1.bf16.msra.mxu0 0
      %286 = vmatprep.subr.bf16.mxu0 0
      %287 = vmatpush1.bf16.msra.mxu0 0
      %288 = vmatprep.subr.bf16.mxu0 0
      %289 = vmatpush1.bf16.msra.mxu0 0
      %290 = vmatprep.subr.bf16.mxu0 0
      %291 = vmatpush1.bf16.msra.mxu0 0
      %292 = vmatprep.subr.bf16.mxu0 0
      %293 = vmatpush1.bf16.msra.mxu0 0
      %294 = vmatprep.subr.bf16.mxu0 0
      %295 = vmatpush1.bf16.msra.mxu0 0
      %296 = vmatprep.subr.bf16.mxu0 0
      %297 = vmatpush1.bf16.msra.mxu0 0
      %298 = vmatprep.subr.bf16.mxu0 0
      %299 = vmatpush1.bf16.msra.mxu0 0
      %300 = vmatprep.mubr.bf16.mxu0 0
      %301 = vmatmul.mubr.bf16.gmra.mrb[0].mxu0 %v263
      %v302 = vpop.f32.mrb[0].mxu0
      %v303 = vadd.f32 0.0, %v302
      %v304 = vpop.f32.mrb[0].mxu0
      %v305 = vpop.f32.mrb[0].mxu0
      %v306 = vadd.f32 0.0, %v305
      %v307 = vpop.f32.mrb[0].mxu0
      %308 = vmatprep.mubr.bf16.mxu0 0
      %309 = vmatmul.mubr.bf16.gmra.mrb[0].mxu0 %v266
      %v310 = vpop.f32.mrb[0].mxu0
      %v311 = vadd.f32 0.0, %v310
      %v312 = vpop.f32.mrb[0].mxu0
      %v313 = vpop.f32.mrb[0].mxu0
      %v314 = vpop.f32.mrb[0].mxu0
      %315 = vdwg.mxu0
      %v316 = vpack.c.b16 %v229, %v229
      %v321 = vunpack.c.l.b16 %v213
      %v322 = vunpack.c.l.b16 %v214
      %v323 = vunpack.c.l.b16 %v215
      %v324 = vunpack.c.l.b16 %v216
      %v325 = vpack.c.b16 %v322, %v321
      %v326 = vpack.c.b16 %v324, %v323
      %v329 = vsel %vm261, %v231, 0
      %v332 = vsel %vm261, %v316, 0
      %334 = vmatprep.subr.bf16.mxu0 0
      %335 = vmatpush1.bf16.msra.mxu0 %v325
      %336 = vmatprep.subr.bf16.mxu0 0
      %337 = vmatpush1.bf16.msra.mxu0 %v326
      %338 = vmatprep.subr.bf16.mxu0 0
      %339 = vmatpush1.bf16.msra.mxu0 0
      %340 = vmatprep.subr.bf16.mxu0 0
      %341 = vmatpush1.bf16.msra.mxu0 0
      %342 = vmatprep.subr.bf16.mxu0 0
      %343 = vmatpush1.bf16.msra.mxu0 0
      %344 = vmatprep.subr.bf16.mxu0 0
      %345 = vmatpush1.bf16.msra.mxu0 0
      %346 = vmatprep.subr.bf16.mxu0 0
      %347 = vmatpush1.bf16.msra.mxu0 0
      %348 = vmatprep.subr.bf16.mxu0 0
      %349 = vmatpush1.bf16.msra.mxu0 0
      %350 = vmatprep.subr.bf16.mxu0 0
      %351 = vmatpush1.bf16.msra.mxu0 0
      %352 = vmatprep.subr.bf16.mxu0 0
      %353 = vmatpush1.bf16.msra.mxu0 0
      %354 = vmatprep.subr.bf16.mxu0 0
      %355 = vmatpush1.bf16.msra.mxu0 0
      %356 = vmatprep.subr.bf16.mxu0 0
      %357 = vmatpush1.bf16.msra.mxu0 0
      %358 = vmatprep.subr.bf16.mxu0 0
      %359 = vmatpush1.bf16.msra.mxu0 0
      %360 = vmatprep.subr.bf16.mxu0 0
      %361 = vmatpush1.bf16.msra.mxu0 0
      %362 = vmatprep.subr.bf16.mxu0 0
      %363 = vmatpush1.bf16.msra.mxu0 0
      %364 = vmatprep.subr.bf16.mxu0 0
      %365 = vmatpush1.bf16.msra.mxu0 0
      %366 = vmatprep.mubr.bf16.mxu0 0
      %367 = vmatmul.mubr.bf16.gmra.mrb[0].mxu0 %v329
      %v368 = vpop.f32.mrb[0].mxu0
      %v369 = vadd.f32 %v303, %v368
      %v370 = vpop.f32.mrb[0].mxu0
      %v371 = vpop.f32.mrb[0].mxu0
      %v372 = vadd.f32 %v306, %v371
      %v373 = vpop.f32.mrb[0].mxu0
      %374 = vmatprep.mubr.bf16.mxu0 0
      %375 = vmatmul.mubr.bf16.gmra.mrb[0].mxu0 %v332
      %v376 = vpop.f32.mrb[0].mxu0
      %v377 = vadd.f32 %v311, %v376
      %v378 = vpop.f32.mrb[0].mxu0
      %v379 = vpop.f32.mrb[0].mxu0
      %v380 = vpop.f32.mrb[0].mxu0
      %381 = vdwg.mxu0
      %v382 = vld [vmem:[%s199] sm:$0xe]
      %s383 = scalar_lea.vmem %s1, 32
      %v384 = vld [vmem:[%s383] sm:$0xf]
      %v385 = vld [vmem:[%s383 + $0x4] sm:$0xf]
      %v386 = vld [vmem:[%s383 + $0x8] sm:$0xf]
      %v387 = vld [vmem:[%s383 + $0xc] sm:$0xf]
      %v389 = vunpack.c.l.b16 %v382
      %v390 = vpack.c.b16 %v228, %v389
      %vm391 = vcmask 1046528
      %v392 = vrot.slane %v390, 1
      %v393 = vrot.slane %v232, 1
      %v394 = vsel %vm391, %v392, %v393
      %v399 = vunpack.c.l.b16 %v384
      %v400 = vunpack.c.l.b16 %v385
      %v401 = vunpack.c.l.b16 %v386
      %v402 = vunpack.c.l.b16 %v387
      %v403 = vpack.c.b16 %v400, %v399
      %v404 = vpack.c.b16 %v402, %v401
      %v408 = vsel %vm261, %v394, 0
      %v411 = vsel %vm261, %v393, 0
      %413 = vmatprep.subr.bf16.mxu0 0
      %414 = vmatpush1.bf16.msra.mxu0 %v403
      %415 = vmatprep.subr.bf16.mxu0 0
      %416 = vmatpush1.bf16.msra.mxu0 %v404
      %417 = vmatprep.subr.bf16.mxu0 0
      %418 = vmatpush1.bf16.msra.mxu0 0
      %419 = vmatprep.subr.bf16.mxu0 0
      %420 = vmatpush1.bf16.msra.mxu0 0
      %421 = vmatprep.subr.bf16.mxu0 0
      %422 = vmatpush1.bf16.msra.mxu0 0
      %423 = vmatprep.subr.bf16.mxu0 0
      %424 = vmatpush1.bf16.msra.mxu0 0
      %425 = vmatprep.subr.bf16.mxu0 0
      %426 = vmatpush1.bf16.msra.mxu0 0
      %427 = vmatprep.subr.bf16.mxu0 0
      %428 = vmatpush1.bf16.msra.mxu0 0
      %429 = vmatprep.subr.bf16.mxu0 0
      %430 = vmatpush1.bf16.msra.mxu0 0
      %431 = vmatprep.subr.bf16.mxu0 0
      %432 = vmatpush1.bf16.msra.mxu0 0
      %433 = vmatprep.subr.bf16.mxu0 0
      %434 = vmatpush1.bf16.msra.mxu0 0
      %435 = vmatprep.subr.bf16.mxu0 0
      %436 = vmatpush1.bf16.msra.mxu0 0
      %437 = vmatprep.subr.bf16.mxu0 0
      %438 = vmatpush1.bf16.msra.mxu0 0
      %439 = vmatprep.subr.bf16.mxu0 0
      %440 = vmatpush1.bf16.msra.mxu0 0
      %441 = vmatprep.subr.bf16.mxu0 0
      %442 = vmatpush1.bf16.msra.mxu0 0
      %443 = vmatprep.subr.bf16.mxu0 0
      %444 = vmatpush1.bf16.msra.mxu0 0
      %445 = vmatprep.mubr.bf16.mxu0 0
      %446 = vmatmul.mubr.bf16.gmra.mrb[0].mxu0 %v408
      %v447 = vpop.f32.mrb[0].mxu0
      %v448 = vadd.f32 0.0, %v447
      %v449 = vpop.f32.mrb[0].mxu0
      %v450 = vpop.f32.mrb[0].mxu0
      %v451 = vadd.f32 0.0, %v450
      %v452 = vpop.f32.mrb[0].mxu0
      %453 = vmatprep.mubr.bf16.mxu0 0
      %454 = vmatmul.mubr.bf16.gmra.mrb[0].mxu0 %v411
      %v455 = vpop.f32.mrb[0].mxu0
      %v456 = vadd.f32 0.0, %v455
      %v457 = vpop.f32.mrb[0].mxu0
      %v458 = vpop.f32.mrb[0].mxu0
      %v459 = vpop.f32.mrb[0].mxu0
      %460 = vdwg.mxu0
      %v461 = vadd.f32 %v369, %v448
      %v462 = vadd.f32 %v372, %v451
      %v463 = vadd.f32 %v377, %v456
      %v464 = vld [vmem:[%s199 + $0xc] sm:$0x3]
      %s465 = scalar_lea.vmem %s1, 48
      %v466 = vld [vmem:[%s465] sm:$0xf]
      %v467 = vld [vmem:[%s465 + $0x4] sm:$0xf]
      %v468 = vld [vmem:[%s465 + $0x8] sm:$0xf]
      %v469 = vld [vmem:[%s465 + $0xc] sm:$0xf]
      %v471 = vunpack.c.l.b16 %v464
      %v472 = vpack.c.b16 %v471, %v229
      %vm473 = vsmask.f32 6400
      %v475 = vshrl.u32 %v390, 16
      %v477 = vrot.slane %v475, 1
      %v478 = vshll.u32 %v390, 16
      %v480 = vrot.slane %v478, 2
      %v481 = vor.u32 %v477, %v480
      %v483 = vshrl.u32 %v472, 16
      %v485 = vrot.slane %v483, 1
      %v486 = vshll.u32 %v472, 16
      %v488 = vrot.slane %v486, 2
      %v489 = vor.u32 %v485, %v488
      %v490 = vsel %vm473, %v481, %v489
      %v495 = vunpack.c.l.b16 %v466
      %v496 = vunpack.c.l.b16 %v467
      %v497 = vunpack.c.l.b16 %v468
      %v498 = vunpack.c.l.b16 %v469
      %v499 = vpack.c.b16 %v496, %v495
      %v500 = vpack.c.b16 %v498, %v497
      %v504 = vsel %vm261, %v490, 0
      %v507 = vsel %vm261, %v489, 0
      %509 = vmatprep.subr.bf16.mxu0 0
      %510 = vmatpush1.bf16.msra.mxu0 %v499
      %511 = vmatprep.subr.bf16.mxu0 0
      %512 = vmatpush1.bf16.msra.mxu0 %v500
      %513 = vmatprep.subr.bf16.mxu0 0
      %514 = vmatpush1.bf16.msra.mxu0 0
      %515 = vmatprep.subr.bf16.mxu0 0
      %516 = vmatpush1.bf16.msra.mxu0 0
      %517 = vmatprep.subr.bf16.mxu0 0
      %518 = vmatpush1.bf16.msra.mxu0 0
      %519 = vmatprep.subr.bf16.mxu0 0
      %520 = vmatpush1.bf16.msra.mxu0 0
      %521 = vmatprep.subr.bf16.mxu0 0
      %522 = vmatpush1.bf16.msra.mxu0 0
      %523 = vmatprep.subr.bf16.mxu0 0
      %524 = vmatpush1.bf16.msra.mxu0 0
      %525 = vmatprep.subr.bf16.mxu0 0
      %526 = vmatpush1.bf16.msra.mxu0 0
      %527 = vmatprep.subr.bf16.mxu0 0
      %528 = vmatpush1.bf16.msra.mxu0 0
      %529 = vmatprep.subr.bf16.mxu0 0
      %530 = vmatpush1.bf16.msra.mxu0 0
      %531 = vmatprep.subr.bf16.mxu0 0
      %532 = vmatpush1.bf16.msra.mxu0 0
      %533 = vmatprep.subr.bf16.mxu0 0
      %534 = vmatpush1.bf16.msra.mxu0 0
      %535 = vmatprep.subr.bf16.mxu0 0
      %536 = vmatpush1.bf16.msra.mxu0 0
      %537 = vmatprep.subr.bf16.mxu0 0
      %538 = vmatpush1.bf16.msra.mxu0 0
      %539 = vmatprep.subr.bf16.mxu0 0
      %540 = vmatpush1.bf16.msra.mxu0 0
      %541 = vmatprep.mubr.bf16.mxu0 0
      %542 = vmatmul.mubr.bf16.gmra.mrb[0].mxu0 %v504
      %v543 = vpop.f32.mrb[0].mxu0
      %v544 = vadd.f32 0.0, %v543
      %v545 = vpop.f32.mrb[0].mxu0
      %v546 = vpop.f32.mrb[0].mxu0
      %v547 = vadd.f32 0.0, %v546
      %v548 = vpop.f32.mrb[0].mxu0
      %549 = vmatprep.mubr.bf16.mxu0 0
      %550 = vmatmul.mubr.bf16.gmra.mrb[0].mxu0 %v507
      %v551 = vpop.f32.mrb[0].mxu0
      %v552 = vadd.f32 0.0, %v551
      %v553 = vpop.f32.mrb[0].mxu0
      %v554 = vpop.f32.mrb[0].mxu0
      %v555 = vpop.f32.mrb[0].mxu0
      %556 = vdwg.mxu0
      %v557 = vadd.f32 %v461, %v544
      %v558 = vadd.f32 %v462, %v547
      %v559 = vadd.f32 %v463, %v552
      %v560 = vld [vmem:[%s199 + $0xc] sm:$0xf]
      %s561 = scalar_lea.vmem %s1, 64
      %v562 = vld [vmem:[%s561] sm:$0xf]
      %v563 = vld [vmem:[%s561 + $0x4] sm:$0xf]
      %v564 = vld [vmem:[%s561 + $0x8] sm:$0xf]
      %v565 = vld [vmem:[%s561 + $0xc] sm:$0xf]
      %v567 = vunpack.c.l.b16 %v560
      %v568 = vpack.c.b16 %v229, %v228
      %v569 = vpack.c.b16 %v567, %v567
      %v574 = vunpack.c.l.b16 %v562
      %v575 = vunpack.c.l.b16 %v563
      %v576 = vunpack.c.l.b16 %v564
      %v577 = vunpack.c.l.b16 %v565
      %v578 = vpack.c.b16 %v575, %v574
      %v579 = vpack.c.b16 %v577, %v576
      %v583 = vsel %vm261, %v568, 0
      %v586 = vsel %vm261, %v569, 0
      %588 = vmatprep.subr.bf16.mxu0 0
      %589 = vmatpush1.bf16.msra.mxu0 %v578
      %590 = vmatprep.subr.bf16.mxu0 0
      %591 = vmatpush1.bf16.msra.mxu0 %v579
      %592 = vmatprep.subr.bf16.mxu0 0
      %593 = vmatpush1.bf16.msra.mxu0 0
      %594 = vmatprep.subr.bf16.mxu0 0
      %595 = vmatpush1.bf16.msra.mxu0 0
      %596 = vmatprep.subr.bf16.mxu0 0
      %597 = vmatpush1.bf16.msra.mxu0 0
      %598 = vmatprep.subr.bf16.mxu0 0
      %599 = vmatpush1.bf16.msra.mxu0 0
      %600 = vmatprep.subr.bf16.mxu0 0
      %601 = vmatpush1.bf16.msra.mxu0 0
      %602 = vmatprep.subr.bf16.mxu0 0
      %603 = vmatpush1.bf16.msra.mxu0 0
      %604 = vmatprep.subr.bf16.mxu0 0
      %605 = vmatpush1.bf16.msra.mxu0 0
      %606 = vmatprep.subr.bf16.mxu0 0
      %607 = vmatpush1.bf16.msra.mxu0 0
      %608 = vmatprep.subr.bf16.mxu0 0
      %609 = vmatpush1.bf16.msra.mxu0 0
      %610 = vmatprep.subr.bf16.mxu0 0
      %611 = vmatpush1.bf16.msra.mxu0 0
      %612 = vmatprep.subr.bf16.mxu0 0
      %613 = vmatpush1.bf16.msra.mxu0 0
      %614 = vmatprep.subr.bf16.mxu0 0
      %615 = vmatpush1.bf16.msra.mxu0 0
      %616 = vmatprep.subr.bf16.mxu0 0
      %617 = vmatpush1.bf16.msra.mxu0 0
      %618 = vmatprep.subr.bf16.mxu0 0
      %619 = vmatpush1.bf16.msra.mxu0 0
      %620 = vmatprep.mubr.bf16.mxu0 0
      %621 = vmatmul.mubr.bf16.gmra.mrb[0].mxu0 %v583
      %v622 = vpop.f32.mrb[0].mxu0
      %v623 = vadd.f32 0.0, %v622
      %v624 = vpop.f32.mrb[0].mxu0
      %v625 = vpop.f32.mrb[0].mxu0
      %v626 = vadd.f32 0.0, %v625
      %v627 = vpop.f32.mrb[0].mxu0
      %628 = vmatprep.mubr.bf16.mxu0 0
      %629 = vmatmul.mubr.bf16.gmra.mrb[0].mxu0 %v586
      %v630 = vpop.f32.mrb[0].mxu0
      %v631 = vadd.f32 0.0, %v630
      %v632 = vpop.f32.mrb[0].mxu0
      %v633 = vpop.f32.mrb[0].mxu0
      %v634 = vpop.f32.mrb[0].mxu0
      %635 = vdwg.mxu0
      %v636 = vadd.f32 %v557, %v623
      %v637 = vadd.f32 %v558, %v626
      %v638 = vadd.f32 %v559, %v631
      %v639 = vld [vmem:[%s199 + $0x4] sm:$0xf]
      %v640 = vld [vmem:[%s199 + $0x8] sm:$0xf]
      %v641 = vld [vmem:[%s199 + $0xc] sm:$0xf]
      %v642 = vld [vmem:[%s199 + $0x10] sm:$0x1]
      %s643 = scalar_lea.vmem %s1, 80
      %v644 = vld [vmem:[%s643] sm:$0xf]
      %v645 = vld [vmem:[%s643 + $0x4] sm:$0xf]
      %v646 = vld [vmem:[%s643 + $0x8] sm:$0xf]
      %v647 = vld [vmem:[%s643 + $0xc] sm:$0xf]
      %v652 = vunpack.c.l.b16 %v639
      %v653 = vunpack.c.l.b16 %v640
      %v654 = vunpack.c.l.b16 %v641
      %v655 = vunpack.c.l.b16 %v642
      %v656 = vpack.c.b16 %v653, %v652
      %v657 = vpack.c.b16 %v655, %v654
      %v659 = vshrl.u32 %v656, 16
      %v661 = vshll.u32 %v656, 16
      %v663 = vrot.slane %v661, 1
      %v664 = vor.u32 %v659, %v663
      %v666 = vshll.u32 %v657, 16
      %v668 = vrot.slane %v666, 1
      %v669 = vsel %vm233, %v664, %v668
      %v670 = vshrl.u32 %v657, 16
      %v672 = vor.u32 %v670, %v668
      %v677 = vunpack.c.l.b16 %v644
      %v678 = vunpack.c.l.b16 %v645
      %v679 = vunpack.c.l.b16 %v646
      %v680 = vunpack.c.l.b16 %v647
      %v681 = vpack.c.b16 %v678, %v677
      %v682 = vpack.c.b16 %v680, %v679
      %v686 = vsel %vm261, %v669, 0
      %v689 = vsel %vm261, %v672, 0
      %691 = vmatprep.subr.bf16.mxu0 0
      %692 = vmatpush1.bf16.msra.mxu0 %v681
      %693 = vmatprep.subr.bf16.mxu0 0
      %694 = vmatpush1.bf16.msra.mxu0 %v682
      %695 = vmatprep.subr.bf16.mxu0 0
      %696 = vmatpush1.bf16.msra.mxu0 0
      %697 = vmatprep.subr.bf16.mxu0 0
      %698 = vmatpush1.bf16.msra.mxu0 0
      %699 = vmatprep.subr.bf16.mxu0 0
      %700 = vmatpush1.bf16.msra.mxu0 0
      %701 = vmatprep.subr.bf16.mxu0 0
      %702 = vmatpush1.bf16.msra.mxu0 0
      %703 = vmatprep.subr.bf16.mxu0 0
      %704 = vmatpush1.bf16.msra.mxu0 0
      %705 = vmatprep.subr.bf16.mxu0 0
      %706 = vmatpush1.bf16.msra.mxu0 0
      %707 = vmatprep.subr.bf16.mxu0 0
      %708 = vmatpush1.bf16.msra.mxu0 0
      %709 = vmatprep.subr.bf16.mxu0 0
      %710 = vmatpush1.bf16.msra.mxu0 0
      %711 = vmatprep.subr.bf16.mxu0 0
      %712 = vmatpush1.bf16.msra.mxu0 0
      %713 = vmatprep.subr.bf16.mxu0 0
      %714 = vmatpush1.bf16.msra.mxu0 0
      %715 = vmatprep.subr.bf16.mxu0 0
      %716 = vmatpush1.bf16.msra.mxu0 0
      %717 = vmatprep.subr.bf16.mxu0 0
      %718 = vmatpush1.bf16.msra.mxu0 0
      %719 = vmatprep.subr.bf16.mxu0 0
      %720 = vmatpush1.bf16.msra.mxu0 0
      %721 = vmatprep.subr.bf16.mxu0 0
      %722 = vmatpush1.bf16.msra.mxu0 0
      %723 = vmatprep.mubr.bf16.mxu0 0
      %724 = vmatmul.mubr.bf16.gmra.mrb[0].mxu0 %v686
      %v725 = vpop.f32.mrb[0].mxu0
      %v726 = vadd.f32 0.0, %v725
      %v727 = vpop.f32.mrb[0].mxu0
      %v728 = vpop.f32.mrb[0].mxu0
      %v729 = vadd.f32 0.0, %v728
      %v730 = vpop.f32.mrb[0].mxu0
      %731 = vmatprep.mubr.bf16.mxu0 0
      %732 = vmatmul.mubr.bf16.gmra.mrb[0].mxu0 %v689
      %v733 = vpop.f32.mrb[0].mxu0
      %v734 = vadd.f32 0.0, %v733
      %v735 = vpop.f32.mrb[0].mxu0
      %v736 = vpop.f32.mrb[0].mxu0
      %v737 = vpop.f32.mrb[0].mxu0
      %738 = vdwg.mxu0
      %v739 = vadd.f32 %v636, %v726
      %v740 = vadd.f32 %v637, %v729
      %v741 = vadd.f32 %v638, %v734
      %v742 = vld [vmem:[%s199 + $0x4] sm:$0xe]
      %s743 = scalar_lea.vmem %s1, 96
      %v744 = vld [vmem:[%s743] sm:$0xf]
      %v745 = vld [vmem:[%s743 + $0x4] sm:$0xf]
      %v746 = vld [vmem:[%s743 + $0x8] sm:$0xf]
      %v747 = vld [vmem:[%s743 + $0xc] sm:$0xf]
      %v749 = vunpack.c.l.b16 %v742
      %v750 = vpack.c.b16 %v653, %v749
      %v751 = vrot.slane %v750, 1
      %v752 = vrot.slane %v657, 1
      %v753 = vsel %vm391, %v751, %v752
      %v758 = vunpack.c.l.b16 %v744
      %v759 = vunpack.c.l.b16 %v745
      %v760 = vunpack.c.l.b16 %v746
      %v761 = vunpack.c.l.b16 %v747
      %v762 = vpack.c.b16 %v759, %v758
      %v763 = vpack.c.b16 %v761, %v760
      %v767 = vsel %vm261, %v753, 0
      %v770 = vsel %vm261, %v752, 0
      %772 = vmatprep.subr.bf16.mxu0 0
      %773 = vmatpush1.bf16.msra.mxu0 %v762
      %774 = vmatprep.subr.bf16.mxu0 0
      %775 = vmatpush1.bf16.msra.mxu0 %v763
      %776 = vmatprep.subr.bf16.mxu0 0
      %777 = vmatpush1.bf16.msra.mxu0 0
      %778 = vmatprep.subr.bf16.mxu0 0
      %779 = vmatpush1.bf16.msra.mxu0 0
      %780 = vmatprep.subr.bf16.mxu0 0
      %781 = vmatpush1.bf16.msra.mxu0 0
      %782 = vmatprep.subr.bf16.mxu0 0
      %783 = vmatpush1.bf16.msra.mxu0 0
      %784 = vmatprep.subr.bf16.mxu0 0
      %785 = vmatpush1.bf16.msra.mxu0 0
      %786 = vmatprep.subr.bf16.mxu0 0
      %787 = vmatpush1.bf16.msra.mxu0 0
      %788 = vmatprep.subr.bf16.mxu0 0
      %789 = vmatpush1.bf16.msra.mxu0 0
      %790 = vmatprep.subr.bf16.mxu0 0
      %791 = vmatpush1.bf16.msra.mxu0 0
      %792 = vmatprep.subr.bf16.mxu0 0
      %793 = vmatpush1.bf16.msra.mxu0 0
      %794 = vmatprep.subr.bf16.mxu0 0
      %795 = vmatpush1.bf16.msra.mxu0 0
      %796 = vmatprep.subr.bf16.mxu0 0
      %797 = vmatpush1.bf16.msra.mxu0 0
      %798 = vmatprep.subr.bf16.mxu0 0
      %799 = vmatpush1.bf16.msra.mxu0 0
      %800 = vmatprep.subr.bf16.mxu0 0
      %801 = vmatpush1.bf16.msra.mxu0 0
      %802 = vmatprep.subr.bf16.mxu0 0
      %803 = vmatpush1.bf16.msra.mxu0 0
      %804 = vmatprep.mubr.bf16.mxu0 0
      %805 = vmatmul.mubr.bf16.gmra.mrb[0].mxu0 %v767
      %v806 = vpop.f32.mrb[0].mxu0
      %v807 = vadd.f32 0.0, %v806
      %v808 = vpop.f32.mrb[0].mxu0
      %v809 = vpop.f32.mrb[0].mxu0
      %v810 = vadd.f32 0.0, %v809
      %v811 = vpop.f32.mrb[0].mxu0
      %812 = vmatprep.mubr.bf16.mxu0 0
      %813 = vmatmul.mubr.bf16.gmra.mrb[0].mxu0 %v770
      %v814 = vpop.f32.mrb[0].mxu0
      %v815 = vadd.f32 0.0, %v814
      %v816 = vpop.f32.mrb[0].mxu0
      %v817 = vpop.f32.mrb[0].mxu0
      %v818 = vpop.f32.mrb[0].mxu0
      %819 = vdwg.mxu0
      %v820 = vadd.f32 %v739, %v807
      %v821 = vadd.f32 %v740, %v810
      %v822 = vadd.f32 %v741, %v815
      %v823 = vld [vmem:[%s199 + $0x10] sm:$0x3]
      %s824 = scalar_lea.vmem %s1, 112
      %v825 = vld [vmem:[%s824] sm:$0xf]
      %v826 = vld [vmem:[%s824 + $0x4] sm:$0xf]
      %v827 = vld [vmem:[%s824 + $0x8] sm:$0xf]
      %v828 = vld [vmem:[%s824 + $0xc] sm:$0xf]
      %v830 = vunpack.c.l.b16 %v823
      %v831 = vpack.c.b16 %v830, %v654
      %v833 = vshrl.u32 %v750, 16
      %v835 = vrot.slane %v833, 1
      %v836 = vshll.u32 %v750, 16
      %v838 = vrot.slane %v836, 2
      %v839 = vor.u32 %v835, %v838
      %v841 = vshrl.u32 %v831, 16
      %v843 = vrot.slane %v841, 1
      %v844 = vshll.u32 %v831, 16
      %v846 = vrot.slane %v844, 2
      %v847 = vor.u32 %v843, %v846
      %v848 = vsel %vm473, %v839, %v847
      %v853 = vunpack.c.l.b16 %v825
      %v854 = vunpack.c.l.b16 %v826
      %v855 = vunpack.c.l.b16 %v827
      %v856 = vunpack.c.l.b16 %v828
      %v857 = vpack.c.b16 %v854, %v853
      %v858 = vpack.c.b16 %v856, %v855
      %v862 = vsel %vm261, %v848, 0
      %v865 = vsel %vm261, %v847, 0
      %867 = vmatprep.subr.bf16.mxu0 0
      %868 = vmatpush1.bf16.msra.mxu0 %v857
      %869 = vmatprep.subr.bf16.mxu0 0
      %870 = vmatpush1.bf16.msra.mxu0 %v858
      %871 = vmatprep.subr.bf16.mxu0 0
      %872 = vmatpush1.bf16.msra.mxu0 0
      %873 = vmatprep.subr.bf16.mxu0 0
      %874 = vmatpush1.bf16.msra.mxu0 0
      %875 = vmatprep.subr.bf16.mxu0 0
      %876 = vmatpush1.bf16.msra.mxu0 0
      %877 = vmatprep.subr.bf16.mxu0 0
      %878 = vmatpush1.bf16.msra.mxu0 0
      %879 = vmatprep.subr.bf16.mxu0 0
      %880 = vmatpush1.bf16.msra.mxu0 0
      %881 = vmatprep.subr.bf16.mxu0 0
      %882 = vmatpush1.bf16.msra.mxu0 0
      %883 = vmatprep.subr.bf16.mxu0 0
      %884 = vmatpush1.bf16.msra.mxu0 0
      %885 = vmatprep.subr.bf16.mxu0 0
      %886 = vmatpush1.bf16.msra.mxu0 0
      %887 = vmatprep.subr.bf16.mxu0 0
      %888 = vmatpush1.bf16.msra.mxu0 0
      %889 = vmatprep.subr.bf16.mxu0 0
      %890 = vmatpush1.bf16.msra.mxu0 0
      %891 = vmatprep.subr.bf16.mxu0 0
      %892 = vmatpush1.bf16.msra.mxu0 0
      %893 = vmatprep.subr.bf16.mxu0 0
      %894 = vmatpush1.bf16.msra.mxu0 0
      %895 = vmatprep.subr.bf16.mxu0 0
      %896 = vmatpush1.bf16.msra.mxu0 0
      %897 = vmatprep.subr.bf16.mxu0 0
      %898 = vmatpush1.bf16.msra.mxu0 0
      %899 = vmatprep.mubr.bf16.mxu0 0
      %900 = vmatmul.mubr.bf16.gmra.mrb[0].mxu0 %v862
      %v901 = vpop.f32.mrb[0].mxu0
      %v902 = vadd.f32 0.0, %v901
      %v903 = vpop.f32.mrb[0].mxu0
      %v904 = vpop.f32.mrb[0].mxu0
      %v905 = vadd.f32 0.0, %v904
      %v906 = vpop.f32.mrb[0].mxu0
      %907 = vmatprep.mubr.bf16.mxu0 0
      %908 = vmatmul.mubr.bf16.gmra.mrb[0].mxu0 %v865
      %v909 = vpop.f32.mrb[0].mxu0
      %v910 = vadd.f32 0.0, %v909
      %v911 = vpop.f32.mrb[0].mxu0
      %v912 = vpop.f32.mrb[0].mxu0
      %v913 = vpop.f32.mrb[0].mxu0
      %914 = vdwg.mxu0
      %v915 = vadd.f32 %v820, %v902
      %v916 = vadd.f32 %v821, %v905
      %v917 = vadd.f32 %v822, %v910
      %v918 = vld [vmem:[%s199 + $0x10] sm:$0xf]
      %s919 = scalar_lea.vmem %s1, 128
      %v920 = vld [vmem:[%s919] sm:$0xf]
      %v921 = vld [vmem:[%s919 + $0x4] sm:$0xf]
      %v922 = vld [vmem:[%s919 + $0x8] sm:$0xf]
      %v923 = vld [vmem:[%s919 + $0xc] sm:$0xf]
      %v925 = vunpack.c.l.b16 %v918
      %v926 = vpack.c.b16 %v654, %v653
      %v927 = vpack.c.b16 %v925, %v925
      %v932 = vunpack.c.l.b16 %v920
      %v933 = vunpack.c.l.b16 %v921
      %v934 = vunpack.c.l.b16 %v922
      %v935 = vunpack.c.l.b16 %v923
      %v936 = vpack.c.b16 %v933, %v932
      %v937 = vpack.c.b16 %v935, %v934
      %v941 = vsel %vm261, %v926, 0
      %v944 = vsel %vm261, %v927, 0
      %946 = vmatprep.subr.bf16.mxu0 0
      %947 = vmatpush1.bf16.msra.mxu0 %v936
      %948 = vmatprep.subr.bf16.mxu0 0
      %949 = vmatpush1.bf16.msra.mxu0 %v937
      %950 = vmatprep.subr.bf16.mxu0 0
      %951 = vmatpush1.bf16.msra.mxu0 0
      %952 = vmatprep.subr.bf16.mxu0 0
      %953 = vmatpush1.bf16.msra.mxu0 0
      %954 = vmatprep.subr.bf16.mxu0 0
      %955 = vmatpush1.bf16.msra.mxu0 0
      %956 = vmatprep.subr.bf16.mxu0 0
      %957 = vmatpush1.bf16.msra.mxu0 0
      %958 = vmatprep.subr.bf16.mxu0 0
      %959 = vmatpush1.bf16.msra.mxu0 0
      %960 = vmatprep.subr.bf16.mxu0 0
      %961 = vmatpush1.bf16.msra.mxu0 0
      %962 = vmatprep.subr.bf16.mxu0 0
      %963 = vmatpush1.bf16.msra.mxu0 0
      %964 = vmatprep.subr.bf16.mxu0 0
      %965 = vmatpush1.bf16.msra.mxu0 0
      %966 = vmatprep.subr.bf16.mxu0 0
      %967 = vmatpush1.bf16.msra.mxu0 0
      %968 = vmatprep.subr.bf16.mxu0 0
      %969 = vmatpush1.bf16.msra.mxu0 0
      %970 = vmatprep.subr.bf16.mxu0 0
      %971 = vmatpush1.bf16.msra.mxu0 0
      %972 = vmatprep.subr.bf16.mxu0 0
      %973 = vmatpush1.bf16.msra.mxu0 0
      %974 = vmatprep.subr.bf16.mxu0 0
      %975 = vmatpush1.bf16.msra.mxu0 0
      %976 = vmatprep.subr.bf16.mxu0 0
      %977 = vmatpush1.bf16.msra.mxu0 0
      %978 = vmatprep.mubr.bf16.mxu0 0
      %979 = vmatmul.mubr.bf16.gmra.mrb[0].mxu0 %v941
      %v980 = vpop.f32.mrb[0].mxu0
      %v981 = vadd.f32 0.0, %v980
      %v982 = vpop.f32.mrb[0].mxu0
      %v983 = vpop.f32.mrb[0].mxu0
      %v984 = vadd.f32 0.0, %v983
      %v985 = vpop.f32.mrb[0].mxu0
      %986 = vmatprep.mubr.bf16.mxu0 0
      %987 = vmatmul.mubr.bf16.gmra.mrb[0].mxu0 %v944
      %v988 = vpop.f32.mrb[0].mxu0
      %v989 = vadd.f32 0.0, %v988
      %v990 = vpop.f32.mrb[0].mxu0
      %v991 = vpop.f32.mrb[0].mxu0
      %v992 = vpop.f32.mrb[0].mxu0
      %993 = vdwg.mxu0
      %v994 = vadd.f32 %v915, %v981
      %v995 = vadd.f32 %v916, %v984
      %v996 = vadd.f32 %v917, %v989
      %v997 = vld [vmem:[%s199 + $0x8] sm:$0xf]
      %v998 = vld [vmem:[%s199 + $0xc] sm:$0xf]
      %v999 = vld [vmem:[%s199 + $0x10] sm:$0xf]
      %v1000 = vld [vmem:[%s199 + $0x14] sm:$0x1]
      %s1001 = scalar_lea.vmem %s1, 144
      %v1002 = vld [vmem:[%s1001] sm:$0xf]
      %v1003 = vld [vmem:[%s1001 + $0x4] sm:$0xf]
      %v1004 = vld [vmem:[%s1001 + $0x8] sm:$0xf]
      %v1005 = vld [vmem:[%s1001 + $0xc] sm:$0xf]
      %v1010 = vunpack.c.l.b16 %v997
      %v1011 = vunpack.c.l.b16 %v998
      %v1012 = vunpack.c.l.b16 %v999
      %v1013 = vunpack.c.l.b16 %v1000
      %v1014 = vpack.c.b16 %v1011, %v1010
      %v1015 = vpack.c.b16 %v1013, %v1012
      %v1017 = vshrl.u32 %v1014, 16
      %v1019 = vshll.u32 %v1014, 16
      %v1021 = vrot.slane %v1019, 1
      %v1022 = vor.u32 %v1017, %v1021
      %v1024 = vshll.u32 %v1015, 16
      %v1026 = vrot.slane %v1024, 1
      %v1027 = vsel %vm233, %v1022, %v1026
      %v1028 = vshrl.u32 %v1015, 16
      %v1030 = vor.u32 %v1028, %v1026
      %v1035 = vunpack.c.l.b16 %v1002
      %v1036 = vunpack.c.l.b16 %v1003
      %v1037 = vunpack.c.l.b16 %v1004
      %v1038 = vunpack.c.l.b16 %v1005
      %v1039 = vpack.c.b16 %v1036, %v1035
      %v1040 = vpack.c.b16 %v1038, %v1037
      %v1044 = vsel %vm261, %v1027, 0
      %v1047 = vsel %vm261, %v1030, 0
      %1049 = vmatprep.subr.bf16.mxu0 0
      %1050 = vmatpush1.bf16.msra.mxu0 %v1039
      %1051 = vmatprep.subr.bf16.mxu0 0
      %1052 = vmatpush1.bf16.msra.mxu0 %v1040
      %1053 = vmatprep.subr.bf16.mxu0 0
      %1054 = vmatpush1.bf16.msra.mxu0 0
      %1055 = vmatprep.subr.bf16.mxu0 0
      %1056 = vmatpush1.bf16.msra.mxu0 0
      %1057 = vmatprep.subr.bf16.mxu0 0
      %1058 = vmatpush1.bf16.msra.mxu0 0
      %1059 = vmatprep.subr.bf16.mxu0 0
      %1060 = vmatpush1.bf16.msra.mxu0 0
      %1061 = vmatprep.subr.bf16.mxu0 0
      %1062 = vmatpush1.bf16.msra.mxu0 0
      %1063 = vmatprep.subr.bf16.mxu0 0
      %1064 = vmatpush1.bf16.msra.mxu0 0
      %1065 = vmatprep.subr.bf16.mxu0 0
      %1066 = vmatpush1.bf16.msra.mxu0 0
      %1067 = vmatprep.subr.bf16.mxu0 0
      %1068 = vmatpush1.bf16.msra.mxu0 0
      %1069 = vmatprep.subr.bf16.mxu0 0
      %1070 = vmatpush1.bf16.msra.mxu0 0
      %1071 = vmatprep.subr.bf16.mxu0 0
      %1072 = vmatpush1.bf16.msra.mxu0 0
      %1073 = vmatprep.subr.bf16.mxu0 0
      %1074 = vmatpush1.bf16.msra.mxu0 0
      %1075 = vmatprep.subr.bf16.mxu0 0
      %1076 = vmatpush1.bf16.msra.mxu0 0
      %1077 = vmatprep.subr.bf16.mxu0 0
      %1078 = vmatpush1.bf16.msra.mxu0 0
      %1079 = vmatprep.subr.bf16.mxu0 0
      %1080 = vmatpush1.bf16.msra.mxu0 0
      %1081 = vmatprep.mubr.bf16.mxu0 0
      %1082 = vmatmul.mubr.bf16.gmra.mrb[0].mxu0 %v1044
      %v1083 = vpop.f32.mrb[0].mxu0
      %v1084 = vadd.f32 0.0, %v1083
      %v1085 = vpop.f32.mrb[0].mxu0
      %v1086 = vpop.f32.mrb[0].mxu0
      %v1087 = vadd.f32 0.0, %v1086
      %v1088 = vpop.f32.mrb[0].mxu0
      %1089 = vmatprep.mubr.bf16.mxu0 0
      %1090 = vmatmul.mubr.bf16.gmra.mrb[0].mxu0 %v1047
      %v1091 = vpop.f32.mrb[0].mxu0
      %v1092 = vadd.f32 0.0, %v1091
      %v1093 = vpop.f32.mrb[0].mxu0
      %v1094 = vpop.f32.mrb[0].mxu0
      %v1095 = vpop.f32.mrb[0].mxu0
      %1096 = vdwg.mxu0
      %v1097 = vadd.f32 %v994, %v1084
      %v1098 = vadd.f32 %v995, %v1087
      %v1099 = vadd.f32 %v996, %v1092
      %v1100 = vld [vmem:[%s199 + $0x8] sm:$0xe]
      %s1101 = scalar_lea.vmem %s1, 160
      %v1102 = vld [vmem:[%s1101] sm:$0xf]
      %v1103 = vld [vmem:[%s1101 + $0x4] sm:$0xf]
      %v1104 = vld [vmem:[%s1101 + $0x8] sm:$0xf]
      %v1105 = vld [vmem:[%s1101 + $0xc] sm:$0xf]
      %v1107 = vunpack.c.l.b16 %v1100
      %v1108 = vpack.c.b16 %v1011, %v1107
      %v1109 = vrot.slane %v1108, 1
      %v1110 = vrot.slane %v1015, 1
      %v1111 = vsel %vm391, %v1109, %v1110
      %v1116 = vunpack.c.l.b16 %v1102
      %v1117 = vunpack.c.l.b16 %v1103
      %v1118 = vunpack.c.l.b16 %v1104
      %v1119 = vunpack.c.l.b16 %v1105
      %v1120 = vpack.c.b16 %v1117, %v1116
      %v1121 = vpack.c.b16 %v1119, %v1118
      %v1125 = vsel %vm261, %v1111, 0
      %v1128 = vsel %vm261, %v1110, 0
      %1130 = vmatprep.subr.bf16.mxu0 0
      %1131 = vmatpush1.bf16.msra.mxu0 %v1120
      %1132 = vmatprep.subr.bf16.mxu0 0
      %1133 = vmatpush1.bf16.msra.mxu0 %v1121
      %1134 = vmatprep.subr.bf16.mxu0 0
      %1135 = vmatpush1.bf16.msra.mxu0 0
      %1136 = vmatprep.subr.bf16.mxu0 0
      %1137 = vmatpush1.bf16.msra.mxu0 0
      %1138 = vmatprep.subr.bf16.mxu0 0
      %1139 = vmatpush1.bf16.msra.mxu0 0
      %1140 = vmatprep.subr.bf16.mxu0 0
      %1141 = vmatpush1.bf16.msra.mxu0 0
      %1142 = vmatprep.subr.bf16.mxu0 0
      %1143 = vmatpush1.bf16.msra.mxu0 0
      %1144 = vmatprep.subr.bf16.mxu0 0
      %1145 = vmatpush1.bf16.msra.mxu0 0
      %1146 = vmatprep.subr.bf16.mxu0 0
      %1147 = vmatpush1.bf16.msra.mxu0 0
      %1148 = vmatprep.subr.bf16.mxu0 0
      %1149 = vmatpush1.bf16.msra.mxu0 0
      %1150 = vmatprep.subr.bf16.mxu0 0
      %1151 = vmatpush1.bf16.msra.mxu0 0
      %1152 = vmatprep.subr.bf16.mxu0 0
      %1153 = vmatpush1.bf16.msra.mxu0 0
      %1154 = vmatprep.subr.bf16.mxu0 0
      %1155 = vmatpush1.bf16.msra.mxu0 0
      %1156 = vmatprep.subr.bf16.mxu0 0
      %1157 = vmatpush1.bf16.msra.mxu0 0
      %1158 = vmatprep.subr.bf16.mxu0 0
      %1159 = vmatpush1.bf16.msra.mxu0 0
      %1160 = vmatprep.subr.bf16.mxu0 0
      %1161 = vmatpush1.bf16.msra.mxu0 0
      %1162 = vmatprep.mubr.bf16.mxu0 0
      %1163 = vmatmul.mubr.bf16.gmra.mrb[0].mxu0 %v1125
      %v1164 = vpop.f32.mrb[0].mxu0
      %v1165 = vadd.f32 0.0, %v1164
      %v1166 = vpop.f32.mrb[0].mxu0
      %v1167 = vpop.f32.mrb[0].mxu0
      %v1168 = vadd.f32 0.0, %v1167
      %v1169 = vpop.f32.mrb[0].mxu0
      %1170 = vmatprep.mubr.bf16.mxu0 0
      %1171 = vmatmul.mubr.bf16.gmra.mrb[0].mxu0 %v1128
      %v1172 = vpop.f32.mrb[0].mxu0
      %v1173 = vadd.f32 0.0, %v1172
      %v1174 = vpop.f32.mrb[0].mxu0
      %v1175 = vpop.f32.mrb[0].mxu0
      %v1176 = vpop.f32.mrb[0].mxu0
      %1177 = vdwg.mxu0
      %v1178 = vadd.f32 %v1097, %v1165
      %v1179 = vadd.f32 %v1098, %v1168
      %v1180 = vadd.f32 %v1099, %v1173
      %v1181 = vld [vmem:[%s199 + $0x14] sm:$0x3]
      %s1182 = scalar_lea.vmem %s1, 176
      %v1183 = vld [vmem:[%s1182] sm:$0xf]
      %v1184 = vld [vmem:[%s1182 + $0x4] sm:$0xf]
      %v1185 = vld [vmem:[%s1182 + $0x8] sm:$0xf]
      %v1186 = vld [vmem:[%s1182 + $0xc] sm:$0xf]
      %v1188 = vunpack.c.l.b16 %v1181
      %v1189 = vpack.c.b16 %v1188, %v1012
      %v1191 = vshrl.u32 %v1108, 16
      %v1193 = vrot.slane %v1191, 1
      %v1194 = vshll.u32 %v1108, 16
      %v1196 = vrot.slane %v1194, 2
      %v1197 = vor.u32 %v1193, %v1196
      %v1199 = vshrl.u32 %v1189, 16
      %v1201 = vrot.slane %v1199, 1
      %v1202 = vshll.u32 %v1189, 16
      %v1204 = vrot.slane %v1202, 2
      %v1205 = vor.u32 %v1201, %v1204
      %v1206 = vsel %vm473, %v1197, %v1205
      %v1211 = vunpack.c.l.b16 %v1183
      %v1212 = vunpack.c.l.b16 %v1184
      %v1213 = vunpack.c.l.b16 %v1185
      %v1214 = vunpack.c.l.b16 %v1186
      %v1215 = vpack.c.b16 %v1212, %v1211
      %v1216 = vpack.c.b16 %v1214, %v1213
      %v1220 = vsel %vm261, %v1206, 0
      %v1223 = vsel %vm261, %v1205, 0
      %1225 = vmatprep.subr.bf16.mxu0 0
      %1226 = vmatpush1.bf16.msra.mxu0 %v1215
      %1227 = vmatprep.subr.bf16.mxu0 0
      %1228 = vmatpush1.bf16.msra.mxu0 %v1216
      %1229 = vmatprep.subr.bf16.mxu0 0
      %1230 = vmatpush1.bf16.msra.mxu0 0
      %1231 = vmatprep.subr.bf16.mxu0 0
      %1232 = vmatpush1.bf16.msra.mxu0 0
      %1233 = vmatprep.subr.bf16.mxu0 0
      %1234 = vmatpush1.bf16.msra.mxu0 0
      %1235 = vmatprep.subr.bf16.mxu0 0
      %1236 = vmatpush1.bf16.msra.mxu0 0
      %1237 = vmatprep.subr.bf16.mxu0 0
      %1238 = vmatpush1.bf16.msra.mxu0 0
      %1239 = vmatprep.subr.bf16.mxu0 0
      %1240 = vmatpush1.bf16.msra.mxu0 0
      %1241 = vmatprep.subr.bf16.mxu0 0
      %1242 = vmatpush1.bf16.msra.mxu0 0
      %1243 = vmatprep.subr.bf16.mxu0 0
      %1244 = vmatpush1.bf16.msra.mxu0 0
      %1245 = vmatprep.subr.bf16.mxu0 0
      %1246 = vmatpush1.bf16.msra.mxu0 0
      %1247 = vmatprep.subr.bf16.mxu0 0
      %1248 = vmatpush1.bf16.msra.mxu0 0
      %1249 = vmatprep.subr.bf16.mxu0 0
      %1250 = vmatpush1.bf16.msra.mxu0 0
      %1251 = vmatprep.subr.bf16.mxu0 0
      %1252 = vmatpush1.bf16.msra.mxu0 0
      %1253 = vmatprep.subr.bf16.mxu0 0
      %1254 = vmatpush1.bf16.msra.mxu0 0
      %1255 = vmatprep.subr.bf16.mxu0 0
      %1256 = vmatpush1.bf16.msra.mxu0 0
      %1257 = vmatprep.mubr.bf16.mxu0 0
      %1258 = vmatmul.mubr.bf16.gmra.mrb[0].mxu0 %v1220
      %v1259 = vpop.f32.mrb[0].mxu0
      %v1260 = vadd.f32 0.0, %v1259
      %v1261 = vpop.f32.mrb[0].mxu0
      %v1262 = vpop.f32.mrb[0].mxu0
      %v1263 = vadd.f32 0.0, %v1262
      %v1264 = vpop.f32.mrb[0].mxu0
      %1265 = vmatprep.mubr.bf16.mxu0 0
      %1266 = vmatmul.mubr.bf16.gmra.mrb[0].mxu0 %v1223
      %v1267 = vpop.f32.mrb[0].mxu0
      %v1268 = vadd.f32 0.0, %v1267
      %v1269 = vpop.f32.mrb[0].mxu0
      %v1270 = vpop.f32.mrb[0].mxu0
      %v1271 = vpop.f32.mrb[0].mxu0
      %1272 = vdwg.mxu0
      %v1273 = vadd.f32 %v1178, %v1260
      %v1274 = vadd.f32 %v1179, %v1263
      %v1275 = vadd.f32 %v1180, %v1268
      %v1276 = vld [vmem:[%s199 + $0x14] sm:$0xf]
      %s1277 = scalar_lea.vmem %s1, 192
      %v1278 = vld [vmem:[%s1277] sm:$0xf]
      %v1279 = vld [vmem:[%s1277 + $0x4] sm:$0xf]
      %v1280 = vld [vmem:[%s1277 + $0x8] sm:$0xf]
      %v1281 = vld [vmem:[%s1277 + $0xc] sm:$0xf]
      %v1283 = vunpack.c.l.b16 %v1276
      %v1284 = vpack.c.b16 %v1012, %v1011
      %v1285 = vpack.c.b16 %v1283, %v1283
      %v1290 = vunpack.c.l.b16 %v1278
      %v1291 = vunpack.c.l.b16 %v1279
      %v1292 = vunpack.c.l.b16 %v1280
      %v1293 = vunpack.c.l.b16 %v1281
      %v1294 = vpack.c.b16 %v1291, %v1290
      %v1295 = vpack.c.b16 %v1293, %v1292
      %v1299 = vsel %vm261, %v1284, 0
      %v1302 = vsel %vm261, %v1285, 0
      %1304 = vmatprep.subr.bf16.mxu0 0
      %1305 = vmatpush1.bf16.msra.mxu0 %v1294
      %1306 = vmatprep.subr.bf16.mxu0 0
      %1307 = vmatpush1.bf16.msra.mxu0 %v1295
      %1308 = vmatprep.subr.bf16.mxu0 0
      %1309 = vmatpush1.bf16.msra.mxu0 0
      %1310 = vmatprep.subr.bf16.mxu0 0
      %1311 = vmatpush1.bf16.msra.mxu0 0
      %1312 = vmatprep.subr.bf16.mxu0 0
      %1313 = vmatpush1.bf16.msra.mxu0 0
      %1314 = vmatprep.subr.bf16.mxu0 0
      %1315 = vmatpush1.bf16.msra.mxu0 0
      %1316 = vmatprep.subr.bf16.mxu0 0
      %1317 = vmatpush1.bf16.msra.mxu0 0
      %1318 = vmatprep.subr.bf16.mxu0 0
      %1319 = vmatpush1.bf16.msra.mxu0 0
      %1320 = vmatprep.subr.bf16.mxu0 0
      %1321 = vmatpush1.bf16.msra.mxu0 0
      %1322 = vmatprep.subr.bf16.mxu0 0
      %1323 = vmatpush1.bf16.msra.mxu0 0
      %1324 = vmatprep.subr.bf16.mxu0 0
      %1325 = vmatpush1.bf16.msra.mxu0 0
      %1326 = vmatprep.subr.bf16.mxu0 0
      %1327 = vmatpush1.bf16.msra.mxu0 0
      %1328 = vmatprep.subr.bf16.mxu0 0
      %1329 = vmatpush1.bf16.msra.mxu0 0
      %1330 = vmatprep.subr.bf16.mxu0 0
      %1331 = vmatpush1.bf16.msra.mxu0 0
      %1332 = vmatprep.subr.bf16.mxu0 0
      %1333 = vmatpush1.bf16.msra.mxu0 0
      %1334 = vmatprep.subr.bf16.mxu0 0
      %1335 = vmatpush1.bf16.msra.mxu0 0
      %1336 = vmatprep.mubr.bf16.mxu0 0
      %1337 = vmatmul.mubr.bf16.gmra.mrb[0].mxu0 %v1299
      %v1338 = vpop.f32.mrb[0].mxu0
      %v1339 = vadd.f32 0.0, %v1338
      %v1340 = vpop.f32.mrb[0].mxu0
      %v1341 = vpop.f32.mrb[0].mxu0
      %v1342 = vadd.f32 0.0, %v1341
      %v1343 = vpop.f32.mrb[0].mxu0
      %1344 = vmatprep.mubr.bf16.mxu0 0
      %1345 = vmatmul.mubr.bf16.gmra.mrb[0].mxu0 %v1302
      %v1346 = vpop.f32.mrb[0].mxu0
      %v1347 = vadd.f32 0.0, %v1346
      %v1348 = vpop.f32.mrb[0].mxu0
      %v1349 = vpop.f32.mrb[0].mxu0
      %v1350 = vpop.f32.mrb[0].mxu0
      %1351 = vdwg.mxu0
      %v1352 = vadd.f32 %v1273, %v1339
      %v1353 = vadd.f32 %v1274, %v1342
      %v1354 = vadd.f32 %v1275, %v1347
      %v1355 = vld [vmem:[%s199 + $0xc] sm:$0xf]
      %v1356 = vld [vmem:[%s199 + $0x10] sm:$0xf]
      %v1357 = vld [vmem:[%s199 + $0x14] sm:$0xf]
      %v1358 = vld [vmem:[%s199 + $0x18] sm:$0x1]
      %s1359 = scalar_lea.vmem %s1, 208
      %v1360 = vld [vmem:[%s1359] sm:$0xf]
      %v1361 = vld [vmem:[%s1359 + $0x4] sm:$0xf]
      %v1362 = vld [vmem:[%s1359 + $0x8] sm:$0xf]
      %v1363 = vld [vmem:[%s1359 + $0xc] sm:$0xf]
      %v1368 = vunpack.c.l.b16 %v1355
      %v1369 = vunpack.c.l.b16 %v1356
      %v1370 = vunpack.c.l.b16 %v1357
      %v1371 = vunpack.c.l.b16 %v1358
      %v1372 = vpack.c.b16 %v1369, %v1368
      %v1373 = vpack.c.b16 %v1371, %v1370
      %v1375 = vshrl.u32 %v1372, 16
      %v1377 = vshll.u32 %v1372, 16
      %v1379 = vrot.slane %v1377, 1
      %v1380 = vor.u32 %v1375, %v1379
      %v1382 = vshll.u32 %v1373, 16
      %v1384 = vrot.slane %v1382, 1
      %v1385 = vsel %vm233, %v1380, %v1384
      %v1386 = vshrl.u32 %v1373, 16
      %v1388 = vor.u32 %v1386, %v1384
      %v1393 = vunpack.c.l.b16 %v1360
      %v1394 = vunpack.c.l.b16 %v1361
      %v1395 = vunpack.c.l.b16 %v1362
      %v1396 = vunpack.c.l.b16 %v1363
      %v1397 = vpack.c.b16 %v1394, %v1393
      %v1398 = vpack.c.b16 %v1396, %v1395
      %v1402 = vsel %vm261, %v1385, 0
      %v1405 = vsel %vm261, %v1388, 0
      %1407 = vmatprep.subr.bf16.mxu0 0
      %1408 = vmatpush1.bf16.msra.mxu0 %v1397
      %1409 = vmatprep.subr.bf16.mxu0 0
      %1410 = vmatpush1.bf16.msra.mxu0 %v1398
      %1411 = vmatprep.subr.bf16.mxu0 0
      %1412 = vmatpush1.bf16.msra.mxu0 0
      %1413 = vmatprep.subr.bf16.mxu0 0
      %1414 = vmatpush1.bf16.msra.mxu0 0
      %1415 = vmatprep.subr.bf16.mxu0 0
      %1416 = vmatpush1.bf16.msra.mxu0 0
      %1417 = vmatprep.subr.bf16.mxu0 0
      %1418 = vmatpush1.bf16.msra.mxu0 0
      %1419 = vmatprep.subr.bf16.mxu0 0
      %1420 = vmatpush1.bf16.msra.mxu0 0
      %1421 = vmatprep.subr.bf16.mxu0 0
      %1422 = vmatpush1.bf16.msra.mxu0 0
      %1423 = vmatprep.subr.bf16.mxu0 0
      %1424 = vmatpush1.bf16.msra.mxu0 0
      %1425 = vmatprep.subr.bf16.mxu0 0
      %1426 = vmatpush1.bf16.msra.mxu0 0
      %1427 = vmatprep.subr.bf16.mxu0 0
      %1428 = vmatpush1.bf16.msra.mxu0 0
      %1429 = vmatprep.subr.bf16.mxu0 0
      %1430 = vmatpush1.bf16.msra.mxu0 0
      %1431 = vmatprep.subr.bf16.mxu0 0
      %1432 = vmatpush1.bf16.msra.mxu0 0
      %1433 = vmatprep.subr.bf16.mxu0 0
      %1434 = vmatpush1.bf16.msra.mxu0 0
      %1435 = vmatprep.subr.bf16.mxu0 0
      %1436 = vmatpush1.bf16.msra.mxu0 0
      %1437 = vmatprep.subr.bf16.mxu0 0
      %1438 = vmatpush1.bf16.msra.mxu0 0
      %1439 = vmatprep.mubr.bf16.mxu0 0
      %1440 = vmatmul.mubr.bf16.gmra.mrb[0].mxu0 %v1402
      %v1441 = vpop.f32.mrb[0].mxu0
      %v1442 = vadd.f32 0.0, %v1441
      %v1443 = vpop.f32.mrb[0].mxu0
      %v1444 = vpop.f32.mrb[0].mxu0
      %v1445 = vadd.f32 0.0, %v1444
      %v1446 = vpop.f32.mrb[0].mxu0
      %1447 = vmatprep.mubr.bf16.mxu0 0
      %1448 = vmatmul.mubr.bf16.gmra.mrb[0].mxu0 %v1405
      %v1449 = vpop.f32.mrb[0].mxu0
      %v1450 = vadd.f32 0.0, %v1449
      %v1451 = vpop.f32.mrb[0].mxu0
      %v1452 = vpop.f32.mrb[0].mxu0
      %v1453 = vpop.f32.mrb[0].mxu0
      %1454 = vdwg.mxu0
      %v1455 = vadd.f32 %v1352, %v1442
      %v1456 = vadd.f32 %v1353, %v1445
      %v1457 = vadd.f32 %v1354, %v1450
      %v1458 = vld [vmem:[%s199 + $0xc] sm:$0xe]
      %s1459 = scalar_lea.vmem %s1, 224
      %v1460 = vld [vmem:[%s1459] sm:$0xf]
      %v1461 = vld [vmem:[%s1459 + $0x4] sm:$0xf]
      %v1462 = vld [vmem:[%s1459 + $0x8] sm:$0xf]
      %v1463 = vld [vmem:[%s1459 + $0xc] sm:$0xf]
      %v1465 = vunpack.c.l.b16 %v1458
      %v1466 = vpack.c.b16 %v1369, %v1465
      %v1467 = vrot.slane %v1466, 1
      %v1468 = vrot.slane %v1373, 1
      %v1469 = vsel %vm391, %v1467, %v1468
      %v1474 = vunpack.c.l.b16 %v1460
      %v1475 = vunpack.c.l.b16 %v1461
      %v1476 = vunpack.c.l.b16 %v1462
      %v1477 = vunpack.c.l.b16 %v1463
      %v1478 = vpack.c.b16 %v1475, %v1474
      %v1479 = vpack.c.b16 %v1477, %v1476
      %v1483 = vsel %vm261, %v1469, 0
      %v1486 = vsel %vm261, %v1468, 0
      %1488 = vmatprep.subr.bf16.mxu0 0
      %1489 = vmatpush1.bf16.msra.mxu0 %v1478
      %1490 = vmatprep.subr.bf16.mxu0 0
      %1491 = vmatpush1.bf16.msra.mxu0 %v1479
      %1492 = vmatprep.subr.bf16.mxu0 0
      %1493 = vmatpush1.bf16.msra.mxu0 0
      %1494 = vmatprep.subr.bf16.mxu0 0
      %1495 = vmatpush1.bf16.msra.mxu0 0
      %1496 = vmatprep.subr.bf16.mxu0 0
      %1497 = vmatpush1.bf16.msra.mxu0 0
      %1498 = vmatprep.subr.bf16.mxu0 0
      %1499 = vmatpush1.bf16.msra.mxu0 0
      %1500 = vmatprep.subr.bf16.mxu0 0
      %1501 = vmatpush1.bf16.msra.mxu0 0
      %1502 = vmatprep.subr.bf16.mxu0 0
      %1503 = vmatpush1.bf16.msra.mxu0 0
      %1504 = vmatprep.subr.bf16.mxu0 0
      %1505 = vmatpush1.bf16.msra.mxu0 0
      %1506 = vmatprep.subr.bf16.mxu0 0
      %1507 = vmatpush1.bf16.msra.mxu0 0
      %1508 = vmatprep.subr.bf16.mxu0 0
      %1509 = vmatpush1.bf16.msra.mxu0 0
      %1510 = vmatprep.subr.bf16.mxu0 0
      %1511 = vmatpush1.bf16.msra.mxu0 0
      %1512 = vmatprep.subr.bf16.mxu0 0
      %1513 = vmatpush1.bf16.msra.mxu0 0
      %1514 = vmatprep.subr.bf16.mxu0 0
      %1515 = vmatpush1.bf16.msra.mxu0 0
      %1516 = vmatprep.subr.bf16.mxu0 0
      %1517 = vmatpush1.bf16.msra.mxu0 0
      %1518 = vmatprep.subr.bf16.mxu0 0
      %1519 = vmatpush1.bf16.msra.mxu0 0
      %1520 = vmatprep.mubr.bf16.mxu0 0
      %1521 = vmatmul.mubr.bf16.gmra.mrb[0].mxu0 %v1483
      %v1522 = vpop.f32.mrb[0].mxu0
      %v1523 = vadd.f32 0.0, %v1522
      %v1524 = vpop.f32.mrb[0].mxu0
      %v1525 = vpop.f32.mrb[0].mxu0
      %v1526 = vadd.f32 0.0, %v1525
      %v1527 = vpop.f32.mrb[0].mxu0
      %1528 = vmatprep.mubr.bf16.mxu0 0
      %1529 = vmatmul.mubr.bf16.gmra.mrb[0].mxu0 %v1486
      %v1530 = vpop.f32.mrb[0].mxu0
      %v1531 = vadd.f32 0.0, %v1530
      %v1532 = vpop.f32.mrb[0].mxu0
      %v1533 = vpop.f32.mrb[0].mxu0
      %v1534 = vpop.f32.mrb[0].mxu0
      %1535 = vdwg.mxu0
      %v1536 = vadd.f32 %v1455, %v1523
      %v1537 = vadd.f32 %v1456, %v1526
      %v1538 = vadd.f32 %v1457, %v1531
      %v1539 = vld [vmem:[%s199 + $0x18] sm:$0x3]
      %s1540 = scalar_lea.vmem %s1, 240
      %v1541 = vld [vmem:[%s1540] sm:$0xf]
      %v1542 = vld [vmem:[%s1540 + $0x4] sm:$0xf]
      %v1543 = vld [vmem:[%s1540 + $0x8] sm:$0xf]
      %v1544 = vld [vmem:[%s1540 + $0xc] sm:$0xf]
      %v1546 = vunpack.c.l.b16 %v1539
      %v1547 = vpack.c.b16 %v1546, %v1370
      %v1549 = vshrl.u32 %v1466, 16
      %v1551 = vrot.slane %v1549, 1
      %v1552 = vshll.u32 %v1466, 16
      %v1554 = vrot.slane %v1552, 2
      %v1555 = vor.u32 %v1551, %v1554
      %v1557 = vshrl.u32 %v1547, 16
      %v1559 = vrot.slane %v1557, 1
      %v1560 = vshll.u32 %v1547, 16
      %v1562 = vrot.slane %v1560, 2
      %v1563 = vor.u32 %v1559, %v1562
      %v1564 = vsel %vm473, %v1555, %v1563
      %v1569 = vunpack.c.l.b16 %v1541
      %v1570 = vunpack.c.l.b16 %v1542
      %v1571 = vunpack.c.l.b16 %v1543
      %v1572 = vunpack.c.l.b16 %v1544
      %v1573 = vpack.c.b16 %v1570, %v1569
      %v1574 = vpack.c.b16 %v1572, %v1571
      %v1578 = vsel %vm261, %v1564, 0
      %v1581 = vsel %vm261, %v1563, 0
      %1583 = vmatprep.subr.bf16.mxu0 0
      %1584 = vmatpush1.bf16.msra.mxu0 %v1573
      %1585 = vmatprep.subr.bf16.mxu0 0
      %1586 = vmatpush1.bf16.msra.mxu0 %v1574
      %1587 = vmatprep.subr.bf16.mxu0 0
      %1588 = vmatpush1.bf16.msra.mxu0 0
      %1589 = vmatprep.subr.bf16.mxu0 0
      %1590 = vmatpush1.bf16.msra.mxu0 0
      %1591 = vmatprep.subr.bf16.mxu0 0
      %1592 = vmatpush1.bf16.msra.mxu0 0
      %1593 = vmatprep.subr.bf16.mxu0 0
      %1594 = vmatpush1.bf16.msra.mxu0 0
      %1595 = vmatprep.subr.bf16.mxu0 0
      %1596 = vmatpush1.bf16.msra.mxu0 0
      %1597 = vmatprep.subr.bf16.mxu0 0
      %1598 = vmatpush1.bf16.msra.mxu0 0
      %1599 = vmatprep.subr.bf16.mxu0 0
      %1600 = vmatpush1.bf16.msra.mxu0 0
      %1601 = vmatprep.subr.bf16.mxu0 0
      %1602 = vmatpush1.bf16.msra.mxu0 0
      %1603 = vmatprep.subr.bf16.mxu0 0
      %1604 = vmatpush1.bf16.msra.mxu0 0
      %1605 = vmatprep.subr.bf16.mxu0 0
      %1606 = vmatpush1.bf16.msra.mxu0 0
      %1607 = vmatprep.subr.bf16.mxu0 0
      %1608 = vmatpush1.bf16.msra.mxu0 0
      %1609 = vmatprep.subr.bf16.mxu0 0
      %1610 = vmatpush1.bf16.msra.mxu0 0
      %1611 = vmatprep.subr.bf16.mxu0 0
      %1612 = vmatpush1.bf16.msra.mxu0 0
      %1613 = vmatprep.subr.bf16.mxu0 0
      %1614 = vmatpush1.bf16.msra.mxu0 0
      %1615 = vmatprep.mubr.bf16.mxu0 0
      %1616 = vmatmul.mubr.bf16.gmra.mrb[0].mxu0 %v1578
      %v1617 = vpop.f32.mrb[0].mxu0
      %v1618 = vadd.f32 0.0, %v1617
      %v1619 = vpop.f32.mrb[0].mxu0
      %v1620 = vpop.f32.mrb[0].mxu0
      %v1621 = vadd.f32 0.0, %v1620
      %v1622 = vpop.f32.mrb[0].mxu0
      %1623 = vmatprep.mubr.bf16.mxu0 0
      %1624 = vmatmul.mubr.bf16.gmra.mrb[0].mxu0 %v1581
      %v1625 = vpop.f32.mrb[0].mxu0
      %v1626 = vadd.f32 0.0, %v1625
      %v1627 = vpop.f32.mrb[0].mxu0
      %v1628 = vpop.f32.mrb[0].mxu0
      %v1629 = vpop.f32.mrb[0].mxu0
      %1630 = vdwg.mxu0
      %v1631 = vadd.f32 %v1536, %v1618
      %v1632 = vadd.f32 %v1537, %v1621
      %v1633 = vadd.f32 %v1538, %v1626
      %v1634 = vpack.c.bf16 %v1632, %v1631
      %v1635 = vpack.c.bf16 %v1633, %v1633
      %v1638 = vunpack.c.l.b16 %v1634
      %v1639 = vunpack.c.h.b16 %v1634
      %v1640 = vunpack.c.l.b16 %v1635
      %v1641 = vpack.c.b16 %v1638, %v1638
      %v1642 = vpack.c.b16 %v1639, %v1639
      %v1643 = vpack.c.b16 %v1640, %v1640
      %1647 = vst [vmem:[%s204] sm:$0xf] %v1641
      %1648 = vst [vmem:[%s204 + $0x4] sm:$0xf] %v1642
      %1649 = vst [vmem:[%s204 + $0x8] sm:$0xf] %v1643
      %v1650 = vld [vmem:[%s2] sm:$0xff]
      %v1651 = vld [vmem:[%s2 + $0x8] sm:$0xff]
      %v1652 = vld [vmem:[%s2 + $0x10] sm:$0xff]
      %1654 = vset.pattern.permute.xlu0 0
      %1655 = vperm.xlu0 %1654, %v1650
      %v1656 = vpop.permute.xlu0 %1655
      %1659 = vset.pattern.permute.xlu0 0
      %1660 = vperm.xlu0 %1659, %v1651
      %v1661 = vpop.permute.xlu0 %1660
      %1664 = vset.pattern.permute.xlu0 0
      %1665 = vperm.xlu0 %1664, %v1652
      %v1666 = vpop.permute.xlu0 %1665
      %v1668 = vmul.f32 %v1631, %v1656
      %v1669 = vmul.f32 %v1632, %v1661
      %v1670 = vmul.f32 %v1633, %v1666
      %v1671 = vadd.f32 %v1668, %v1669
      %v1672 = vadd.f32 %v1671, %v1670
      %v1673 = vrot.slane %v1672, 4
      %v1674 = vadd.f32 %v1672, %v1673
      %v1675 = vrot.slane %v1674, 2
      %v1676 = vadd.f32 %v1674, %v1675
      %v1677 = vrot.slane %v1676, 1
      %v1678 = vadd.f32 %v1676, %v1677
      %v1679 = vadd.f32 %v1678, 0.0
      %v1680 = vmul.f32 %v1668, %v1631
      %v1681 = vmul.f32 %v1669, %v1632
      %v1682 = vmul.f32 %v1670, %v1633
      %v1683 = vadd.f32 %v1680, %v1681
      %v1684 = vadd.f32 %v1683, %v1682
      %v1685 = vrot.slane %v1684, 4
      %v1686 = vadd.f32 %v1684, %v1685
      %v1687 = vrot.slane %v1686, 2
      %v1688 = vadd.f32 %v1686, %v1687
      %v1689 = vrot.slane %v1688, 1
      %v1690 = vadd.f32 %v1688, %v1689
      %v1691 = vadd.f32 %v1690, 0.0
      %vm1692 = vcmask 1040384
      %v1693 = vsel %vm1692, %v1679, %v1691
      %1694 = vst [vmem:[%s208] sm:$0x3] %v1693
      %p1695 = scmp.lt.s32.totalorder %s16, 1
      %s1696 = scalar_select %p1695, %s16, 1
      %s1697 = smul.addr %s1696, 3
      %s1698 = smul.addr %s1697, 4
      %s1699 = scalar_lea.vmem %s3, %s1698
      %p1700 = scmp.lt.s32.totalorder %s16, 1
      %s1701 = scalar_select %p1700, %s16, 1
      %s1702 = smul.addr %s1701, 2
      %s1703 = scalar_lea.vmem %s4, %s1702
      // Predicated region
      $region33: #{_lambda_.8} parent=31 // pred_check
        %p1704 = pneg %p102
      $region34: #{_lambda_.8} parent=31 // pred_check_branch
        %1706 = sbr.rel (%p1704) target = $region36
      $region35: #{_lambda_.8} parent=31 // pred_region
        _
      $region36: #{_lambda_.8} parent=31 // pred_fallthru
        _
      // Predicated region
      $region37: #{_lambda_.8} parent=31 // pred_check
        %p1707 = pneg %p128
      $region38: #{_lambda_.8} parent=31 // pred_check_branch
        %1709 = sbr.rel (%p1707) target = $region40
      $region39: #{_lambda_.8} parent=31 // pred_region
        _
      $region40: #{_lambda_.8} parent=31 // pred_fallthru
        _
    $region32: #{_lambda_.8} parent=5 // pred_fallthru
      _
    %p1710 = scmp.le.s32.totalorder 2, %s11
    // Predicated region
    $region41: #{_lambda_.8} parent=5 // pred_check
      %p1711 = pneg %p1710
    $region42: #{_lambda_.8} parent=5 // pred_check_branch
      %1713 = sbr.rel (%p1711) target = $region44
    $region43: #{_lambda_.8} parent=5 // pred_region
      %s1714 = ssub.s32 %s11, 2
      // Predicated region
      $region45: #{_lambda_.8} parent=43 // pred_check
        %p1715 = pneg %p108
      $region46: #{_lambda_.8} parent=43 // pred_check_branch
        %1717 = sbr.rel (%p1715) target = $region48
      $region47: #{_lambda_.8} parent=43 // pred_region
        %p1718 = scmp.lt.s32.totalorder %s17, 1
        %s1719 = scalar_select %p1718, %s17, 1
        %s1720 = smul.addr %s1719, 3
        %s1721 = smul.addr %s1720, 4
        %s1722 = scalar_lea.vmem %s3, %s1721
      $region48: #{_lambda_.8} parent=43 // pred_fallthru
        _
      // Predicated region
      $region49: #{_lambda_.8} parent=43 // pred_check
        %p1723 = pneg %p134
      $region50: #{_lambda_.8} parent=43 // pred_check_branch
        %1725 = sbr.rel (%p1723) target = $region52
      $region51: #{_lambda_.8} parent=43 // pred_region
        %p1726 = scmp.lt.s32.totalorder %s17, 1
        %s1727 = scalar_select %p1726, %s17, 1
        %s1728 = smul.addr %s1727, 2
        %s1729 = scalar_lea.vmem %s4, %s1728
      $region52: #{_lambda_.8} parent=43 // pred_fallthru
        _
    $region44: #{_lambda_.8} parent=5 // pred_fallthru
      _
  $region6: #{_lambda_.8} parent=0 // loop_footer
    %s15 = sadd.s32 1, %s11
  $region7: #{_lambda_.8} parent=0 // loop_footer_branch
    %10 = sbr.rel target = $region3
  $region8: #{_lambda_.8} parent=0 // loop_exit
    _

// kernel: _lambda_.9
$region0: #{_lambda_.9}
  #allocation0 [shape = 'u32[]', space=smem, size = 0x4, offset = 0x4, fixed_abs, tag = 'smem constant byte address 0x4 - core index']
  #allocation1 [shape = 'u32[144,128]{1,0:T(1,128)}', space=vmem, size = 0x12000, scoped, tag = 'internal scratch']
  %s0 = inlined_call_operand.vmem [shape: bf16[2,43,64], index: 0, kind: input, shape index: {}]
  %s1 = inlined_call_operand.vmem [shape: bf16[16,64,128], index: 1, kind: input, shape index: {}]
  %s2 = inlined_call_operand.vmem [shape: f32[1,128], index: 2, kind: input, shape index: {}]
  %s3 = inlined_call_operand.vmem [shape: f32[2,16,128], index: 3, kind: output, shape index: {}]
  %s4 = sld [smem:[#allocation0]]
  $region45: #{_lambda_.9} parent=0
    _
  %s6 = ssub.s32 1, %s4
  %s7 = scalar_select 0, %s6, %s4
  loop: start=0, step=1, limit=4
  $region2: #{_lambda_.9} parent=0 // loop_pre_header
    _
  $region3: #{_lambda_.9} parent=0 // loop_header
    %s9 = sphi 0, %s13
    %p10 = scmp.ge.s32.totalorder %s9, 4
    %s19 = sphi 0, %s21
    %s22 = sphi 0, %s19
    %s23 = sphi 0, %s22
    %s39 = sphi 0, %s23
    %s43 = sphi 0, %s43
    %s45 = sphi 0, %s43
    %s46 = sphi 0, %s45
    %s60 = sphi 0, %s46
    %s64 = sphi 0, %s64
    %s66 = sphi 0, %s64
    %s67 = sphi 0, %s66
    %s81 = sphi 0, %s67
    %s87 = sphi 0, %s89
    %s90 = sphi 0, %s87
    %s91 = sphi 0, %s90
    %s107 = sphi 0, %s91
  $region4: #{_lambda_.9} parent=0 // loop_header_branch
    %12 = sbr.rel (%p10) target = $region8
  $region5: #{_lambda_.9} parent=0 // loop_body
    %s14 = ssub.s32 %s9, 1
    %s15 = ssub.s32 %s9, 2
    %s16 = sadd.s32 %s9, 1
    %s17 = ssub.s32 %s9, %s16
    %p18 = scmp.eq.s32.totalorder %s17, 0
    %s20 = sadd.s32 %s19, 1
    %s21 = scalar_select %p18, %s19, %s20
    %p24 = pneg %p18
    %p25 = scmp.eq.s32.totalorder %s9, 1
    %p26 = por %p24, %p25
    %p27 = scmp.ne.s32.totalorder %s19, %s22
    %p28 = scmp.eq.s32.totalorder %s9, 0
    %p29 = por %p27, %p28
    %p30 = scmp.ne.s32.totalorder %s19, %s22
    %p31 = scmp.eq.s32.totalorder %s14, 1
    %p32 = por %p30, %p31
    %p33 = scmp.ne.s32.totalorder %s22, %s23
    %p34 = scmp.eq.s32.totalorder %s14, 0
    %p35 = por %p33, %p34
    %p36 = scmp.ne.s32.totalorder %s22, %s23
    %p37 = scmp.eq.s32.totalorder %s15, 1
    %p38 = por %p36, %p37
    %p40 = scmp.ne.s32.totalorder %s23, %s39
    %p41 = scmp.eq.s32.totalorder %s15, 0
    %p42 = por %p40, %p41
    %s44 = sadd.s32 %s43, 1
    %p47 = scmp.eq.s32.totalorder %s9, 1
    %p48 = scmp.ne.s32.totalorder %s43, %s45
    %p49 = scmp.eq.s32.totalorder %s9, 0
    %p50 = por %p48, %p49
    %p51 = scmp.ne.s32.totalorder %s43, %s45
    %p52 = scmp.eq.s32.totalorder %s14, 1
    %p53 = por %p51, %p52
    %p54 = scmp.ne.s32.totalorder %s45, %s46
    %p55 = scmp.eq.s32.totalorder %s14, 0
    %p56 = por %p54, %p55
    %p57 = scmp.ne.s32.totalorder %s45, %s46
    %p58 = scmp.eq.s32.totalorder %s15, 1
    %p59 = por %p57, %p58
    %p61 = scmp.ne.s32.totalorder %s46, %s60
    %p62 = scmp.eq.s32.totalorder %s15, 0
    %p63 = por %p61, %p62
    %s65 = sadd.s32 %s64, 1
    %p68 = scmp.eq.s32.totalorder %s9, 1
    %p69 = scmp.ne.s32.totalorder %s64, %s66
    %p70 = scmp.eq.s32.totalorder %s9, 0
    %p71 = por %p69, %p70
    %p72 = scmp.ne.s32.totalorder %s64, %s66
    %p73 = scmp.eq.s32.totalorder %s14, 1
    %p74 = por %p72, %p73
    %p75 = scmp.ne.s32.totalorder %s66, %s67
    %p76 = scmp.eq.s32.totalorder %s14, 0
    %p77 = por %p75, %p76
    %p78 = scmp.ne.s32.totalorder %s66, %s67
    %p79 = scmp.eq.s32.totalorder %s15, 1
    %p80 = por %p78, %p79
    %p82 = scmp.ne.s32.totalorder %s67, %s81
    %p83 = scmp.eq.s32.totalorder %s15, 0
    %p84 = por %p82, %p83
    %s85 = ssub.s32 %s9, %s16
    %p86 = scmp.eq.s32.totalorder %s85, 0
    %s88 = sadd.s32 %s87, 1
    %s89 = scalar_select %p86, %s87, %s88
    %p92 = pneg %p86
    %p93 = scmp.eq.s32.totalorder %s9, 1
    %p94 = por %p92, %p93
    %p95 = scmp.ne.s32.totalorder %s87, %s90
    %p96 = scmp.eq.s32.totalorder %s9, 0
    %p97 = por %p95, %p96
    %p98 = scmp.ne.s32.totalorder %s87, %s90
    %p99 = scmp.eq.s32.totalorder %s14, 1
    %p100 = por %p98, %p99
    %p101 = scmp.ne.s32.totalorder %s90, %s91
    %p102 = scmp.eq.s32.totalorder %s14, 0
    %p103 = por %p101, %p102
    %p104 = scmp.ne.s32.totalorder %s90, %s91
    %p105 = scmp.eq.s32.totalorder %s15, 1
    %p106 = por %p104, %p105
    %p108 = scmp.ne.s32.totalorder %s91, %s107
    %p109 = scmp.eq.s32.totalorder %s15, 0
    %p110 = por %p108, %p109
    %p111 = scmp.le.s32.totalorder 1, %s9
    %p112 = scmp.lt.s32.totalorder %s9, 3
    %p113 = pnand %p111, %p112
    %p114 = pneg %p113
    // Predicated region
    $region9: #{_lambda_.9} parent=5 // pred_check
      _
    $region10: #{_lambda_.9} parent=5 // pred_check_branch
      %116 = sbr.rel (%p113) target = $region12
    $region11: #{_lambda_.9} parent=5 // pred_region
      %s117 = ssub.s32 %s9, 1
      // Predicated region
      $region13: #{_lambda_.9} parent=11 // pred_check
        %p118 = pneg %p56
      $region14: #{_lambda_.9} parent=11 // pred_check_branch
        %120 = sbr.rel (%p118) target = $region16
      $region15: #{_lambda_.9} parent=11 // pred_region
        _
      $region16: #{_lambda_.9} parent=11 // pred_fallthru
        _
      // Predicated region
      $region17: #{_lambda_.9} parent=11 // pred_check
        %p121 = pneg %p77
      $region18: #{_lambda_.9} parent=11 // pred_check_branch
        %123 = sbr.rel (%p121) target = $region20
      $region19: #{_lambda_.9} parent=11 // pred_region
        _
      $region20: #{_lambda_.9} parent=11 // pred_fallthru
        _
    $region12: #{_lambda_.9} parent=5 // pred_fallthru
      _
    %p124 = scmp.lt.s32.totalorder %s9, 2
    // Predicated region
    $region21: #{_lambda_.9} parent=5 // pred_check
      %p125 = pneg %p124
    $region22: #{_lambda_.9} parent=5 // pred_check_branch
      %127 = sbr.rel (%p125) target = $region24
    $region23: #{_lambda_.9} parent=5 // pred_region
      // Predicated region
      $region25: #{_lambda_.9} parent=23 // pred_check
        %p128 = pneg %p29
      $region26: #{_lambda_.9} parent=23 // pred_check_branch
        %130 = sbr.rel (%p128) target = $region28
      $region27: #{_lambda_.9} parent=23 // pred_region
        %p131 = scmp.lt.s32.totalorder %s9, 1
        %s132 = scalar_select %p131, %s9, 1
        %s133 = smul.addr %s132, 6
        %s134 = smul.addr %s133, 4
        %s135 = scalar_lea.vmem %s0, %s134
      $region28: #{_lambda_.9} parent=23 // pred_fallthru
        _
    $region24: #{_lambda_.9} parent=5 // pred_fallthru
      _
    %p136 = scmp.le.s32.totalorder 1, %s9
    %p137 = scmp.lt.s32.totalorder %s9, 3
    %p138 = pnand %p136, %p137
    %p139 = pneg %p138
    // Predicated region
    $region29: #{_lambda_.9} parent=5 // pred_check
      _
    $region30: #{_lambda_.9} parent=5 // pred_check_branch
      %141 = sbr.rel (%p138) target = $region32
    $region31: #{_lambda_.9} parent=5 // pred_region
      %s142 = ssub.s32 %s9, 1
      %p143 = scmp.lt.s32.totalorder %s14, 1
      %s144 = scalar_select %p143, %s14, 1
      %s145 = smul.addr %s144, 6
      %s146 = smul.addr %s145, 4
      %s147 = scalar_lea.vmem %s0, %s146
      %p148 = pneg %p35
      %p149 = pneg %p32
      %p150 = pneg %p56
      %p151 = pneg %p53
      %p152 = pneg %p77
      %p153 = pneg %p74
      %p154 = pneg %p103
      %p155 = pneg %p100
      %p156 = scmp.lt.s32.totalorder %s14, 1
      %s157 = scalar_select %p156, %s14, 1
      %s158 = smul.addr %s157, 2
      %s159 = smul.addr %s158, 8
      %s160 = scalar_lea.vmem %s3, %s159
      %p161 = scmp.lt.s32.totalorder %s14, 1
      %s162 = scalar_select %p161, %s14, 1
      %s163 = smul.addr %s162, 6
      %s164 = smul.addr %s163, 4
      %s165 = scalar_lea.vmem %s0, %s164
      %p166 = scmp.lt.s32.totalorder %s14, 1
      %s167 = scalar_select %p166, %s14, 1
      %s168 = smul.addr %s167, 2
      %s169 = smul.addr %s168, 8
      %s170 = scalar_lea.vmem %s3, %s169
      %v172 = vld [vmem:[%s165] sm:$0xf]
      %v173 = vld [vmem:[%s165 + $0x4] sm:$0xf]
      %v174 = vld [vmem:[%s1] sm:$0xf]
      %v175 = vld [vmem:[%s1 + $0x4] sm:$0xf]
      %v176 = vld [vmem:[%s1 + $0x8] sm:$0xf]
      %v177 = vld [vmem:[%s1 + $0xc] sm:$0xf]
      %v178 = vld [vmem:[%s1 + $0x10] sm:$0xf]
      %v179 = vld [vmem:[%s1 + $0x14] sm:$0xf]
      %v180 = vld [vmem:[%s1 + $0x18] sm:$0xf]
      %v181 = vld [vmem:[%s1 + $0x1c] sm:$0xf]
      %v182 = vld [vmem:[%s165 + $0x8] sm:$0x1]
      %s183 = scalar_lea.vmem %s1, 32
      %v184 = vld [vmem:[%s183] sm:$0xf]
      %v185 = vld [vmem:[%s183 + $0x4] sm:$0xf]
      %v186 = vld [vmem:[%s183 + $0x8] sm:$0xf]
      %v187 = vld [vmem:[%s183 + $0xc] sm:$0xf]
      %v188 = vld [vmem:[%s183 + $0x10] sm:$0xf]
      %v189 = vld [vmem:[%s183 + $0x14] sm:$0xf]
      %v190 = vld [vmem:[%s183 + $0x18] sm:$0xf]
      %v191 = vld [vmem:[%s183 + $0x1c] sm:$0xf]
      %v195 = vunpack.c.l.b16 %v172
      %v196 = vunpack.c.l.b16 %v173
      %v197 = vunpack.c.l.b16 %v182
      %v198 = vpack.c.b16 %v196, %v195
      %v199 = vpack.c.b16 %v197, %v197
      %vm200 = vsmask.f32 7424
      %v202 = vshrl.u32 %v198, 16
      %v204 = vshll.u32 %v198, 16
      %v206 = vrot.slane %v204, 1
      %v207 = vor.u32 %v202, %v206
      %v209 = vshll.u32 %v199, 16
      %v211 = vrot.slane %v209, 1
      %v212 = vsel %vm200, %v207, %v211
      %v221 = vunpack.c.l.b16 %v184
      %v222 = vunpack.c.l.b16 %v185
      %v223 = vunpack.c.l.b16 %v186
      %v224 = vunpack.c.l.b16 %v187
      %v225 = vunpack.c.l.b16 %v188
      %v226 = vunpack.c.l.b16 %v189
      %v227 = vunpack.c.l.b16 %v190
      %v228 = vunpack.c.l.b16 %v191
      %v229 = vpack.c.b16 %v222, %v221
      %v230 = vpack.c.b16 %v224, %v223
      %v231 = vpack.c.b16 %v226, %v225
      %v232 = vpack.c.b16 %v228, %v227
      %vm237 = vcmask 523264
      %v239 = vsel %vm237, %v212, 0
      %241 = vmatprep.subr.bf16.mxu0 0
      %242 = vmatpush1.bf16.msra.mxu0 %v229
      %243 = vmatprep.subr.bf16.mxu0 0
      %244 = vmatpush1.bf16.msra.mxu0 %v230
      %245 = vmatprep.subr.bf16.mxu0 0
      %246 = vmatpush1.bf16.msra.mxu0 %v231
      %247 = vmatprep.subr.bf16.mxu0 0
      %248 = vmatpush1.bf16.msra.mxu0 %v232
      %249 = vmatprep.subr.bf16.mxu0 0
      %250 = vmatpush1.bf16.msra.mxu0 0
      %251 = vmatprep.subr.bf16.mxu0 0
      %252 = vmatpush1.bf16.msra.mxu0 0
      %253 = vmatprep.subr.bf16.mxu0 0
      %254 = vmatpush1.bf16.msra.mxu0 0
      %255 = vmatprep.subr.bf16.mxu0 0
      %256 = vmatpush1.bf16.msra.mxu0 0
      %257 = vmatprep.subr.bf16.mxu0 0
      %258 = vmatpush1.bf16.msra.mxu0 0
      %259 = vmatprep.subr.bf16.mxu0 0
      %260 = vmatpush1.bf16.msra.mxu0 0
      %261 = vmatprep.subr.bf16.mxu0 0
      %262 = vmatpush1.bf16.msra.mxu0 0
      %263 = vmatprep.subr.bf16.mxu0 0
      %264 = vmatpush1.bf16.msra.mxu0 0
      %265 = vmatprep.subr.bf16.mxu0 0
      %266 = vmatpush1.bf16.msra.mxu0 0
      %267 = vmatprep.subr.bf16.mxu0 0
      %268 = vmatpush1.bf16.msra.mxu0 0
      %269 = vmatprep.subr.bf16.mxu0 0
      %270 = vmatpush1.bf16.msra.mxu0 0
      %271 = vmatprep.subr.bf16.mxu0 0
      %272 = vmatpush1.bf16.msra.mxu0 0
      %273 = vmatprep.mubr.bf16.mxu0 0
      %274 = vmatmul.mubr.bf16.gmra.mrb[0].mxu0 %v239
      %v275 = vpop.f32.mrb[0].mxu0
      %v276 = vadd.f32 0.0, %v275
      %v277 = vpop.f32.mrb[0].mxu0
      %v278 = vpop.f32.mrb[0].mxu0
      %v279 = vadd.f32 0.0, %v278
      %v280 = vpop.f32.mrb[0].mxu0
      %281 = vdwg.mxu0
      %v290 = vunpack.c.l.b16 %v174
      %v291 = vunpack.c.l.b16 %v175
      %v292 = vunpack.c.l.b16 %v176
      %v293 = vunpack.c.l.b16 %v177
      %v294 = vunpack.c.l.b16 %v178
      %v295 = vunpack.c.l.b16 %v179
      %v296 = vunpack.c.l.b16 %v180
      %v297 = vunpack.c.l.b16 %v181
      %v298 = vpack.c.b16 %v291, %v290
      %v299 = vpack.c.b16 %v293, %v292
      %v300 = vpack.c.b16 %v295, %v294
      %v301 = vpack.c.b16 %v297, %v296
      %v306 = vsel %vm237, %v198, 0
      %308 = vmatprep.subr.bf16.mxu0 0
      %309 = vmatpush1.bf16.msra.mxu0 %v298
      %310 = vmatprep.subr.bf16.mxu0 0
      %311 = vmatpush1.bf16.msra.mxu0 %v299
      %312 = vmatprep.subr.bf16.mxu0 0
      %313 = vmatpush1.bf16.msra.mxu0 %v300
      %314 = vmatprep.subr.bf16.mxu0 0
      %315 = vmatpush1.bf16.msra.mxu0 %v301
      %316 = vmatprep.subr.bf16.mxu0 0
      %317 = vmatpush1.bf16.msra.mxu0 0
      %318 = vmatprep.subr.bf16.mxu0 0
      %319 = vmatpush1.bf16.msra.mxu0 0
      %320 = vmatprep.subr.bf16.mxu0 0
      %321 = vmatpush1.bf16.msra.mxu0 0
      %322 = vmatprep.subr.bf16.mxu0 0
      %323 = vmatpush1.bf16.msra.mxu0 0
      %324 = vmatprep.subr.bf16.mxu0 0
      %325 = vmatpush1.bf16.msra.mxu0 0
      %326 = vmatprep.subr.bf16.mxu0 0
      %327 = vmatpush1.bf16.msra.mxu0 0
      %328 = vmatprep.subr.bf16.mxu0 0
      %329 = vmatpush1.bf16.msra.mxu0 0
      %330 = vmatprep.subr.bf16.mxu0 0
      %331 = vmatpush1.bf16.msra.mxu0 0
      %332 = vmatprep.subr.bf16.mxu0 0
      %333 = vmatpush1.bf16.msra.mxu0 0
      %334 = vmatprep.subr.bf16.mxu0 0
      %335 = vmatpush1.bf16.msra.mxu0 0
      %336 = vmatprep.subr.bf16.mxu0 0
      %337 = vmatpush1.bf16.msra.mxu0 0
      %338 = vmatprep.subr.bf16.mxu0 0
      %339 = vmatpush1.bf16.msra.mxu0 0
      %340 = vmatprep.mubr.bf16.mxu0 0
      %341 = vmatmul.mubr.bf16.gmra.mrb[0].mxu0 %v306
      %v342 = vpop.f32.mrb[0].mxu0
      %v343 = vadd.f32 %v276, %v342
      %v344 = vpop.f32.mrb[0].mxu0
      %v345 = vpop.f32.mrb[0].mxu0
      %v346 = vadd.f32 %v279, %v345
      %v347 = vpop.f32.mrb[0].mxu0
      %348 = vdwg.mxu0
      %v349 = vld [vmem:[%s165] sm:$0xe]
      %s350 = scalar_lea.vmem %s1, 64
      %v351 = vld [vmem:[%s350] sm:$0xf]
      %v352 = vld [vmem:[%s350 + $0x4] sm:$0xf]
      %v353 = vld [vmem:[%s350 + $0x8] sm:$0xf]
      %v354 = vld [vmem:[%s350 + $0xc] sm:$0xf]
      %v355 = vld [vmem:[%s350 + $0x10] sm:$0xf]
      %v356 = vld [vmem:[%s350 + $0x14] sm:$0xf]
      %v357 = vld [vmem:[%s350 + $0x18] sm:$0xf]
      %v358 = vld [vmem:[%s350 + $0x1c] sm:$0xf]
      %v360 = vunpack.c.l.b16 %v349
      %v361 = vpack.c.b16 %v196, %v360
      %vm362 = vcmask 1046528
      %v363 = vrot.slane %v361, 1
      %v364 = vrot.slane %v199, 1
      %v365 = vsel %vm362, %v363, %v364
      %v374 = vunpack.c.l.b16 %v351
      %v375 = vunpack.c.l.b16 %v352
      %v376 = vunpack.c.l.b16 %v353
      %v377 = vunpack.c.l.b16 %v354
      %v378 = vunpack.c.l.b16 %v355
      %v379 = vunpack.c.l.b16 %v356
      %v380 = vunpack.c.l.b16 %v357
      %v381 = vunpack.c.l.b16 %v358
      %v382 = vpack.c.b16 %v375, %v374
      %v383 = vpack.c.b16 %v377, %v376
      %v384 = vpack.c.b16 %v379, %v378
      %v385 = vpack.c.b16 %v381, %v380
      %v391 = vsel %vm237, %v365, 0
      %393 = vmatprep.subr.bf16.mxu0 0
      %394 = vmatpush1.bf16.msra.mxu0 %v382
      %395 = vmatprep.subr.bf16.mxu0 0
      %396 = vmatpush1.bf16.msra.mxu0 %v383
      %397 = vmatprep.subr.bf16.mxu0 0
      %398 = vmatpush1.bf16.msra.mxu0 %v384
      %399 = vmatprep.subr.bf16.mxu0 0
      %400 = vmatpush1.bf16.msra.mxu0 %v385
      %401 = vmatprep.subr.bf16.mxu0 0
      %402 = vmatpush1.bf16.msra.mxu0 0
      %403 = vmatprep.subr.bf16.mxu0 0
      %404 = vmatpush1.bf16.msra.mxu0 0
      %405 = vmatprep.subr.bf16.mxu0 0
      %406 = vmatpush1.bf16.msra.mxu0 0
      %407 = vmatprep.subr.bf16.mxu0 0
      %408 = vmatpush1.bf16.msra.mxu0 0
      %409 = vmatprep.subr.bf16.mxu0 0
      %410 = vmatpush1.bf16.msra.mxu0 0
      %411 = vmatprep.subr.bf16.mxu0 0
      %412 = vmatpush1.bf16.msra.mxu0 0
      %413 = vmatprep.subr.bf16.mxu0 0
      %414 = vmatpush1.bf16.msra.mxu0 0
      %415 = vmatprep.subr.bf16.mxu0 0
      %416 = vmatpush1.bf16.msra.mxu0 0
      %417 = vmatprep.subr.bf16.mxu0 0
      %418 = vmatpush1.bf16.msra.mxu0 0
      %419 = vmatprep.subr.bf16.mxu0 0
      %420 = vmatpush1.bf16.msra.mxu0 0
      %421 = vmatprep.subr.bf16.mxu0 0
      %422 = vmatpush1.bf16.msra.mxu0 0
      %423 = vmatprep.subr.bf16.mxu0 0
      %424 = vmatpush1.bf16.msra.mxu0 0
      %425 = vmatprep.mubr.bf16.mxu0 0
      %426 = vmatmul.mubr.bf16.gmra.mrb[0].mxu0 %v391
      %v427 = vpop.f32.mrb[0].mxu0
      %v428 = vadd.f32 0.0, %v427
      %v429 = vpop.f32.mrb[0].mxu0
      %v430 = vpop.f32.mrb[0].mxu0
      %v431 = vadd.f32 0.0, %v430
      %v432 = vpop.f32.mrb[0].mxu0
      %433 = vdwg.mxu0
      %v434 = vadd.f32 %v343, %v428
      %v435 = vadd.f32 %v346, %v431
      %v436 = vld [vmem:[%s165 + $0x8] sm:$0x3]
      %s437 = scalar_lea.vmem %s1, 96
      %v438 = vld [vmem:[%s437] sm:$0xf]
      %v439 = vld [vmem:[%s437 + $0x4] sm:$0xf]
      %v440 = vld [vmem:[%s437 + $0x8] sm:$0xf]
      %v441 = vld [vmem:[%s437 + $0xc] sm:$0xf]
      %v442 = vld [vmem:[%s437 + $0x10] sm:$0xf]
      %v443 = vld [vmem:[%s437 + $0x14] sm:$0xf]
      %v444 = vld [vmem:[%s437 + $0x18] sm:$0xf]
      %v445 = vld [vmem:[%s437 + $0x1c] sm:$0xf]
      %v447 = vunpack.c.l.b16 %v436
      %v448 = vpack.c.b16 %v447, %v447
      %vm449 = vsmask.f32 6400
      %v451 = vshrl.u32 %v361, 16
      %v453 = vrot.slane %v451, 1
      %v454 = vshll.u32 %v361, 16
      %v456 = vrot.slane %v454, 2
      %v457 = vor.u32 %v453, %v456
      %v459 = vshrl.u32 %v448, 16
      %v461 = vrot.slane %v459, 1
      %v462 = vshll.u32 %v448, 16
      %v464 = vrot.slane %v462, 2
      %v465 = vor.u32 %v461, %v464
      %v466 = vsel %vm449, %v457, %v465
      %v475 = vunpack.c.l.b16 %v438
      %v476 = vunpack.c.l.b16 %v439
      %v477 = vunpack.c.l.b16 %v440
      %v478 = vunpack.c.l.b16 %v441
      %v479 = vunpack.c.l.b16 %v442
      %v480 = vunpack.c.l.b16 %v443
      %v481 = vunpack.c.l.b16 %v444
      %v482 = vunpack.c.l.b16 %v445
      %v483 = vpack.c.b16 %v476, %v475
      %v484 = vpack.c.b16 %v478, %v477
      %v485 = vpack.c.b16 %v480, %v479
      %v486 = vpack.c.b16 %v482, %v481
      %v492 = vsel %vm237, %v466, 0
      %494 = vmatprep.subr.bf16.mxu0 0
      %495 = vmatpush1.bf16.msra.mxu0 %v483
      %496 = vmatprep.subr.bf16.mxu0 0
      %497 = vmatpush1.bf16.msra.mxu0 %v484
      %498 = vmatprep.subr.bf16.mxu0 0
      %499 = vmatpush1.bf16.msra.mxu0 %v485
      %500 = vmatprep.subr.bf16.mxu0 0
      %501 = vmatpush1.bf16.msra.mxu0 %v486
      %502 = vmatprep.subr.bf16.mxu0 0
      %503 = vmatpush1.bf16.msra.mxu0 0
      %504 = vmatprep.subr.bf16.mxu0 0
      %505 = vmatpush1.bf16.msra.mxu0 0
      %506 = vmatprep.subr.bf16.mxu0 0
      %507 = vmatpush1.bf16.msra.mxu0 0
      %508 = vmatprep.subr.bf16.mxu0 0
      %509 = vmatpush1.bf16.msra.mxu0 0
      %510 = vmatprep.subr.bf16.mxu0 0
      %511 = vmatpush1.bf16.msra.mxu0 0
      %512 = vmatprep.subr.bf16.mxu0 0
      %513 = vmatpush1.bf16.msra.mxu0 0
      %514 = vmatprep.subr.bf16.mxu0 0
      %515 = vmatpush1.bf16.msra.mxu0 0
      %516 = vmatprep.subr.bf16.mxu0 0
      %517 = vmatpush1.bf16.msra.mxu0 0
      %518 = vmatprep.subr.bf16.mxu0 0
      %519 = vmatpush1.bf16.msra.mxu0 0
      %520 = vmatprep.subr.bf16.mxu0 0
      %521 = vmatpush1.bf16.msra.mxu0 0
      %522 = vmatprep.subr.bf16.mxu0 0
      %523 = vmatpush1.bf16.msra.mxu0 0
      %524 = vmatprep.subr.bf16.mxu0 0
      %525 = vmatpush1.bf16.msra.mxu0 0
      %526 = vmatprep.mubr.bf16.mxu0 0
      %527 = vmatmul.mubr.bf16.gmra.mrb[0].mxu0 %v492
      %v528 = vpop.f32.mrb[0].mxu0
      %v529 = vadd.f32 0.0, %v528
      %v530 = vpop.f32.mrb[0].mxu0
      %v531 = vpop.f32.mrb[0].mxu0
      %v532 = vadd.f32 0.0, %v531
      %v533 = vpop.f32.mrb[0].mxu0
      %534 = vdwg.mxu0
      %v535 = vadd.f32 %v434, %v529
      %v536 = vadd.f32 %v435, %v532
      %v537 = vld [vmem:[%s165 + $0x8] sm:$0xf]
      %s538 = scalar_lea.vmem %s1, 128
      %v539 = vld [vmem:[%s538] sm:$0xf]
      %v540 = vld [vmem:[%s538 + $0x4] sm:$0xf]
      %v541 = vld [vmem:[%s538 + $0x8] sm:$0xf]
      %v542 = vld [vmem:[%s538 + $0xc] sm:$0xf]
      %v543 = vld [vmem:[%s538 + $0x10] sm:$0xf]
      %v544 = vld [vmem:[%s538 + $0x14] sm:$0xf]
      %v545 = vld [vmem:[%s538 + $0x18] sm:$0xf]
      %v546 = vld [vmem:[%s538 + $0x1c] sm:$0xf]
      %v548 = vunpack.c.l.b16 %v537
      %v549 = vpack.c.b16 %v548, %v196
      %v558 = vunpack.c.l.b16 %v539
      %v559 = vunpack.c.l.b16 %v540
      %v560 = vunpack.c.l.b16 %v541
      %v561 = vunpack.c.l.b16 %v542
      %v562 = vunpack.c.l.b16 %v543
      %v563 = vunpack.c.l.b16 %v544
      %v564 = vunpack.c.l.b16 %v545
      %v565 = vunpack.c.l.b16 %v546
      %v566 = vpack.c.b16 %v559, %v558
      %v567 = vpack.c.b16 %v561, %v560
      %v568 = vpack.c.b16 %v563, %v562
      %v569 = vpack.c.b16 %v565, %v564
      %v575 = vsel %vm237, %v549, 0
      %577 = vmatprep.subr.bf16.mxu0 0
      %578 = vmatpush1.bf16.msra.mxu0 %v566
      %579 = vmatprep.subr.bf16.mxu0 0
      %580 = vmatpush1.bf16.msra.mxu0 %v567
      %581 = vmatprep.subr.bf16.mxu0 0
      %582 = vmatpush1.bf16.msra.mxu0 %v568
      %583 = vmatprep.subr.bf16.mxu0 0
      %584 = vmatpush1.bf16.msra.mxu0 %v569
      %585 = vmatprep.subr.bf16.mxu0 0
      %586 = vmatpush1.bf16.msra.mxu0 0
      %587 = vmatprep.subr.bf16.mxu0 0
      %588 = vmatpush1.bf16.msra.mxu0 0
      %589 = vmatprep.subr.bf16.mxu0 0
      %590 = vmatpush1.bf16.msra.mxu0 0
      %591 = vmatprep.subr.bf16.mxu0 0
      %592 = vmatpush1.bf16.msra.mxu0 0
      %593 = vmatprep.subr.bf16.mxu0 0
      %594 = vmatpush1.bf16.msra.mxu0 0
      %595 = vmatprep.subr.bf16.mxu0 0
      %596 = vmatpush1.bf16.msra.mxu0 0
      %597 = vmatprep.subr.bf16.mxu0 0
      %598 = vmatpush1.bf16.msra.mxu0 0
      %599 = vmatprep.subr.bf16.mxu0 0
      %600 = vmatpush1.bf16.msra.mxu0 0
      %601 = vmatprep.subr.bf16.mxu0 0
      %602 = vmatpush1.bf16.msra.mxu0 0
      %603 = vmatprep.subr.bf16.mxu0 0
      %604 = vmatpush1.bf16.msra.mxu0 0
      %605 = vmatprep.subr.bf16.mxu0 0
      %606 = vmatpush1.bf16.msra.mxu0 0
      %607 = vmatprep.subr.bf16.mxu0 0
      %608 = vmatpush1.bf16.msra.mxu0 0
      %609 = vmatprep.mubr.bf16.mxu0 0
      %610 = vmatmul.mubr.bf16.gmra.mrb[0].mxu0 %v575
      %v611 = vpop.f32.mrb[0].mxu0
      %v612 = vadd.f32 0.0, %v611
      %v613 = vpop.f32.mrb[0].mxu0
      %v614 = vpop.f32.mrb[0].mxu0
      %v615 = vadd.f32 0.0, %v614
      %v616 = vpop.f32.mrb[0].mxu0
      %617 = vdwg.mxu0
      %v618 = vadd.f32 %v535, %v612
      %v619 = vadd.f32 %v536, %v615
      %v620 = vld [vmem:[%s165 + $0x4] sm:$0xf]
      %v621 = vld [vmem:[%s165 + $0x8] sm:$0xf]
      %v622 = vld [vmem:[%s165 + $0xc] sm:$0x1]
      %s623 = scalar_lea.vmem %s1, 160
      %v624 = vld [vmem:[%s623] sm:$0xf]
      %v625 = vld [vmem:[%s623 + $0x4] sm:$0xf]
      %v626 = vld [vmem:[%s623 + $0x8] sm:$0xf]
      %v627 = vld [vmem:[%s623 + $0xc] sm:$0xf]
      %v628 = vld [vmem:[%s623 + $0x10] sm:$0xf]
      %v629 = vld [vmem:[%s623 + $0x14] sm:$0xf]
      %v630 = vld [vmem:[%s623 + $0x18] sm:$0xf]
      %v631 = vld [vmem:[%s623 + $0x1c] sm:$0xf]
      %v635 = vunpack.c.l.b16 %v620
      %v636 = vunpack.c.l.b16 %v621
      %v637 = vunpack.c.l.b16 %v622
      %v638 = vpack.c.b16 %v636, %v635
      %v639 = vpack.c.b16 %v637, %v637
      %v641 = vshrl.u32 %v638, 16
      %v643 = vshll.u32 %v638, 16
      %v645 = vrot.slane %v643, 1
      %v646 = vor.u32 %v641, %v645
      %v648 = vshll.u32 %v639, 16
      %v650 = vrot.slane %v648, 1
      %v651 = vsel %vm200, %v646, %v650
      %v660 = vunpack.c.l.b16 %v624
      %v661 = vunpack.c.l.b16 %v625
      %v662 = vunpack.c.l.b16 %v626
      %v663 = vunpack.c.l.b16 %v627
      %v664 = vunpack.c.l.b16 %v628
      %v665 = vunpack.c.l.b16 %v629
      %v666 = vunpack.c.l.b16 %v630
      %v667 = vunpack.c.l.b16 %v631
      %v668 = vpack.c.b16 %v661, %v660
      %v669 = vpack.c.b16 %v663, %v662
      %v670 = vpack.c.b16 %v665, %v664
      %v671 = vpack.c.b16 %v667, %v666
      %v677 = vsel %vm237, %v651, 0
      %679 = vmatprep.subr.bf16.mxu0 0
      %680 = vmatpush1.bf16.msra.mxu0 %v668
      %681 = vmatprep.subr.bf16.mxu0 0
      %682 = vmatpush1.bf16.msra.mxu0 %v669
      %683 = vmatprep.subr.bf16.mxu0 0
      %684 = vmatpush1.bf16.msra.mxu0 %v670
      %685 = vmatprep.subr.bf16.mxu0 0
      %686 = vmatpush1.bf16.msra.mxu0 %v671
      %687 = vmatprep.subr.bf16.mxu0 0
      %688 = vmatpush1.bf16.msra.mxu0 0
      %689 = vmatprep.subr.bf16.mxu0 0
      %690 = vmatpush1.bf16.msra.mxu0 0
      %691 = vmatprep.subr.bf16.mxu0 0
      %692 = vmatpush1.bf16.msra.mxu0 0
      %693 = vmatprep.subr.bf16.mxu0 0
      %694 = vmatpush1.bf16.msra.mxu0 0
      %695 = vmatprep.subr.bf16.mxu0 0
      %696 = vmatpush1.bf16.msra.mxu0 0
      %697 = vmatprep.subr.bf16.mxu0 0
      %698 = vmatpush1.bf16.msra.mxu0 0
      %699 = vmatprep.subr.bf16.mxu0 0
      %700 = vmatpush1.bf16.msra.mxu0 0
      %701 = vmatprep.subr.bf16.mxu0 0
      %702 = vmatpush1.bf16.msra.mxu0 0
      %703 = vmatprep.subr.bf16.mxu0 0
      %704 = vmatpush1.bf16.msra.mxu0 0
      %705 = vmatprep.subr.bf16.mxu0 0
      %706 = vmatpush1.bf16.msra.mxu0 0
      %707 = vmatprep.subr.bf16.mxu0 0
      %708 = vmatpush1.bf16.msra.mxu0 0
      %709 = vmatprep.subr.bf16.mxu0 0
      %710 = vmatpush1.bf16.msra.mxu0 0
      %711 = vmatprep.mubr.bf16.mxu0 0
      %712 = vmatmul.mubr.bf16.gmra.mrb[0].mxu0 %v677
      %v713 = vpop.f32.mrb[0].mxu0
      %v714 = vadd.f32 0.0, %v713
      %v715 = vpop.f32.mrb[0].mxu0
      %v716 = vpop.f32.mrb[0].mxu0
      %v717 = vadd.f32 0.0, %v716
      %v718 = vpop.f32.mrb[0].mxu0
      %719 = vdwg.mxu0
      %v720 = vadd.f32 %v618, %v714
      %v721 = vadd.f32 %v619, %v717
      %v722 = vld [vmem:[%s165 + $0x4] sm:$0xe]
      %s723 = scalar_lea.vmem %s1, 192
      %v724 = vld [vmem:[%s723] sm:$0xf]
      %v725 = vld [vmem:[%s723 + $0x4] sm:$0xf]
      %v726 = vld [vmem:[%s723 + $0x8] sm:$0xf]
      %v727 = vld [vmem:[%s723 + $0xc] sm:$0xf]
      %v728 = vld [vmem:[%s723 + $0x10] sm:$0xf]
      %v729 = vld [vmem:[%s723 + $0x14] sm:$0xf]
      %v730 = vld [vmem:[%s723 + $0x18] sm:$0xf]
      %v731 = vld [vmem:[%s723 + $0x1c] sm:$0xf]
      %v733 = vunpack.c.l.b16 %v722
      %v734 = vpack.c.b16 %v636, %v733
      %v735 = vrot.slane %v734, 1
      %v736 = vrot.slane %v639, 1
      %v737 = vsel %vm362, %v735, %v736
      %v746 = vunpack.c.l.b16 %v724
      %v747 = vunpack.c.l.b16 %v725
      %v748 = vunpack.c.l.b16 %v726
      %v749 = vunpack.c.l.b16 %v727
      %v750 = vunpack.c.l.b16 %v728
      %v751 = vunpack.c.l.b16 %v729
      %v752 = vunpack.c.l.b16 %v730
      %v753 = vunpack.c.l.b16 %v731
      %v754 = vpack.c.b16 %v747, %v746
      %v755 = vpack.c.b16 %v749, %v748
      %v756 = vpack.c.b16 %v751, %v750
      %v757 = vpack.c.b16 %v753, %v752
      %v763 = vsel %vm237, %v737, 0
      %765 = vmatprep.subr.bf16.mxu0 0
      %766 = vmatpush1.bf16.msra.mxu0 %v754
      %767 = vmatprep.subr.bf16.mxu0 0
      %768 = vmatpush1.bf16.msra.mxu0 %v755
      %769 = vmatprep.subr.bf16.mxu0 0
      %770 = vmatpush1.bf16.msra.mxu0 %v756
      %771 = vmatprep.subr.bf16.mxu0 0
      %772 = vmatpush1.bf16.msra.mxu0 %v757
      %773 = vmatprep.subr.bf16.mxu0 0
      %774 = vmatpush1.bf16.msra.mxu0 0
      %775 = vmatprep.subr.bf16.mxu0 0
      %776 = vmatpush1.bf16.msra.mxu0 0
      %777 = vmatprep.subr.bf16.mxu0 0
      %778 = vmatpush1.bf16.msra.mxu0 0
      %779 = vmatprep.subr.bf16.mxu0 0
      %780 = vmatpush1.bf16.msra.mxu0 0
      %781 = vmatprep.subr.bf16.mxu0 0
      %782 = vmatpush1.bf16.msra.mxu0 0
      %783 = vmatprep.subr.bf16.mxu0 0
      %784 = vmatpush1.bf16.msra.mxu0 0
      %785 = vmatprep.subr.bf16.mxu0 0
      %786 = vmatpush1.bf16.msra.mxu0 0
      %787 = vmatprep.subr.bf16.mxu0 0
      %788 = vmatpush1.bf16.msra.mxu0 0
      %789 = vmatprep.subr.bf16.mxu0 0
      %790 = vmatpush1.bf16.msra.mxu0 0
      %791 = vmatprep.subr.bf16.mxu0 0
      %792 = vmatpush1.bf16.msra.mxu0 0
      %793 = vmatprep.subr.bf16.mxu0 0
      %794 = vmatpush1.bf16.msra.mxu0 0
      %795 = vmatprep.subr.bf16.mxu0 0
      %796 = vmatpush1.bf16.msra.mxu0 0
      %797 = vmatprep.mubr.bf16.mxu0 0
      %798 = vmatmul.mubr.bf16.gmra.mrb[0].mxu0 %v763
      %v799 = vpop.f32.mrb[0].mxu0
      %v800 = vadd.f32 0.0, %v799
      %v801 = vpop.f32.mrb[0].mxu0
      %v802 = vpop.f32.mrb[0].mxu0
      %v803 = vadd.f32 0.0, %v802
      %v804 = vpop.f32.mrb[0].mxu0
      %805 = vdwg.mxu0
      %v806 = vadd.f32 %v720, %v800
      %v807 = vadd.f32 %v721, %v803
      %v808 = vld [vmem:[%s165 + $0xc] sm:$0x3]
      %s809 = scalar_lea.vmem %s1, 224
      %v810 = vld [vmem:[%s809] sm:$0xf]
      %v811 = vld [vmem:[%s809 + $0x4] sm:$0xf]
      %v812 = vld [vmem:[%s809 + $0x8] sm:$0xf]
      %v813 = vld [vmem:[%s809 + $0xc] sm:$0xf]
      %v814 = vld [vmem:[%s809 + $0x10] sm:$0xf]
      %v815 = vld [vmem:[%s809 + $0x14] sm:$0xf]
      %v816 = vld [vmem:[%s809 + $0x18] sm:$0xf]
      %v817 = vld [vmem:[%s809 + $0x1c] sm:$0xf]
      %v819 = vunpack.c.l.b16 %v808
      %v820 = vpack.c.b16 %v819, %v819
      %v822 = vshrl.u32 %v734, 16
      %v824 = vrot.slane %v822, 1
      %v825 = vshll.u32 %v734, 16
      %v827 = vrot.slane %v825, 2
      %v828 = vor.u32 %v824, %v827
      %v830 = vshrl.u32 %v820, 16
      %v832 = vrot.slane %v830, 1
      %v833 = vshll.u32 %v820, 16
      %v835 = vrot.slane %v833, 2
      %v836 = vor.u32 %v832, %v835
      %v837 = vsel %vm449, %v828, %v836
      %v846 = vunpack.c.l.b16 %v810
      %v847 = vunpack.c.l.b16 %v811
      %v848 = vunpack.c.l.b16 %v812
      %v849 = vunpack.c.l.b16 %v813
      %v850 = vunpack.c.l.b16 %v814
      %v851 = vunpack.c.l.b16 %v815
      %v852 = vunpack.c.l.b16 %v816
      %v853 = vunpack.c.l.b16 %v817
      %v854 = vpack.c.b16 %v847, %v846
      %v855 = vpack.c.b16 %v849, %v848
      %v856 = vpack.c.b16 %v851, %v850
      %v857 = vpack.c.b16 %v853, %v852
      %v863 = vsel %vm237, %v837, 0
      %865 = vmatprep.subr.bf16.mxu0 0
      %866 = vmatpush1.bf16.msra.mxu0 %v854
      %867 = vmatprep.subr.bf16.mxu0 0
      %868 = vmatpush1.bf16.msra.mxu0 %v855
      %869 = vmatprep.subr.bf16.mxu0 0
      %870 = vmatpush1.bf16.msra.mxu0 %v856
      %871 = vmatprep.subr.bf16.mxu0 0
      %872 = vmatpush1.bf16.msra.mxu0 %v857
      %873 = vmatprep.subr.bf16.mxu0 0
      %874 = vmatpush1.bf16.msra.mxu0 0
      %875 = vmatprep.subr.bf16.mxu0 0
      %876 = vmatpush1.bf16.msra.mxu0 0
      %877 = vmatprep.subr.bf16.mxu0 0
      %878 = vmatpush1.bf16.msra.mxu0 0
      %879 = vmatprep.subr.bf16.mxu0 0
      %880 = vmatpush1.bf16.msra.mxu0 0
      %881 = vmatprep.subr.bf16.mxu0 0
      %882 = vmatpush1.bf16.msra.mxu0 0
      %883 = vmatprep.subr.bf16.mxu0 0
      %884 = vmatpush1.bf16.msra.mxu0 0
      %885 = vmatprep.subr.bf16.mxu0 0
      %886 = vmatpush1.bf16.msra.mxu0 0
      %887 = vmatprep.subr.bf16.mxu0 0
      %888 = vmatpush1.bf16.msra.mxu0 0
      %889 = vmatprep.subr.bf16.mxu0 0
      %890 = vmatpush1.bf16.msra.mxu0 0
      %891 = vmatprep.subr.bf16.mxu0 0
      %892 = vmatpush1.bf16.msra.mxu0 0
      %893 = vmatprep.subr.bf16.mxu0 0
      %894 = vmatpush1.bf16.msra.mxu0 0
      %895 = vmatprep.subr.bf16.mxu0 0
      %896 = vmatpush1.bf16.msra.mxu0 0
      %897 = vmatprep.mubr.bf16.mxu0 0
      %898 = vmatmul.mubr.bf16.gmra.mrb[0].mxu0 %v863
      %v899 = vpop.f32.mrb[0].mxu0
      %v900 = vadd.f32 0.0, %v899
      %v901 = vpop.f32.mrb[0].mxu0
      %v902 = vpop.f32.mrb[0].mxu0
      %v903 = vadd.f32 0.0, %v902
      %v904 = vpop.f32.mrb[0].mxu0
      %905 = vdwg.mxu0
      %v906 = vadd.f32 %v806, %v900
      %v907 = vadd.f32 %v807, %v903
      %v908 = vld [vmem:[%s165 + $0xc] sm:$0xf]
      %s909 = scalar_lea.vmem %s1, 256
      %v910 = vld [vmem:[%s909] sm:$0xf]
      %v911 = vld [vmem:[%s909 + $0x4] sm:$0xf]
      %v912 = vld [vmem:[%s909 + $0x8] sm:$0xf]
      %v913 = vld [vmem:[%s909 + $0xc] sm:$0xf]
      %v914 = vld [vmem:[%s909 + $0x10] sm:$0xf]
      %v915 = vld [vmem:[%s909 + $0x14] sm:$0xf]
      %v916 = vld [vmem:[%s909 + $0x18] sm:$0xf]
      %v917 = vld [vmem:[%s909 + $0x1c] sm:$0xf]
      %v919 = vunpack.c.l.b16 %v908
      %v920 = vpack.c.b16 %v919, %v636
      %v929 = vunpack.c.l.b16 %v910
      %v930 = vunpack.c.l.b16 %v911
      %v931 = vunpack.c.l.b16 %v912
      %v932 = vunpack.c.l.b16 %v913
      %v933 = vunpack.c.l.b16 %v914
      %v934 = vunpack.c.l.b16 %v915
      %v935 = vunpack.c.l.b16 %v916
      %v936 = vunpack.c.l.b16 %v917
      %v937 = vpack.c.b16 %v930, %v929
      %v938 = vpack.c.b16 %v932, %v931
      %v939 = vpack.c.b16 %v934, %v933
      %v940 = vpack.c.b16 %v936, %v935
      %v946 = vsel %vm237, %v920, 0
      %948 = vmatprep.subr.bf16.mxu0 0
      %949 = vmatpush1.bf16.msra.mxu0 %v937
      %950 = vmatprep.subr.bf16.mxu0 0
      %951 = vmatpush1.bf16.msra.mxu0 %v938
      %952 = vmatprep.subr.bf16.mxu0 0
      %953 = vmatpush1.bf16.msra.mxu0 %v939
      %954 = vmatprep.subr.bf16.mxu0 0
      %955 = vmatpush1.bf16.msra.mxu0 %v940
      %956 = vmatprep.subr.bf16.mxu0 0
      %957 = vmatpush1.bf16.msra.mxu0 0
      %958 = vmatprep.subr.bf16.mxu0 0
      %959 = vmatpush1.bf16.msra.mxu0 0
      %960 = vmatprep.subr.bf16.mxu0 0
      %961 = vmatpush1.bf16.msra.mxu0 0
      %962 = vmatprep.subr.bf16.mxu0 0
      %963 = vmatpush1.bf16.msra.mxu0 0
      %964 = vmatprep.subr.bf16.mxu0 0
      %965 = vmatpush1.bf16.msra.mxu0 0
      %966 = vmatprep.subr.bf16.mxu0 0
      %967 = vmatpush1.bf16.msra.mxu0 0
      %968 = vmatprep.subr.bf16.mxu0 0
      %969 = vmatpush1.bf16.msra.mxu0 0
      %970 = vmatprep.subr.bf16.mxu0 0
      %971 = vmatpush1.bf16.msra.mxu0 0
      %972 = vmatprep.subr.bf16.mxu0 0
      %973 = vmatpush1.bf16.msra.mxu0 0
      %974 = vmatprep.subr.bf16.mxu0 0
      %975 = vmatpush1.bf16.msra.mxu0 0
      %976 = vmatprep.subr.bf16.mxu0 0
      %977 = vmatpush1.bf16.msra.mxu0 0
      %978 = vmatprep.subr.bf16.mxu0 0
      %979 = vmatpush1.bf16.msra.mxu0 0
      %980 = vmatprep.mubr.bf16.mxu0 0
      %981 = vmatmul.mubr.bf16.gmra.mrb[0].mxu0 %v946
      %v982 = vpop.f32.mrb[0].mxu0
      %v983 = vadd.f32 0.0, %v982
      %v984 = vpop.f32.mrb[0].mxu0
      %v985 = vpop.f32.mrb[0].mxu0
      %v986 = vadd.f32 0.0, %v985
      %v987 = vpop.f32.mrb[0].mxu0
      %988 = vdwg.mxu0
      %v989 = vadd.f32 %v906, %v983
      %v990 = vadd.f32 %v907, %v986
      %v991 = vld [vmem:[%s165 + $0x8] sm:$0xf]
      %v992 = vld [vmem:[%s165 + $0xc] sm:$0xf]
      %v993 = vld [vmem:[%s165 + $0x10] sm:$0x1]
      %s994 = scalar_lea.vmem %s1, 288
      %v995 = vld [vmem:[%s994] sm:$0xf]
      %v996 = vld [vmem:[%s994 + $0x4] sm:$0xf]
      %v997 = vld [vmem:[%s994 + $0x8] sm:$0xf]
      %v998 = vld [vmem:[%s994 + $0xc] sm:$0xf]
      %v999 = vld [vmem:[%s994 + $0x10] sm:$0xf]
      %v1000 = vld [vmem:[%s994 + $0x14] sm:$0xf]
      %v1001 = vld [vmem:[%s994 + $0x18] sm:$0xf]
      %v1002 = vld [vmem:[%s994 + $0x1c] sm:$0xf]
      %v1006 = vunpack.c.l.b16 %v991
      %v1007 = vunpack.c.l.b16 %v992
      %v1008 = vunpack.c.l.b16 %v993
      %v1009 = vpack.c.b16 %v1007, %v1006
      %v1010 = vpack.c.b16 %v1008, %v1008
      %v1012 = vshrl.u32 %v1009, 16
      %v1014 = vshll.u32 %v1009, 16
      %v1016 = vrot.slane %v1014, 1
      %v1017 = vor.u32 %v1012, %v1016
      %v1019 = vshll.u32 %v1010, 16
      %v1021 = vrot.slane %v1019, 1
      %v1022 = vsel %vm200, %v1017, %v1021
      %v1031 = vunpack.c.l.b16 %v995
      %v1032 = vunpack.c.l.b16 %v996
      %v1033 = vunpack.c.l.b16 %v997
      %v1034 = vunpack.c.l.b16 %v998
      %v1035 = vunpack.c.l.b16 %v999
      %v1036 = vunpack.c.l.b16 %v1000
      %v1037 = vunpack.c.l.b16 %v1001
      %v1038 = vunpack.c.l.b16 %v1002
      %v1039 = vpack.c.b16 %v1032, %v1031
      %v1040 = vpack.c.b16 %v1034, %v1033
      %v1041 = vpack.c.b16 %v1036, %v1035
      %v1042 = vpack.c.b16 %v1038, %v1037
      %v1048 = vsel %vm237, %v1022, 0
      %1050 = vmatprep.subr.bf16.mxu0 0
      %1051 = vmatpush1.bf16.msra.mxu0 %v1039
      %1052 = vmatprep.subr.bf16.mxu0 0
      %1053 = vmatpush1.bf16.msra.mxu0 %v1040
      %1054 = vmatprep.subr.bf16.mxu0 0
      %1055 = vmatpush1.bf16.msra.mxu0 %v1041
      %1056 = vmatprep.subr.bf16.mxu0 0
      %1057 = vmatpush1.bf16.msra.mxu0 %v1042
      %1058 = vmatprep.subr.bf16.mxu0 0
      %1059 = vmatpush1.bf16.msra.mxu0 0
      %1060 = vmatprep.subr.bf16.mxu0 0
      %1061 = vmatpush1.bf16.msra.mxu0 0
      %1062 = vmatprep.subr.bf16.mxu0 0
      %1063 = vmatpush1.bf16.msra.mxu0 0
      %1064 = vmatprep.subr.bf16.mxu0 0
      %1065 = vmatpush1.bf16.msra.mxu0 0
      %1066 = vmatprep.subr.bf16.mxu0 0
      %1067 = vmatpush1.bf16.msra.mxu0 0
      %1068 = vmatprep.subr.bf16.mxu0 0
      %1069 = vmatpush1.bf16.msra.mxu0 0
      %1070 = vmatprep.subr.bf16.mxu0 0
      %1071 = vmatpush1.bf16.msra.mxu0 0
      %1072 = vmatprep.subr.bf16.mxu0 0
      %1073 = vmatpush1.bf16.msra.mxu0 0
      %1074 = vmatprep.subr.bf16.mxu0 0
      %1075 = vmatpush1.bf16.msra.mxu0 0
      %1076 = vmatprep.subr.bf16.mxu0 0
      %1077 = vmatpush1.bf16.msra.mxu0 0
      %1078 = vmatprep.subr.bf16.mxu0 0
      %1079 = vmatpush1.bf16.msra.mxu0 0
      %1080 = vmatprep.subr.bf16.mxu0 0
      %1081 = vmatpush1.bf16.msra.mxu0 0
      %1082 = vmatprep.mubr.bf16.mxu0 0
      %1083 = vmatmul.mubr.bf16.gmra.mrb[0].mxu0 %v1048
      %v1084 = vpop.f32.mrb[0].mxu0
      %v1085 = vadd.f32 0.0, %v1084
      %v1086 = vpop.f32.mrb[0].mxu0
      %v1087 = vpop.f32.mrb[0].mxu0
      %v1088 = vadd.f32 0.0, %v1087
      %v1089 = vpop.f32.mrb[0].mxu0
      %1090 = vdwg.mxu0
      %v1091 = vadd.f32 %v989, %v1085
      %v1092 = vadd.f32 %v990, %v1088
      %v1093 = vld [vmem:[%s165 + $0x8] sm:$0xe]
      %s1094 = scalar_lea.vmem %s1, 320
      %v1095 = vld [vmem:[%s1094] sm:$0xf]
      %v1096 = vld [vmem:[%s1094 + $0x4] sm:$0xf]
      %v1097 = vld [vmem:[%s1094 + $0x8] sm:$0xf]
      %v1098 = vld [vmem:[%s1094 + $0xc] sm:$0xf]
      %v1099 = vld [vmem:[%s1094 + $0x10] sm:$0xf]
      %v1100 = vld [vmem:[%s1094 + $0x14] sm:$0xf]
      %v1101 = vld [vmem:[%s1094 + $0x18] sm:$0xf]
      %v1102 = vld [vmem:[%s1094 + $0x1c] sm:$0xf]
      %v1104 = vunpack.c.l.b16 %v1093
      %v1105 = vpack.c.b16 %v1007, %v1104
      %v1106 = vrot.slane %v1105, 1
      %v1107 = vrot.slane %v1010, 1
      %v1108 = vsel %vm362, %v1106, %v1107
      %v1117 = vunpack.c.l.b16 %v1095
      %v1118 = vunpack.c.l.b16 %v1096
      %v1119 = vunpack.c.l.b16 %v1097
      %v1120 = vunpack.c.l.b16 %v1098
      %v1121 = vunpack.c.l.b16 %v1099
      %v1122 = vunpack.c.l.b16 %v1100
      %v1123 = vunpack.c.l.b16 %v1101
      %v1124 = vunpack.c.l.b16 %v1102
      %v1125 = vpack.c.b16 %v1118, %v1117
      %v1126 = vpack.c.b16 %v1120, %v1119
      %v1127 = vpack.c.b16 %v1122, %v1121
      %v1128 = vpack.c.b16 %v1124, %v1123
      %v1134 = vsel %vm237, %v1108, 0
      %1136 = vmatprep.subr.bf16.mxu0 0
      %1137 = vmatpush1.bf16.msra.mxu0 %v1125
      %1138 = vmatprep.subr.bf16.mxu0 0
      %1139 = vmatpush1.bf16.msra.mxu0 %v1126
      %1140 = vmatprep.subr.bf16.mxu0 0
      %1141 = vmatpush1.bf16.msra.mxu0 %v1127
      %1142 = vmatprep.subr.bf16.mxu0 0
      %1143 = vmatpush1.bf16.msra.mxu0 %v1128
      %1144 = vmatprep.subr.bf16.mxu0 0
      %1145 = vmatpush1.bf16.msra.mxu0 0
      %1146 = vmatprep.subr.bf16.mxu0 0
      %1147 = vmatpush1.bf16.msra.mxu0 0
      %1148 = vmatprep.subr.bf16.mxu0 0
      %1149 = vmatpush1.bf16.msra.mxu0 0
      %1150 = vmatprep.subr.bf16.mxu0 0
      %1151 = vmatpush1.bf16.msra.mxu0 0
      %1152 = vmatprep.subr.bf16.mxu0 0
      %1153 = vmatpush1.bf16.msra.mxu0 0
      %1154 = vmatprep.subr.bf16.mxu0 0
      %1155 = vmatpush1.bf16.msra.mxu0 0
      %1156 = vmatprep.subr.bf16.mxu0 0
      %1157 = vmatpush1.bf16.msra.mxu0 0
      %1158 = vmatprep.subr.bf16.mxu0 0
      %1159 = vmatpush1.bf16.msra.mxu0 0
      %1160 = vmatprep.subr.bf16.mxu0 0
      %1161 = vmatpush1.bf16.msra.mxu0 0
      %1162 = vmatprep.subr.bf16.mxu0 0
      %1163 = vmatpush1.bf16.msra.mxu0 0
      %1164 = vmatprep.subr.bf16.mxu0 0
      %1165 = vmatpush1.bf16.msra.mxu0 0
      %1166 = vmatprep.subr.bf16.mxu0 0
      %1167 = vmatpush1.bf16.msra.mxu0 0
      %1168 = vmatprep.mubr.bf16.mxu0 0
      %1169 = vmatmul.mubr.bf16.gmra.mrb[0].mxu0 %v1134
      %v1170 = vpop.f32.mrb[0].mxu0
      %v1171 = vadd.f32 0.0, %v1170
      %v1172 = vpop.f32.mrb[0].mxu0
      %v1173 = vpop.f32.mrb[0].mxu0
      %v1174 = vadd.f32 0.0, %v1173
      %v1175 = vpop.f32.mrb[0].mxu0
      %1176 = vdwg.mxu0
      %v1177 = vadd.f32 %v1091, %v1171
      %v1178 = vadd.f32 %v1092, %v1174
      %v1179 = vld [vmem:[%s165 + $0x10] sm:$0x3]
      %s1180 = scalar_lea.vmem %s1, 352
      %v1181 = vld [vmem:[%s1180] sm:$0xf]
      %v1182 = vld [vmem:[%s1180 + $0x4] sm:$0xf]
      %v1183 = vld [vmem:[%s1180 + $0x8] sm:$0xf]
      %v1184 = vld [vmem:[%s1180 + $0xc] sm:$0xf]
      %v1185 = vld [vmem:[%s1180 + $0x10] sm:$0xf]
      %v1186 = vld [vmem:[%s1180 + $0x14] sm:$0xf]
      %v1187 = vld [vmem:[%s1180 + $0x18] sm:$0xf]
      %v1188 = vld [vmem:[%s1180 + $0x1c] sm:$0xf]
      %v1190 = vunpack.c.l.b16 %v1179
      %v1191 = vpack.c.b16 %v1190, %v1190
      %v1193 = vshrl.u32 %v1105, 16
      %v1195 = vrot.slane %v1193, 1
      %v1196 = vshll.u32 %v1105, 16
      %v1198 = vrot.slane %v1196, 2
      %v1199 = vor.u32 %v1195, %v1198
      %v1201 = vshrl.u32 %v1191, 16
      %v1203 = vrot.slane %v1201, 1
      %v1204 = vshll.u32 %v1191, 16
      %v1206 = vrot.slane %v1204, 2
      %v1207 = vor.u32 %v1203, %v1206
      %v1208 = vsel %vm449, %v1199, %v1207
      %v1217 = vunpack.c.l.b16 %v1181
      %v1218 = vunpack.c.l.b16 %v1182
      %v1219 = vunpack.c.l.b16 %v1183
      %v1220 = vunpack.c.l.b16 %v1184
      %v1221 = vunpack.c.l.b16 %v1185
      %v1222 = vunpack.c.l.b16 %v1186
      %v1223 = vunpack.c.l.b16 %v1187
      %v1224 = vunpack.c.l.b16 %v1188
      %v1225 = vpack.c.b16 %v1218, %v1217
      %v1226 = vpack.c.b16 %v1220, %v1219
      %v1227 = vpack.c.b16 %v1222, %v1221
      %v1228 = vpack.c.b16 %v1224, %v1223
      %v1234 = vsel %vm237, %v1208, 0
      %1236 = vmatprep.subr.bf16.mxu0 0
      %1237 = vmatpush1.bf16.msra.mxu0 %v1225
      %1238 = vmatprep.subr.bf16.mxu0 0
      %1239 = vmatpush1.bf16.msra.mxu0 %v1226
      %1240 = vmatprep.subr.bf16.mxu0 0
      %1241 = vmatpush1.bf16.msra.mxu0 %v1227
      %1242 = vmatprep.subr.bf16.mxu0 0
      %1243 = vmatpush1.bf16.msra.mxu0 %v1228
      %1244 = vmatprep.subr.bf16.mxu0 0
      %1245 = vmatpush1.bf16.msra.mxu0 0
      %1246 = vmatprep.subr.bf16.mxu0 0
      %1247 = vmatpush1.bf16.msra.mxu0 0
      %1248 = vmatprep.subr.bf16.mxu0 0
      %1249 = vmatpush1.bf16.msra.mxu0 0
      %1250 = vmatprep.subr.bf16.mxu0 0
      %1251 = vmatpush1.bf16.msra.mxu0 0
      %1252 = vmatprep.subr.bf16.mxu0 0
      %1253 = vmatpush1.bf16.msra.mxu0 0
      %1254 = vmatprep.subr.bf16.mxu0 0
      %1255 = vmatpush1.bf16.msra.mxu0 0
      %1256 = vmatprep.subr.bf16.mxu0 0
      %1257 = vmatpush1.bf16.msra.mxu0 0
      %1258 = vmatprep.subr.bf16.mxu0 0
      %1259 = vmatpush1.bf16.msra.mxu0 0
      %1260 = vmatprep.subr.bf16.mxu0 0
      %1261 = vmatpush1.bf16.msra.mxu0 0
      %1262 = vmatprep.subr.bf16.mxu0 0
      %1263 = vmatpush1.bf16.msra.mxu0 0
      %1264 = vmatprep.subr.bf16.mxu0 0
      %1265 = vmatpush1.bf16.msra.mxu0 0
      %1266 = vmatprep.subr.bf16.mxu0 0
      %1267 = vmatpush1.bf16.msra.mxu0 0
      %1268 = vmatprep.mubr.bf16.mxu0 0
      %1269 = vmatmul.mubr.bf16.gmra.mrb[0].mxu0 %v1234
      %v1270 = vpop.f32.mrb[0].mxu0
      %v1271 = vadd.f32 0.0, %v1270
      %v1272 = vpop.f32.mrb[0].mxu0
      %v1273 = vpop.f32.mrb[0].mxu0
      %v1274 = vadd.f32 0.0, %v1273
      %v1275 = vpop.f32.mrb[0].mxu0
      %1276 = vdwg.mxu0
      %v1277 = vadd.f32 %v1177, %v1271
      %v1278 = vadd.f32 %v1178, %v1274
      %v1279 = vld [vmem:[%s165 + $0x10] sm:$0xf]
      %s1280 = scalar_lea.vmem %s1, 384
      %v1281 = vld [vmem:[%s1280] sm:$0xf]
      %v1282 = vld [vmem:[%s1280 + $0x4] sm:$0xf]
      %v1283 = vld [vmem:[%s1280 + $0x8] sm:$0xf]
      %v1284 = vld [vmem:[%s1280 + $0xc] sm:$0xf]
      %v1285 = vld [vmem:[%s1280 + $0x10] sm:$0xf]
      %v1286 = vld [vmem:[%s1280 + $0x14] sm:$0xf]
      %v1287 = vld [vmem:[%s1280 + $0x18] sm:$0xf]
      %v1288 = vld [vmem:[%s1280 + $0x1c] sm:$0xf]
      %v1290 = vunpack.c.l.b16 %v1279
      %v1291 = vpack.c.b16 %v1290, %v1007
      %v1300 = vunpack.c.l.b16 %v1281
      %v1301 = vunpack.c.l.b16 %v1282
      %v1302 = vunpack.c.l.b16 %v1283
      %v1303 = vunpack.c.l.b16 %v1284
      %v1304 = vunpack.c.l.b16 %v1285
      %v1305 = vunpack.c.l.b16 %v1286
      %v1306 = vunpack.c.l.b16 %v1287
      %v1307 = vunpack.c.l.b16 %v1288
      %v1308 = vpack.c.b16 %v1301, %v1300
      %v1309 = vpack.c.b16 %v1303, %v1302
      %v1310 = vpack.c.b16 %v1305, %v1304
      %v1311 = vpack.c.b16 %v1307, %v1306
      %v1317 = vsel %vm237, %v1291, 0
      %1319 = vmatprep.subr.bf16.mxu0 0
      %1320 = vmatpush1.bf16.msra.mxu0 %v1308
      %1321 = vmatprep.subr.bf16.mxu0 0
      %1322 = vmatpush1.bf16.msra.mxu0 %v1309
      %1323 = vmatprep.subr.bf16.mxu0 0
      %1324 = vmatpush1.bf16.msra.mxu0 %v1310
      %1325 = vmatprep.subr.bf16.mxu0 0
      %1326 = vmatpush1.bf16.msra.mxu0 %v1311
      %1327 = vmatprep.subr.bf16.mxu0 0
      %1328 = vmatpush1.bf16.msra.mxu0 0
      %1329 = vmatprep.subr.bf16.mxu0 0
      %1330 = vmatpush1.bf16.msra.mxu0 0
      %1331 = vmatprep.subr.bf16.mxu0 0
      %1332 = vmatpush1.bf16.msra.mxu0 0
      %1333 = vmatprep.subr.bf16.mxu0 0
      %1334 = vmatpush1.bf16.msra.mxu0 0
      %1335 = vmatprep.subr.bf16.mxu0 0
      %1336 = vmatpush1.bf16.msra.mxu0 0
      %1337 = vmatprep.subr.bf16.mxu0 0
      %1338 = vmatpush1.bf16.msra.mxu0 0
      %1339 = vmatprep.subr.bf16.mxu0 0
      %1340 = vmatpush1.bf16.msra.mxu0 0
      %1341 = vmatprep.subr.bf16.mxu0 0
      %1342 = vmatpush1.bf16.msra.mxu0 0
      %1343 = vmatprep.subr.bf16.mxu0 0
      %1344 = vmatpush1.bf16.msra.mxu0 0
      %1345 = vmatprep.subr.bf16.mxu0 0
      %1346 = vmatpush1.bf16.msra.mxu0 0
      %1347 = vmatprep.subr.bf16.mxu0 0
      %1348 = vmatpush1.bf16.msra.mxu0 0
      %1349 = vmatprep.subr.bf16.mxu0 0
      %1350 = vmatpush1.bf16.msra.mxu0 0
      %1351 = vmatprep.mubr.bf16.mxu0 0
      %1352 = vmatmul.mubr.bf16.gmra.mrb[0].mxu0 %v1317
      %v1353 = vpop.f32.mrb[0].mxu0
      %v1354 = vadd.f32 0.0, %v1353
      %v1355 = vpop.f32.mrb[0].mxu0
      %v1356 = vpop.f32.mrb[0].mxu0
      %v1357 = vadd.f32 0.0, %v1356
      %v1358 = vpop.f32.mrb[0].mxu0
      %1359 = vdwg.mxu0
      %v1360 = vadd.f32 %v1277, %v1354
      %v1361 = vadd.f32 %v1278, %v1357
      %v1362 = vld [vmem:[%s165 + $0xc] sm:$0xf]
      %v1363 = vld [vmem:[%s165 + $0x10] sm:$0xf]
      %v1364 = vld [vmem:[%s165 + $0x14] sm:$0x1]
      %s1365 = scalar_lea.vmem %s1, 416
      %v1366 = vld [vmem:[%s1365] sm:$0xf]
      %v1367 = vld [vmem:[%s1365 + $0x4] sm:$0xf]
      %v1368 = vld [vmem:[%s1365 + $0x8] sm:$0xf]
      %v1369 = vld [vmem:[%s1365 + $0xc] sm:$0xf]
      %v1370 = vld [vmem:[%s1365 + $0x10] sm:$0xf]
      %v1371 = vld [vmem:[%s1365 + $0x14] sm:$0xf]
      %v1372 = vld [vmem:[%s1365 + $0x18] sm:$0xf]
      %v1373 = vld [vmem:[%s1365 + $0x1c] sm:$0xf]
      %v1377 = vunpack.c.l.b16 %v1362
      %v1378 = vunpack.c.l.b16 %v1363
      %v1379 = vunpack.c.l.b16 %v1364
      %v1380 = vpack.c.b16 %v1378, %v1377
      %v1381 = vpack.c.b16 %v1379, %v1379
      %v1383 = vshrl.u32 %v1380, 16
      %v1385 = vshll.u32 %v1380, 16
      %v1387 = vrot.slane %v1385, 1
      %v1388 = vor.u32 %v1383, %v1387
      %v1390 = vshll.u32 %v1381, 16
      %v1392 = vrot.slane %v1390, 1
      %v1393 = vsel %vm200, %v1388, %v1392
      %v1402 = vunpack.c.l.b16 %v1366
      %v1403 = vunpack.c.l.b16 %v1367
      %v1404 = vunpack.c.l.b16 %v1368
      %v1405 = vunpack.c.l.b16 %v1369
      %v1406 = vunpack.c.l.b16 %v1370
      %v1407 = vunpack.c.l.b16 %v1371
      %v1408 = vunpack.c.l.b16 %v1372
      %v1409 = vunpack.c.l.b16 %v1373
      %v1410 = vpack.c.b16 %v1403, %v1402
      %v1411 = vpack.c.b16 %v1405, %v1404
      %v1412 = vpack.c.b16 %v1407, %v1406
      %v1413 = vpack.c.b16 %v1409, %v1408
      %v1419 = vsel %vm237, %v1393, 0
      %1421 = vmatprep.subr.bf16.mxu0 0
      %1422 = vmatpush1.bf16.msra.mxu0 %v1410
      %1423 = vmatprep.subr.bf16.mxu0 0
      %1424 = vmatpush1.bf16.msra.mxu0 %v1411
      %1425 = vmatprep.subr.bf16.mxu0 0
      %1426 = vmatpush1.bf16.msra.mxu0 %v1412
      %1427 = vmatprep.subr.bf16.mxu0 0
      %1428 = vmatpush1.bf16.msra.mxu0 %v1413
      %1429 = vmatprep.subr.bf16.mxu0 0
      %1430 = vmatpush1.bf16.msra.mxu0 0
      %1431 = vmatprep.subr.bf16.mxu0 0
      %1432 = vmatpush1.bf16.msra.mxu0 0
      %1433 = vmatprep.subr.bf16.mxu0 0
      %1434 = vmatpush1.bf16.msra.mxu0 0
      %1435 = vmatprep.subr.bf16.mxu0 0
      %1436 = vmatpush1.bf16.msra.mxu0 0
      %1437 = vmatprep.subr.bf16.mxu0 0
      %1438 = vmatpush1.bf16.msra.mxu0 0
      %1439 = vmatprep.subr.bf16.mxu0 0
      %1440 = vmatpush1.bf16.msra.mxu0 0
      %1441 = vmatprep.subr.bf16.mxu0 0
      %1442 = vmatpush1.bf16.msra.mxu0 0
      %1443 = vmatprep.subr.bf16.mxu0 0
      %1444 = vmatpush1.bf16.msra.mxu0 0
      %1445 = vmatprep.subr.bf16.mxu0 0
      %1446 = vmatpush1.bf16.msra.mxu0 0
      %1447 = vmatprep.subr.bf16.mxu0 0
      %1448 = vmatpush1.bf16.msra.mxu0 0
      %1449 = vmatprep.subr.bf16.mxu0 0
      %1450 = vmatpush1.bf16.msra.mxu0 0
      %1451 = vmatprep.subr.bf16.mxu0 0
      %1452 = vmatpush1.bf16.msra.mxu0 0
      %1453 = vmatprep.mubr.bf16.mxu0 0
      %1454 = vmatmul.mubr.bf16.gmra.mrb[0].mxu0 %v1419
      %v1455 = vpop.f32.mrb[0].mxu0
      %v1456 = vadd.f32 0.0, %v1455
      %v1457 = vpop.f32.mrb[0].mxu0
      %v1458 = vpop.f32.mrb[0].mxu0
      %v1459 = vadd.f32 0.0, %v1458
      %v1460 = vpop.f32.mrb[0].mxu0
      %1461 = vdwg.mxu0
      %v1462 = vadd.f32 %v1360, %v1456
      %v1463 = vadd.f32 %v1361, %v1459
      %v1464 = vld [vmem:[%s165 + $0xc] sm:$0xe]
      %s1465 = scalar_lea.vmem %s1, 448
      %v1466 = vld [vmem:[%s1465] sm:$0xf]
      %v1467 = vld [vmem:[%s1465 + $0x4] sm:$0xf]
      %v1468 = vld [vmem:[%s1465 + $0x8] sm:$0xf]
      %v1469 = vld [vmem:[%s1465 + $0xc] sm:$0xf]
      %v1470 = vld [vmem:[%s1465 + $0x10] sm:$0xf]
      %v1471 = vld [vmem:[%s1465 + $0x14] sm:$0xf]
      %v1472 = vld [vmem:[%s1465 + $0x18] sm:$0xf]
      %v1473 = vld [vmem:[%s1465 + $0x1c] sm:$0xf]
      %v1475 = vunpack.c.l.b16 %v1464
      %v1476 = vpack.c.b16 %v1378, %v1475
      %v1477 = vrot.slane %v1476, 1
      %v1478 = vrot.slane %v1381, 1
      %v1479 = vsel %vm362, %v1477, %v1478
      %v1488 = vunpack.c.l.b16 %v1466
      %v1489 = vunpack.c.l.b16 %v1467
      %v1490 = vunpack.c.l.b16 %v1468
      %v1491 = vunpack.c.l.b16 %v1469
      %v1492 = vunpack.c.l.b16 %v1470
      %v1493 = vunpack.c.l.b16 %v1471
      %v1494 = vunpack.c.l.b16 %v1472
      %v1495 = vunpack.c.l.b16 %v1473
      %v1496 = vpack.c.b16 %v1489, %v1488
      %v1497 = vpack.c.b16 %v1491, %v1490
      %v1498 = vpack.c.b16 %v1493, %v1492
      %v1499 = vpack.c.b16 %v1495, %v1494
      %v1505 = vsel %vm237, %v1479, 0
      %1507 = vmatprep.subr.bf16.mxu0 0
      %1508 = vmatpush1.bf16.msra.mxu0 %v1496
      %1509 = vmatprep.subr.bf16.mxu0 0
      %1510 = vmatpush1.bf16.msra.mxu0 %v1497
      %1511 = vmatprep.subr.bf16.mxu0 0
      %1512 = vmatpush1.bf16.msra.mxu0 %v1498
      %1513 = vmatprep.subr.bf16.mxu0 0
      %1514 = vmatpush1.bf16.msra.mxu0 %v1499
      %1515 = vmatprep.subr.bf16.mxu0 0
      %1516 = vmatpush1.bf16.msra.mxu0 0
      %1517 = vmatprep.subr.bf16.mxu0 0
      %1518 = vmatpush1.bf16.msra.mxu0 0
      %1519 = vmatprep.subr.bf16.mxu0 0
      %1520 = vmatpush1.bf16.msra.mxu0 0
      %1521 = vmatprep.subr.bf16.mxu0 0
      %1522 = vmatpush1.bf16.msra.mxu0 0
      %1523 = vmatprep.subr.bf16.mxu0 0
      %1524 = vmatpush1.bf16.msra.mxu0 0
      %1525 = vmatprep.subr.bf16.mxu0 0
      %1526 = vmatpush1.bf16.msra.mxu0 0
      %1527 = vmatprep.subr.bf16.mxu0 0
      %1528 = vmatpush1.bf16.msra.mxu0 0
      %1529 = vmatprep.subr.bf16.mxu0 0
      %1530 = vmatpush1.bf16.msra.mxu0 0
      %1531 = vmatprep.subr.bf16.mxu0 0
      %1532 = vmatpush1.bf16.msra.mxu0 0
      %1533 = vmatprep.subr.bf16.mxu0 0
      %1534 = vmatpush1.bf16.msra.mxu0 0
      %1535 = vmatprep.subr.bf16.mxu0 0
      %1536 = vmatpush1.bf16.msra.mxu0 0
      %1537 = vmatprep.subr.bf16.mxu0 0
      %1538 = vmatpush1.bf16.msra.mxu0 0
      %1539 = vmatprep.mubr.bf16.mxu0 0
      %1540 = vmatmul.mubr.bf16.gmra.mrb[0].mxu0 %v1505
      %v1541 = vpop.f32.mrb[0].mxu0
      %v1542 = vadd.f32 0.0, %v1541
      %v1543 = vpop.f32.mrb[0].mxu0
      %v1544 = vpop.f32.mrb[0].mxu0
      %v1545 = vadd.f32 0.0, %v1544
      %v1546 = vpop.f32.mrb[0].mxu0
      %1547 = vdwg.mxu0
      %v1548 = vadd.f32 %v1462, %v1542
      %v1549 = vadd.f32 %v1463, %v1545
      %v1550 = vld [vmem:[%s165 + $0x14] sm:$0x3]
      %s1551 = scalar_lea.vmem %s1, 480
      %v1552 = vld [vmem:[%s1551] sm:$0xf]
      %v1553 = vld [vmem:[%s1551 + $0x4] sm:$0xf]
      %v1554 = vld [vmem:[%s1551 + $0x8] sm:$0xf]
      %v1555 = vld [vmem:[%s1551 + $0xc] sm:$0xf]
      %v1556 = vld [vmem:[%s1551 + $0x10] sm:$0xf]
      %v1557 = vld [vmem:[%s1551 + $0x14] sm:$0xf]
      %v1558 = vld [vmem:[%s1551 + $0x18] sm:$0xf]
      %v1559 = vld [vmem:[%s1551 + $0x1c] sm:$0xf]
      %v1561 = vunpack.c.l.b16 %v1550
      %v1562 = vpack.c.b16 %v1561, %v1561
      %v1564 = vshrl.u32 %v1476, 16
      %v1566 = vrot.slane %v1564, 1
      %v1567 = vshll.u32 %v1476, 16
      %v1569 = vrot.slane %v1567, 2
      %v1570 = vor.u32 %v1566, %v1569
      %v1572 = vshrl.u32 %v1562, 16
      %v1574 = vrot.slane %v1572, 1
      %v1575 = vshll.u32 %v1562, 16
      %v1577 = vrot.slane %v1575, 2
      %v1578 = vor.u32 %v1574, %v1577
      %v1579 = vsel %vm449, %v1570, %v1578
      %v1588 = vunpack.c.l.b16 %v1552
      %v1589 = vunpack.c.l.b16 %v1553
      %v1590 = vunpack.c.l.b16 %v1554
      %v1591 = vunpack.c.l.b16 %v1555
      %v1592 = vunpack.c.l.b16 %v1556
      %v1593 = vunpack.c.l.b16 %v1557
      %v1594 = vunpack.c.l.b16 %v1558
      %v1595 = vunpack.c.l.b16 %v1559
      %v1596 = vpack.c.b16 %v1589, %v1588
      %v1597 = vpack.c.b16 %v1591, %v1590
      %v1598 = vpack.c.b16 %v1593, %v1592
      %v1599 = vpack.c.b16 %v1595, %v1594
      %v1605 = vsel %vm237, %v1579, 0
      %1607 = vmatprep.subr.bf16.mxu0 0
      %1608 = vmatpush1.bf16.msra.mxu0 %v1596
      %1609 = vmatprep.subr.bf16.mxu0 0
      %1610 = vmatpush1.bf16.msra.mxu0 %v1597
      %1611 = vmatprep.subr.bf16.mxu0 0
      %1612 = vmatpush1.bf16.msra.mxu0 %v1598
      %1613 = vmatprep.subr.bf16.mxu0 0
      %1614 = vmatpush1.bf16.msra.mxu0 %v1599
      %1615 = vmatprep.subr.bf16.mxu0 0
      %1616 = vmatpush1.bf16.msra.mxu0 0
      %1617 = vmatprep.subr.bf16.mxu0 0
      %1618 = vmatpush1.bf16.msra.mxu0 0
      %1619 = vmatprep.subr.bf16.mxu0 0
      %1620 = vmatpush1.bf16.msra.mxu0 0
      %1621 = vmatprep.subr.bf16.mxu0 0
      %1622 = vmatpush1.bf16.msra.mxu0 0
      %1623 = vmatprep.subr.bf16.mxu0 0
      %1624 = vmatpush1.bf16.msra.mxu0 0
      %1625 = vmatprep.subr.bf16.mxu0 0
      %1626 = vmatpush1.bf16.msra.mxu0 0
      %1627 = vmatprep.subr.bf16.mxu0 0
      %1628 = vmatpush1.bf16.msra.mxu0 0
      %1629 = vmatprep.subr.bf16.mxu0 0
      %1630 = vmatpush1.bf16.msra.mxu0 0
      %1631 = vmatprep.subr.bf16.mxu0 0
      %1632 = vmatpush1.bf16.msra.mxu0 0
      %1633 = vmatprep.subr.bf16.mxu0 0
      %1634 = vmatpush1.bf16.msra.mxu0 0
      %1635 = vmatprep.subr.bf16.mxu0 0
      %1636 = vmatpush1.bf16.msra.mxu0 0
      %1637 = vmatprep.subr.bf16.mxu0 0
      %1638 = vmatpush1.bf16.msra.mxu0 0
      %1639 = vmatprep.mubr.bf16.mxu0 0
      %1640 = vmatmul.mubr.bf16.gmra.mrb[0].mxu0 %v1605
      %v1641 = vpop.f32.mrb[0].mxu0
      %v1642 = vadd.f32 0.0, %v1641
      %v1643 = vpop.f32.mrb[0].mxu0
      %v1644 = vpop.f32.mrb[0].mxu0
      %v1645 = vadd.f32 0.0, %v1644
      %v1646 = vpop.f32.mrb[0].mxu0
      %1647 = vdwg.mxu0
      %v1648 = vadd.f32 %v1548, %v1642
      %v1649 = vadd.f32 %v1549, %v1645
      %v1650 = vld [vmem:[%s2] sm:$0x1]
      %v1652 = vlaneseq
      %v1653 = vshrl.u32 %v1652, 7
      %v1654 = vsub.s32 0, %v1653
      %v1655 = vrot.slane %v1650, %v1654
      %v1657 = vadd.f32 %v1648, %v1655
      %v1658 = vadd.f32 %v1649, %v1655
      %v1659 = vxor.u32 %v1657, 2147483648
      %v1660 = vxor.u32 %v1658, 2147483648
      %v1661 = vmul.f32 %v1659, 1.442695
      %v1662 = vpow.pop %v1661
      %v1663 = vmul.f32 %v1660, 1.442695
      %v1664 = vpow.pop %v1663
      %v1665 = vadd.f32 %v1662, 1.0
      %v1666 = vadd.f32 %v1664, 1.0
      %v1667 = vrcp.pop %v1665
      %v1668 = vmul.f32 1.0, %v1667
      %v1669 = vrcp.pop %v1666
      %v1670 = vmul.f32 1.0, %v1669
      %1671 = vst [vmem:[%s170] sm:$0xff] %v1668
      %1672 = vst [vmem:[%s170 + $0x8] sm:$0xff] %v1670
      %p1673 = scmp.lt.s32.totalorder %s14, 1
      %s1674 = scalar_select %p1673, %s14, 1
      %s1675 = smul.addr %s1674, 2
      %s1676 = smul.addr %s1675, 8
      %s1677 = scalar_lea.vmem %s3, %s1676
      // Predicated region
      $region33: #{_lambda_.9} parent=31 // pred_check
        %p1678 = pneg %p100
      $region34: #{_lambda_.9} parent=31 // pred_check_branch
        %1680 = sbr.rel (%p1678) target = $region36
      $region35: #{_lambda_.9} parent=31 // pred_region
        _
      $region36: #{_lambda_.9} parent=31 // pred_fallthru
        _
    $region32: #{_lambda_.9} parent=5 // pred_fallthru
      _
    %p1681 = scmp.le.s32.totalorder 2, %s9
    // Predicated region
    $region37: #{_lambda_.9} parent=5 // pred_check
      %p1682 = pneg %p1681
    $region38: #{_lambda_.9} parent=5 // pred_check_branch
      %1684 = sbr.rel (%p1682) target = $region40
    $region39: #{_lambda_.9} parent=5 // pred_region
      %s1685 = ssub.s32 %s9, 2
      // Predicated region
      $region41: #{_lambda_.9} parent=39 // pred_check
        %p1686 = pneg %p106
      $region42: #{_lambda_.9} parent=39 // pred_check_branch
        %1688 = sbr.rel (%p1686) target = $region44
      $region43: #{_lambda_.9} parent=39 // pred_region
        %p1689 = scmp.lt.s32.totalorder %s15, 1
        %s1690 = scalar_select %p1689, %s15, 1
        %s1691 = smul.addr %s1690, 2
        %s1692 = smul.addr %s1691, 8
        %s1693 = scalar_lea.vmem %s3, %s1692
      $region44: #{_lambda_.9} parent=39 // pred_fallthru
        _
    $region40: #{_lambda_.9} parent=5 // pred_fallthru
      _
  $region6: #{_lambda_.9} parent=0 // loop_footer
    %s13 = sadd.s32 1, %s9
  $region7: #{_lambda_.9} parent=0 // loop_footer_branch
    %8 = sbr.rel target = $region3
  $region8: #{_lambda_.9} parent=0 // loop_exit
    _

</llo_original>
